<compile_context>
chip_gen: v7x
topology: tpu7x:2x2x1
jax: 0.10.0
libtpu: 0.0.40
codegen_flags: <defaults>
</compile_context>

<pallas_src>
import jax
import jax.numpy as jnp
from jax.experimental import pallas as pl
from jax.experimental.pallas import tpu as pltpu


# ----------------------------------------------------------------------------
# helpers
# ----------------------------------------------------------------------------
def _round_up(x, m):
    return (x + m - 1) // m * m


def _tile_rows(m, target, align=16, min_tiles=2):
    """Row-tile size Mt and tile count.

    Prefers >= `min_tiles` grid steps (v7x megacore) when m is big enough and
    caps tiles at ~`target` rows.  A single tile uses the exact row count (a
    full-dim block needs no alignment); multi-tile cases use `align`-multiple
    tiles and rely on Pallas boundary masking for the last partial tile.
    """
    n = max(min_tiles, -(-m // target))
    if m < n * align:                       # too small to split usefully
        return m, 1
    mt = _round_up(-(-m // n), align)
    return mt, -(-m // mt)


# ----------------------------------------------------------------------------
# Fused conv(3x3, pad 1) + bias + ReLU + maxpool(2,2) kernel (batch-folded).
# ----------------------------------------------------------------------------
def _conv_relu_pool_kernel(p_ref, w_ref, b_ref, o_ref):
    # p_ref: (4, Mt, 9*Cin) bf16 quadrant-major im2col patches
    # w_ref: (9*Cin, Cout)  bf16
    # b_ref: (1, Cout)      f32
    # o_ref: (Mt, Cout)     bf16
    w = w_ref[...]
    # 2x2 max-pool == elementwise max over the four quadrant matmuls.
    acc = jnp.dot(p_ref[0], w, preferred_element_type=jnp.float32)
    for q in range(1, 4):
        acc = jnp.maximum(
            acc, jnp.dot(p_ref[q], w, preferred_element_type=jnp.float32))
    # bias + ReLU hoisted past the quadrant max (bias shared, ReLU monotone).
    o_ref[...] = jnp.maximum(acc + b_ref[...], 0.0).astype(o_ref.dtype)


def conv_relu_pool(x_nhwc, w_oihw, bias, *, mt_target=1024):
    """Conv2d(k=3, s=1, p=1) -> ReLU -> MaxPool2d(2, 2). NHWC in / NHWC out."""
    B, H, W, Cin = x_nhwc.shape
    Cout = w_oihw.shape[0]
    Hp, Wp = H // 2, W // 2                 # floor, matches nn.MaxPool2d(2, 2)
    M = B * Hp * Wp                         # batch folded into matmul M dim
    K = 9 * Cin

    # ---- quadrant-major im2col, built with strided XLA slices so the 9x
    #      patch tensor is written exactly once (no transposes) ----
    x16 = x_nhwc.astype(jnp.bfloat16)
    xpad = jnp.pad(x16, ((0, 0), (1, 1), (1, 1), (0, 0)))
    quads = []
    for qy in range(2):
        for qx in range(2):
            taps = [xpad[:, qy + dy: qy + dy + 2 * Hp: 2,
                            qx + dx: qx + dx + 2 * Wp: 2, :]
                    for dy in range(3) for dx in range(3)]
            quads.append(jnp.concatenate(taps, axis=-1).reshape(M, K))
    p = jnp.stack(quads, axis=0)            # (4, M, K)

    # PyTorch conv weight (Cout, Cin, 3, 3) -> (9*Cin, Cout),
    # k index = (dy*3 + dx)*Cin + ci  (matches the tap concat order above).
    w_mat = w_oihw.transpose(2, 3, 1, 0).reshape(K, Cout).astype(jnp.bfloat16)
    b_mat = bias.reshape(1, Cout).astype(jnp.float32)

    Mt, n_tiles = _tile_rows(M, mt_target, align=16)

    out = pl.pallas_call(
        _conv_relu_pool_kernel,
        out_shape=jax.ShapeDtypeStruct((M, Cout), jnp.bfloat16),
        grid=(n_tiles,),
        in_specs=[
            pl.BlockSpec((4, Mt, K), lambda i: (0, i, 0)),
            pl.BlockSpec((K, Cout), lambda i: (0, 0)),
            pl.BlockSpec((1, Cout), lambda i: (0, 0)),
        ],
        out_specs=pl.BlockSpec((Mt, Cout), lambda i: (i, 0)),
        compiler_params=pltpu.CompilerParams(
            dimension_semantics=("parallel",),
            vmem_limit_bytes=32 * 1024 * 1024),
    )(p, w_mat, b_mat)

    return out.reshape(B, Hp, Wp, Cout)


# ----------------------------------------------------------------------------
# Fused fc1 + ReLU (+ identity dropout) + fc2 kernel, lane-padded output.
# ----------------------------------------------------------------------------
def _mlp_kernel(x_ref, w1_ref, b1_ref, w2_ref, b2_ref, o_ref):
    h = jnp.dot(x_ref[...], w1_ref[...],
                preferred_element_type=jnp.float32) + b1_ref[...]
    h = jnp.maximum(h, 0.0)
    # TODO(synk): training-mode Dropout(0.5) would need pltpu.prng_* masking;
    # it is the identity at inference (eval mode).
    y = jnp.dot(h.astype(w2_ref.dtype), w2_ref[...],
                preferred_element_type=jnp.float32) + b2_ref[...]
    o_ref[...] = y.astype(o_ref.dtype)


def mlp_head(x_flat, fc1_w, fc1_b, fc2_w, fc2_b, *, bt_target=512):
    # x_flat: (B, Kin) bf16 NHWC-flattened activations; fc1_w already permuted
    # to consume that order.  fc2 output padded to 128 lanes (lane-dense store)
    # and sliced after.
    B, Kin = x_flat.shape
    H1 = fc1_w.shape[0]
    Out = fc2_w.shape[0]
    Out_pad = _round_up(Out, 128)

    Bt, n_tiles = _tile_rows(B, bt_target, align=16)

    x16 = x_flat.astype(jnp.bfloat16)
    w1 = fc1_w.T.astype(jnp.bfloat16)                           # (Kin, H1)
    b1 = fc1_b.reshape(1, H1).astype(jnp.float32)
    w2 = jnp.zeros((H1, Out_pad), jnp.bfloat16)
    w2 = w2.at[:, :Out].set(fc2_w.T.astype(jnp.bfloat16))
    b2 = jnp.zeros((1, Out_pad), jnp.float32).at[:, :Out].set(fc2_b)

    out = pl.pallas_call(
        _mlp_kernel,
        out_shape=jax.ShapeDtypeStruct((B, Out_pad), jnp.float32),
        grid=(n_tiles,),
        in_specs=[
            pl.BlockSpec((Bt, Kin), lambda i: (i, 0)),
            pl.BlockSpec((Kin, H1), lambda i: (0, 0)),
            pl.BlockSpec((1, H1), lambda i: (0, 0)),
            pl.BlockSpec((H1, Out_pad), lambda i: (0, 0)),
            pl.BlockSpec((1, Out_pad), lambda i: (0, 0)),
        ],
        out_specs=pl.BlockSpec((Bt, Out_pad), lambda i: (i, 0)),
        compiler_params=pltpu.CompilerParams(
            dimension_semantics=("parallel",),
            vmem_limit_bytes=32 * 1024 * 1024),
    )(x16, w1, b1, w2, b2)
    return out[:, :Out]


# ----------------------------------------------------------------------------
# Full forward pass (mirrors CNNModel.forward, eval mode).
# ----------------------------------------------------------------------------
def cnn_forward(x_nchw, p):
    x = jnp.transpose(x_nchw, (0, 2, 3, 1))                # NCHW -> NHWC
    x = conv_relu_pool(x, p["w1"], p["b1"])                # (B, 14, 14, 32) bf16
    x = conv_relu_pool(x, p["w2"], p["b2"])                # (B, 7, 7, 64)   bf16
    x = conv_relu_pool(x, p["w3"], p["b3"])                # (B, 3, 3, 128)  bf16
    B = x.shape[0]
    x_flat = x.reshape(B, -1)                              # NHWC flatten (h,w,c)
    # Bake PyTorch's NCHW .view() flatten order (c,h,w) into fc1's weights so
    # no activation transpose is needed between conv3 and fc1.
    C = p["w3"].shape[0]
    H1 = p["fc1_w"].shape[0]
    fc1_w_hwc = p["fc1_w"].reshape(H1, C, 3, 3).transpose(0, 2, 3, 1)
    fc1_w_hwc = fc1_w_hwc.reshape(H1, -1)
    return mlp_head(x_flat, fc1_w_hwc, p["fc1_b"], p["fc2_w"], p["fc2_b"])


# ----------------------------------------------------------------------------
# Deterministic parameter init (same shapes as the PyTorch module).
# ----------------------------------------------------------------------------
def init_params(key):
    ks = jax.random.split(key, 10)

    def he(k, shape, fan_in):
        return jax.random.normal(k, shape, jnp.float32) * jnp.sqrt(2.0 / fan_in)

    def small(k, shape):
        return jax.random.normal(k, shape, jnp.float32) * 0.05

    return {
        "w1": he(ks[0], (32, 1, 3, 3), 1 * 9),     "b1": small(ks[1], (32,)),
        "w2": he(ks[2], (64, 32, 3, 3), 32 * 9),   "b2": small(ks[3], (64,)),
        "w3": he(ks[4], (128, 64, 3, 3), 64 * 9),  "b3": small(ks[5], (128,)),
        "fc1_w": he(ks[6], (512, 1152), 1152),     "fc1_b": small(ks[7], (512,)),
        "fc2_w": he(ks[8], (10, 512), 512),        "fc2_b": small(ks[9], (10,)),
    }


# ----------------------------------------------------------------------------
# Pure-JAX reference (PyTorch semantics, f32) for a numerical sanity check.
# ----------------------------------------------------------------------------
def reference_forward(x_nchw, p):
    def conv(x, w, b):
        y = jax.lax.conv_general_dilated(
            x, w, window_strides=(1, 1), padding=((1, 1), (1, 1)),
            dimension_numbers=("NCHW", "OIHW", "NCHW"),
            precision=jax.lax.Precision.HIGHEST)
        return y + b.reshape(1, -1, 1, 1)

    def pool(x):
        return jax.lax.reduce_window(x, -jnp.inf, jax.lax.max,
                                     (1, 1, 2, 2), (1, 1, 2, 2), "VALID")

    x = pool(jax.nn.relu(conv(x_nchw, p["w1"], p["b1"])))
    x = pool(jax.nn.relu(conv(x, p["w2"], p["b2"])))
    x = pool(jax.nn.relu(conv(x, p["w3"], p["b3"])))
    x = x.reshape(x.shape[0], -1)
    x = jax.nn.relu(jnp.dot(x, p["fc1_w"].T,
                            precision=jax.lax.Precision.HIGHEST) + p["fc1_b"])
    x = jnp.dot(x, p["fc2_w"].T,
                precision=jax.lax.Precision.HIGHEST) + p["fc2_b"]
    return x


if __name__ == "__main__":
    key = jax.random.PRNGKey(0)
    pkey, xkey = jax.random.split(key)
    params = init_params(pkey)

    # MNIST-style input implied by fc1 = 128 * 3 * 3  -> (B, 1, 28, 28)
    x = jax.random.normal(xkey, (2, 1, 28, 28), jnp.float32)

    out = jax.jit(cnn_forward)(x, params)
    out = jax.block_until_ready(out)

    assert out.shape == (2, 10), out.shape
    assert bool(jnp.all(jnp.isfinite(out)))

    ref = reference_forward(x, params)
    # bf16 MXU operands + bf16 inter-block activations vs f32 reference.
    err = float(jnp.max(jnp.abs(out - ref)))
    tol = 0.05 * float(jnp.max(jnp.abs(ref))) + 0.2
    assert err <= tol, f"mismatch vs reference: max abs err {err} > tol {tol}"

    print("KERNEL_OK")
</pallas_src>

<mosaic_0001>
module attributes {stable_mosaic.version = 11 : i64} {
  func.func @_conv_relu_pool_kernel(%arg0: i32, %arg1: memref<4x208x9xbf16, #tpu.memory_space<vmem>>, %arg2: memref<9x32xbf16, #tpu.memory_space<vmem>>, %arg3: memref<1x32xf32, #tpu.memory_space<vmem>>, %arg4: memref<208x32xbf16, #tpu.memory_space<vmem>>) attributes {dimension_semantics = [#tpu.dimension_semantics<parallel>], iteration_bounds = array<i64: 2>, scalar_prefetch = 0 : i64, scratch_operands = 0 : i64, tpu.core_type = #tpu.core_type<tc>, window_params = [{transform_indices = @transform_0, window_bounds = array<i64: 4, 208, 9>}, {pipeline_mode = #tpu.pipeline_mode<synchronous>, transform_indices = @transform_1, window_bounds = array<i64: 9, 32>}, {pipeline_mode = #tpu.pipeline_mode<synchronous>, transform_indices = @transform_2, window_bounds = array<i64: 1, 32>}, {transform_indices = @transform_3, window_bounds = array<i64: 208, 32>}]} {
    %c0 = arith.constant 0 : index
    %c0_0 = arith.constant 0 : index
    %0 = vector.load %arg2[%c0, %c0_0] : memref<9x32xbf16, #tpu.memory_space<vmem>>, vector<9x32xbf16>
    %c0_1 = arith.constant 0 : index
    %c0_2 = arith.constant 0 : index
    %c0_3 = arith.constant 0 : index
    %1 = vector.load %arg1[%c0_1, %c0_2, %c0_3] : memref<4x208x9xbf16, #tpu.memory_space<vmem>>, vector<1x208x9xbf16>
    %2 = vector.shape_cast %1 : vector<1x208x9xbf16> to vector<208x9xbf16>
    %cst = arith.constant dense<0.000000e+00> : vector<208x32xf32>
    %3 = tpu.matmul %2, %0, %cst {dimension_numbers = #tpu.dot_dimension_numbers<[1], [0], [0], [1], [0, 0, 1, 1], [], []>} : vector<208x9xbf16>, vector<9x32xbf16>, vector<208x32xf32> -> vector<208x32xf32>
    %c1 = arith.constant 1 : index
    %c0_4 = arith.constant 0 : index
    %c0_5 = arith.constant 0 : index
    %4 = vector.load %arg1[%c1, %c0_4, %c0_5] : memref<4x208x9xbf16, #tpu.memory_space<vmem>>, vector<1x208x9xbf16>
    %5 = vector.shape_cast %4 : vector<1x208x9xbf16> to vector<208x9xbf16>
    %cst_6 = arith.constant dense<0.000000e+00> : vector<208x32xf32>
    %6 = tpu.matmul %5, %0, %cst_6 {dimension_numbers = #tpu.dot_dimension_numbers<[1], [0], [0], [1], [0, 0, 1, 1], [], []>} : vector<208x9xbf16>, vector<9x32xbf16>, vector<208x32xf32> -> vector<208x32xf32>
    %7 = arith.maximumf %3, %6 : vector<208x32xf32>
    %c2 = arith.constant 2 : index
    %c0_7 = arith.constant 0 : index
    %c0_8 = arith.constant 0 : index
    %8 = vector.load %arg1[%c2, %c0_7, %c0_8] : memref<4x208x9xbf16, #tpu.memory_space<vmem>>, vector<1x208x9xbf16>
    %9 = vector.shape_cast %8 : vector<1x208x9xbf16> to vector<208x9xbf16>
    %cst_9 = arith.constant dense<0.000000e+00> : vector<208x32xf32>
    %10 = tpu.matmul %9, %0, %cst_9 {dimension_numbers = #tpu.dot_dimension_numbers<[1], [0], [0], [1], [0, 0, 1, 1], [], []>} : vector<208x9xbf16>, vector<9x32xbf16>, vector<208x32xf32> -> vector<208x32xf32>
    %11 = arith.maximumf %7, %10 : vector<208x32xf32>
    %c3 = arith.constant 3 : index
    %c0_10 = arith.constant 0 : index
    %c0_11 = arith.constant 0 : index
    %12 = vector.load %arg1[%c3, %c0_10, %c0_11] : memref<4x208x9xbf16, #tpu.memory_space<vmem>>, vector<1x208x9xbf16>
    %13 = vector.shape_cast %12 : vector<1x208x9xbf16> to vector<208x9xbf16>
    %cst_12 = arith.constant dense<0.000000e+00> : vector<208x32xf32>
    %14 = tpu.matmul %13, %0, %cst_12 {dimension_numbers = #tpu.dot_dimension_numbers<[1], [0], [0], [1], [0, 0, 1, 1], [], []>} : vector<208x9xbf16>, vector<9x32xbf16>, vector<208x32xf32> -> vector<208x32xf32>
    %15 = arith.maximumf %11, %14 : vector<208x32xf32>
    %c0_13 = arith.constant 0 : index
    %c0_14 = arith.constant 0 : index
    %16 = vector.load %arg3[%c0_13, %c0_14] : memref<1x32xf32, #tpu.memory_space<vmem>>, vector<1x32xf32>
    %17 = vector.broadcast %16 : vector<1x32xf32> to vector<208x32xf32>
    %18 = arith.addf %15, %17 : vector<208x32xf32>
    %cst_15 = arith.constant 0.000000e+00 : f32
    %19 = vector.broadcast %cst_15 : f32 to vector<208x32xf32>
    %20 = arith.maximumf %18, %19 : vector<208x32xf32>
    %21 = arith.truncf %20 : vector<208x32xf32> to vector<208x32xbf16>
    %c0_16 = arith.constant 0 : index
    %c0_17 = arith.constant 0 : index
    %22 = vector.load %arg4[%c0_16, %c0_17] : memref<208x32xbf16, #tpu.memory_space<vmem>>, vector<208x32xbf16>
    tpu.vector_store %arg4[%c0_16, %c0_17], %21 {strides = array<i32>} : memref<208x32xbf16, #tpu.memory_space<vmem>>, vector<208x32xbf16>,
    return
  }
  func.func @transform_0(%arg0: i32) -> (i32, i32, i32) {
    %c0_i32 = arith.constant 0 : i32
    %c0_i32_0 = arith.constant 0 : i32
    %c0_i32_1 = arith.constant 0 : i32
    return %c0_i32, %arg0, %c0_i32_0 : i32, i32, i32
  }
  func.func @transform_1(%arg0: i32) -> (i32, i32) {
    %c0_i32 = arith.constant 0 : i32
    %c0_i32_0 = arith.constant 0 : i32
    %c0_i32_1 = arith.constant 0 : i32
    return %c0_i32, %c0_i32_0 : i32, i32
  }
  func.func @transform_2(%arg0: i32) -> (i32, i32) {
    %c0_i32 = arith.constant 0 : i32
    %c0_i32_0 = arith.constant 0 : i32
    %c0_i32_1 = arith.constant 0 : i32
    return %c0_i32, %c0_i32_0 : i32, i32
  }
  func.func @transform_3(%arg0: i32) -> (i32, i32) {
    %c0_i32 = arith.constant 0 : i32
    %c0_i32_0 = arith.constant 0 : i32
    return %arg0, %c0_i32 : i32, i32
  }
}

module attributes {stable_mosaic.version = 11 : i64} {
  func.func @_conv_relu_pool_kernel(%arg0: i32, %arg1: memref<4x64x288xbf16, #tpu.memory_space<vmem>>, %arg2: memref<288x64xbf16, #tpu.memory_space<vmem>>, %arg3: memref<1x64xf32, #tpu.memory_space<vmem>>, %arg4: memref<64x64xbf16, #tpu.memory_space<vmem>>) attributes {dimension_semantics = [#tpu.dimension_semantics<parallel>], iteration_bounds = array<i64: 2>, scalar_prefetch = 0 : i64, scratch_operands = 0 : i64, tpu.core_type = #tpu.core_type<tc>, window_params = [{transform_indices = @transform_0, window_bounds = array<i64: 4, 64, 288>}, {pipeline_mode = #tpu.pipeline_mode<synchronous>, transform_indices = @transform_1, window_bounds = array<i64: 288, 64>}, {pipeline_mode = #tpu.pipeline_mode<synchronous>, transform_indices = @transform_2, window_bounds = array<i64: 1, 64>}, {transform_indices = @transform_3, window_bounds = array<i64: 64, 64>}]} {
    %c0 = arith.constant 0 : index
    %c0_0 = arith.constant 0 : index
    %0 = vector.load %arg2[%c0, %c0_0] : memref<288x64xbf16, #tpu.memory_space<vmem>>, vector<288x64xbf16>
    %c0_1 = arith.constant 0 : index
    %c0_2 = arith.constant 0 : index
    %c0_3 = arith.constant 0 : index
    %1 = vector.load %arg1[%c0_1, %c0_2, %c0_3] : memref<4x64x288xbf16, #tpu.memory_space<vmem>>, vector<1x64x288xbf16>
    %2 = vector.shape_cast %1 : vector<1x64x288xbf16> to vector<64x288xbf16>
    %cst = arith.constant dense<0.000000e+00> : vector<64x64xf32>
    %3 = tpu.matmul %2, %0, %cst {dimension_numbers = #tpu.dot_dimension_numbers<[1], [0], [0], [1], [0, 0, 1, 1], [], []>} : vector<64x288xbf16>, vector<288x64xbf16>, vector<64x64xf32> -> vector<64x64xf32>
    %c1 = arith.constant 1 : index
    %c0_4 = arith.constant 0 : index
    %c0_5 = arith.constant 0 : index
    %4 = vector.load %arg1[%c1, %c0_4, %c0_5] : memref<4x64x288xbf16, #tpu.memory_space<vmem>>, vector<1x64x288xbf16>
    %5 = vector.shape_cast %4 : vector<1x64x288xbf16> to vector<64x288xbf16>
    %cst_6 = arith.constant dense<0.000000e+00> : vector<64x64xf32>
    %6 = tpu.matmul %5, %0, %cst_6 {dimension_numbers = #tpu.dot_dimension_numbers<[1], [0], [0], [1], [0, 0, 1, 1], [], []>} : vector<64x288xbf16>, vector<288x64xbf16>, vector<64x64xf32> -> vector<64x64xf32>
    %7 = arith.maximumf %3, %6 : vector<64x64xf32>
    %c2 = arith.constant 2 : index
    %c0_7 = arith.constant 0 : index
    %c0_8 = arith.constant 0 : index
    %8 = vector.load %arg1[%c2, %c0_7, %c0_8] : memref<4x64x288xbf16, #tpu.memory_space<vmem>>, vector<1x64x288xbf16>
    %9 = vector.shape_cast %8 : vector<1x64x288xbf16> to vector<64x288xbf16>
    %cst_9 = arith.constant dense<0.000000e+00> : vector<64x64xf32>
    %10 = tpu.matmul %9, %0, %cst_9 {dimension_numbers = #tpu.dot_dimension_numbers<[1], [0], [0], [1], [0, 0, 1, 1], [], []>} : vector<64x288xbf16>, vector<288x64xbf16>, vector<64x64xf32> -> vector<64x64xf32>
    %11 = arith.maximumf %7, %10 : vector<64x64xf32>
    %c3 = arith.constant 3 : index
    %c0_10 = arith.constant 0 : index
    %c0_11 = arith.constant 0 : index
    %12 = vector.load %arg1[%c3, %c0_10, %c0_11] : memref<4x64x288xbf16, #tpu.memory_space<vmem>>, vector<1x64x288xbf16>
    %13 = vector.shape_cast %12 : vector<1x64x288xbf16> to vector<64x288xbf16>
    %cst_12 = arith.constant dense<0.000000e+00> : vector<64x64xf32>
    %14 = tpu.matmul %13, %0, %cst_12 {dimension_numbers = #tpu.dot_dimension_numbers<[1], [0], [0], [1], [0, 0, 1, 1], [], []>} : vector<64x288xbf16>, vector<288x64xbf16>, vector<64x64xf32> -> vector<64x64xf32>
    %15 = arith.maximumf %11, %14 : vector<64x64xf32>
    %c0_13 = arith.constant 0 : index
    %c0_14 = arith.constant 0 : index
    %16 = vector.load %arg3[%c0_13, %c0_14] : memref<1x64xf32, #tpu.memory_space<vmem>>, vector<1x64xf32>
    %17 = vector.broadcast %16 : vector<1x64xf32> to vector<64x64xf32>
    %18 = arith.addf %15, %17 : vector<64x64xf32>
    %cst_15 = arith.constant 0.000000e+00 : f32
    %19 = vector.broadcast %cst_15 : f32 to vector<64x64xf32>
    %20 = arith.maximumf %18, %19 : vector<64x64xf32>
    %21 = arith.truncf %20 : vector<64x64xf32> to vector<64x64xbf16>
    %c0_16 = arith.constant 0 : index
    %c0_17 = arith.constant 0 : index
    %22 = vector.load %arg4[%c0_16, %c0_17] : memref<64x64xbf16, #tpu.memory_space<vmem>>, vector<64x64xbf16>
    tpu.vector_store %arg4[%c0_16, %c0_17], %21 {strides = array<i32>} : memref<64x64xbf16, #tpu.memory_space<vmem>>, vector<64x64xbf16>,
    return
  }
  func.func @transform_0(%arg0: i32) -> (i32, i32, i32) {
    %c0_i32 = arith.constant 0 : i32
    %c0_i32_0 = arith.constant 0 : i32
    %c0_i32_1 = arith.constant 0 : i32
    return %c0_i32, %arg0, %c0_i32_0 : i32, i32, i32
  }
  func.func @transform_1(%arg0: i32) -> (i32, i32) {
    %c0_i32 = arith.constant 0 : i32
    %c0_i32_0 = arith.constant 0 : i32
    %c0_i32_1 = arith.constant 0 : i32
    return %c0_i32, %c0_i32_0 : i32, i32
  }
  func.func @transform_2(%arg0: i32) -> (i32, i32) {
    %c0_i32 = arith.constant 0 : i32
    %c0_i32_0 = arith.constant 0 : i32
    %c0_i32_1 = arith.constant 0 : i32
    return %c0_i32, %c0_i32_0 : i32, i32
  }
  func.func @transform_3(%arg0: i32) -> (i32, i32) {
    %c0_i32 = arith.constant 0 : i32
    %c0_i32_0 = arith.constant 0 : i32
    return %arg0, %c0_i32 : i32, i32
  }
}

module attributes {stable_mosaic.version = 11 : i64} {
  func.func @_conv_relu_pool_kernel(%arg0: i32, %arg1: memref<4x18x576xbf16, #tpu.memory_space<vmem>>, %arg2: memref<576x128xbf16, #tpu.memory_space<vmem>>, %arg3: memref<1x128xf32, #tpu.memory_space<vmem>>, %arg4: memref<18x128xbf16, #tpu.memory_space<vmem>>) attributes {dimension_semantics = [#tpu.dimension_semantics<parallel>], iteration_bounds = array<i64: 1>, scalar_prefetch = 0 : i64, scratch_operands = 0 : i64, tpu.core_type = #tpu.core_type<tc>, window_params = [{transform_indices = @transform_0, window_bounds = array<i64: 4, 18, 576>}, {pipeline_mode = #tpu.pipeline_mode<synchronous>, transform_indices = @transform_1, window_bounds = array<i64: 576, 128>}, {pipeline_mode = #tpu.pipeline_mode<synchronous>, transform_indices = @transform_2, window_bounds = array<i64: 1, 128>}, {transform_indices = @transform_3, window_bounds = array<i64: 18, 128>}]} {
    %c0 = arith.constant 0 : index
    %c0_0 = arith.constant 0 : index
    %0 = vector.load %arg2[%c0, %c0_0] : memref<576x128xbf16, #tpu.memory_space<vmem>>, vector<576x128xbf16>
    %c0_1 = arith.constant 0 : index
    %c0_2 = arith.constant 0 : index
    %c0_3 = arith.constant 0 : index
    %1 = vector.load %arg1[%c0_1, %c0_2, %c0_3] : memref<4x18x576xbf16, #tpu.memory_space<vmem>>, vector<1x18x576xbf16>
    %2 = vector.shape_cast %1 : vector<1x18x576xbf16> to vector<18x576xbf16>
    %cst = arith.constant dense<0.000000e+00> : vector<18x128xf32>
    %3 = tpu.matmul %2, %0, %cst {dimension_numbers = #tpu.dot_dimension_numbers<[1], [0], [0], [1], [0, 0, 1, 1], [], []>} : vector<18x576xbf16>, vector<576x128xbf16>, vector<18x128xf32> -> vector<18x128xf32>
    %c1 = arith.constant 1 : index
    %c0_4 = arith.constant 0 : index
    %c0_5 = arith.constant 0 : index
    %4 = vector.load %arg1[%c1, %c0_4, %c0_5] : memref<4x18x576xbf16, #tpu.memory_space<vmem>>, vector<1x18x576xbf16>
    %5 = vector.shape_cast %4 : vector<1x18x576xbf16> to vector<18x576xbf16>
    %cst_6 = arith.constant dense<0.000000e+00> : vector<18x128xf32>
    %6 = tpu.matmul %5, %0, %cst_6 {dimension_numbers = #tpu.dot_dimension_numbers<[1], [0], [0], [1], [0, 0, 1, 1], [], []>} : vector<18x576xbf16>, vector<576x128xbf16>, vector<18x128xf32> -> vector<18x128xf32>
    %7 = arith.maximumf %3, %6 : vector<18x128xf32>
    %c2 = arith.constant 2 : index
    %c0_7 = arith.constant 0 : index
    %c0_8 = arith.constant 0 : index
    %8 = vector.load %arg1[%c2, %c0_7, %c0_8] : memref<4x18x576xbf16, #tpu.memory_space<vmem>>, vector<1x18x576xbf16>
    %9 = vector.shape_cast %8 : vector<1x18x576xbf16> to vector<18x576xbf16>
    %cst_9 = arith.constant dense<0.000000e+00> : vector<18x128xf32>
    %10 = tpu.matmul %9, %0, %cst_9 {dimension_numbers = #tpu.dot_dimension_numbers<[1], [0], [0], [1], [0, 0, 1, 1], [], []>} : vector<18x576xbf16>, vector<576x128xbf16>, vector<18x128xf32> -> vector<18x128xf32>
    %11 = arith.maximumf %7, %10 : vector<18x128xf32>
    %c3 = arith.constant 3 : index
    %c0_10 = arith.constant 0 : index
    %c0_11 = arith.constant 0 : index
    %12 = vector.load %arg1[%c3, %c0_10, %c0_11] : memref<4x18x576xbf16, #tpu.memory_space<vmem>>, vector<1x18x576xbf16>
    %13 = vector.shape_cast %12 : vector<1x18x576xbf16> to vector<18x576xbf16>
    %cst_12 = arith.constant dense<0.000000e+00> : vector<18x128xf32>
    %14 = tpu.matmul %13, %0, %cst_12 {dimension_numbers = #tpu.dot_dimension_numbers<[1], [0], [0], [1], [0, 0, 1, 1], [], []>} : vector<18x576xbf16>, vector<576x128xbf16>, vector<18x128xf32> -> vector<18x128xf32>
    %15 = arith.maximumf %11, %14 : vector<18x128xf32>
    %c0_13 = arith.constant 0 : index
    %c0_14 = arith.constant 0 : index
    %16 = vector.load %arg3[%c0_13, %c0_14] : memref<1x128xf32, #tpu.memory_space<vmem>>, vector<1x128xf32>
    %17 = vector.broadcast %16 : vector<1x128xf32> to vector<18x128xf32>
    %18 = arith.addf %15, %17 : vector<18x128xf32>
    %cst_15 = arith.constant 0.000000e+00 : f32
    %19 = vector.broadcast %cst_15 : f32 to vector<18x128xf32>
    %20 = arith.maximumf %18, %19 : vector<18x128xf32>
    %21 = arith.truncf %20 : vector<18x128xf32> to vector<18x128xbf16>
    %c0_16 = arith.constant 0 : index
    %c0_17 = arith.constant 0 : index
    %22 = vector.load %arg4[%c0_16, %c0_17] : memref<18x128xbf16, #tpu.memory_space<vmem>>, vector<18x128xbf16>
    tpu.vector_store %arg4[%c0_16, %c0_17], %21 {strides = array<i32>} : memref<18x128xbf16, #tpu.memory_space<vmem>>, vector<18x128xbf16>,
    return
  }
  func.func @transform_0(%arg0: i32) -> (i32, i32, i32) {
    %c0_i32 = arith.constant 0 : i32
    %c0_i32_0 = arith.constant 0 : i32
    %c0_i32_1 = arith.constant 0 : i32
    return %c0_i32, %arg0, %c0_i32_0 : i32, i32, i32
  }
  func.func @transform_1(%arg0: i32) -> (i32, i32) {
    %c0_i32 = arith.constant 0 : i32
    %c0_i32_0 = arith.constant 0 : i32
    %c0_i32_1 = arith.constant 0 : i32
    return %c0_i32, %c0_i32_0 : i32, i32
  }
  func.func @transform_2(%arg0: i32) -> (i32, i32) {
    %c0_i32 = arith.constant 0 : i32
    %c0_i32_0 = arith.constant 0 : i32
    %c0_i32_1 = arith.constant 0 : i32
    return %c0_i32, %c0_i32_0 : i32, i32
  }
  func.func @transform_3(%arg0: i32) -> (i32, i32) {
    %c0_i32 = arith.constant 0 : i32
    %c0_i32_0 = arith.constant 0 : i32
    return %arg0, %c0_i32 : i32, i32
  }
}

module attributes {stable_mosaic.version = 11 : i64} {
  func.func @_mlp_kernel(%arg0: i32, %arg1: memref<2x1152xbf16, #tpu.memory_space<vmem>>, %arg2: memref<1152x512xbf16, #tpu.memory_space<vmem>>, %arg3: memref<1x512xf32, #tpu.memory_space<vmem>>, %arg4: memref<512x128xbf16, #tpu.memory_space<vmem>>, %arg5: memref<1x128xf32, #tpu.memory_space<vmem>>, %arg6: memref<2x128xf32, #tpu.memory_space<vmem>>) attributes {dimension_semantics = [#tpu.dimension_semantics<parallel>], iteration_bounds = array<i64: 1>, scalar_prefetch = 0 : i64, scratch_operands = 0 : i64, tpu.core_type = #tpu.core_type<tc>, window_params = [{transform_indices = @transform_0, window_bounds = array<i64: 2, 1152>}, {pipeline_mode = #tpu.pipeline_mode<synchronous>, transform_indices = @transform_1, window_bounds = array<i64: 1152, 512>}, {pipeline_mode = #tpu.pipeline_mode<synchronous>, transform_indices = @transform_2, window_bounds = array<i64: 1, 512>}, {pipeline_mode = #tpu.pipeline_mode<synchronous>, transform_indices = @transform_3, window_bounds = array<i64: 512, 128>}, {pipeline_mode = #tpu.pipeline_mode<synchronous>, transform_indices = @transform_4, window_bounds = array<i64: 1, 128>}, {transform_indices = @transform_5, window_bounds = array<i64: 2, 128>}]} {
    %c0 = arith.constant 0 : index
    %c0_0 = arith.constant 0 : index
    %0 = vector.load %arg1[%c0, %c0_0] : memref<2x1152xbf16, #tpu.memory_space<vmem>>, vector<2x1152xbf16>
    %c0_1 = arith.constant 0 : index
    %c0_2 = arith.constant 0 : index
    %1 = vector.load %arg2[%c0_1, %c0_2] : memref<1152x512xbf16, #tpu.memory_space<vmem>>, vector<1152x512xbf16>
    %cst = arith.constant dense<0.000000e+00> : vector<2x512xf32>
    %2 = tpu.matmul %0, %1, %cst {dimension_numbers = #tpu.dot_dimension_numbers<[1], [0], [0], [1], [0, 0, 1, 1], [], []>} : vector<2x1152xbf16>, vector<1152x512xbf16>, vector<2x512xf32> -> vector<2x512xf32>
    %c0_3 = arith.constant 0 : index
    %c0_4 = arith.constant 0 : index
    %3 = vector.load %arg3[%c0_3, %c0_4] : memref<1x512xf32, #tpu.memory_space<vmem>>, vector<1x512xf32>
    %4 = vector.broadcast %3 : vector<1x512xf32> to vector<2x512xf32>
    %5 = arith.addf %2, %4 : vector<2x512xf32>
    %cst_5 = arith.constant 0.000000e+00 : f32
    %6 = vector.broadcast %cst_5 : f32 to vector<2x512xf32>
    %7 = arith.maximumf %5, %6 : vector<2x512xf32>
    %8 = arith.truncf %7 : vector<2x512xf32> to vector<2x512xbf16>
    %c0_6 = arith.constant 0 : index
    %c0_7 = arith.constant 0 : index
    %9 = vector.load %arg4[%c0_6, %c0_7] : memref<512x128xbf16, #tpu.memory_space<vmem>>, vector<512x128xbf16>
    %cst_8 = arith.constant dense<0.000000e+00> : vector<2x128xf32>
    %10 = tpu.matmul %8, %9, %cst_8 {dimension_numbers = #tpu.dot_dimension_numbers<[1], [0], [0], [1], [0, 0, 1, 1], [], []>} : vector<2x512xbf16>, vector<512x128xbf16>, vector<2x128xf32> -> vector<2x128xf32>
    %c0_9 = arith.constant 0 : index
    %c0_10 = arith.constant 0 : index
    %11 = vector.load %arg5[%c0_9, %c0_10] : memref<1x128xf32, #tpu.memory_space<vmem>>, vector<1x128xf32>
    %12 = vector.broadcast %11 : vector<1x128xf32> to vector<2x128xf32>
    %13 = arith.addf %10, %12 : vector<2x128xf32>
    %c0_11 = arith.constant 0 : index
    %c0_12 = arith.constant 0 : index
    %14 = vector.load %arg6[%c0_11, %c0_12] : memref<2x128xf32, #tpu.memory_space<vmem>>, vector<2x128xf32>
    tpu.vector_store %arg6[%c0_11, %c0_12], %13 {strides = array<i32>} : memref<2x128xf32, #tpu.memory_space<vmem>>, vector<2x128xf32>,
    return
  }
  func.func @transform_0(%arg0: i32) -> (i32, i32) {
    %c0_i32 = arith.constant 0 : i32
    %c0_i32_0 = arith.constant 0 : i32
    return %arg0, %c0_i32 : i32, i32
  }
  func.func @transform_1(%arg0: i32) -> (i32, i32) {
    %c0_i32 = arith.constant 0 : i32
    %c0_i32_0 = arith.constant 0 : i32
    %c0_i32_1 = arith.constant 0 : i32
    return %c0_i32, %c0_i32_0 : i32, i32
  }
  func.func @transform_2(%arg0: i32) -> (i32, i32) {
    %c0_i32 = arith.constant 0 : i32
    %c0_i32_0 = arith.constant 0 : i32
    %c0_i32_1 = arith.constant 0 : i32
    return %c0_i32, %c0_i32_0 : i32, i32
  }
  func.func @transform_3(%arg0: i32) -> (i32, i32) {
    %c0_i32 = arith.constant 0 : i32
    %c0_i32_0 = arith.constant 0 : i32
    %c0_i32_1 = arith.constant 0 : i32
    return %c0_i32, %c0_i32_0 : i32, i32
  }
  func.func @transform_4(%arg0: i32) -> (i32, i32) {
    %c0_i32 = arith.constant 0 : i32
    %c0_i32_0 = arith.constant 0 : i32
    %c0_i32_1 = arith.constant 0 : i32
    return %c0_i32, %c0_i32_0 : i32, i32
  }
  func.func @transform_5(%arg0: i32) -> (i32, i32) {
    %c0_i32 = arith.constant 0 : i32
    %c0_i32_0 = arith.constant 0 : i32
    return %arg0, %c0_i32 : i32, i32
  }
}

</mosaic_0001>

<llo_original>
// kernel: cnn_forward.4
$region0: #{cnn_forward.4}
  #allocation0 [shape = 'u32[]', space=smem, size = 0x4, offset = 0x4, fixed_abs, tag = 'smem constant byte address 0x4 - core index']
  #allocation1 [shape = 'u32[144,128]{1,0:T(1,128)}', space=vmem, size = 0x12000, scoped, tag = 'internal scratch']
  %s0 = inlined_call_operand.vmem [shape: bf16[4,392,9], index: 0, kind: input, shape index: {}]
  %s1 = inlined_call_operand.vmem [shape: bf16[9,32], index: 1, kind: input, shape index: {}]
  %s2 = inlined_call_operand.vmem [shape: f32[1,32], index: 2, kind: input, shape index: {}]
  %s3 = inlined_call_operand.vmem [shape: bf16[392,32], index: 3, kind: output, shape index: {}]
  %s4 = sld [smem:[#allocation0]]
  $region151: #{cnn_forward.4} parent=0
    _
  %s6 = ssub.s32 1, %s4
  %s7 = scalar_select 0, %s6, %s4
  $region1: #{cnn_forward.4} parent=0
    #allocation2 [shape = 'u8[425984]{0}', space=vmem, size = 0x68000, scoped, tag = 'input window, operand 0']
    #allocation3 [shape = 'u8[106496]{0}', space=vmem, size = 0x1a000, scoped, tag = 'output window, operand 0']
    loop: start=0, step=1, limit=4
    $region2: #{cnn_forward.4} parent=1 // loop_pre_header
      _
    $region3: #{cnn_forward.4} parent=1 // loop_header
      %s9 = sphi 0, %s13
      %p10 = scmp.ge.s32.totalorder %s9, 4
      %s19 = sphi 0, %s21
      %s22 = sphi 0, %s19
      %s23 = sphi 0, %s22
      %s39 = sphi 0, %s23
      %s43 = sphi 0, %s43
      %s45 = sphi 0, %s43
      %s46 = sphi 0, %s45
      %s60 = sphi 0, %s46
      %s64 = sphi 0, %s64
      %s66 = sphi 0, %s64
      %s67 = sphi 0, %s66
      %s81 = sphi 0, %s67
      %s87 = sphi 0, %s89
      %s90 = sphi 0, %s87
      %s91 = sphi 0, %s90
      %s107 = sphi 0, %s91
    $region4: #{cnn_forward.4} parent=1 // loop_header_branch
      %12 = sbr.rel (%p10) target = $region8
    $region5: #{cnn_forward.4} parent=1 // loop_body
      %s14 = ssub.s32 %s9, 1
      %s15 = ssub.s32 %s9, 2
      %s16 = sadd.s32 %s9, 1
      %s17 = ssub.s32 %s9, %s16
      %p18 = scmp.eq.s32.totalorder %s17, 0
      %s20 = sadd.s32 %s19, 1
      %s21 = scalar_select %p18, %s19, %s20
      %p24 = pneg %p18
      %p25 = scmp.eq.s32.totalorder %s9, 1
      %p26 = por %p24, %p25
      %p27 = scmp.ne.s32.totalorder %s19, %s22
      %p28 = scmp.eq.s32.totalorder %s9, 0
      %p29 = por %p27, %p28
      %p30 = scmp.ne.s32.totalorder %s19, %s22
      %p31 = scmp.eq.s32.totalorder %s14, 1
      %p32 = por %p30, %p31
      %p33 = scmp.ne.s32.totalorder %s22, %s23
      %p34 = scmp.eq.s32.totalorder %s14, 0
      %p35 = por %p33, %p34
      %p36 = scmp.ne.s32.totalorder %s22, %s23
      %p37 = scmp.eq.s32.totalorder %s15, 1
      %p38 = por %p36, %p37
      %p40 = scmp.ne.s32.totalorder %s23, %s39
      %p41 = scmp.eq.s32.totalorder %s15, 0
      %p42 = por %p40, %p41
      %s44 = sadd.s32 %s43, 1
      %p47 = scmp.eq.s32.totalorder %s9, 1
      %p48 = scmp.ne.s32.totalorder %s43, %s45
      %p49 = scmp.eq.s32.totalorder %s9, 0
      %p50 = por %p48, %p49
      %p51 = scmp.ne.s32.totalorder %s43, %s45
      %p52 = scmp.eq.s32.totalorder %s14, 1
      %p53 = por %p51, %p52
      %p54 = scmp.ne.s32.totalorder %s45, %s46
      %p55 = scmp.eq.s32.totalorder %s14, 0
      %p56 = por %p54, %p55
      %p57 = scmp.ne.s32.totalorder %s45, %s46
      %p58 = scmp.eq.s32.totalorder %s15, 1
      %p59 = por %p57, %p58
      %p61 = scmp.ne.s32.totalorder %s46, %s60
      %p62 = scmp.eq.s32.totalorder %s15, 0
      %p63 = por %p61, %p62
      %s65 = sadd.s32 %s64, 1
      %p68 = scmp.eq.s32.totalorder %s9, 1
      %p69 = scmp.ne.s32.totalorder %s64, %s66
      %p70 = scmp.eq.s32.totalorder %s9, 0
      %p71 = por %p69, %p70
      %p72 = scmp.ne.s32.totalorder %s64, %s66
      %p73 = scmp.eq.s32.totalorder %s14, 1
      %p74 = por %p72, %p73
      %p75 = scmp.ne.s32.totalorder %s66, %s67
      %p76 = scmp.eq.s32.totalorder %s14, 0
      %p77 = por %p75, %p76
      %p78 = scmp.ne.s32.totalorder %s66, %s67
      %p79 = scmp.eq.s32.totalorder %s15, 1
      %p80 = por %p78, %p79
      %p82 = scmp.ne.s32.totalorder %s67, %s81
      %p83 = scmp.eq.s32.totalorder %s15, 0
      %p84 = por %p82, %p83
      %s85 = ssub.s32 %s9, %s16
      %p86 = scmp.eq.s32.totalorder %s85, 0
      %s88 = sadd.s32 %s87, 1
      %s89 = scalar_select %p86, %s87, %s88
      %p92 = pneg %p86
      %p93 = scmp.eq.s32.totalorder %s9, 1
      %p94 = por %p92, %p93
      %p95 = scmp.ne.s32.totalorder %s87, %s90
      %p96 = scmp.eq.s32.totalorder %s9, 0
      %p97 = por %p95, %p96
      %p98 = scmp.ne.s32.totalorder %s87, %s90
      %p99 = scmp.eq.s32.totalorder %s14, 1
      %p100 = por %p98, %p99
      %p101 = scmp.ne.s32.totalorder %s90, %s91
      %p102 = scmp.eq.s32.totalorder %s14, 0
      %p103 = por %p101, %p102
      %p104 = scmp.ne.s32.totalorder %s90, %s91
      %p105 = scmp.eq.s32.totalorder %s15, 1
      %p106 = por %p104, %p105
      %p108 = scmp.ne.s32.totalorder %s91, %s107
      %p109 = scmp.eq.s32.totalorder %s15, 0
      %p110 = por %p108, %p109
      %p111 = scmp.le.s32.totalorder 1, %s9
      %p112 = scmp.lt.s32.totalorder %s9, 3
      %p113 = pnand %p111, %p112
      %p114 = pneg %p113
      // Predicated region
      $region9: #{cnn_forward.4} parent=5 // pred_check
        _
      $region10: #{cnn_forward.4} parent=5 // pred_check_branch
        %116 = sbr.rel (%p113) target = $region12
      $region11: #{cnn_forward.4} parent=5 // pred_region
        %s117 = ssub.s32 %s9, 1
        // Predicated region
        $region13: #{cnn_forward.4} parent=11 // pred_check
          %p118 = pneg %p56
        $region14: #{cnn_forward.4} parent=11 // pred_check_branch
          %120 = sbr.rel (%p118) target = $region16
        $region15: #{cnn_forward.4} parent=11 // pred_region
          _
        $region16: #{cnn_forward.4} parent=11 // pred_fallthru
          _
        // Predicated region
        $region17: #{cnn_forward.4} parent=11 // pred_check
          %p121 = pneg %p77
        $region18: #{cnn_forward.4} parent=11 // pred_check_branch
          %123 = sbr.rel (%p121) target = $region20
        $region19: #{cnn_forward.4} parent=11 // pred_region
          _
        $region20: #{cnn_forward.4} parent=11 // pred_fallthru
          _
      $region12: #{cnn_forward.4} parent=5 // pred_fallthru
        _
      %p124 = scmp.lt.s32.totalorder %s9, 2
      // Predicated region
      $region21: #{cnn_forward.4} parent=5 // pred_check
        %p125 = pneg %p124
      $region22: #{cnn_forward.4} parent=5 // pred_check_branch
        %127 = sbr.rel (%p125) target = $region24
      $region23: #{cnn_forward.4} parent=5 // pred_region
        // Predicated region
        $region25: #{cnn_forward.4} parent=23 // pred_check
          %p128 = pneg %p29
        $region26: #{cnn_forward.4} parent=23 // pred_check_branch
          %130 = sbr.rel (%p128) target = $region28
        $region27: #{cnn_forward.4} parent=23 // pred_region
          %s131 = sand.u32 %s19, 1
          %s132 = sand.u32 %s19, 1
          %s133 = smul.addr %s132, 416
          %s134 = scalar_lea.vmem [#allocation2], %s133
          %s135 = smul.u32 26, %s9
          %s136 = ssub.s32 49, %s135
          %p137 = scmp.lt.s32.totalorder %s136, 26
          %s138 = scalar_select %p137, %s136, 26
          %s139 = smul.u32 256, %s138
          %p140 = scmp.ne.s32.totalorder 0, %s139
          %s141 = smul.addr %s135, 4
          %s142 = scalar_lea.vmem %s0, %s141
          // Predicated region
          $region29: #{cnn_forward.4} parent=27 // pred_check
            %p143 = pneg %p140
          $region30: #{cnn_forward.4} parent=27 // pred_check_branch
            %145 = sbr.rel (%p143) target = $region32
          $region31: #{cnn_forward.4} parent=27 // pred_region
            // Predicated region
            $region33: #{cnn_forward.4} parent=31 // pred_check
              _
            $region34: #{cnn_forward.4} parent=31 // pred_check_branch
              %147 = sbr.rel target = $region36
            $region35: #{cnn_forward.4} parent=31 // pred_region
              // Predicated region
              $region55: #{cnn_forward.4} parent=35 // pred_check
                _
              $region56: #{cnn_forward.4} parent=35 // pred_check_branch
                %328 = sbr.rel (0) target = $region58
              $region57: #{cnn_forward.4} parent=35 // pred_region
                %s329 = sdiv.u32.pop %s138, 26
                %s330 = srem.u32.pop %s138, 26
                // While loop
                $region59: #{cnn_forward.4} parent=57 // loop_pre_header
                  _
                $region60: #{cnn_forward.4} parent=57 // loop_header
                  %s332 = sphi 0, %s334
                  %p333 = scmp.ge.s32.totalorder %s332, %s329
                  %s337 = sphi 0, %s342
                  %s338 = sphi %s142, %s345
                  %s339 = sphi %s134, %s346
                $region61: #{cnn_forward.4} parent=57 // loop_header_branch
                  %336 = sbr.rel (%p333) target = $region65
                $region62: #{cnn_forward.4} parent=57 // loop_body
                  %s340 = sadd.s32 1, %s337
                  %p341 = scmp.ge.s32.totalorder %s340, %s329
                  %s342 = scalar_select %p341, 0, %s340
                  %s343 = smul.u32 %s342, 104
                  %s344 = smul.u32 %s342, 104
                  %s345 = scalar_lea.vmem %s142, %s343
                  %s346 = scalar_lea.vmem %s134, %s344 [#allocation2]
                $region63: #{cnn_forward.4} parent=57 // loop_footer
                  %s334 = sadd.s32 %s332, 1
                $region64: #{cnn_forward.4} parent=57 // loop_footer_branch
                  %331 = sbr.rel target = $region60
                $region65: #{cnn_forward.4} parent=57 // loop_exit
                  _
                %s347 = sdiv.u32.pop %s138, 26
                %s348 = srem.u32.pop %s138, 26
                %s349 = smul.u32 %s347, 26
                %s350 = smul.u32 4, %s349
                %s351 = scalar_lea.vmem %s142, %s350
                %s352 = smul.u32 4, %s349
                %s353 = scalar_lea.vmem %s134, %s352 [#allocation2]
                // While loop
                $region66: #{cnn_forward.4} parent=57 // loop_pre_header
                  _
                $region67: #{cnn_forward.4} parent=57 // loop_header
                  %s355 = sphi 0, %s357
                  %p356 = scmp.ge.s32.totalorder %s355, %s348
                  %s360 = sphi 0, %s365
                  %s361 = sphi %s351, %s368
                  %s362 = sphi %s353, %s369
                $region68: #{cnn_forward.4} parent=57 // loop_header_branch
                  %359 = sbr.rel (%p356) target = $region72
                $region69: #{cnn_forward.4} parent=57 // loop_body
                  %s363 = sadd.s32 1, %s360
                  %p364 = scmp.ge.s32.totalorder %s363, %s348
                  %s365 = scalar_select %p364, 0, %s363
                  %s366 = smul.u32 %s365, 4
                  %s367 = smul.u32 %s365, 4
                  %s368 = scalar_lea.vmem %s351, %s366
                  %s369 = scalar_lea.vmem %s353, %s367 [#allocation2]
                $region70: #{cnn_forward.4} parent=57 // loop_footer
                  %s357 = sadd.s32 %s355, 1
                $region71: #{cnn_forward.4} parent=57 // loop_footer_branch
                  %354 = sbr.rel target = $region67
                $region72: #{cnn_forward.4} parent=57 // loop_exit
                  _
                %s371 = sshrl.u32 %s138, 4
                // While loop
                $region73: #{cnn_forward.4} parent=57 // loop_pre_header
                  _
                $region74: #{cnn_forward.4} parent=57 // loop_header
                  %s373 = sphi 0, %s375
                  %p374 = scmp.ge.s32.totalorder %s373, %s371
                  %s378 = sphi 0, %s511
                  %s379 = sphi %s142, %s514
                  %s380 = sphi %s134, %s515
                $region75: #{cnn_forward.4} parent=57 // loop_header_branch
                  %377 = sbr.rel (%p374) target = $region79
                $region76: #{cnn_forward.4} parent=57 // loop_body
                  %v381 = vld [vmem:[%s379] sm:$0xf]
                  %382 = vst [vmem:[%s380] sm:$0xf] %v381
                  %v383 = vld [vmem:[%s379 + $0x4] sm:$0xf]
                  %384 = vst [vmem:[%s380 + $0x4] sm:$0xf] %v383
                  %v385 = vld [vmem:[%s379 + $0x8] sm:$0xf]
                  %386 = vst [vmem:[%s380 + $0x8] sm:$0xf] %v385
                  %v387 = vld [vmem:[%s379 + $0xc] sm:$0xf]
                  %388 = vst [vmem:[%s380 + $0xc] sm:$0xf] %v387
                  %v389 = vld [vmem:[%s379 + $0x10] sm:$0xf]
                  %390 = vst [vmem:[%s380 + $0x10] sm:$0xf] %v389
                  %v391 = vld [vmem:[%s379 + $0x14] sm:$0xf]
                  %392 = vst [vmem:[%s380 + $0x14] sm:$0xf] %v391
                  %v393 = vld [vmem:[%s379 + $0x18] sm:$0xf]
                  %394 = vst [vmem:[%s380 + $0x18] sm:$0xf] %v393
                  %v395 = vld [vmem:[%s379 + $0x1c] sm:$0xf]
                  %396 = vst [vmem:[%s380 + $0x1c] sm:$0xf] %v395
                  %v397 = vld [vmem:[%s379 + $0x20] sm:$0xf]
                  %398 = vst [vmem:[%s380 + $0x20] sm:$0xf] %v397
                  %v399 = vld [vmem:[%s379 + $0x24] sm:$0xf]
                  %400 = vst [vmem:[%s380 + $0x24] sm:$0xf] %v399
                  %v401 = vld [vmem:[%s379 + $0x28] sm:$0xf]
                  %402 = vst [vmem:[%s380 + $0x28] sm:$0xf] %v401
                  %v403 = vld [vmem:[%s379 + $0x2c] sm:$0xf]
                  %404 = vst [vmem:[%s380 + $0x2c] sm:$0xf] %v403
                  %v405 = vld [vmem:[%s379 + $0x30] sm:$0xf]
                  %406 = vst [vmem:[%s380 + $0x30] sm:$0xf] %v405
                  %v407 = vld [vmem:[%s379 + $0x34] sm:$0xf]
                  %408 = vst [vmem:[%s380 + $0x34] sm:$0xf] %v407
                  %v409 = vld [vmem:[%s379 + $0x38] sm:$0xf]
                  %410 = vst [vmem:[%s380 + $0x38] sm:$0xf] %v409
                  %v411 = vld [vmem:[%s379 + $0x3c] sm:$0xf]
                  %412 = vst [vmem:[%s380 + $0x3c] sm:$0xf] %v411
                  %v413 = vld [vmem:[%s379 + $0xc4] sm:$0xf]
                  %414 = vst [vmem:[%s380 + $0x68] sm:$0xf] %v413
                  %v415 = vld [vmem:[%s379 + $0xc8] sm:$0xf]
                  %416 = vst [vmem:[%s380 + $0x6c] sm:$0xf] %v415
                  %v417 = vld [vmem:[%s379 + $0xcc] sm:$0xf]
                  %418 = vst [vmem:[%s380 + $0x70] sm:$0xf] %v417
                  %v419 = vld [vmem:[%s379 + $0xd0] sm:$0xf]
                  %420 = vst [vmem:[%s380 + $0x74] sm:$0xf] %v419
                  %v421 = vld [vmem:[%s379 + $0xd4] sm:$0xf]
                  %422 = vst [vmem:[%s380 + $0x78] sm:$0xf] %v421
                  %v423 = vld [vmem:[%s379 + $0xd8] sm:$0xf]
                  %424 = vst [vmem:[%s380 + $0x7c] sm:$0xf] %v423
                  %v425 = vld [vmem:[%s379 + $0xdc] sm:$0xf]
                  %426 = vst [vmem:[%s380 + $0x80] sm:$0xf] %v425
                  %v427 = vld [vmem:[%s379 + $0xe0] sm:$0xf]
                  %428 = vst [vmem:[%s380 + $0x84] sm:$0xf] %v427
                  %v429 = vld [vmem:[%s379 + $0xe4] sm:$0xf]
                  %430 = vst [vmem:[%s380 + $0x88] sm:$0xf] %v429
                  %v431 = vld [vmem:[%s379 + $0xe8] sm:$0xf]
                  %432 = vst [vmem:[%s380 + $0x8c] sm:$0xf] %v431
                  %v433 = vld [vmem:[%s379 + $0xec] sm:$0xf]
                  %434 = vst [vmem:[%s380 + $0x90] sm:$0xf] %v433
                  %v435 = vld [vmem:[%s379 + $0xf0] sm:$0xf]
                  %436 = vst [vmem:[%s380 + $0x94] sm:$0xf] %v435
                  %v437 = vld [vmem:[%s379 + $0xf4] sm:$0xf]
                  %438 = vst [vmem:[%s380 + $0x98] sm:$0xf] %v437
                  %v439 = vld [vmem:[%s379 + $0xf8] sm:$0xf]
                  %440 = vst [vmem:[%s380 + $0x9c] sm:$0xf] %v439
                  %v441 = vld [vmem:[%s379 + $0xfc] sm:$0xf]
                  %442 = vst [vmem:[%s380 + $0xa0] sm:$0xf] %v441
                  %v443 = vld [vmem:[%s379 + $0x100] sm:$0xf]
                  %444 = vst [vmem:[%s380 + $0xa4] sm:$0xf] %v443
                  %v445 = vld [vmem:[%s379 + $0x188] sm:$0xf]
                  %446 = vst [vmem:[%s380 + $0xd0] sm:$0xf] %v445
                  %v447 = vld [vmem:[%s379 + $0x18c] sm:$0xf]
                  %448 = vst [vmem:[%s380 + $0xd4] sm:$0xf] %v447
                  %v449 = vld [vmem:[%s379 + $0x190] sm:$0xf]
                  %450 = vst [vmem:[%s380 + $0xd8] sm:$0xf] %v449
                  %v451 = vld [vmem:[%s379 + $0x194] sm:$0xf]
                  %452 = vst [vmem:[%s380 + $0xdc] sm:$0xf] %v451
                  %v453 = vld [vmem:[%s379 + $0x198] sm:$0xf]
                  %454 = vst [vmem:[%s380 + $0xe0] sm:$0xf] %v453
                  %v455 = vld [vmem:[%s379 + $0x19c] sm:$0xf]
                  %456 = vst [vmem:[%s380 + $0xe4] sm:$0xf] %v455
                  %v457 = vld [vmem:[%s379 + $0x1a0] sm:$0xf]
                  %458 = vst [vmem:[%s380 + $0xe8] sm:$0xf] %v457
                  %v459 = vld [vmem:[%s379 + $0x1a4] sm:$0xf]
                  %460 = vst [vmem:[%s380 + $0xec] sm:$0xf] %v459
                  %v461 = vld [vmem:[%s379 + $0x1a8] sm:$0xf]
                  %462 = vst [vmem:[%s380 + $0xf0] sm:$0xf] %v461
                  %v463 = vld [vmem:[%s379 + $0x1ac] sm:$0xf]
                  %464 = vst [vmem:[%s380 + $0xf4] sm:$0xf] %v463
                  %v465 = vld [vmem:[%s379 + $0x1b0] sm:$0xf]
                  %466 = vst [vmem:[%s380 + $0xf8] sm:$0xf] %v465
                  %v467 = vld [vmem:[%s379 + $0x1b4] sm:$0xf]
                  %468 = vst [vmem:[%s380 + $0xfc] sm:$0xf] %v467
                  %v469 = vld [vmem:[%s379 + $0x1b8] sm:$0xf]
                  %470 = vst [vmem:[%s380 + $0x100] sm:$0xf] %v469
                  %v471 = vld [vmem:[%s379 + $0x1bc] sm:$0xf]
                  %472 = vst [vmem:[%s380 + $0x104] sm:$0xf] %v471
                  %v473 = vld [vmem:[%s379 + $0x1c0] sm:$0xf]
                  %474 = vst [vmem:[%s380 + $0x108] sm:$0xf] %v473
                  %v475 = vld [vmem:[%s379 + $0x1c4] sm:$0xf]
                  %476 = vst [vmem:[%s380 + $0x10c] sm:$0xf] %v475
                  %v477 = vld [vmem:[%s379 + $0x24c] sm:$0xf]
                  %478 = vst [vmem:[%s380 + $0x138] sm:$0xf] %v477
                  %v479 = vld [vmem:[%s379 + $0x250] sm:$0xf]
                  %480 = vst [vmem:[%s380 + $0x13c] sm:$0xf] %v479
                  %v481 = vld [vmem:[%s379 + $0x254] sm:$0xf]
                  %482 = vst [vmem:[%s380 + $0x140] sm:$0xf] %v481
                  %v483 = vld [vmem:[%s379 + $0x258] sm:$0xf]
                  %484 = vst [vmem:[%s380 + $0x144] sm:$0xf] %v483
                  %v485 = vld [vmem:[%s379 + $0x25c] sm:$0xf]
                  %486 = vst [vmem:[%s380 + $0x148] sm:$0xf] %v485
                  %v487 = vld [vmem:[%s379 + $0x260] sm:$0xf]
                  %488 = vst [vmem:[%s380 + $0x14c] sm:$0xf] %v487
                  %v489 = vld [vmem:[%s379 + $0x264] sm:$0xf]
                  %490 = vst [vmem:[%s380 + $0x150] sm:$0xf] %v489
                  %v491 = vld [vmem:[%s379 + $0x268] sm:$0xf]
                  %492 = vst [vmem:[%s380 + $0x154] sm:$0xf] %v491
                  %v493 = vld [vmem:[%s379 + $0x26c] sm:$0xf]
                  %494 = vst [vmem:[%s380 + $0x158] sm:$0xf] %v493
                  %v495 = vld [vmem:[%s379 + $0x270] sm:$0xf]
                  %496 = vst [vmem:[%s380 + $0x15c] sm:$0xf] %v495
                  %v497 = vld [vmem:[%s379 + $0x274] sm:$0xf]
                  %498 = vst [vmem:[%s380 + $0x160] sm:$0xf] %v497
                  %v499 = vld [vmem:[%s379 + $0x278] sm:$0xf]
                  %500 = vst [vmem:[%s380 + $0x164] sm:$0xf] %v499
                  %v501 = vld [vmem:[%s379 + $0x27c] sm:$0xf]
                  %502 = vst [vmem:[%s380 + $0x168] sm:$0xf] %v501
                  %v503 = vld [vmem:[%s379 + $0x280] sm:$0xf]
                  %504 = vst [vmem:[%s380 + $0x16c] sm:$0xf] %v503
                  %v505 = vld [vmem:[%s379 + $0x284] sm:$0xf]
                  %506 = vst [vmem:[%s380 + $0x170] sm:$0xf] %v505
                  %v507 = vld [vmem:[%s379 + $0x288] sm:$0xf]
                  %508 = vst [vmem:[%s380 + $0x174] sm:$0xf] %v507
                  %s509 = sadd.s32 1, %s378
                  %p510 = scmp.ge.s32.totalorder %s509, %s371
                  %s511 = scalar_select %p510, 0, %s509
                  %s512 = smul.u32 %s511, 64
                  %s513 = smul.u32 %s511, 64
                  %s514 = scalar_lea.vmem %s142, %s512
                  %s515 = scalar_lea.vmem %s134, %s513 [#allocation2]
                $region77: #{cnn_forward.4} parent=57 // loop_footer
                  %s375 = sadd.s32 %s373, 1
                $region78: #{cnn_forward.4} parent=57 // loop_footer_branch
                  %372 = sbr.rel target = $region74
                $region79: #{cnn_forward.4} parent=57 // loop_exit
                  _
                %s516 = sshrl.u32 %s138, 4
                %s517 = sand.u32 %s138, 15
                %s518 = smul.u32 %s516, 16
                %s519 = smul.u32 4, %s518
                %s520 = scalar_lea.vmem %s142, %s519
                %s521 = smul.u32 4, %s518
                %s522 = scalar_lea.vmem %s134, %s521 [#allocation2]
                // While loop
                $region80: #{cnn_forward.4} parent=57 // loop_pre_header
                  _
                $region81: #{cnn_forward.4} parent=57 // loop_header
                  %s524 = sphi 0, %s526
                  %p525 = scmp.ge.s32.totalorder %s524, %s517
                  %s529 = sphi 0, %s542
                  %s530 = sphi %s520, %s545
                  %s531 = sphi %s522, %s546
                $region82: #{cnn_forward.4} parent=57 // loop_header_branch
                  %528 = sbr.rel (%p525) target = $region86
                $region83: #{cnn_forward.4} parent=57 // loop_body
                  %v532 = vld [vmem:[%s530] sm:$0xf]
                  %533 = vst [vmem:[%s531] sm:$0xf] %v532
                  %v534 = vld [vmem:[%s530 + $0xc4] sm:$0xf]
                  %535 = vst [vmem:[%s531 + $0x68] sm:$0xf] %v534
                  %v536 = vld [vmem:[%s530 + $0x188] sm:$0xf]
                  %537 = vst [vmem:[%s531 + $0xd0] sm:$0xf] %v536
                  %v538 = vld [vmem:[%s530 + $0x24c] sm:$0xf]
                  %539 = vst [vmem:[%s531 + $0x138] sm:$0xf] %v538
                  %s540 = sadd.s32 1, %s529
                  %p541 = scmp.ge.s32.totalorder %s540, %s517
                  %s542 = scalar_select %p541, 0, %s540
                  %s543 = smul.u32 %s542, 4
                  %s544 = smul.u32 %s542, 4
                  %s545 = scalar_lea.vmem %s520, %s543
                  %s546 = scalar_lea.vmem %s522, %s544 [#allocation2]
                $region84: #{cnn_forward.4} parent=57 // loop_footer
                  %s526 = sadd.s32 %s524, 1
                $region85: #{cnn_forward.4} parent=57 // loop_footer_branch
                  %523 = sbr.rel target = $region81
                $region86: #{cnn_forward.4} parent=57 // loop_exit
                  _
              $region58: #{cnn_forward.4} parent=35 // pred_fallthru
                _
            $region36: #{cnn_forward.4} parent=31 // pred_fallthru
              _
            // Predicated region
            $region37: #{cnn_forward.4} parent=31 // pred_check
              _
            $region38: #{cnn_forward.4} parent=31 // pred_check_branch
              %149 = sbr.rel (0) target = $region40
            $region39: #{cnn_forward.4} parent=31 // pred_region
              %s151 = sshrl.u32 %s138, 4
              // While loop
              $region41: #{cnn_forward.4} parent=39 // loop_pre_header
                _
              $region42: #{cnn_forward.4} parent=39 // loop_header
                %s153 = sphi 0, %s155
                %p154 = scmp.ge.s32.totalorder %s153, %s151
                %s158 = sphi 0, %s291
                %s159 = sphi %s142, %s294
                %s160 = sphi %s134, %s295
              $region43: #{cnn_forward.4} parent=39 // loop_header_branch
                %157 = sbr.rel (%p154) target = $region47
              $region44: #{cnn_forward.4} parent=39 // loop_body
                %v161 = vld [vmem:[%s159] sm:$0xf]
                %162 = vst [vmem:[%s160] sm:$0xf] %v161
                %v163 = vld [vmem:[%s159 + $0x4] sm:$0xf]
                %164 = vst [vmem:[%s160 + $0x4] sm:$0xf] %v163
                %v165 = vld [vmem:[%s159 + $0x8] sm:$0xf]
                %166 = vst [vmem:[%s160 + $0x8] sm:$0xf] %v165
                %v167 = vld [vmem:[%s159 + $0xc] sm:$0xf]
                %168 = vst [vmem:[%s160 + $0xc] sm:$0xf] %v167
                %v169 = vld [vmem:[%s159 + $0x10] sm:$0xf]
                %170 = vst [vmem:[%s160 + $0x10] sm:$0xf] %v169
                %v171 = vld [vmem:[%s159 + $0x14] sm:$0xf]
                %172 = vst [vmem:[%s160 + $0x14] sm:$0xf] %v171
                %v173 = vld [vmem:[%s159 + $0x18] sm:$0xf]
                %174 = vst [vmem:[%s160 + $0x18] sm:$0xf] %v173
                %v175 = vld [vmem:[%s159 + $0x1c] sm:$0xf]
                %176 = vst [vmem:[%s160 + $0x1c] sm:$0xf] %v175
                %v177 = vld [vmem:[%s159 + $0x20] sm:$0xf]
                %178 = vst [vmem:[%s160 + $0x20] sm:$0xf] %v177
                %v179 = vld [vmem:[%s159 + $0x24] sm:$0xf]
                %180 = vst [vmem:[%s160 + $0x24] sm:$0xf] %v179
                %v181 = vld [vmem:[%s159 + $0x28] sm:$0xf]
                %182 = vst [vmem:[%s160 + $0x28] sm:$0xf] %v181
                %v183 = vld [vmem:[%s159 + $0x2c] sm:$0xf]
                %184 = vst [vmem:[%s160 + $0x2c] sm:$0xf] %v183
                %v185 = vld [vmem:[%s159 + $0x30] sm:$0xf]
                %186 = vst [vmem:[%s160 + $0x30] sm:$0xf] %v185
                %v187 = vld [vmem:[%s159 + $0x34] sm:$0xf]
                %188 = vst [vmem:[%s160 + $0x34] sm:$0xf] %v187
                %v189 = vld [vmem:[%s159 + $0x38] sm:$0xf]
                %190 = vst [vmem:[%s160 + $0x38] sm:$0xf] %v189
                %v191 = vld [vmem:[%s159 + $0x3c] sm:$0xf]
                %192 = vst [vmem:[%s160 + $0x3c] sm:$0xf] %v191
                %v193 = vld [vmem:[%s159 + $0xc4] sm:$0xf]
                %194 = vst [vmem:[%s160 + $0x68] sm:$0xf] %v193
                %v195 = vld [vmem:[%s159 + $0xc8] sm:$0xf]
                %196 = vst [vmem:[%s160 + $0x6c] sm:$0xf] %v195
                %v197 = vld [vmem:[%s159 + $0xcc] sm:$0xf]
                %198 = vst [vmem:[%s160 + $0x70] sm:$0xf] %v197
                %v199 = vld [vmem:[%s159 + $0xd0] sm:$0xf]
                %200 = vst [vmem:[%s160 + $0x74] sm:$0xf] %v199
                %v201 = vld [vmem:[%s159 + $0xd4] sm:$0xf]
                %202 = vst [vmem:[%s160 + $0x78] sm:$0xf] %v201
                %v203 = vld [vmem:[%s159 + $0xd8] sm:$0xf]
                %204 = vst [vmem:[%s160 + $0x7c] sm:$0xf] %v203
                %v205 = vld [vmem:[%s159 + $0xdc] sm:$0xf]
                %206 = vst [vmem:[%s160 + $0x80] sm:$0xf] %v205
                %v207 = vld [vmem:[%s159 + $0xe0] sm:$0xf]
                %208 = vst [vmem:[%s160 + $0x84] sm:$0xf] %v207
                %v209 = vld [vmem:[%s159 + $0xe4] sm:$0xf]
                %210 = vst [vmem:[%s160 + $0x88] sm:$0xf] %v209
                %v211 = vld [vmem:[%s159 + $0xe8] sm:$0xf]
                %212 = vst [vmem:[%s160 + $0x8c] sm:$0xf] %v211
                %v213 = vld [vmem:[%s159 + $0xec] sm:$0xf]
                %214 = vst [vmem:[%s160 + $0x90] sm:$0xf] %v213
                %v215 = vld [vmem:[%s159 + $0xf0] sm:$0xf]
                %216 = vst [vmem:[%s160 + $0x94] sm:$0xf] %v215
                %v217 = vld [vmem:[%s159 + $0xf4] sm:$0xf]
                %218 = vst [vmem:[%s160 + $0x98] sm:$0xf] %v217
                %v219 = vld [vmem:[%s159 + $0xf8] sm:$0xf]
                %220 = vst [vmem:[%s160 + $0x9c] sm:$0xf] %v219
                %v221 = vld [vmem:[%s159 + $0xfc] sm:$0xf]
                %222 = vst [vmem:[%s160 + $0xa0] sm:$0xf] %v221
                %v223 = vld [vmem:[%s159 + $0x100] sm:$0xf]
                %224 = vst [vmem:[%s160 + $0xa4] sm:$0xf] %v223
                %v225 = vld [vmem:[%s159 + $0x188] sm:$0xf]
                %226 = vst [vmem:[%s160 + $0xd0] sm:$0xf] %v225
                %v227 = vld [vmem:[%s159 + $0x18c] sm:$0xf]
                %228 = vst [vmem:[%s160 + $0xd4] sm:$0xf] %v227
                %v229 = vld [vmem:[%s159 + $0x190] sm:$0xf]
                %230 = vst [vmem:[%s160 + $0xd8] sm:$0xf] %v229
                %v231 = vld [vmem:[%s159 + $0x194] sm:$0xf]
                %232 = vst [vmem:[%s160 + $0xdc] sm:$0xf] %v231
                %v233 = vld [vmem:[%s159 + $0x198] sm:$0xf]
                %234 = vst [vmem:[%s160 + $0xe0] sm:$0xf] %v233
                %v235 = vld [vmem:[%s159 + $0x19c] sm:$0xf]
                %236 = vst [vmem:[%s160 + $0xe4] sm:$0xf] %v235
                %v237 = vld [vmem:[%s159 + $0x1a0] sm:$0xf]
                %238 = vst [vmem:[%s160 + $0xe8] sm:$0xf] %v237
                %v239 = vld [vmem:[%s159 + $0x1a4] sm:$0xf]
                %240 = vst [vmem:[%s160 + $0xec] sm:$0xf] %v239
                %v241 = vld [vmem:[%s159 + $0x1a8] sm:$0xf]
                %242 = vst [vmem:[%s160 + $0xf0] sm:$0xf] %v241
                %v243 = vld [vmem:[%s159 + $0x1ac] sm:$0xf]
                %244 = vst [vmem:[%s160 + $0xf4] sm:$0xf] %v243
                %v245 = vld [vmem:[%s159 + $0x1b0] sm:$0xf]
                %246 = vst [vmem:[%s160 + $0xf8] sm:$0xf] %v245
                %v247 = vld [vmem:[%s159 + $0x1b4] sm:$0xf]
                %248 = vst [vmem:[%s160 + $0xfc] sm:$0xf] %v247
                %v249 = vld [vmem:[%s159 + $0x1b8] sm:$0xf]
                %250 = vst [vmem:[%s160 + $0x100] sm:$0xf] %v249
                %v251 = vld [vmem:[%s159 + $0x1bc] sm:$0xf]
                %252 = vst [vmem:[%s160 + $0x104] sm:$0xf] %v251
                %v253 = vld [vmem:[%s159 + $0x1c0] sm:$0xf]
                %254 = vst [vmem:[%s160 + $0x108] sm:$0xf] %v253
                %v255 = vld [vmem:[%s159 + $0x1c4] sm:$0xf]
                %256 = vst [vmem:[%s160 + $0x10c] sm:$0xf] %v255
                %v257 = vld [vmem:[%s159 + $0x24c] sm:$0xf]
                %258 = vst [vmem:[%s160 + $0x138] sm:$0xf] %v257
                %v259 = vld [vmem:[%s159 + $0x250] sm:$0xf]
                %260 = vst [vmem:[%s160 + $0x13c] sm:$0xf] %v259
                %v261 = vld [vmem:[%s159 + $0x254] sm:$0xf]
                %262 = vst [vmem:[%s160 + $0x140] sm:$0xf] %v261
                %v263 = vld [vmem:[%s159 + $0x258] sm:$0xf]
                %264 = vst [vmem:[%s160 + $0x144] sm:$0xf] %v263
                %v265 = vld [vmem:[%s159 + $0x25c] sm:$0xf]
                %266 = vst [vmem:[%s160 + $0x148] sm:$0xf] %v265
                %v267 = vld [vmem:[%s159 + $0x260] sm:$0xf]
                %268 = vst [vmem:[%s160 + $0x14c] sm:$0xf] %v267
                %v269 = vld [vmem:[%s159 + $0x264] sm:$0xf]
                %270 = vst [vmem:[%s160 + $0x150] sm:$0xf] %v269
                %v271 = vld [vmem:[%s159 + $0x268] sm:$0xf]
                %272 = vst [vmem:[%s160 + $0x154] sm:$0xf] %v271
                %v273 = vld [vmem:[%s159 + $0x26c] sm:$0xf]
                %274 = vst [vmem:[%s160 + $0x158] sm:$0xf] %v273
                %v275 = vld [vmem:[%s159 + $0x270] sm:$0xf]
                %276 = vst [vmem:[%s160 + $0x15c] sm:$0xf] %v275
                %v277 = vld [vmem:[%s159 + $0x274] sm:$0xf]
                %278 = vst [vmem:[%s160 + $0x160] sm:$0xf] %v277
                %v279 = vld [vmem:[%s159 + $0x278] sm:$0xf]
                %280 = vst [vmem:[%s160 + $0x164] sm:$0xf] %v279
                %v281 = vld [vmem:[%s159 + $0x27c] sm:$0xf]
                %282 = vst [vmem:[%s160 + $0x168] sm:$0xf] %v281
                %v283 = vld [vmem:[%s159 + $0x280] sm:$0xf]
                %284 = vst [vmem:[%s160 + $0x16c] sm:$0xf] %v283
                %v285 = vld [vmem:[%s159 + $0x284] sm:$0xf]
                %286 = vst [vmem:[%s160 + $0x170] sm:$0xf] %v285
                %v287 = vld [vmem:[%s159 + $0x288] sm:$0xf]
                %288 = vst [vmem:[%s160 + $0x174] sm:$0xf] %v287
                %s289 = sadd.s32 1, %s158
                %p290 = scmp.ge.s32.totalorder %s289, %s151
                %s291 = scalar_select %p290, 0, %s289
                %s292 = smul.u32 %s291, 64
                %s293 = smul.u32 %s291, 64
                %s294 = scalar_lea.vmem %s142, %s292
                %s295 = scalar_lea.vmem %s134, %s293 [#allocation2]
              $region45: #{cnn_forward.4} parent=39 // loop_footer
                %s155 = sadd.s32 %s153, 1
              $region46: #{cnn_forward.4} parent=39 // loop_footer_branch
                %152 = sbr.rel target = $region42
              $region47: #{cnn_forward.4} parent=39 // loop_exit
                _
              %s296 = sshrl.u32 %s138, 4
              %s297 = sand.u32 %s138, 15
              %s298 = smul.u32 %s296, 16
              %s299 = smul.u32 4, %s298
              %s300 = scalar_lea.vmem %s142, %s299
              %s301 = smul.u32 4, %s298
              %s302 = scalar_lea.vmem %s134, %s301 [#allocation2]
              // While loop
              $region48: #{cnn_forward.4} parent=39 // loop_pre_header
                _
              $region49: #{cnn_forward.4} parent=39 // loop_header
                %s304 = sphi 0, %s306
                %p305 = scmp.ge.s32.totalorder %s304, %s297
                %s309 = sphi 0, %s322
                %s310 = sphi %s300, %s325
                %s311 = sphi %s302, %s326
              $region50: #{cnn_forward.4} parent=39 // loop_header_branch
                %308 = sbr.rel (%p305) target = $region54
              $region51: #{cnn_forward.4} parent=39 // loop_body
                %v312 = vld [vmem:[%s310] sm:$0xf]
                %313 = vst [vmem:[%s311] sm:$0xf] %v312
                %v314 = vld [vmem:[%s310 + $0xc4] sm:$0xf]
                %315 = vst [vmem:[%s311 + $0x68] sm:$0xf] %v314
                %v316 = vld [vmem:[%s310 + $0x188] sm:$0xf]
                %317 = vst [vmem:[%s311 + $0xd0] sm:$0xf] %v316
                %v318 = vld [vmem:[%s310 + $0x24c] sm:$0xf]
                %319 = vst [vmem:[%s311 + $0x138] sm:$0xf] %v318
                %s320 = sadd.s32 1, %s309
                %p321 = scmp.ge.s32.totalorder %s320, %s297
                %s322 = scalar_select %p321, 0, %s320
                %s323 = smul.u32 %s322, 4
                %s324 = smul.u32 %s322, 4
                %s325 = scalar_lea.vmem %s300, %s323
                %s326 = scalar_lea.vmem %s302, %s324 [#allocation2]
              $region52: #{cnn_forward.4} parent=39 // loop_footer
                %s306 = sadd.s32 %s304, 1
              $region53: #{cnn_forward.4} parent=39 // loop_footer_branch
                %303 = sbr.rel target = $region49
              $region54: #{cnn_forward.4} parent=39 // loop_exit
                _
            $region40: #{cnn_forward.4} parent=31 // pred_fallthru
              _
          $region32: #{cnn_forward.4} parent=27 // pred_fallthru
            _
          %547 = vnop
        $region28: #{cnn_forward.4} parent=23 // pred_fallthru
          _
      $region24: #{cnn_forward.4} parent=5 // pred_fallthru
        _
      %p548 = scmp.le.s32.totalorder 1, %s9
      %p549 = scmp.lt.s32.totalorder %s9, 3
      %p550 = pnand %p548, %p549
      %p551 = pneg %p550
      // Predicated region
      $region87: #{cnn_forward.4} parent=5 // pred_check
        _
      $region88: #{cnn_forward.4} parent=5 // pred_check_branch
        %553 = sbr.rel (%p550) target = $region90
      $region89: #{cnn_forward.4} parent=5 // pred_region
        %s554 = ssub.s32 %s9, 1
        %s555 = sand.u32 %s22, 1
        %s556 = sand.u32 %s22, 1
        %s557 = smul.addr %s556, 416
        %s558 = scalar_lea.vmem [#allocation2], %s557
        // Predicated region
        $region91: #{cnn_forward.4} parent=89 // pred_check
          %p559 = pneg %p35
        $region92: #{cnn_forward.4} parent=89 // pred_check_branch
          %561 = sbr.rel (%p559) target = $region94
        $region93: #{cnn_forward.4} parent=89 // pred_region
          _
        $region94: #{cnn_forward.4} parent=89 // pred_fallthru
          _
        %s562 = sand.u32 %s22, 1
        %s563 = sand.u32 %s22, 1
        %s564 = smul.addr %s563, 416
        %s565 = scalar_lea.vmem [#allocation2], %s564
        %p566 = pneg %p35
        %p567 = pneg %p32
        %p568 = pneg %p56
        %p569 = pneg %p53
        %p570 = pneg %p77
        %p571 = pneg %p74
        %p572 = pneg %p103
        %p573 = pneg %p100
        %s574 = sand.u32 %s90, 1
        %s575 = sand.u32 %s90, 1
        %s576 = smul.addr %s575, 104
        %s577 = scalar_lea.vmem [#allocation3], %s576
        %s578 = smul.u32 26, %s14
        %s579 = ssub.s32 49, %s578
        %p580 = scmp.lt.s32.totalorder %s579, 26
        %s581 = scalar_select %p580, %s579, 26
        %s582 = smul.u32 256, %s581
        %s583 = smul.u32 26, %s14
        %s584 = ssub.s32 49, %s583
        %p585 = scmp.lt.s32.totalorder %s584, 26
        %s586 = scalar_select %p585, %s584, 26
        %s587 = smul.u32 64, %s586
        %v589 = vld [vmem:[%s1] sm:$0xf]
        %v590 = vld [vmem:[%s1 + $0x4] sm:$0x1]
        %v591 = vld [vmem:[%s558] sm:$0xf]
        %v592 = vld [vmem:[%s558 + $0x4] sm:$0xf]
        %v593 = vld [vmem:[%s558 + $0x8] sm:$0xf]
        %v594 = vld [vmem:[%s558 + $0xc] sm:$0xf]
        %v595 = vld [vmem:[%s558 + $0x10] sm:$0xf]
        %v596 = vld [vmem:[%s558 + $0x14] sm:$0xf]
        %v597 = vld [vmem:[%s558 + $0x18] sm:$0xf]
        %v598 = vld [vmem:[%s558 + $0x1c] sm:$0xf]
        %v599 = vld [vmem:[%s558 + $0x20] sm:$0xf]
        %v600 = vld [vmem:[%s558 + $0x24] sm:$0xf]
        %v601 = vld [vmem:[%s558 + $0x28] sm:$0xf]
        %v602 = vld [vmem:[%s558 + $0x2c] sm:$0xf]
        %v603 = vld [vmem:[%s558 + $0x30] sm:$0xf]
        %v604 = vld [vmem:[%s558 + $0x34] sm:$0xf]
        %v605 = vld [vmem:[%s558 + $0x38] sm:$0xf]
        %v606 = vld [vmem:[%s558 + $0x3c] sm:$0xf]
        %v607 = vld [vmem:[%s558 + $0x40] sm:$0xf]
        %v608 = vld [vmem:[%s558 + $0x44] sm:$0xf]
        %v609 = vld [vmem:[%s558 + $0x48] sm:$0xf]
        %v610 = vld [vmem:[%s558 + $0x4c] sm:$0xf]
        %v611 = vld [vmem:[%s558 + $0x50] sm:$0xf]
        %v612 = vld [vmem:[%s558 + $0x54] sm:$0xf]
        %v613 = vld [vmem:[%s558 + $0x58] sm:$0xf]
        %v614 = vld [vmem:[%s558 + $0x5c] sm:$0xf]
        %v615 = vld [vmem:[%s558 + $0x60] sm:$0xf]
        %v616 = vld [vmem:[%s558 + $0x64] sm:$0xf]
        %v643 = vunpack.c.l.b16 %v591
        %v644 = vunpack.c.l.b16 %v592
        %v645 = vunpack.c.l.b16 %v593
        %v646 = vunpack.c.l.b16 %v594
        %v647 = vunpack.c.l.b16 %v595
        %v648 = vunpack.c.l.b16 %v596
        %v649 = vunpack.c.l.b16 %v597
        %v650 = vunpack.c.l.b16 %v598
        %v651 = vunpack.c.l.b16 %v599
        %v652 = vunpack.c.l.b16 %v600
        %v653 = vunpack.c.l.b16 %v601
        %v654 = vunpack.c.l.b16 %v602
        %v655 = vunpack.c.l.b16 %v603
        %v656 = vunpack.c.l.b16 %v604
        %v657 = vunpack.c.l.b16 %v605
        %v658 = vunpack.c.l.b16 %v606
        %v659 = vunpack.c.l.b16 %v607
        %v660 = vunpack.c.l.b16 %v608
        %v661 = vunpack.c.l.b16 %v609
        %v662 = vunpack.c.l.b16 %v610
        %v663 = vunpack.c.l.b16 %v611
        %v664 = vunpack.c.l.b16 %v612
        %v665 = vunpack.c.l.b16 %v613
        %v666 = vunpack.c.l.b16 %v614
        %v667 = vunpack.c.l.b16 %v615
        %v668 = vunpack.c.l.b16 %v616
        %v669 = vpack.c.b16 %v644, %v643
        %v670 = vpack.c.b16 %v646, %v645
        %v671 = vpack.c.b16 %v648, %v647
        %v672 = vpack.c.b16 %v650, %v649
        %v673 = vpack.c.b16 %v652, %v651
        %v674 = vpack.c.b16 %v654, %v653
        %v675 = vpack.c.b16 %v656, %v655
        %v676 = vpack.c.b16 %v658, %v657
        %v677 = vpack.c.b16 %v660, %v659
        %v678 = vpack.c.b16 %v662, %v661
        %v679 = vpack.c.b16 %v664, %v663
        %v680 = vpack.c.b16 %v666, %v665
        %v681 = vpack.c.b16 %v668, %v667
        %v684 = vunpack.c.l.b16 %v589
        %v685 = vunpack.c.l.b16 %v590
        %v686 = vpack.c.b16 %v685, %v684
        %vm687 = vcmask 72704
        %v689 = vsel %vm687, %v669, 0
        %v692 = vsel %vm687, %v670, 0
        %v695 = vsel %vm687, %v671, 0
        %v698 = vsel %vm687, %v672, 0
        %v701 = vsel %vm687, %v673, 0
        %v704 = vsel %vm687, %v674, 0
        %v707 = vsel %vm687, %v675, 0
        %v710 = vsel %vm687, %v676, 0
        %v713 = vsel %vm687, %v677, 0
        %v716 = vsel %vm687, %v678, 0
        %v719 = vsel %vm687, %v679, 0
        %v722 = vsel %vm687, %v680, 0
        %v725 = vsel %vm687, %v681, 0
        %vm727 = vcmask 1043456
        %vm728 = vcmask 1044480
        %v729 = vsel %vm727, 4294967295, 65535
        %v730 = vsel %vm728, %v729, 0
        %v732 = vand.u32 %v686, %v730
        %734 = vmatprep.subr.bf16.mxu0 0
        %735 = vmatpush1.bf16.msra.mxu0 %v732
        %736 = vmatprep.subr.bf16.mxu0 0
        %737 = vmatpush1.bf16.msra.mxu0 0
        %738 = vmatprep.subr.bf16.mxu0 0
        %739 = vmatpush1.bf16.msra.mxu0 0
        %740 = vmatprep.subr.bf16.mxu0 0
        %741 = vmatpush1.bf16.msra.mxu0 0
        %742 = vmatprep.subr.bf16.mxu0 0
        %743 = vmatpush1.bf16.msra.mxu0 0
        %744 = vmatprep.subr.bf16.mxu0 0
        %745 = vmatpush1.bf16.msra.mxu0 0
        %746 = vmatprep.subr.bf16.mxu0 0
        %747 = vmatpush1.bf16.msra.mxu0 0
        %748 = vmatprep.subr.bf16.mxu0 0
        %749 = vmatpush1.bf16.msra.mxu0 0
        %750 = vmatprep.subr.bf16.mxu0 0
        %751 = vmatpush1.bf16.msra.mxu0 0
        %752 = vmatprep.subr.bf16.mxu0 0
        %753 = vmatpush1.bf16.msra.mxu0 0
        %754 = vmatprep.subr.bf16.mxu0 0
        %755 = vmatpush1.bf16.msra.mxu0 0
        %756 = vmatprep.subr.bf16.mxu0 0
        %757 = vmatpush1.bf16.msra.mxu0 0
        %758 = vmatprep.subr.bf16.mxu0 0
        %759 = vmatpush1.bf16.msra.mxu0 0
        %760 = vmatprep.subr.bf16.mxu0 0
        %761 = vmatpush1.bf16.msra.mxu0 0
        %762 = vmatprep.subr.bf16.mxu0 0
        %763 = vmatpush1.bf16.msra.mxu0 0
        %764 = vmatprep.subr.bf16.mxu0 0
        %765 = vmatpush1.bf16.msra.mxu0 0
        %766 = vmatprep.mubr.bf16.mxu0 0
        %767 = vmatmul.mubr.bf16.gmra.mrb[0].mxu0 %v689
        %v768 = vpop.f32.mrb[0].mxu0
        %v769 = vadd.f32 0.0, %v768
        %v770 = vpop.f32.mrb[0].mxu0
        %v771 = vpop.f32.mrb[0].mxu0
        %v772 = vadd.f32 0.0, %v771
        %v773 = vpop.f32.mrb[0].mxu0
        %774 = vmatprep.mubr.bf16.mxu0 0
        %775 = vmatmul.mubr.bf16.gmra.mrb[0].mxu0 %v692
        %v776 = vpop.f32.mrb[0].mxu0
        %v777 = vadd.f32 0.0, %v776
        %v778 = vpop.f32.mrb[0].mxu0
        %v779 = vpop.f32.mrb[0].mxu0
        %v780 = vadd.f32 0.0, %v779
        %v781 = vpop.f32.mrb[0].mxu0
        %782 = vmatprep.mubr.bf16.mxu0 0
        %783 = vmatmul.mubr.bf16.gmra.mrb[0].mxu0 %v695
        %v784 = vpop.f32.mrb[0].mxu0
        %v785 = vadd.f32 0.0, %v784
        %v786 = vpop.f32.mrb[0].mxu0
        %v787 = vpop.f32.mrb[0].mxu0
        %v788 = vadd.f32 0.0, %v787
        %v789 = vpop.f32.mrb[0].mxu0
        %790 = vmatprep.mubr.bf16.mxu0 0
        %791 = vmatmul.mubr.bf16.gmra.mrb[0].mxu0 %v698
        %v792 = vpop.f32.mrb[0].mxu0
        %v793 = vadd.f32 0.0, %v792
        %v794 = vpop.f32.mrb[0].mxu0
        %v795 = vpop.f32.mrb[0].mxu0
        %v796 = vadd.f32 0.0, %v795
        %v797 = vpop.f32.mrb[0].mxu0
        %798 = vmatprep.mubr.bf16.mxu0 0
        %799 = vmatmul.mubr.bf16.gmra.mrb[0].mxu0 %v701
        %v800 = vpop.f32.mrb[0].mxu0
        %v801 = vadd.f32 0.0, %v800
        %v802 = vpop.f32.mrb[0].mxu0
        %v803 = vpop.f32.mrb[0].mxu0
        %v804 = vadd.f32 0.0, %v803
        %v805 = vpop.f32.mrb[0].mxu0
        %806 = vmatprep.mubr.bf16.mxu0 0
        %807 = vmatmul.mubr.bf16.gmra.mrb[0].mxu0 %v704
        %v808 = vpop.f32.mrb[0].mxu0
        %v809 = vadd.f32 0.0, %v808
        %v810 = vpop.f32.mrb[0].mxu0
        %v811 = vpop.f32.mrb[0].mxu0
        %v812 = vadd.f32 0.0, %v811
        %v813 = vpop.f32.mrb[0].mxu0
        %814 = vmatprep.mubr.bf16.mxu0 0
        %815 = vmatmul.mubr.bf16.gmra.mrb[0].mxu0 %v707
        %v816 = vpop.f32.mrb[0].mxu0
        %v817 = vadd.f32 0.0, %v816
        %v818 = vpop.f32.mrb[0].mxu0
        %v819 = vpop.f32.mrb[0].mxu0
        %v820 = vadd.f32 0.0, %v819
        %v821 = vpop.f32.mrb[0].mxu0
        %822 = vmatprep.mubr.bf16.mxu0 0
        %823 = vmatmul.mubr.bf16.gmra.mrb[0].mxu0 %v710
        %v824 = vpop.f32.mrb[0].mxu0
        %v825 = vadd.f32 0.0, %v824
        %v826 = vpop.f32.mrb[0].mxu0
        %v827 = vpop.f32.mrb[0].mxu0
        %v828 = vadd.f32 0.0, %v827
        %v829 = vpop.f32.mrb[0].mxu0
        %830 = vmatprep.mubr.bf16.mxu0 0
        %831 = vmatmul.mubr.bf16.gmra.mrb[0].mxu0 %v713
        %v832 = vpop.f32.mrb[0].mxu0
        %v833 = vadd.f32 0.0, %v832
        %v834 = vpop.f32.mrb[0].mxu0
        %v835 = vpop.f32.mrb[0].mxu0
        %v836 = vadd.f32 0.0, %v835
        %v837 = vpop.f32.mrb[0].mxu0
        %838 = vmatprep.mubr.bf16.mxu0 0
        %839 = vmatmul.mubr.bf16.gmra.mrb[0].mxu0 %v716
        %v840 = vpop.f32.mrb[0].mxu0
        %v841 = vadd.f32 0.0, %v840
        %v842 = vpop.f32.mrb[0].mxu0
        %v843 = vpop.f32.mrb[0].mxu0
        %v844 = vadd.f32 0.0, %v843
        %v845 = vpop.f32.mrb[0].mxu0
        %846 = vmatprep.mubr.bf16.mxu0 0
        %847 = vmatmul.mubr.bf16.gmra.mrb[0].mxu0 %v719
        %v848 = vpop.f32.mrb[0].mxu0
        %v849 = vadd.f32 0.0, %v848
        %v850 = vpop.f32.mrb[0].mxu0
        %v851 = vpop.f32.mrb[0].mxu0
        %v852 = vadd.f32 0.0, %v851
        %v853 = vpop.f32.mrb[0].mxu0
        %854 = vmatprep.mubr.bf16.mxu0 0
        %855 = vmatmul.mubr.bf16.gmra.mrb[0].mxu0 %v722
        %v856 = vpop.f32.mrb[0].mxu0
        %v857 = vadd.f32 0.0, %v856
        %v858 = vpop.f32.mrb[0].mxu0
        %v859 = vpop.f32.mrb[0].mxu0
        %v860 = vadd.f32 0.0, %v859
        %v861 = vpop.f32.mrb[0].mxu0
        %862 = vmatprep.mubr.bf16.mxu0 0
        %863 = vmatmul.mubr.bf16.gmra.mrb[0].mxu0 %v725
        %v864 = vpop.f32.mrb[0].mxu0
        %v865 = vadd.f32 0.0, %v864
        %v866 = vpop.f32.mrb[0].mxu0
        %v867 = vpop.f32.mrb[0].mxu0
        %v868 = vadd.f32 0.0, %v867
        %v869 = vpop.f32.mrb[0].mxu0
        %870 = vdwg.mxu0
        %s871 = scalar_lea.vmem %s558, 104 [#allocation2]
        %v872 = vld [vmem:[%s871] sm:$0xf]
        %v873 = vld [vmem:[%s871 + $0x4] sm:$0xf]
        %v874 = vld [vmem:[%s871 + $0x8] sm:$0xf]
        %v875 = vld [vmem:[%s871 + $0xc] sm:$0xf]
        %v876 = vld [vmem:[%s871 + $0x10] sm:$0xf]
        %v877 = vld [vmem:[%s871 + $0x14] sm:$0xf]
        %v878 = vld [vmem:[%s871 + $0x18] sm:$0xf]
        %v879 = vld [vmem:[%s871 + $0x1c] sm:$0xf]
        %v880 = vld [vmem:[%s871 + $0x20] sm:$0xf]
        %v881 = vld [vmem:[%s871 + $0x24] sm:$0xf]
        %v882 = vld [vmem:[%s871 + $0x28] sm:$0xf]
        %v883 = vld [vmem:[%s871 + $0x2c] sm:$0xf]
        %v884 = vld [vmem:[%s871 + $0x30] sm:$0xf]
        %v885 = vld [vmem:[%s871 + $0x34] sm:$0xf]
        %v886 = vld [vmem:[%s871 + $0x38] sm:$0xf]
        %v887 = vld [vmem:[%s871 + $0x3c] sm:$0xf]
        %v888 = vld [vmem:[%s871 + $0x40] sm:$0xf]
        %v889 = vld [vmem:[%s871 + $0x44] sm:$0xf]
        %v890 = vld [vmem:[%s871 + $0x48] sm:$0xf]
        %v891 = vld [vmem:[%s871 + $0x4c] sm:$0xf]
        %v892 = vld [vmem:[%s871 + $0x50] sm:$0xf]
        %v893 = vld [vmem:[%s871 + $0x54] sm:$0xf]
        %v894 = vld [vmem:[%s871 + $0x58] sm:$0xf]
        %v895 = vld [vmem:[%s871 + $0x5c] sm:$0xf]
        %v896 = vld [vmem:[%s871 + $0x60] sm:$0xf]
        %v897 = vld [vmem:[%s871 + $0x64] sm:$0xf]
        %v924 = vunpack.c.l.b16 %v872
        %v925 = vunpack.c.l.b16 %v873
        %v926 = vunpack.c.l.b16 %v874
        %v927 = vunpack.c.l.b16 %v875
        %v928 = vunpack.c.l.b16 %v876
        %v929 = vunpack.c.l.b16 %v877
        %v930 = vunpack.c.l.b16 %v878
        %v931 = vunpack.c.l.b16 %v879
        %v932 = vunpack.c.l.b16 %v880
        %v933 = vunpack.c.l.b16 %v881
        %v934 = vunpack.c.l.b16 %v882
        %v935 = vunpack.c.l.b16 %v883
        %v936 = vunpack.c.l.b16 %v884
        %v937 = vunpack.c.l.b16 %v885
        %v938 = vunpack.c.l.b16 %v886
        %v939 = vunpack.c.l.b16 %v887
        %v940 = vunpack.c.l.b16 %v888
        %v941 = vunpack.c.l.b16 %v889
        %v942 = vunpack.c.l.b16 %v890
        %v943 = vunpack.c.l.b16 %v891
        %v944 = vunpack.c.l.b16 %v892
        %v945 = vunpack.c.l.b16 %v893
        %v946 = vunpack.c.l.b16 %v894
        %v947 = vunpack.c.l.b16 %v895
        %v948 = vunpack.c.l.b16 %v896
        %v949 = vunpack.c.l.b16 %v897
        %v950 = vpack.c.b16 %v925, %v924
        %v951 = vpack.c.b16 %v927, %v926
        %v952 = vpack.c.b16 %v929, %v928
        %v953 = vpack.c.b16 %v931, %v930
        %v954 = vpack.c.b16 %v933, %v932
        %v955 = vpack.c.b16 %v935, %v934
        %v956 = vpack.c.b16 %v937, %v936
        %v957 = vpack.c.b16 %v939, %v938
        %v958 = vpack.c.b16 %v941, %v940
        %v959 = vpack.c.b16 %v943, %v942
        %v960 = vpack.c.b16 %v945, %v944
        %v961 = vpack.c.b16 %v947, %v946
        %v962 = vpack.c.b16 %v949, %v948
        %v964 = vsel %vm687, %v950, 0
        %v967 = vsel %vm687, %v951, 0
        %v970 = vsel %vm687, %v952, 0
        %v973 = vsel %vm687, %v953, 0
        %v976 = vsel %vm687, %v954, 0
        %v979 = vsel %vm687, %v955, 0
        %v982 = vsel %vm687, %v956, 0
        %v985 = vsel %vm687, %v957, 0
        %v988 = vsel %vm687, %v958, 0
        %v991 = vsel %vm687, %v959, 0
        %v994 = vsel %vm687, %v960, 0
        %v997 = vsel %vm687, %v961, 0
        %v1000 = vsel %vm687, %v962, 0
        %1002 = vmatprep.subr.bf16.mxu0 0
        %1003 = vmatpush1.bf16.msra.mxu0 %v732
        %1004 = vmatprep.subr.bf16.mxu0 0
        %1005 = vmatpush1.bf16.msra.mxu0 0
        %1006 = vmatprep.subr.bf16.mxu0 0
        %1007 = vmatpush1.bf16.msra.mxu0 0
        %1008 = vmatprep.subr.bf16.mxu0 0
        %1009 = vmatpush1.bf16.msra.mxu0 0
        %1010 = vmatprep.subr.bf16.mxu0 0
        %1011 = vmatpush1.bf16.msra.mxu0 0
        %1012 = vmatprep.subr.bf16.mxu0 0
        %1013 = vmatpush1.bf16.msra.mxu0 0
        %1014 = vmatprep.subr.bf16.mxu0 0
        %1015 = vmatpush1.bf16.msra.mxu0 0
        %1016 = vmatprep.subr.bf16.mxu0 0
        %1017 = vmatpush1.bf16.msra.mxu0 0
        %1018 = vmatprep.subr.bf16.mxu0 0
        %1019 = vmatpush1.bf16.msra.mxu0 0
        %1020 = vmatprep.subr.bf16.mxu0 0
        %1021 = vmatpush1.bf16.msra.mxu0 0
        %1022 = vmatprep.subr.bf16.mxu0 0
        %1023 = vmatpush1.bf16.msra.mxu0 0
        %1024 = vmatprep.subr.bf16.mxu0 0
        %1025 = vmatpush1.bf16.msra.mxu0 0
        %1026 = vmatprep.subr.bf16.mxu0 0
        %1027 = vmatpush1.bf16.msra.mxu0 0
        %1028 = vmatprep.subr.bf16.mxu0 0
        %1029 = vmatpush1.bf16.msra.mxu0 0
        %1030 = vmatprep.subr.bf16.mxu0 0
        %1031 = vmatpush1.bf16.msra.mxu0 0
        %1032 = vmatprep.subr.bf16.mxu0 0
        %1033 = vmatpush1.bf16.msra.mxu0 0
        %1034 = vmatprep.mubr.bf16.mxu0 0
        %1035 = vmatmul.mubr.bf16.gmra.mrb[0].mxu0 %v964
        %v1036 = vpop.f32.mrb[0].mxu0
        %v1037 = vadd.f32 0.0, %v1036
        %v1038 = vpop.f32.mrb[0].mxu0
        %v1039 = vpop.f32.mrb[0].mxu0
        %v1040 = vadd.f32 0.0, %v1039
        %v1041 = vpop.f32.mrb[0].mxu0
        %1042 = vmatprep.mubr.bf16.mxu0 0
        %1043 = vmatmul.mubr.bf16.gmra.mrb[0].mxu0 %v967
        %v1044 = vpop.f32.mrb[0].mxu0
        %v1045 = vadd.f32 0.0, %v1044
        %v1046 = vpop.f32.mrb[0].mxu0
        %v1047 = vpop.f32.mrb[0].mxu0
        %v1048 = vadd.f32 0.0, %v1047
        %v1049 = vpop.f32.mrb[0].mxu0
        %1050 = vmatprep.mubr.bf16.mxu0 0
        %1051 = vmatmul.mubr.bf16.gmra.mrb[0].mxu0 %v970
        %v1052 = vpop.f32.mrb[0].mxu0
        %v1053 = vadd.f32 0.0, %v1052
        %v1054 = vpop.f32.mrb[0].mxu0
        %v1055 = vpop.f32.mrb[0].mxu0
        %v1056 = vadd.f32 0.0, %v1055
        %v1057 = vpop.f32.mrb[0].mxu0
        %1058 = vmatprep.mubr.bf16.mxu0 0
        %1059 = vmatmul.mubr.bf16.gmra.mrb[0].mxu0 %v973
        %v1060 = vpop.f32.mrb[0].mxu0
        %v1061 = vadd.f32 0.0, %v1060
        %v1062 = vpop.f32.mrb[0].mxu0
        %v1063 = vpop.f32.mrb[0].mxu0
        %v1064 = vadd.f32 0.0, %v1063
        %v1065 = vpop.f32.mrb[0].mxu0
        %1066 = vmatprep.mubr.bf16.mxu0 0
        %1067 = vmatmul.mubr.bf16.gmra.mrb[0].mxu0 %v976
        %v1068 = vpop.f32.mrb[0].mxu0
        %v1069 = vadd.f32 0.0, %v1068
        %v1070 = vpop.f32.mrb[0].mxu0
        %v1071 = vpop.f32.mrb[0].mxu0
        %v1072 = vadd.f32 0.0, %v1071
        %v1073 = vpop.f32.mrb[0].mxu0
        %1074 = vmatprep.mubr.bf16.mxu0 0
        %1075 = vmatmul.mubr.bf16.gmra.mrb[0].mxu0 %v979
        %v1076 = vpop.f32.mrb[0].mxu0
        %v1077 = vadd.f32 0.0, %v1076
        %v1078 = vpop.f32.mrb[0].mxu0
        %v1079 = vpop.f32.mrb[0].mxu0
        %v1080 = vadd.f32 0.0, %v1079
        %v1081 = vpop.f32.mrb[0].mxu0
        %1082 = vmatprep.mubr.bf16.mxu0 0
        %1083 = vmatmul.mubr.bf16.gmra.mrb[0].mxu0 %v982
        %v1084 = vpop.f32.mrb[0].mxu0
        %v1085 = vadd.f32 0.0, %v1084
        %v1086 = vpop.f32.mrb[0].mxu0
        %v1087 = vpop.f32.mrb[0].mxu0
        %v1088 = vadd.f32 0.0, %v1087
        %v1089 = vpop.f32.mrb[0].mxu0
        %1090 = vmatprep.mubr.bf16.mxu0 0
        %1091 = vmatmul.mubr.bf16.gmra.mrb[0].mxu0 %v985
        %v1092 = vpop.f32.mrb[0].mxu0
        %v1093 = vadd.f32 0.0, %v1092
        %v1094 = vpop.f32.mrb[0].mxu0
        %v1095 = vpop.f32.mrb[0].mxu0
        %v1096 = vadd.f32 0.0, %v1095
        %v1097 = vpop.f32.mrb[0].mxu0
        %1098 = vmatprep.mubr.bf16.mxu0 0
        %1099 = vmatmul.mubr.bf16.gmra.mrb[0].mxu0 %v988
        %v1100 = vpop.f32.mrb[0].mxu0
        %v1101 = vadd.f32 0.0, %v1100
        %v1102 = vpop.f32.mrb[0].mxu0
        %v1103 = vpop.f32.mrb[0].mxu0
        %v1104 = vadd.f32 0.0, %v1103
        %v1105 = vpop.f32.mrb[0].mxu0
        %1106 = vmatprep.mubr.bf16.mxu0 0
        %1107 = vmatmul.mubr.bf16.gmra.mrb[0].mxu0 %v991
        %v1108 = vpop.f32.mrb[0].mxu0
        %v1109 = vadd.f32 0.0, %v1108
        %v1110 = vpop.f32.mrb[0].mxu0
        %v1111 = vpop.f32.mrb[0].mxu0
        %v1112 = vadd.f32 0.0, %v1111
        %v1113 = vpop.f32.mrb[0].mxu0
        %1114 = vmatprep.mubr.bf16.mxu0 0
        %1115 = vmatmul.mubr.bf16.gmra.mrb[0].mxu0 %v994
        %v1116 = vpop.f32.mrb[0].mxu0
        %v1117 = vadd.f32 0.0, %v1116
        %v1118 = vpop.f32.mrb[0].mxu0
        %v1119 = vpop.f32.mrb[0].mxu0
        %v1120 = vadd.f32 0.0, %v1119
        %v1121 = vpop.f32.mrb[0].mxu0
        %1122 = vmatprep.mubr.bf16.mxu0 0
        %1123 = vmatmul.mubr.bf16.gmra.mrb[0].mxu0 %v997
        %v1124 = vpop.f32.mrb[0].mxu0
        %v1125 = vadd.f32 0.0, %v1124
        %v1126 = vpop.f32.mrb[0].mxu0
        %v1127 = vpop.f32.mrb[0].mxu0
        %v1128 = vadd.f32 0.0, %v1127
        %v1129 = vpop.f32.mrb[0].mxu0
        %1130 = vmatprep.mubr.bf16.mxu0 0
        %1131 = vmatmul.mubr.bf16.gmra.mrb[0].mxu0 %v1000
        %v1132 = vpop.f32.mrb[0].mxu0
        %v1133 = vadd.f32 0.0, %v1132
        %v1134 = vpop.f32.mrb[0].mxu0
        %v1135 = vpop.f32.mrb[0].mxu0
        %v1136 = vadd.f32 0.0, %v1135
        %v1137 = vpop.f32.mrb[0].mxu0
        %1138 = vdwg.mxu0
        %v1139 = vmax.f32 %v769, %v1037
        %v1140 = vmax.f32 %v772, %v1040
        %v1141 = vmax.f32 %v777, %v1045
        %v1142 = vmax.f32 %v780, %v1048
        %v1143 = vmax.f32 %v785, %v1053
        %v1144 = vmax.f32 %v788, %v1056
        %v1145 = vmax.f32 %v793, %v1061
        %v1146 = vmax.f32 %v796, %v1064
        %v1147 = vmax.f32 %v801, %v1069
        %v1148 = vmax.f32 %v804, %v1072
        %v1149 = vmax.f32 %v809, %v1077
        %v1150 = vmax.f32 %v812, %v1080
        %v1151 = vmax.f32 %v817, %v1085
        %v1152 = vmax.f32 %v820, %v1088
        %v1153 = vmax.f32 %v825, %v1093
        %v1154 = vmax.f32 %v828, %v1096
        %v1155 = vmax.f32 %v833, %v1101
        %v1156 = vmax.f32 %v836, %v1104
        %v1157 = vmax.f32 %v841, %v1109
        %v1158 = vmax.f32 %v844, %v1112
        %v1159 = vmax.f32 %v849, %v1117
        %v1160 = vmax.f32 %v852, %v1120
        %v1161 = vmax.f32 %v857, %v1125
        %v1162 = vmax.f32 %v860, %v1128
        %v1163 = vmax.f32 %v865, %v1133
        %v1164 = vmax.f32 %v868, %v1136
        %s1165 = scalar_lea.vmem %s558, 208 [#allocation2]
        %v1166 = vld [vmem:[%s1165] sm:$0xf]
        %v1167 = vld [vmem:[%s1165 + $0x4] sm:$0xf]
        %v1168 = vld [vmem:[%s1165 + $0x8] sm:$0xf]
        %v1169 = vld [vmem:[%s1165 + $0xc] sm:$0xf]
        %v1170 = vld [vmem:[%s1165 + $0x10] sm:$0xf]
        %v1171 = vld [vmem:[%s1165 + $0x14] sm:$0xf]
        %v1172 = vld [vmem:[%s1165 + $0x18] sm:$0xf]
        %v1173 = vld [vmem:[%s1165 + $0x1c] sm:$0xf]
        %v1174 = vld [vmem:[%s1165 + $0x20] sm:$0xf]
        %v1175 = vld [vmem:[%s1165 + $0x24] sm:$0xf]
        %v1176 = vld [vmem:[%s1165 + $0x28] sm:$0xf]
        %v1177 = vld [vmem:[%s1165 + $0x2c] sm:$0xf]
        %v1178 = vld [vmem:[%s1165 + $0x30] sm:$0xf]
        %v1179 = vld [vmem:[%s1165 + $0x34] sm:$0xf]
        %v1180 = vld [vmem:[%s1165 + $0x38] sm:$0xf]
        %v1181 = vld [vmem:[%s1165 + $0x3c] sm:$0xf]
        %v1182 = vld [vmem:[%s1165 + $0x40] sm:$0xf]
        %v1183 = vld [vmem:[%s1165 + $0x44] sm:$0xf]
        %v1184 = vld [vmem:[%s1165 + $0x48] sm:$0xf]
        %v1185 = vld [vmem:[%s1165 + $0x4c] sm:$0xf]
        %v1186 = vld [vmem:[%s1165 + $0x50] sm:$0xf]
        %v1187 = vld [vmem:[%s1165 + $0x54] sm:$0xf]
        %v1188 = vld [vmem:[%s1165 + $0x58] sm:$0xf]
        %v1189 = vld [vmem:[%s1165 + $0x5c] sm:$0xf]
        %v1190 = vld [vmem:[%s1165 + $0x60] sm:$0xf]
        %v1191 = vld [vmem:[%s1165 + $0x64] sm:$0xf]
        %v1218 = vunpack.c.l.b16 %v1166
        %v1219 = vunpack.c.l.b16 %v1167
        %v1220 = vunpack.c.l.b16 %v1168
        %v1221 = vunpack.c.l.b16 %v1169
        %v1222 = vunpack.c.l.b16 %v1170
        %v1223 = vunpack.c.l.b16 %v1171
        %v1224 = vunpack.c.l.b16 %v1172
        %v1225 = vunpack.c.l.b16 %v1173
        %v1226 = vunpack.c.l.b16 %v1174
        %v1227 = vunpack.c.l.b16 %v1175
        %v1228 = vunpack.c.l.b16 %v1176
        %v1229 = vunpack.c.l.b16 %v1177
        %v1230 = vunpack.c.l.b16 %v1178
        %v1231 = vunpack.c.l.b16 %v1179
        %v1232 = vunpack.c.l.b16 %v1180
        %v1233 = vunpack.c.l.b16 %v1181
        %v1234 = vunpack.c.l.b16 %v1182
        %v1235 = vunpack.c.l.b16 %v1183
        %v1236 = vunpack.c.l.b16 %v1184
        %v1237 = vunpack.c.l.b16 %v1185
        %v1238 = vunpack.c.l.b16 %v1186
        %v1239 = vunpack.c.l.b16 %v1187
        %v1240 = vunpack.c.l.b16 %v1188
        %v1241 = vunpack.c.l.b16 %v1189
        %v1242 = vunpack.c.l.b16 %v1190
        %v1243 = vunpack.c.l.b16 %v1191
        %v1244 = vpack.c.b16 %v1219, %v1218
        %v1245 = vpack.c.b16 %v1221, %v1220
        %v1246 = vpack.c.b16 %v1223, %v1222
        %v1247 = vpack.c.b16 %v1225, %v1224
        %v1248 = vpack.c.b16 %v1227, %v1226
        %v1249 = vpack.c.b16 %v1229, %v1228
        %v1250 = vpack.c.b16 %v1231, %v1230
        %v1251 = vpack.c.b16 %v1233, %v1232
        %v1252 = vpack.c.b16 %v1235, %v1234
        %v1253 = vpack.c.b16 %v1237, %v1236
        %v1254 = vpack.c.b16 %v1239, %v1238
        %v1255 = vpack.c.b16 %v1241, %v1240
        %v1256 = vpack.c.b16 %v1243, %v1242
        %v1258 = vsel %vm687, %v1244, 0
        %v1261 = vsel %vm687, %v1245, 0
        %v1264 = vsel %vm687, %v1246, 0
        %v1267 = vsel %vm687, %v1247, 0
        %v1270 = vsel %vm687, %v1248, 0
        %v1273 = vsel %vm687, %v1249, 0
        %v1276 = vsel %vm687, %v1250, 0
        %v1279 = vsel %vm687, %v1251, 0
        %v1282 = vsel %vm687, %v1252, 0
        %v1285 = vsel %vm687, %v1253, 0
        %v1288 = vsel %vm687, %v1254, 0
        %v1291 = vsel %vm687, %v1255, 0
        %v1294 = vsel %vm687, %v1256, 0
        %1296 = vmatprep.subr.bf16.mxu0 0
        %1297 = vmatpush1.bf16.msra.mxu0 %v732
        %1298 = vmatprep.subr.bf16.mxu0 0
        %1299 = vmatpush1.bf16.msra.mxu0 0
        %1300 = vmatprep.subr.bf16.mxu0 0
        %1301 = vmatpush1.bf16.msra.mxu0 0
        %1302 = vmatprep.subr.bf16.mxu0 0
        %1303 = vmatpush1.bf16.msra.mxu0 0
        %1304 = vmatprep.subr.bf16.mxu0 0
        %1305 = vmatpush1.bf16.msra.mxu0 0
        %1306 = vmatprep.subr.bf16.mxu0 0
        %1307 = vmatpush1.bf16.msra.mxu0 0
        %1308 = vmatprep.subr.bf16.mxu0 0
        %1309 = vmatpush1.bf16.msra.mxu0 0
        %1310 = vmatprep.subr.bf16.mxu0 0
        %1311 = vmatpush1.bf16.msra.mxu0 0
        %1312 = vmatprep.subr.bf16.mxu0 0
        %1313 = vmatpush1.bf16.msra.mxu0 0
        %1314 = vmatprep.subr.bf16.mxu0 0
        %1315 = vmatpush1.bf16.msra.mxu0 0
        %1316 = vmatprep.subr.bf16.mxu0 0
        %1317 = vmatpush1.bf16.msra.mxu0 0
        %1318 = vmatprep.subr.bf16.mxu0 0
        %1319 = vmatpush1.bf16.msra.mxu0 0
        %1320 = vmatprep.subr.bf16.mxu0 0
        %1321 = vmatpush1.bf16.msra.mxu0 0
        %1322 = vmatprep.subr.bf16.mxu0 0
        %1323 = vmatpush1.bf16.msra.mxu0 0
        %1324 = vmatprep.subr.bf16.mxu0 0
        %1325 = vmatpush1.bf16.msra.mxu0 0
        %1326 = vmatprep.subr.bf16.mxu0 0
        %1327 = vmatpush1.bf16.msra.mxu0 0
        %1328 = vmatprep.mubr.bf16.mxu0 0
        %1329 = vmatmul.mubr.bf16.gmra.mrb[0].mxu0 %v1258
        %v1330 = vpop.f32.mrb[0].mxu0
        %v1331 = vadd.f32 0.0, %v1330
        %v1332 = vpop.f32.mrb[0].mxu0
        %v1333 = vpop.f32.mrb[0].mxu0
        %v1334 = vadd.f32 0.0, %v1333
        %v1335 = vpop.f32.mrb[0].mxu0
        %1336 = vmatprep.mubr.bf16.mxu0 0
        %1337 = vmatmul.mubr.bf16.gmra.mrb[0].mxu0 %v1261
        %v1338 = vpop.f32.mrb[0].mxu0
        %v1339 = vadd.f32 0.0, %v1338
        %v1340 = vpop.f32.mrb[0].mxu0
        %v1341 = vpop.f32.mrb[0].mxu0
        %v1342 = vadd.f32 0.0, %v1341
        %v1343 = vpop.f32.mrb[0].mxu0
        %1344 = vmatprep.mubr.bf16.mxu0 0
        %1345 = vmatmul.mubr.bf16.gmra.mrb[0].mxu0 %v1264
        %v1346 = vpop.f32.mrb[0].mxu0
        %v1347 = vadd.f32 0.0, %v1346
        %v1348 = vpop.f32.mrb[0].mxu0
        %v1349 = vpop.f32.mrb[0].mxu0
        %v1350 = vadd.f32 0.0, %v1349
        %v1351 = vpop.f32.mrb[0].mxu0
        %1352 = vmatprep.mubr.bf16.mxu0 0
        %1353 = vmatmul.mubr.bf16.gmra.mrb[0].mxu0 %v1267
        %v1354 = vpop.f32.mrb[0].mxu0
        %v1355 = vadd.f32 0.0, %v1354
        %v1356 = vpop.f32.mrb[0].mxu0
        %v1357 = vpop.f32.mrb[0].mxu0
        %v1358 = vadd.f32 0.0, %v1357
        %v1359 = vpop.f32.mrb[0].mxu0
        %1360 = vmatprep.mubr.bf16.mxu0 0
        %1361 = vmatmul.mubr.bf16.gmra.mrb[0].mxu0 %v1270
        %v1362 = vpop.f32.mrb[0].mxu0
        %v1363 = vadd.f32 0.0, %v1362
        %v1364 = vpop.f32.mrb[0].mxu0
        %v1365 = vpop.f32.mrb[0].mxu0
        %v1366 = vadd.f32 0.0, %v1365
        %v1367 = vpop.f32.mrb[0].mxu0
        %1368 = vmatprep.mubr.bf16.mxu0 0
        %1369 = vmatmul.mubr.bf16.gmra.mrb[0].mxu0 %v1273
        %v1370 = vpop.f32.mrb[0].mxu0
        %v1371 = vadd.f32 0.0, %v1370
        %v1372 = vpop.f32.mrb[0].mxu0
        %v1373 = vpop.f32.mrb[0].mxu0
        %v1374 = vadd.f32 0.0, %v1373
        %v1375 = vpop.f32.mrb[0].mxu0
        %1376 = vmatprep.mubr.bf16.mxu0 0
        %1377 = vmatmul.mubr.bf16.gmra.mrb[0].mxu0 %v1276
        %v1378 = vpop.f32.mrb[0].mxu0
        %v1379 = vadd.f32 0.0, %v1378
        %v1380 = vpop.f32.mrb[0].mxu0
        %v1381 = vpop.f32.mrb[0].mxu0
        %v1382 = vadd.f32 0.0, %v1381
        %v1383 = vpop.f32.mrb[0].mxu0
        %1384 = vmatprep.mubr.bf16.mxu0 0
        %1385 = vmatmul.mubr.bf16.gmra.mrb[0].mxu0 %v1279
        %v1386 = vpop.f32.mrb[0].mxu0
        %v1387 = vadd.f32 0.0, %v1386
        %v1388 = vpop.f32.mrb[0].mxu0
        %v1389 = vpop.f32.mrb[0].mxu0
        %v1390 = vadd.f32 0.0, %v1389
        %v1391 = vpop.f32.mrb[0].mxu0
        %1392 = vmatprep.mubr.bf16.mxu0 0
        %1393 = vmatmul.mubr.bf16.gmra.mrb[0].mxu0 %v1282
        %v1394 = vpop.f32.mrb[0].mxu0
        %v1395 = vadd.f32 0.0, %v1394
        %v1396 = vpop.f32.mrb[0].mxu0
        %v1397 = vpop.f32.mrb[0].mxu0
        %v1398 = vadd.f32 0.0, %v1397
        %v1399 = vpop.f32.mrb[0].mxu0
        %1400 = vmatprep.mubr.bf16.mxu0 0
        %1401 = vmatmul.mubr.bf16.gmra.mrb[0].mxu0 %v1285
        %v1402 = vpop.f32.mrb[0].mxu0
        %v1403 = vadd.f32 0.0, %v1402
        %v1404 = vpop.f32.mrb[0].mxu0
        %v1405 = vpop.f32.mrb[0].mxu0
        %v1406 = vadd.f32 0.0, %v1405
        %v1407 = vpop.f32.mrb[0].mxu0
        %1408 = vmatprep.mubr.bf16.mxu0 0
        %1409 = vmatmul.mubr.bf16.gmra.mrb[0].mxu0 %v1288
        %v1410 = vpop.f32.mrb[0].mxu0
        %v1411 = vadd.f32 0.0, %v1410
        %v1412 = vpop.f32.mrb[0].mxu0
        %v1413 = vpop.f32.mrb[0].mxu0
        %v1414 = vadd.f32 0.0, %v1413
        %v1415 = vpop.f32.mrb[0].mxu0
        %1416 = vmatprep.mubr.bf16.mxu0 0
        %1417 = vmatmul.mubr.bf16.gmra.mrb[0].mxu0 %v1291
        %v1418 = vpop.f32.mrb[0].mxu0
        %v1419 = vadd.f32 0.0, %v1418
        %v1420 = vpop.f32.mrb[0].mxu0
        %v1421 = vpop.f32.mrb[0].mxu0
        %v1422 = vadd.f32 0.0, %v1421
        %v1423 = vpop.f32.mrb[0].mxu0
        %1424 = vmatprep.mubr.bf16.mxu0 0
        %1425 = vmatmul.mubr.bf16.gmra.mrb[0].mxu0 %v1294
        %v1426 = vpop.f32.mrb[0].mxu0
        %v1427 = vadd.f32 0.0, %v1426
        %v1428 = vpop.f32.mrb[0].mxu0
        %v1429 = vpop.f32.mrb[0].mxu0
        %v1430 = vadd.f32 0.0, %v1429
        %v1431 = vpop.f32.mrb[0].mxu0
        %1432 = vdwg.mxu0
        %v1433 = vmax.f32 %v1139, %v1331
        %v1434 = vmax.f32 %v1140, %v1334
        %v1435 = vmax.f32 %v1141, %v1339
        %v1436 = vmax.f32 %v1142, %v1342
        %v1437 = vmax.f32 %v1143, %v1347
        %v1438 = vmax.f32 %v1144, %v1350
        %v1439 = vmax.f32 %v1145, %v1355
        %v1440 = vmax.f32 %v1146, %v1358
        %v1441 = vmax.f32 %v1147, %v1363
        %v1442 = vmax.f32 %v1148, %v1366
        %v1443 = vmax.f32 %v1149, %v1371
        %v1444 = vmax.f32 %v1150, %v1374
        %v1445 = vmax.f32 %v1151, %v1379
        %v1446 = vmax.f32 %v1152, %v1382
        %v1447 = vmax.f32 %v1153, %v1387
        %v1448 = vmax.f32 %v1154, %v1390
        %v1449 = vmax.f32 %v1155, %v1395
        %v1450 = vmax.f32 %v1156, %v1398
        %v1451 = vmax.f32 %v1157, %v1403
        %v1452 = vmax.f32 %v1158, %v1406
        %v1453 = vmax.f32 %v1159, %v1411
        %v1454 = vmax.f32 %v1160, %v1414
        %v1455 = vmax.f32 %v1161, %v1419
        %v1456 = vmax.f32 %v1162, %v1422
        %v1457 = vmax.f32 %v1163, %v1427
        %v1458 = vmax.f32 %v1164, %v1430
        %s1459 = scalar_lea.vmem %s558, 312 [#allocation2]
        %v1460 = vld [vmem:[%s1459] sm:$0xf]
        %v1461 = vld [vmem:[%s1459 + $0x4] sm:$0xf]
        %v1462 = vld [vmem:[%s1459 + $0x8] sm:$0xf]
        %v1463 = vld [vmem:[%s1459 + $0xc] sm:$0xf]
        %v1464 = vld [vmem:[%s1459 + $0x10] sm:$0xf]
        %v1465 = vld [vmem:[%s1459 + $0x14] sm:$0xf]
        %v1466 = vld [vmem:[%s1459 + $0x18] sm:$0xf]
        %v1467 = vld [vmem:[%s1459 + $0x1c] sm:$0xf]
        %v1468 = vld [vmem:[%s1459 + $0x20] sm:$0xf]
        %v1469 = vld [vmem:[%s1459 + $0x24] sm:$0xf]
        %v1470 = vld [vmem:[%s1459 + $0x28] sm:$0xf]
        %v1471 = vld [vmem:[%s1459 + $0x2c] sm:$0xf]
        %v1472 = vld [vmem:[%s1459 + $0x30] sm:$0xf]
        %v1473 = vld [vmem:[%s1459 + $0x34] sm:$0xf]
        %v1474 = vld [vmem:[%s1459 + $0x38] sm:$0xf]
        %v1475 = vld [vmem:[%s1459 + $0x3c] sm:$0xf]
        %v1476 = vld [vmem:[%s1459 + $0x40] sm:$0xf]
        %v1477 = vld [vmem:[%s1459 + $0x44] sm:$0xf]
        %v1478 = vld [vmem:[%s1459 + $0x48] sm:$0xf]
        %v1479 = vld [vmem:[%s1459 + $0x4c] sm:$0xf]
        %v1480 = vld [vmem:[%s1459 + $0x50] sm:$0xf]
        %v1481 = vld [vmem:[%s1459 + $0x54] sm:$0xf]
        %v1482 = vld [vmem:[%s1459 + $0x58] sm:$0xf]
        %v1483 = vld [vmem:[%s1459 + $0x5c] sm:$0xf]
        %v1484 = vld [vmem:[%s1459 + $0x60] sm:$0xf]
        %v1485 = vld [vmem:[%s1459 + $0x64] sm:$0xf]
        %v1512 = vunpack.c.l.b16 %v1460
        %v1513 = vunpack.c.l.b16 %v1461
        %v1514 = vunpack.c.l.b16 %v1462
        %v1515 = vunpack.c.l.b16 %v1463
        %v1516 = vunpack.c.l.b16 %v1464
        %v1517 = vunpack.c.l.b16 %v1465
        %v1518 = vunpack.c.l.b16 %v1466
        %v1519 = vunpack.c.l.b16 %v1467
        %v1520 = vunpack.c.l.b16 %v1468
        %v1521 = vunpack.c.l.b16 %v1469
        %v1522 = vunpack.c.l.b16 %v1470
        %v1523 = vunpack.c.l.b16 %v1471
        %v1524 = vunpack.c.l.b16 %v1472
        %v1525 = vunpack.c.l.b16 %v1473
        %v1526 = vunpack.c.l.b16 %v1474
        %v1527 = vunpack.c.l.b16 %v1475
        %v1528 = vunpack.c.l.b16 %v1476
        %v1529 = vunpack.c.l.b16 %v1477
        %v1530 = vunpack.c.l.b16 %v1478
        %v1531 = vunpack.c.l.b16 %v1479
        %v1532 = vunpack.c.l.b16 %v1480
        %v1533 = vunpack.c.l.b16 %v1481
        %v1534 = vunpack.c.l.b16 %v1482
        %v1535 = vunpack.c.l.b16 %v1483
        %v1536 = vunpack.c.l.b16 %v1484
        %v1537 = vunpack.c.l.b16 %v1485
        %v1538 = vpack.c.b16 %v1513, %v1512
        %v1539 = vpack.c.b16 %v1515, %v1514
        %v1540 = vpack.c.b16 %v1517, %v1516
        %v1541 = vpack.c.b16 %v1519, %v1518
        %v1542 = vpack.c.b16 %v1521, %v1520
        %v1543 = vpack.c.b16 %v1523, %v1522
        %v1544 = vpack.c.b16 %v1525, %v1524
        %v1545 = vpack.c.b16 %v1527, %v1526
        %v1546 = vpack.c.b16 %v1529, %v1528
        %v1547 = vpack.c.b16 %v1531, %v1530
        %v1548 = vpack.c.b16 %v1533, %v1532
        %v1549 = vpack.c.b16 %v1535, %v1534
        %v1550 = vpack.c.b16 %v1537, %v1536
        %v1552 = vsel %vm687, %v1538, 0
        %v1555 = vsel %vm687, %v1539, 0
        %v1558 = vsel %vm687, %v1540, 0
        %v1561 = vsel %vm687, %v1541, 0
        %v1564 = vsel %vm687, %v1542, 0
        %v1567 = vsel %vm687, %v1543, 0
        %v1570 = vsel %vm687, %v1544, 0
        %v1573 = vsel %vm687, %v1545, 0
        %v1576 = vsel %vm687, %v1546, 0
        %v1579 = vsel %vm687, %v1547, 0
        %v1582 = vsel %vm687, %v1548, 0
        %v1585 = vsel %vm687, %v1549, 0
        %v1588 = vsel %vm687, %v1550, 0
        %1590 = vmatprep.subr.bf16.mxu0 0
        %1591 = vmatpush1.bf16.msra.mxu0 %v732
        %1592 = vmatprep.subr.bf16.mxu0 0
        %1593 = vmatpush1.bf16.msra.mxu0 0
        %1594 = vmatprep.subr.bf16.mxu0 0
        %1595 = vmatpush1.bf16.msra.mxu0 0
        %1596 = vmatprep.subr.bf16.mxu0 0
        %1597 = vmatpush1.bf16.msra.mxu0 0
        %1598 = vmatprep.subr.bf16.mxu0 0
        %1599 = vmatpush1.bf16.msra.mxu0 0
        %1600 = vmatprep.subr.bf16.mxu0 0
        %1601 = vmatpush1.bf16.msra.mxu0 0
        %1602 = vmatprep.subr.bf16.mxu0 0
        %1603 = vmatpush1.bf16.msra.mxu0 0
        %1604 = vmatprep.subr.bf16.mxu0 0
        %1605 = vmatpush1.bf16.msra.mxu0 0
        %1606 = vmatprep.subr.bf16.mxu0 0
        %1607 = vmatpush1.bf16.msra.mxu0 0
        %1608 = vmatprep.subr.bf16.mxu0 0
        %1609 = vmatpush1.bf16.msra.mxu0 0
        %1610 = vmatprep.subr.bf16.mxu0 0
        %1611 = vmatpush1.bf16.msra.mxu0 0
        %1612 = vmatprep.subr.bf16.mxu0 0
        %1613 = vmatpush1.bf16.msra.mxu0 0
        %1614 = vmatprep.subr.bf16.mxu0 0
        %1615 = vmatpush1.bf16.msra.mxu0 0
        %1616 = vmatprep.subr.bf16.mxu0 0
        %1617 = vmatpush1.bf16.msra.mxu0 0
        %1618 = vmatprep.subr.bf16.mxu0 0
        %1619 = vmatpush1.bf16.msra.mxu0 0
        %1620 = vmatprep.subr.bf16.mxu0 0
        %1621 = vmatpush1.bf16.msra.mxu0 0
        %1622 = vmatprep.mubr.bf16.mxu0 0
        %1623 = vmatmul.mubr.bf16.gmra.mrb[0].mxu0 %v1552
        %v1624 = vpop.f32.mrb[0].mxu0
        %v1625 = vadd.f32 0.0, %v1624
        %v1626 = vpop.f32.mrb[0].mxu0
        %v1627 = vpop.f32.mrb[0].mxu0
        %v1628 = vadd.f32 0.0, %v1627
        %v1629 = vpop.f32.mrb[0].mxu0
        %1630 = vmatprep.mubr.bf16.mxu0 0
        %1631 = vmatmul.mubr.bf16.gmra.mrb[0].mxu0 %v1555
        %v1632 = vpop.f32.mrb[0].mxu0
        %v1633 = vadd.f32 0.0, %v1632
        %v1634 = vpop.f32.mrb[0].mxu0
        %v1635 = vpop.f32.mrb[0].mxu0
        %v1636 = vadd.f32 0.0, %v1635
        %v1637 = vpop.f32.mrb[0].mxu0
        %1638 = vmatprep.mubr.bf16.mxu0 0
        %1639 = vmatmul.mubr.bf16.gmra.mrb[0].mxu0 %v1558
        %v1640 = vpop.f32.mrb[0].mxu0
        %v1641 = vadd.f32 0.0, %v1640
        %v1642 = vpop.f32.mrb[0].mxu0
        %v1643 = vpop.f32.mrb[0].mxu0
        %v1644 = vadd.f32 0.0, %v1643
        %v1645 = vpop.f32.mrb[0].mxu0
        %1646 = vmatprep.mubr.bf16.mxu0 0
        %1647 = vmatmul.mubr.bf16.gmra.mrb[0].mxu0 %v1561
        %v1648 = vpop.f32.mrb[0].mxu0
        %v1649 = vadd.f32 0.0, %v1648
        %v1650 = vpop.f32.mrb[0].mxu0
        %v1651 = vpop.f32.mrb[0].mxu0
        %v1652 = vadd.f32 0.0, %v1651
        %v1653 = vpop.f32.mrb[0].mxu0
        %1654 = vmatprep.mubr.bf16.mxu0 0
        %1655 = vmatmul.mubr.bf16.gmra.mrb[0].mxu0 %v1564
        %v1656 = vpop.f32.mrb[0].mxu0
        %v1657 = vadd.f32 0.0, %v1656
        %v1658 = vpop.f32.mrb[0].mxu0
        %v1659 = vpop.f32.mrb[0].mxu0
        %v1660 = vadd.f32 0.0, %v1659
        %v1661 = vpop.f32.mrb[0].mxu0
        %1662 = vmatprep.mubr.bf16.mxu0 0
        %1663 = vmatmul.mubr.bf16.gmra.mrb[0].mxu0 %v1567
        %v1664 = vpop.f32.mrb[0].mxu0
        %v1665 = vadd.f32 0.0, %v1664
        %v1666 = vpop.f32.mrb[0].mxu0
        %v1667 = vpop.f32.mrb[0].mxu0
        %v1668 = vadd.f32 0.0, %v1667
        %v1669 = vpop.f32.mrb[0].mxu0
        %1670 = vmatprep.mubr.bf16.mxu0 0
        %1671 = vmatmul.mubr.bf16.gmra.mrb[0].mxu0 %v1570
        %v1672 = vpop.f32.mrb[0].mxu0
        %v1673 = vadd.f32 0.0, %v1672
        %v1674 = vpop.f32.mrb[0].mxu0
        %v1675 = vpop.f32.mrb[0].mxu0
        %v1676 = vadd.f32 0.0, %v1675
        %v1677 = vpop.f32.mrb[0].mxu0
        %1678 = vmatprep.mubr.bf16.mxu0 0
        %1679 = vmatmul.mubr.bf16.gmra.mrb[0].mxu0 %v1573
        %v1680 = vpop.f32.mrb[0].mxu0
        %v1681 = vadd.f32 0.0, %v1680
        %v1682 = vpop.f32.mrb[0].mxu0
        %v1683 = vpop.f32.mrb[0].mxu0
        %v1684 = vadd.f32 0.0, %v1683
        %v1685 = vpop.f32.mrb[0].mxu0
        %1686 = vmatprep.mubr.bf16.mxu0 0
        %1687 = vmatmul.mubr.bf16.gmra.mrb[0].mxu0 %v1576
        %v1688 = vpop.f32.mrb[0].mxu0
        %v1689 = vadd.f32 0.0, %v1688
        %v1690 = vpop.f32.mrb[0].mxu0
        %v1691 = vpop.f32.mrb[0].mxu0
        %v1692 = vadd.f32 0.0, %v1691
        %v1693 = vpop.f32.mrb[0].mxu0
        %1694 = vmatprep.mubr.bf16.mxu0 0
        %1695 = vmatmul.mubr.bf16.gmra.mrb[0].mxu0 %v1579
        %v1696 = vpop.f32.mrb[0].mxu0
        %v1697 = vadd.f32 0.0, %v1696
        %v1698 = vpop.f32.mrb[0].mxu0
        %v1699 = vpop.f32.mrb[0].mxu0
        %v1700 = vadd.f32 0.0, %v1699
        %v1701 = vpop.f32.mrb[0].mxu0
        %1702 = vmatprep.mubr.bf16.mxu0 0
        %1703 = vmatmul.mubr.bf16.gmra.mrb[0].mxu0 %v1582
        %v1704 = vpop.f32.mrb[0].mxu0
        %v1705 = vadd.f32 0.0, %v1704
        %v1706 = vpop.f32.mrb[0].mxu0
        %v1707 = vpop.f32.mrb[0].mxu0
        %v1708 = vadd.f32 0.0, %v1707
        %v1709 = vpop.f32.mrb[0].mxu0
        %1710 = vmatprep.mubr.bf16.mxu0 0
        %1711 = vmatmul.mubr.bf16.gmra.mrb[0].mxu0 %v1585
        %v1712 = vpop.f32.mrb[0].mxu0
        %v1713 = vadd.f32 0.0, %v1712
        %v1714 = vpop.f32.mrb[0].mxu0
        %v1715 = vpop.f32.mrb[0].mxu0
        %v1716 = vadd.f32 0.0, %v1715
        %v1717 = vpop.f32.mrb[0].mxu0
        %1718 = vmatprep.mubr.bf16.mxu0 0
        %1719 = vmatmul.mubr.bf16.gmra.mrb[0].mxu0 %v1588
        %v1720 = vpop.f32.mrb[0].mxu0
        %v1721 = vadd.f32 0.0, %v1720
        %v1722 = vpop.f32.mrb[0].mxu0
        %v1723 = vpop.f32.mrb[0].mxu0
        %v1724 = vadd.f32 0.0, %v1723
        %v1725 = vpop.f32.mrb[0].mxu0
        %1726 = vdwg.mxu0
        %v1727 = vmax.f32 %v1433, %v1625
        %v1728 = vmax.f32 %v1434, %v1628
        %v1729 = vmax.f32 %v1435, %v1633
        %v1730 = vmax.f32 %v1436, %v1636
        %v1731 = vmax.f32 %v1437, %v1641
        %v1732 = vmax.f32 %v1438, %v1644
        %v1733 = vmax.f32 %v1439, %v1649
        %v1734 = vmax.f32 %v1440, %v1652
        %v1735 = vmax.f32 %v1441, %v1657
        %v1736 = vmax.f32 %v1442, %v1660
        %v1737 = vmax.f32 %v1443, %v1665
        %v1738 = vmax.f32 %v1444, %v1668
        %v1739 = vmax.f32 %v1445, %v1673
        %v1740 = vmax.f32 %v1446, %v1676
        %v1741 = vmax.f32 %v1447, %v1681
        %v1742 = vmax.f32 %v1448, %v1684
        %v1743 = vmax.f32 %v1449, %v1689
        %v1744 = vmax.f32 %v1450, %v1692
        %v1745 = vmax.f32 %v1451, %v1697
        %v1746 = vmax.f32 %v1452, %v1700
        %v1747 = vmax.f32 %v1453, %v1705
        %v1748 = vmax.f32 %v1454, %v1708
        %v1749 = vmax.f32 %v1455, %v1713
        %v1750 = vmax.f32 %v1456, %v1716
        %v1751 = vmax.f32 %v1457, %v1721
        %v1752 = vmax.f32 %v1458, %v1724
        %v1753 = vld [vmem:[%s2] sm:$0x1]
        %v1755 = vlaneseq
        %v1756 = vshrl.u32 %v1755, 7
        %v1757 = vsub.s32 0, %v1756
        %v1758 = vrot.slane %v1753, %v1757
        %v1760 = vadd.f32 %v1727, %v1758
        %v1761 = vadd.f32 %v1728, %v1758
        %v1762 = vadd.f32 %v1729, %v1758
        %v1763 = vadd.f32 %v1730, %v1758
        %v1764 = vadd.f32 %v1731, %v1758
        %v1765 = vadd.f32 %v1732, %v1758
        %v1766 = vadd.f32 %v1733, %v1758
        %v1767 = vadd.f32 %v1734, %v1758
        %v1768 = vadd.f32 %v1735, %v1758
        %v1769 = vadd.f32 %v1736, %v1758
        %v1770 = vadd.f32 %v1737, %v1758
        %v1771 = vadd.f32 %v1738, %v1758
        %v1772 = vadd.f32 %v1739, %v1758
        %v1773 = vadd.f32 %v1740, %v1758
        %v1774 = vadd.f32 %v1741, %v1758
        %v1775 = vadd.f32 %v1742, %v1758
        %v1776 = vadd.f32 %v1743, %v1758
        %v1777 = vadd.f32 %v1744, %v1758
        %v1778 = vadd.f32 %v1745, %v1758
        %v1779 = vadd.f32 %v1746, %v1758
        %v1780 = vadd.f32 %v1747, %v1758
        %v1781 = vadd.f32 %v1748, %v1758
        %v1782 = vadd.f32 %v1749, %v1758
        %v1783 = vadd.f32 %v1750, %v1758
        %v1784 = vadd.f32 %v1751, %v1758
        %v1785 = vadd.f32 %v1752, %v1758
        %v1786 = vmax.f32 %v1760, 0.0
        %v1787 = vmax.f32 %v1761, 0.0
        %v1788 = vmax.f32 %v1762, 0.0
        %v1789 = vmax.f32 %v1763, 0.0
        %v1790 = vmax.f32 %v1764, 0.0
        %v1791 = vmax.f32 %v1765, 0.0
        %v1792 = vmax.f32 %v1766, 0.0
        %v1793 = vmax.f32 %v1767, 0.0
        %v1794 = vmax.f32 %v1768, 0.0
        %v1795 = vmax.f32 %v1769, 0.0
        %v1796 = vmax.f32 %v1770, 0.0
        %v1797 = vmax.f32 %v1771, 0.0
        %v1798 = vmax.f32 %v1772, 0.0
        %v1799 = vmax.f32 %v1773, 0.0
        %v1800 = vmax.f32 %v1774, 0.0
        %v1801 = vmax.f32 %v1775, 0.0
        %v1802 = vmax.f32 %v1776, 0.0
        %v1803 = vmax.f32 %v1777, 0.0
        %v1804 = vmax.f32 %v1778, 0.0
        %v1805 = vmax.f32 %v1779, 0.0
        %v1806 = vmax.f32 %v1780, 0.0
        %v1807 = vmax.f32 %v1781, 0.0
        %v1808 = vmax.f32 %v1782, 0.0
        %v1809 = vmax.f32 %v1783, 0.0
        %v1810 = vmax.f32 %v1784, 0.0
        %v1811 = vmax.f32 %v1785, 0.0
        %v1812 = vpack.c.bf16 %v1787, %v1786
        %v1813 = vpack.c.bf16 %v1789, %v1788
        %v1814 = vpack.c.bf16 %v1791, %v1790
        %v1815 = vpack.c.bf16 %v1793, %v1792
        %v1816 = vpack.c.bf16 %v1795, %v1794
        %v1817 = vpack.c.bf16 %v1797, %v1796
        %v1818 = vpack.c.bf16 %v1799, %v1798
        %v1819 = vpack.c.bf16 %v1801, %v1800
        %v1820 = vpack.c.bf16 %v1803, %v1802
        %v1821 = vpack.c.bf16 %v1805, %v1804
        %v1822 = vpack.c.bf16 %v1807, %v1806
        %v1823 = vpack.c.bf16 %v1809, %v1808
        %v1824 = vpack.c.bf16 %v1811, %v1810
        %v1838 = vunpack.c.l.b16 %v1812
        %v1839 = vunpack.c.h.b16 %v1812
        %v1840 = vunpack.c.l.b16 %v1813
        %v1841 = vunpack.c.h.b16 %v1813
        %v1842 = vunpack.c.l.b16 %v1814
        %v1843 = vunpack.c.h.b16 %v1814
        %v1844 = vunpack.c.l.b16 %v1815
        %v1845 = vunpack.c.h.b16 %v1815
        %v1846 = vunpack.c.l.b16 %v1816
        %v1847 = vunpack.c.h.b16 %v1816
        %v1848 = vunpack.c.l.b16 %v1817
        %v1849 = vunpack.c.h.b16 %v1817
        %v1850 = vunpack.c.l.b16 %v1818
        %v1851 = vunpack.c.h.b16 %v1818
        %v1852 = vunpack.c.l.b16 %v1819
        %v1853 = vunpack.c.h.b16 %v1819
        %v1854 = vunpack.c.l.b16 %v1820
        %v1855 = vunpack.c.h.b16 %v1820
        %v1856 = vunpack.c.l.b16 %v1821
        %v1857 = vunpack.c.h.b16 %v1821
        %v1858 = vunpack.c.l.b16 %v1822
        %v1859 = vunpack.c.h.b16 %v1822
        %v1860 = vunpack.c.l.b16 %v1823
        %v1861 = vunpack.c.h.b16 %v1823
        %v1862 = vunpack.c.l.b16 %v1824
        %v1863 = vunpack.c.h.b16 %v1824
        %v1864 = vpack.c.b16 %v1838, %v1838
        %v1865 = vpack.c.b16 %v1839, %v1839
        %v1866 = vpack.c.b16 %v1840, %v1840
        %v1867 = vpack.c.b16 %v1841, %v1841
        %v1868 = vpack.c.b16 %v1842, %v1842
        %v1869 = vpack.c.b16 %v1843, %v1843
        %v1870 = vpack.c.b16 %v1844, %v1844
        %v1871 = vpack.c.b16 %v1845, %v1845
        %v1872 = vpack.c.b16 %v1846, %v1846
        %v1873 = vpack.c.b16 %v1847, %v1847
        %v1874 = vpack.c.b16 %v1848, %v1848
        %v1875 = vpack.c.b16 %v1849, %v1849
        %v1876 = vpack.c.b16 %v1850, %v1850
        %v1877 = vpack.c.b16 %v1851, %v1851
        %v1878 = vpack.c.b16 %v1852, %v1852
        %v1879 = vpack.c.b16 %v1853, %v1853
        %v1880 = vpack.c.b16 %v1854, %v1854
        %v1881 = vpack.c.b16 %v1855, %v1855
        %v1882 = vpack.c.b16 %v1856, %v1856
        %v1883 = vpack.c.b16 %v1857, %v1857
        %v1884 = vpack.c.b16 %v1858, %v1858
        %v1885 = vpack.c.b16 %v1859, %v1859
        %v1886 = vpack.c.b16 %v1860, %v1860
        %v1887 = vpack.c.b16 %v1861, %v1861
        %v1888 = vpack.c.b16 %v1862, %v1862
        %v1889 = vpack.c.b16 %v1863, %v1863
        %vm1916 = vcmask 257024
        %1917 = vst.msk [vmem:[%s577] sm:$0xf] %vm1916, %v1864
        %1918 = vst.msk [vmem:[%s577 + $0x4] sm:$0xf] %vm1916, %v1865
        %1919 = vst.msk [vmem:[%s577 + $0x8] sm:$0xf] %vm1916, %v1866
        %1920 = vst.msk [vmem:[%s577 + $0xc] sm:$0xf] %vm1916, %v1867
        %1921 = vst.msk [vmem:[%s577 + $0x10] sm:$0xf] %vm1916, %v1868
        %1922 = vst.msk [vmem:[%s577 + $0x14] sm:$0xf] %vm1916, %v1869
        %1923 = vst.msk [vmem:[%s577 + $0x18] sm:$0xf] %vm1916, %v1870
        %1924 = vst.msk [vmem:[%s577 + $0x1c] sm:$0xf] %vm1916, %v1871
        %1925 = vst.msk [vmem:[%s577 + $0x20] sm:$0xf] %vm1916, %v1872
        %1926 = vst.msk [vmem:[%s577 + $0x24] sm:$0xf] %vm1916, %v1873
        %1927 = vst.msk [vmem:[%s577 + $0x28] sm:$0xf] %vm1916, %v1874
        %1928 = vst.msk [vmem:[%s577 + $0x2c] sm:$0xf] %vm1916, %v1875
        %1929 = vst.msk [vmem:[%s577 + $0x30] sm:$0xf] %vm1916, %v1876
        %1930 = vst.msk [vmem:[%s577 + $0x34] sm:$0xf] %vm1916, %v1877
        %1931 = vst.msk [vmem:[%s577 + $0x38] sm:$0xf] %vm1916, %v1878
        %1932 = vst.msk [vmem:[%s577 + $0x3c] sm:$0xf] %vm1916, %v1879
        %1933 = vst.msk [vmem:[%s577 + $0x40] sm:$0xf] %vm1916, %v1880
        %1934 = vst.msk [vmem:[%s577 + $0x44] sm:$0xf] %vm1916, %v1881
        %1935 = vst.msk [vmem:[%s577 + $0x48] sm:$0xf] %vm1916, %v1882
        %1936 = vst.msk [vmem:[%s577 + $0x4c] sm:$0xf] %vm1916, %v1883
        %1937 = vst.msk [vmem:[%s577 + $0x50] sm:$0xf] %vm1916, %v1884
        %1938 = vst.msk [vmem:[%s577 + $0x54] sm:$0xf] %vm1916, %v1885
        %1939 = vst.msk [vmem:[%s577 + $0x58] sm:$0xf] %vm1916, %v1886
        %1940 = vst.msk [vmem:[%s577 + $0x5c] sm:$0xf] %vm1916, %v1887
        %1941 = vst.msk [vmem:[%s577 + $0x60] sm:$0xf] %vm1916, %v1888
        %1942 = vst.msk [vmem:[%s577 + $0x64] sm:$0xf] %vm1916, %v1889
        %s1943 = sand.u32 %s90, 1
        %s1944 = sand.u32 %s90, 1
        %s1945 = smul.addr %s1944, 104
        %s1946 = scalar_lea.vmem [#allocation3], %s1945
        // Predicated region
        $region95: #{cnn_forward.4} parent=89 // pred_check
          %p1947 = pneg %p100
        $region96: #{cnn_forward.4} parent=89 // pred_check_branch
          %1949 = sbr.rel (%p1947) target = $region98
        $region97: #{cnn_forward.4} parent=89 // pred_region
          %s1950 = smul.u32 26, %s14
          %s1951 = ssub.s32 49, %s1950
          %p1952 = scmp.lt.s32.totalorder %s1951, 26
          %s1953 = scalar_select %p1952, %s1951, 26
          %s1954 = smul.u32 64, %s1953
          %p1955 = scmp.ne.s32.totalorder 0, %s1954
          %s1956 = smul.addr %s1950, 4
          %s1957 = scalar_lea.vmem %s3, %s1956
          // Predicated region
          $region99: #{cnn_forward.4} parent=97 // pred_check
            %p1958 = pneg %p1955
          $region100: #{cnn_forward.4} parent=97 // pred_check_branch
            %1960 = sbr.rel (%p1958) target = $region102
          $region101: #{cnn_forward.4} parent=97 // pred_region
            // Predicated region
            $region103: #{cnn_forward.4} parent=101 // pred_check
              _
            $region104: #{cnn_forward.4} parent=101 // pred_check_branch
              %1962 = sbr.rel target = $region106
            $region105: #{cnn_forward.4} parent=101 // pred_region
              // Predicated region
              $region125: #{cnn_forward.4} parent=105 // pred_check
                _
              $region126: #{cnn_forward.4} parent=105 // pred_check_branch
                %2062 = sbr.rel (0) target = $region128
              $region127: #{cnn_forward.4} parent=105 // pred_region
                %s2064 = sdiv.u32.pop %s1953, 26
                %s2065 = srem.u32.pop %s1953, 26
                // While loop
                $region129: #{cnn_forward.4} parent=127 // loop_pre_header
                  _
                $region130: #{cnn_forward.4} parent=127 // loop_header
                  %s2067 = sphi 0, %s2069
                  %p2068 = scmp.ge.s32.totalorder %s2067, %s2064
                  %s2072 = sphi 0, %s2129
                  %s2073 = sphi %s1946, %s2132
                  %s2074 = sphi %s1957, %s2133
                $region131: #{cnn_forward.4} parent=127 // loop_header_branch
                  %2071 = sbr.rel (%p2068) target = $region135
                $region132: #{cnn_forward.4} parent=127 // loop_body
                  %v2075 = vld [vmem:[%s2073] sm:$0xf]
                  %2076 = vst [vmem:[%s2074] sm:$0xf] %v2075
                  %v2077 = vld [vmem:[%s2073 + $0x4] sm:$0xf]
                  %2078 = vst [vmem:[%s2074 + $0x4] sm:$0xf] %v2077
                  %v2079 = vld [vmem:[%s2073 + $0x8] sm:$0xf]
                  %2080 = vst [vmem:[%s2074 + $0x8] sm:$0xf] %v2079
                  %v2081 = vld [vmem:[%s2073 + $0xc] sm:$0xf]
                  %2082 = vst [vmem:[%s2074 + $0xc] sm:$0xf] %v2081
                  %v2083 = vld [vmem:[%s2073 + $0x10] sm:$0xf]
                  %2084 = vst [vmem:[%s2074 + $0x10] sm:$0xf] %v2083
                  %v2085 = vld [vmem:[%s2073 + $0x14] sm:$0xf]
                  %2086 = vst [vmem:[%s2074 + $0x14] sm:$0xf] %v2085
                  %v2087 = vld [vmem:[%s2073 + $0x18] sm:$0xf]
                  %2088 = vst [vmem:[%s2074 + $0x18] sm:$0xf] %v2087
                  %v2089 = vld [vmem:[%s2073 + $0x1c] sm:$0xf]
                  %2090 = vst [vmem:[%s2074 + $0x1c] sm:$0xf] %v2089
                  %v2091 = vld [vmem:[%s2073 + $0x20] sm:$0xf]
                  %2092 = vst [vmem:[%s2074 + $0x20] sm:$0xf] %v2091
                  %v2093 = vld [vmem:[%s2073 + $0x24] sm:$0xf]
                  %2094 = vst [vmem:[%s2074 + $0x24] sm:$0xf] %v2093
                  %v2095 = vld [vmem:[%s2073 + $0x28] sm:$0xf]
                  %2096 = vst [vmem:[%s2074 + $0x28] sm:$0xf] %v2095
                  %v2097 = vld [vmem:[%s2073 + $0x2c] sm:$0xf]
                  %2098 = vst [vmem:[%s2074 + $0x2c] sm:$0xf] %v2097
                  %v2099 = vld [vmem:[%s2073 + $0x30] sm:$0xf]
                  %2100 = vst [vmem:[%s2074 + $0x30] sm:$0xf] %v2099
                  %v2101 = vld [vmem:[%s2073 + $0x34] sm:$0xf]
                  %2102 = vst [vmem:[%s2074 + $0x34] sm:$0xf] %v2101
                  %v2103 = vld [vmem:[%s2073 + $0x38] sm:$0xf]
                  %2104 = vst [vmem:[%s2074 + $0x38] sm:$0xf] %v2103
                  %v2105 = vld [vmem:[%s2073 + $0x3c] sm:$0xf]
                  %2106 = vst [vmem:[%s2074 + $0x3c] sm:$0xf] %v2105
                  %v2107 = vld [vmem:[%s2073 + $0x40] sm:$0xf]
                  %2108 = vst [vmem:[%s2074 + $0x40] sm:$0xf] %v2107
                  %v2109 = vld [vmem:[%s2073 + $0x44] sm:$0xf]
                  %2110 = vst [vmem:[%s2074 + $0x44] sm:$0xf] %v2109
                  %v2111 = vld [vmem:[%s2073 + $0x48] sm:$0xf]
                  %2112 = vst [vmem:[%s2074 + $0x48] sm:$0xf] %v2111
                  %v2113 = vld [vmem:[%s2073 + $0x4c] sm:$0xf]
                  %2114 = vst [vmem:[%s2074 + $0x4c] sm:$0xf] %v2113
                  %v2115 = vld [vmem:[%s2073 + $0x50] sm:$0xf]
                  %2116 = vst [vmem:[%s2074 + $0x50] sm:$0xf] %v2115
                  %v2117 = vld [vmem:[%s2073 + $0x54] sm:$0xf]
                  %2118 = vst [vmem:[%s2074 + $0x54] sm:$0xf] %v2117
                  %v2119 = vld [vmem:[%s2073 + $0x58] sm:$0xf]
                  %2120 = vst [vmem:[%s2074 + $0x58] sm:$0xf] %v2119
                  %v2121 = vld [vmem:[%s2073 + $0x5c] sm:$0xf]
                  %2122 = vst [vmem:[%s2074 + $0x5c] sm:$0xf] %v2121
                  %v2123 = vld [vmem:[%s2073 + $0x60] sm:$0xf]
                  %2124 = vst [vmem:[%s2074 + $0x60] sm:$0xf] %v2123
                  %v2125 = vld [vmem:[%s2073 + $0x64] sm:$0xf]
                  %2126 = vst [vmem:[%s2074 + $0x64] sm:$0xf] %v2125
                  %s2127 = sadd.s32 1, %s2072
                  %p2128 = scmp.ge.s32.totalorder %s2127, %s2064
                  %s2129 = scalar_select %p2128, 0, %s2127
                  %s2130 = smul.u32 %s2129, 104
                  %s2131 = smul.u32 %s2129, 104
                  %s2132 = scalar_lea.vmem %s1946, %s2130 [#allocation3]
                  %s2133 = scalar_lea.vmem %s1957, %s2131
                $region133: #{cnn_forward.4} parent=127 // loop_footer
                  %s2069 = sadd.s32 %s2067, 1
                $region134: #{cnn_forward.4} parent=127 // loop_footer_branch
                  %2066 = sbr.rel target = $region130
                $region135: #{cnn_forward.4} parent=127 // loop_exit
                  _
                %s2134 = sdiv.u32.pop %s1953, 26
                %s2135 = srem.u32.pop %s1953, 26
                %s2136 = smul.u32 %s2134, 26
                %s2137 = smul.u32 4, %s2136
                %s2138 = scalar_lea.vmem %s1946, %s2137 [#allocation3]
                %s2139 = smul.u32 4, %s2136
                %s2140 = scalar_lea.vmem %s1957, %s2139
                // While loop
                $region136: #{cnn_forward.4} parent=127 // loop_pre_header
                  _
                $region137: #{cnn_forward.4} parent=127 // loop_header
                  %s2142 = sphi 0, %s2144
                  %p2143 = scmp.ge.s32.totalorder %s2142, %s2135
                  %s2147 = sphi 0, %s2154
                  %s2148 = sphi %s2138, %s2157
                  %s2149 = sphi %s2140, %s2158
                $region138: #{cnn_forward.4} parent=127 // loop_header_branch
                  %2146 = sbr.rel (%p2143) target = $region142
                $region139: #{cnn_forward.4} parent=127 // loop_body
                  %v2150 = vld [vmem:[%s2148] sm:$0xf]
                  %2151 = vst [vmem:[%s2149] sm:$0xf] %v2150
                  %s2152 = sadd.s32 1, %s2147
                  %p2153 = scmp.ge.s32.totalorder %s2152, %s2135
                  %s2154 = scalar_select %p2153, 0, %s2152
                  %s2155 = smul.u32 %s2154, 4
                  %s2156 = smul.u32 %s2154, 4
                  %s2157 = scalar_lea.vmem %s2138, %s2155 [#allocation3]
                  %s2158 = scalar_lea.vmem %s2140, %s2156
                $region140: #{cnn_forward.4} parent=127 // loop_footer
                  %s2144 = sadd.s32 %s2142, 1
                $region141: #{cnn_forward.4} parent=127 // loop_footer_branch
                  %2141 = sbr.rel target = $region137
                $region142: #{cnn_forward.4} parent=127 // loop_exit
                  _
              $region128: #{cnn_forward.4} parent=105 // pred_fallthru
                _
            $region106: #{cnn_forward.4} parent=101 // pred_fallthru
              _
            // Predicated region
            $region107: #{cnn_forward.4} parent=101 // pred_check
              _
            $region108: #{cnn_forward.4} parent=101 // pred_check_branch
              %1964 = sbr.rel (0) target = $region110
            $region109: #{cnn_forward.4} parent=101 // pred_region
              %s1966 = sdiv.u32.pop %s1953, 26
              %s1967 = srem.u32.pop %s1953, 26
              // While loop
              $region111: #{cnn_forward.4} parent=109 // loop_pre_header
                _
              $region112: #{cnn_forward.4} parent=109 // loop_header
                %s1969 = sphi 0, %s1971
                %p1970 = scmp.ge.s32.totalorder %s1969, %s1966
                %s1974 = sphi 0, %s2031
                %s1975 = sphi %s1946, %s2034
                %s1976 = sphi %s1957, %s2035
              $region113: #{cnn_forward.4} parent=109 // loop_header_branch
                %1973 = sbr.rel (%p1970) target = $region117
              $region114: #{cnn_forward.4} parent=109 // loop_body
                %v1977 = vld [vmem:[%s1975] sm:$0xf]
                %1978 = vst [vmem:[%s1976] sm:$0xf] %v1977
                %v1979 = vld [vmem:[%s1975 + $0x4] sm:$0xf]
                %1980 = vst [vmem:[%s1976 + $0x4] sm:$0xf] %v1979
                %v1981 = vld [vmem:[%s1975 + $0x8] sm:$0xf]
                %1982 = vst [vmem:[%s1976 + $0x8] sm:$0xf] %v1981
                %v1983 = vld [vmem:[%s1975 + $0xc] sm:$0xf]
                %1984 = vst [vmem:[%s1976 + $0xc] sm:$0xf] %v1983
                %v1985 = vld [vmem:[%s1975 + $0x10] sm:$0xf]
                %1986 = vst [vmem:[%s1976 + $0x10] sm:$0xf] %v1985
                %v1987 = vld [vmem:[%s1975 + $0x14] sm:$0xf]
                %1988 = vst [vmem:[%s1976 + $0x14] sm:$0xf] %v1987
                %v1989 = vld [vmem:[%s1975 + $0x18] sm:$0xf]
                %1990 = vst [vmem:[%s1976 + $0x18] sm:$0xf] %v1989
                %v1991 = vld [vmem:[%s1975 + $0x1c] sm:$0xf]
                %1992 = vst [vmem:[%s1976 + $0x1c] sm:$0xf] %v1991
                %v1993 = vld [vmem:[%s1975 + $0x20] sm:$0xf]
                %1994 = vst [vmem:[%s1976 + $0x20] sm:$0xf] %v1993
                %v1995 = vld [vmem:[%s1975 + $0x24] sm:$0xf]
                %1996 = vst [vmem:[%s1976 + $0x24] sm:$0xf] %v1995
                %v1997 = vld [vmem:[%s1975 + $0x28] sm:$0xf]
                %1998 = vst [vmem:[%s1976 + $0x28] sm:$0xf] %v1997
                %v1999 = vld [vmem:[%s1975 + $0x2c] sm:$0xf]
                %2000 = vst [vmem:[%s1976 + $0x2c] sm:$0xf] %v1999
                %v2001 = vld [vmem:[%s1975 + $0x30] sm:$0xf]
                %2002 = vst [vmem:[%s1976 + $0x30] sm:$0xf] %v2001
                %v2003 = vld [vmem:[%s1975 + $0x34] sm:$0xf]
                %2004 = vst [vmem:[%s1976 + $0x34] sm:$0xf] %v2003
                %v2005 = vld [vmem:[%s1975 + $0x38] sm:$0xf]
                %2006 = vst [vmem:[%s1976 + $0x38] sm:$0xf] %v2005
                %v2007 = vld [vmem:[%s1975 + $0x3c] sm:$0xf]
                %2008 = vst [vmem:[%s1976 + $0x3c] sm:$0xf] %v2007
                %v2009 = vld [vmem:[%s1975 + $0x40] sm:$0xf]
                %2010 = vst [vmem:[%s1976 + $0x40] sm:$0xf] %v2009
                %v2011 = vld [vmem:[%s1975 + $0x44] sm:$0xf]
                %2012 = vst [vmem:[%s1976 + $0x44] sm:$0xf] %v2011
                %v2013 = vld [vmem:[%s1975 + $0x48] sm:$0xf]
                %2014 = vst [vmem:[%s1976 + $0x48] sm:$0xf] %v2013
                %v2015 = vld [vmem:[%s1975 + $0x4c] sm:$0xf]
                %2016 = vst [vmem:[%s1976 + $0x4c] sm:$0xf] %v2015
                %v2017 = vld [vmem:[%s1975 + $0x50] sm:$0xf]
                %2018 = vst [vmem:[%s1976 + $0x50] sm:$0xf] %v2017
                %v2019 = vld [vmem:[%s1975 + $0x54] sm:$0xf]
                %2020 = vst [vmem:[%s1976 + $0x54] sm:$0xf] %v2019
                %v2021 = vld [vmem:[%s1975 + $0x58] sm:$0xf]
                %2022 = vst [vmem:[%s1976 + $0x58] sm:$0xf] %v2021
                %v2023 = vld [vmem:[%s1975 + $0x5c] sm:$0xf]
                %2024 = vst [vmem:[%s1976 + $0x5c] sm:$0xf] %v2023
                %v2025 = vld [vmem:[%s1975 + $0x60] sm:$0xf]
                %2026 = vst [vmem:[%s1976 + $0x60] sm:$0xf] %v2025
                %v2027 = vld [vmem:[%s1975 + $0x64] sm:$0xf]
                %2028 = vst [vmem:[%s1976 + $0x64] sm:$0xf] %v2027
                %s2029 = sadd.s32 1, %s1974
                %p2030 = scmp.ge.s32.totalorder %s2029, %s1966
                %s2031 = scalar_select %p2030, 0, %s2029
                %s2032 = smul.u32 %s2031, 104
                %s2033 = smul.u32 %s2031, 104
                %s2034 = scalar_lea.vmem %s1946, %s2032 [#allocation3]
                %s2035 = scalar_lea.vmem %s1957, %s2033
              $region115: #{cnn_forward.4} parent=109 // loop_footer
                %s1971 = sadd.s32 %s1969, 1
              $region116: #{cnn_forward.4} parent=109 // loop_footer_branch
                %1968 = sbr.rel target = $region112
              $region117: #{cnn_forward.4} parent=109 // loop_exit
                _
              %s2036 = sdiv.u32.pop %s1953, 26
              %s2037 = srem.u32.pop %s1953, 26
              %s2038 = smul.u32 %s2036, 26
              %s2039 = smul.u32 4, %s2038
              %s2040 = scalar_lea.vmem %s1946, %s2039 [#allocation3]
              %s2041 = smul.u32 4, %s2038
              %s2042 = scalar_lea.vmem %s1957, %s2041
              // While loop
              $region118: #{cnn_forward.4} parent=109 // loop_pre_header
                _
              $region119: #{cnn_forward.4} parent=109 // loop_header
                %s2044 = sphi 0, %s2046
                %p2045 = scmp.ge.s32.totalorder %s2044, %s2037
                %s2049 = sphi 0, %s2056
                %s2050 = sphi %s2040, %s2059
                %s2051 = sphi %s2042, %s2060
              $region120: #{cnn_forward.4} parent=109 // loop_header_branch
                %2048 = sbr.rel (%p2045) target = $region124
              $region121: #{cnn_forward.4} parent=109 // loop_body
                %v2052 = vld [vmem:[%s2050] sm:$0xf]
                %2053 = vst [vmem:[%s2051] sm:$0xf] %v2052
                %s2054 = sadd.s32 1, %s2049
                %p2055 = scmp.ge.s32.totalorder %s2054, %s2037
                %s2056 = scalar_select %p2055, 0, %s2054
                %s2057 = smul.u32 %s2056, 4
                %s2058 = smul.u32 %s2056, 4
                %s2059 = scalar_lea.vmem %s2040, %s2057 [#allocation3]
                %s2060 = scalar_lea.vmem %s2042, %s2058
              $region122: #{cnn_forward.4} parent=109 // loop_footer
                %s2046 = sadd.s32 %s2044, 1
              $region123: #{cnn_forward.4} parent=109 // loop_footer_branch
                %2043 = sbr.rel target = $region119
              $region124: #{cnn_forward.4} parent=109 // loop_exit
                _
            $region110: #{cnn_forward.4} parent=101 // pred_fallthru
              _
          $region102: #{cnn_forward.4} parent=97 // pred_fallthru
            _
          %2159 = vnop
        $region98: #{cnn_forward.4} parent=89 // pred_fallthru
          _
      $region90: #{cnn_forward.4} parent=5 // pred_fallthru
        _
      %p2160 = scmp.le.s32.totalorder 2, %s9
      // Predicated region
      $region143: #{cnn_forward.4} parent=5 // pred_check
        %p2161 = pneg %p2160
      $region144: #{cnn_forward.4} parent=5 // pred_check_branch
        %2163 = sbr.rel (%p2161) target = $region146
      $region145: #{cnn_forward.4} parent=5 // pred_region
        %s2164 = ssub.s32 %s9, 2
        // Predicated region
        $region147: #{cnn_forward.4} parent=145 // pred_check
          %p2165 = pneg %p106
        $region148: #{cnn_forward.4} parent=145 // pred_check_branch
          %2167 = sbr.rel (%p2165) target = $region150
        $region149: #{cnn_forward.4} parent=145 // pred_region
          %s2168 = sand.u32 %s91, 1
          %s2169 = sand.u32 %s91, 1
          %s2170 = smul.addr %s2169, 104
          %s2171 = scalar_lea.vmem [#allocation3], %s2170
        $region150: #{cnn_forward.4} parent=145 // pred_fallthru
          _
      $region146: #{cnn_forward.4} parent=5 // pred_fallthru
        _
    $region6: #{cnn_forward.4} parent=1 // loop_footer
      %s13 = sadd.s32 1, %s9
    $region7: #{cnn_forward.4} parent=1 // loop_footer_branch
      %8 = sbr.rel target = $region3
    $region8: #{cnn_forward.4} parent=1 // loop_exit
      _

// kernel: cnn_forward.5
$region0: #{cnn_forward.5}
  #allocation0 [shape = 'u32[]', space=smem, size = 0x4, offset = 0x4, fixed_abs, tag = 'smem constant byte address 0x4 - core index']
  #allocation1 [shape = 'u32[144,128]{1,0:T(1,128)}', space=vmem, size = 0x12000, scoped, tag = 'internal scratch']
  %s0 = inlined_call_operand.vmem [shape: bf16[4,98,288], index: 0, kind: input, shape index: {}]
  %s1 = inlined_call_operand.vmem [shape: bf16[288,64], index: 1, kind: input, shape index: {}]
  %s2 = inlined_call_operand.vmem [shape: f32[1,64], index: 2, kind: input, shape index: {}]
  %s3 = inlined_call_operand.vmem [shape: bf16[98,64], index: 3, kind: output, shape index: {}]
  %s4 = sld [smem:[#allocation0]]
  $region129: #{cnn_forward.5} parent=0
    _
  %s6 = ssub.s32 1, %s4
  %s7 = scalar_select 0, %s6, %s4
  $region1: #{cnn_forward.5} parent=0
    #allocation2 [shape = 'u8[393216]{0}', space=vmem, size = 0x60000, scoped, tag = 'input window, operand 0']
    #allocation3 [shape = 'u8[32768]{0}', space=vmem, size = 0x8000, scoped, tag = 'output window, operand 0']
    loop: start=0, step=1, limit=4
    $region2: #{cnn_forward.5} parent=1 // loop_pre_header
      _
    $region3: #{cnn_forward.5} parent=1 // loop_header
      %s9 = sphi 0, %s13
      %p10 = scmp.ge.s32.totalorder %s9, 4
      %s19 = sphi 0, %s21
      %s22 = sphi 0, %s19
      %s23 = sphi 0, %s22
      %s39 = sphi 0, %s23
      %s43 = sphi 0, %s43
      %s45 = sphi 0, %s43
      %s46 = sphi 0, %s45
      %s60 = sphi 0, %s46
      %s64 = sphi 0, %s64
      %s66 = sphi 0, %s64
      %s67 = sphi 0, %s66
      %s81 = sphi 0, %s67
      %s87 = sphi 0, %s89
      %s90 = sphi 0, %s87
      %s91 = sphi 0, %s90
      %s107 = sphi 0, %s91
    $region4: #{cnn_forward.5} parent=1 // loop_header_branch
      %12 = sbr.rel (%p10) target = $region8
    $region5: #{cnn_forward.5} parent=1 // loop_body
      %s14 = ssub.s32 %s9, 1
      %s15 = ssub.s32 %s9, 2
      %s16 = sadd.s32 %s9, 1
      %s17 = ssub.s32 %s9, %s16
      %p18 = scmp.eq.s32.totalorder %s17, 0
      %s20 = sadd.s32 %s19, 1
      %s21 = scalar_select %p18, %s19, %s20
      %p24 = pneg %p18
      %p25 = scmp.eq.s32.totalorder %s9, 1
      %p26 = por %p24, %p25
      %p27 = scmp.ne.s32.totalorder %s19, %s22
      %p28 = scmp.eq.s32.totalorder %s9, 0
      %p29 = por %p27, %p28
      %p30 = scmp.ne.s32.totalorder %s19, %s22
      %p31 = scmp.eq.s32.totalorder %s14, 1
      %p32 = por %p30, %p31
      %p33 = scmp.ne.s32.totalorder %s22, %s23
      %p34 = scmp.eq.s32.totalorder %s14, 0
      %p35 = por %p33, %p34
      %p36 = scmp.ne.s32.totalorder %s22, %s23
      %p37 = scmp.eq.s32.totalorder %s15, 1
      %p38 = por %p36, %p37
      %p40 = scmp.ne.s32.totalorder %s23, %s39
      %p41 = scmp.eq.s32.totalorder %s15, 0
      %p42 = por %p40, %p41
      %s44 = sadd.s32 %s43, 1
      %p47 = scmp.eq.s32.totalorder %s9, 1
      %p48 = scmp.ne.s32.totalorder %s43, %s45
      %p49 = scmp.eq.s32.totalorder %s9, 0
      %p50 = por %p48, %p49
      %p51 = scmp.ne.s32.totalorder %s43, %s45
      %p52 = scmp.eq.s32.totalorder %s14, 1
      %p53 = por %p51, %p52
      %p54 = scmp.ne.s32.totalorder %s45, %s46
      %p55 = scmp.eq.s32.totalorder %s14, 0
      %p56 = por %p54, %p55
      %p57 = scmp.ne.s32.totalorder %s45, %s46
      %p58 = scmp.eq.s32.totalorder %s15, 1
      %p59 = por %p57, %p58
      %p61 = scmp.ne.s32.totalorder %s46, %s60
      %p62 = scmp.eq.s32.totalorder %s15, 0
      %p63 = por %p61, %p62
      %s65 = sadd.s32 %s64, 1
      %p68 = scmp.eq.s32.totalorder %s9, 1
      %p69 = scmp.ne.s32.totalorder %s64, %s66
      %p70 = scmp.eq.s32.totalorder %s9, 0
      %p71 = por %p69, %p70
      %p72 = scmp.ne.s32.totalorder %s64, %s66
      %p73 = scmp.eq.s32.totalorder %s14, 1
      %p74 = por %p72, %p73
      %p75 = scmp.ne.s32.totalorder %s66, %s67
      %p76 = scmp.eq.s32.totalorder %s14, 0
      %p77 = por %p75, %p76
      %p78 = scmp.ne.s32.totalorder %s66, %s67
      %p79 = scmp.eq.s32.totalorder %s15, 1
      %p80 = por %p78, %p79
      %p82 = scmp.ne.s32.totalorder %s67, %s81
      %p83 = scmp.eq.s32.totalorder %s15, 0
      %p84 = por %p82, %p83
      %s85 = ssub.s32 %s9, %s16
      %p86 = scmp.eq.s32.totalorder %s85, 0
      %s88 = sadd.s32 %s87, 1
      %s89 = scalar_select %p86, %s87, %s88
      %p92 = pneg %p86
      %p93 = scmp.eq.s32.totalorder %s9, 1
      %p94 = por %p92, %p93
      %p95 = scmp.ne.s32.totalorder %s87, %s90
      %p96 = scmp.eq.s32.totalorder %s9, 0
      %p97 = por %p95, %p96
      %p98 = scmp.ne.s32.totalorder %s87, %s90
      %p99 = scmp.eq.s32.totalorder %s14, 1
      %p100 = por %p98, %p99
      %p101 = scmp.ne.s32.totalorder %s90, %s91
      %p102 = scmp.eq.s32.totalorder %s14, 0
      %p103 = por %p101, %p102
      %p104 = scmp.ne.s32.totalorder %s90, %s91
      %p105 = scmp.eq.s32.totalorder %s15, 1
      %p106 = por %p104, %p105
      %p108 = scmp.ne.s32.totalorder %s91, %s107
      %p109 = scmp.eq.s32.totalorder %s15, 0
      %p110 = por %p108, %p109
      %p111 = scmp.le.s32.totalorder 1, %s9
      %p112 = scmp.lt.s32.totalorder %s9, 3
      %p113 = pnand %p111, %p112
      %p114 = pneg %p113
      // Predicated region
      $region9: #{cnn_forward.5} parent=5 // pred_check
        _
      $region10: #{cnn_forward.5} parent=5 // pred_check_branch
        %116 = sbr.rel (%p113) target = $region12
      $region11: #{cnn_forward.5} parent=5 // pred_region
        %s117 = ssub.s32 %s9, 1
        // Predicated region
        $region13: #{cnn_forward.5} parent=11 // pred_check
          %p118 = pneg %p56
        $region14: #{cnn_forward.5} parent=11 // pred_check_branch
          %120 = sbr.rel (%p118) target = $region16
        $region15: #{cnn_forward.5} parent=11 // pred_region
          _
        $region16: #{cnn_forward.5} parent=11 // pred_fallthru
          _
        // Predicated region
        $region17: #{cnn_forward.5} parent=11 // pred_check
          %p121 = pneg %p77
        $region18: #{cnn_forward.5} parent=11 // pred_check_branch
          %123 = sbr.rel (%p121) target = $region20
        $region19: #{cnn_forward.5} parent=11 // pred_region
          _
        $region20: #{cnn_forward.5} parent=11 // pred_fallthru
          _
      $region12: #{cnn_forward.5} parent=5 // pred_fallthru
        _
      %p124 = scmp.lt.s32.totalorder %s9, 2
      // Predicated region
      $region21: #{cnn_forward.5} parent=5 // pred_check
        %p125 = pneg %p124
      $region22: #{cnn_forward.5} parent=5 // pred_check_branch
        %127 = sbr.rel (%p125) target = $region24
      $region23: #{cnn_forward.5} parent=5 // pred_region
        // Predicated region
        $region25: #{cnn_forward.5} parent=23 // pred_check
          %p128 = pneg %p29
        $region26: #{cnn_forward.5} parent=23 // pred_check_branch
          %130 = sbr.rel (%p128) target = $region28
        $region27: #{cnn_forward.5} parent=23 // pred_region
          %s131 = sand.u32 %s19, 1
          %s132 = sand.u32 %s19, 1
          %s133 = smul.addr %s132, 384
          %s134 = scalar_lea.vmem [#allocation2], %s133
          %s135 = smul.u32 8, %s9
          %s136 = ssub.s32 13, %s135
          %p137 = scmp.lt.s32.totalorder %s136, 8
          %s138 = scalar_select %p137, %s136, 8
          %s139 = smul.u32 256, %s138
          %s140 = smul.u32 %s139, 3
          %p141 = scmp.ne.s32.totalorder 0, %s140
          %s142 = smul.addr %s135, 3
          %s143 = smul.addr %s142, 4
          %s144 = scalar_lea.vmem %s0, %s143
          // Predicated region
          $region29: #{cnn_forward.5} parent=27 // pred_check
            %p145 = pneg %p141
          $region30: #{cnn_forward.5} parent=27 // pred_check_branch
            %147 = sbr.rel (%p145) target = $region32
          $region31: #{cnn_forward.5} parent=27 // pred_region
            // Predicated region
            $region33: #{cnn_forward.5} parent=31 // pred_check
              _
            $region34: #{cnn_forward.5} parent=31 // pred_check_branch
              %149 = sbr.rel (0) target = $region36
            $region35: #{cnn_forward.5} parent=31 // pred_region
              %s150 = scalar_lea.vmem %s144, 8
              %s151 = scalar_lea.vmem %s134, 8 [#allocation2]
              %s152 = sshrl.u32 %s138, 3
              // While loop
              $region37: #{cnn_forward.5} parent=35 // loop_pre_header
                _
              $region38: #{cnn_forward.5} parent=35 // loop_header
                %s154 = sphi 0, %s156
                %p155 = scmp.ge.s32.totalorder %s154, %s152
                %s159 = sphi 0, %s228
                %s160 = sphi %s144, %s231
                %s161 = sphi %s134, %s232
              $region39: #{cnn_forward.5} parent=35 // loop_header_branch
                %158 = sbr.rel (%p155) target = $region43
              $region40: #{cnn_forward.5} parent=35 // loop_body
                %v162 = vld [vmem:[%s160] sm:$0xff]
                %163 = vst [vmem:[%s161] sm:$0xff] %v162
                %v164 = vld [vmem:[%s160 + $0xc] sm:$0xff]
                %165 = vst [vmem:[%s161 + $0xc] sm:$0xff] %v164
                %v166 = vld [vmem:[%s160 + $0x18] sm:$0xff]
                %167 = vst [vmem:[%s161 + $0x18] sm:$0xff] %v166
                %v168 = vld [vmem:[%s160 + $0x24] sm:$0xff]
                %169 = vst [vmem:[%s161 + $0x24] sm:$0xff] %v168
                %v170 = vld [vmem:[%s160 + $0x30] sm:$0xff]
                %171 = vst [vmem:[%s161 + $0x30] sm:$0xff] %v170
                %v172 = vld [vmem:[%s160 + $0x3c] sm:$0xff]
                %173 = vst [vmem:[%s161 + $0x3c] sm:$0xff] %v172
                %v174 = vld [vmem:[%s160 + $0x48] sm:$0xff]
                %175 = vst [vmem:[%s161 + $0x48] sm:$0xff] %v174
                %v176 = vld [vmem:[%s160 + $0x54] sm:$0xff]
                %177 = vst [vmem:[%s161 + $0x54] sm:$0xff] %v176
                %v178 = vld [vmem:[%s160 + $0x9c] sm:$0xff]
                %179 = vst [vmem:[%s161 + $0x60] sm:$0xff] %v178
                %v180 = vld [vmem:[%s160 + $0xa8] sm:$0xff]
                %181 = vst [vmem:[%s161 + $0x6c] sm:$0xff] %v180
                %v182 = vld [vmem:[%s160 + $0xb4] sm:$0xff]
                %183 = vst [vmem:[%s161 + $0x78] sm:$0xff] %v182
                %v184 = vld [vmem:[%s160 + $0xc0] sm:$0xff]
                %185 = vst [vmem:[%s161 + $0x84] sm:$0xff] %v184
                %v186 = vld [vmem:[%s160 + $0xcc] sm:$0xff]
                %187 = vst [vmem:[%s161 + $0x90] sm:$0xff] %v186
                %v188 = vld [vmem:[%s160 + $0xd8] sm:$0xff]
                %189 = vst [vmem:[%s161 + $0x9c] sm:$0xff] %v188
                %v190 = vld [vmem:[%s160 + $0xe4] sm:$0xff]
                %191 = vst [vmem:[%s161 + $0xa8] sm:$0xff] %v190
                %v192 = vld [vmem:[%s160 + $0xf0] sm:$0xff]
                %193 = vst [vmem:[%s161 + $0xb4] sm:$0xff] %v192
                %v194 = vld [vmem:[%s160 + $0x138] sm:$0xff]
                %195 = vst [vmem:[%s161 + $0xc0] sm:$0xff] %v194
                %v196 = vld [vmem:[%s160 + $0x144] sm:$0xff]
                %197 = vst [vmem:[%s161 + $0xcc] sm:$0xff] %v196
                %v198 = vld [vmem:[%s160 + $0x150] sm:$0xff]
                %199 = vst [vmem:[%s161 + $0xd8] sm:$0xff] %v198
                %v200 = vld [vmem:[%s160 + $0x15c] sm:$0xff]
                %201 = vst [vmem:[%s161 + $0xe4] sm:$0xff] %v200
                %v202 = vld [vmem:[%s160 + $0x168] sm:$0xff]
                %203 = vst [vmem:[%s161 + $0xf0] sm:$0xff] %v202
                %v204 = vld [vmem:[%s160 + $0x174] sm:$0xff]
                %205 = vst [vmem:[%s161 + $0xfc] sm:$0xff] %v204
                %v206 = vld [vmem:[%s160 + $0x180] sm:$0xff]
                %207 = vst [vmem:[%s161 + $0x108] sm:$0xff] %v206
                %v208 = vld [vmem:[%s160 + $0x18c] sm:$0xff]
                %209 = vst [vmem:[%s161 + $0x114] sm:$0xff] %v208
                %v210 = vld [vmem:[%s160 + $0x1d4] sm:$0xff]
                %211 = vst [vmem:[%s161 + $0x120] sm:$0xff] %v210
                %v212 = vld [vmem:[%s160 + $0x1e0] sm:$0xff]
                %213 = vst [vmem:[%s161 + $0x12c] sm:$0xff] %v212
                %v214 = vld [vmem:[%s160 + $0x1ec] sm:$0xff]
                %215 = vst [vmem:[%s161 + $0x138] sm:$0xff] %v214
                %v216 = vld [vmem:[%s160 + $0x1f8] sm:$0xff]
                %217 = vst [vmem:[%s161 + $0x144] sm:$0xff] %v216
                %v218 = vld [vmem:[%s160 + $0x204] sm:$0xff]
                %219 = vst [vmem:[%s161 + $0x150] sm:$0xff] %v218
                %v220 = vld [vmem:[%s160 + $0x210] sm:$0xff]
                %221 = vst [vmem:[%s161 + $0x15c] sm:$0xff] %v220
                %v222 = vld [vmem:[%s160 + $0x21c] sm:$0xff]
                %223 = vst [vmem:[%s161 + $0x168] sm:$0xff] %v222
                %v224 = vld [vmem:[%s160 + $0x228] sm:$0xff]
                %225 = vst [vmem:[%s161 + $0x174] sm:$0xff] %v224
                %s226 = sadd.s32 1, %s159
                %p227 = scmp.ge.s32.totalorder %s226, %s152
                %s228 = scalar_select %p227, 0, %s226
                %s229 = smul.u32 %s228, 96
                %s230 = smul.u32 %s228, 96
                %s231 = scalar_lea.vmem %s144, %s229
                %s232 = scalar_lea.vmem %s134, %s230 [#allocation2]
              $region41: #{cnn_forward.5} parent=35 // loop_footer
                %s156 = sadd.s32 %s154, 1
              $region42: #{cnn_forward.5} parent=35 // loop_footer_branch
                %153 = sbr.rel target = $region38
              $region43: #{cnn_forward.5} parent=35 // loop_exit
                _
              %s233 = sshrl.u32 %s138, 3
              %s234 = sand.u32 %s138, 7
              %s235 = smul.u32 %s233, 8
              %s236 = smul.u32 12, %s235
              %s237 = scalar_lea.vmem %s144, %s236
              %s238 = smul.u32 12, %s235
              %s239 = scalar_lea.vmem %s134, %s238 [#allocation2]
              // While loop
              $region44: #{cnn_forward.5} parent=35 // loop_pre_header
                _
              $region45: #{cnn_forward.5} parent=35 // loop_header
                %s241 = sphi 0, %s243
                %p242 = scmp.ge.s32.totalorder %s241, %s234
                %s246 = sphi 0, %s259
                %s247 = sphi %s237, %s262
                %s248 = sphi %s239, %s263
              $region46: #{cnn_forward.5} parent=35 // loop_header_branch
                %245 = sbr.rel (%p242) target = $region50
              $region47: #{cnn_forward.5} parent=35 // loop_body
                %v249 = vld [vmem:[%s247] sm:$0xff]
                %250 = vst [vmem:[%s248] sm:$0xff] %v249
                %v251 = vld [vmem:[%s247 + $0x9c] sm:$0xff]
                %252 = vst [vmem:[%s248 + $0x60] sm:$0xff] %v251
                %v253 = vld [vmem:[%s247 + $0x138] sm:$0xff]
                %254 = vst [vmem:[%s248 + $0xc0] sm:$0xff] %v253
                %v255 = vld [vmem:[%s247 + $0x1d4] sm:$0xff]
                %256 = vst [vmem:[%s248 + $0x120] sm:$0xff] %v255
                %s257 = sadd.s32 1, %s246
                %p258 = scmp.ge.s32.totalorder %s257, %s234
                %s259 = scalar_select %p258, 0, %s257
                %s260 = smul.u32 %s259, 12
                %s261 = smul.u32 %s259, 12
                %s262 = scalar_lea.vmem %s237, %s260
                %s263 = scalar_lea.vmem %s239, %s261 [#allocation2]
              $region48: #{cnn_forward.5} parent=35 // loop_footer
                %s243 = sadd.s32 %s241, 1
              $region49: #{cnn_forward.5} parent=35 // loop_footer_branch
                %240 = sbr.rel target = $region45
              $region50: #{cnn_forward.5} parent=35 // loop_exit
                _
              %s265 = sshrl.u32 %s138, 3
              // While loop
              $region51: #{cnn_forward.5} parent=35 // loop_pre_header
                _
              $region52: #{cnn_forward.5} parent=35 // loop_header
                %s267 = sphi 0, %s269
                %p268 = scmp.ge.s32.totalorder %s267, %s265
                %s272 = sphi 0, %s341
                %s273 = sphi %s150, %s344
                %s274 = sphi %s151, %s345
              $region53: #{cnn_forward.5} parent=35 // loop_header_branch
                %271 = sbr.rel (%p268) target = $region57
              $region54: #{cnn_forward.5} parent=35 // loop_body
                %v275 = vld [vmem:[%s273] sm:$0xf]
                %276 = vst [vmem:[%s274] sm:$0xf] %v275
                %v277 = vld [vmem:[%s273 + $0xc] sm:$0xf]
                %278 = vst [vmem:[%s274 + $0xc] sm:$0xf] %v277
                %v279 = vld [vmem:[%s273 + $0x18] sm:$0xf]
                %280 = vst [vmem:[%s274 + $0x18] sm:$0xf] %v279
                %v281 = vld [vmem:[%s273 + $0x24] sm:$0xf]
                %282 = vst [vmem:[%s274 + $0x24] sm:$0xf] %v281
                %v283 = vld [vmem:[%s273 + $0x30] sm:$0xf]
                %284 = vst [vmem:[%s274 + $0x30] sm:$0xf] %v283
                %v285 = vld [vmem:[%s273 + $0x3c] sm:$0xf]
                %286 = vst [vmem:[%s274 + $0x3c] sm:$0xf] %v285
                %v287 = vld [vmem:[%s273 + $0x48] sm:$0xf]
                %288 = vst [vmem:[%s274 + $0x48] sm:$0xf] %v287
                %v289 = vld [vmem:[%s273 + $0x54] sm:$0xf]
                %290 = vst [vmem:[%s274 + $0x54] sm:$0xf] %v289
                %v291 = vld [vmem:[%s273 + $0x9c] sm:$0xf]
                %292 = vst [vmem:[%s274 + $0x60] sm:$0xf] %v291
                %v293 = vld [vmem:[%s273 + $0xa8] sm:$0xf]
                %294 = vst [vmem:[%s274 + $0x6c] sm:$0xf] %v293
                %v295 = vld [vmem:[%s273 + $0xb4] sm:$0xf]
                %296 = vst [vmem:[%s274 + $0x78] sm:$0xf] %v295
                %v297 = vld [vmem:[%s273 + $0xc0] sm:$0xf]
                %298 = vst [vmem:[%s274 + $0x84] sm:$0xf] %v297
                %v299 = vld [vmem:[%s273 + $0xcc] sm:$0xf]
                %300 = vst [vmem:[%s274 + $0x90] sm:$0xf] %v299
                %v301 = vld [vmem:[%s273 + $0xd8] sm:$0xf]
                %302 = vst [vmem:[%s274 + $0x9c] sm:$0xf] %v301
                %v303 = vld [vmem:[%s273 + $0xe4] sm:$0xf]
                %304 = vst [vmem:[%s274 + $0xa8] sm:$0xf] %v303
                %v305 = vld [vmem:[%s273 + $0xf0] sm:$0xf]
                %306 = vst [vmem:[%s274 + $0xb4] sm:$0xf] %v305
                %v307 = vld [vmem:[%s273 + $0x138] sm:$0xf]
                %308 = vst [vmem:[%s274 + $0xc0] sm:$0xf] %v307
                %v309 = vld [vmem:[%s273 + $0x144] sm:$0xf]
                %310 = vst [vmem:[%s274 + $0xcc] sm:$0xf] %v309
                %v311 = vld [vmem:[%s273 + $0x150] sm:$0xf]
                %312 = vst [vmem:[%s274 + $0xd8] sm:$0xf] %v311
                %v313 = vld [vmem:[%s273 + $0x15c] sm:$0xf]
                %314 = vst [vmem:[%s274 + $0xe4] sm:$0xf] %v313
                %v315 = vld [vmem:[%s273 + $0x168] sm:$0xf]
                %316 = vst [vmem:[%s274 + $0xf0] sm:$0xf] %v315
                %v317 = vld [vmem:[%s273 + $0x174] sm:$0xf]
                %318 = vst [vmem:[%s274 + $0xfc] sm:$0xf] %v317
                %v319 = vld [vmem:[%s273 + $0x180] sm:$0xf]
                %320 = vst [vmem:[%s274 + $0x108] sm:$0xf] %v319
                %v321 = vld [vmem:[%s273 + $0x18c] sm:$0xf]
                %322 = vst [vmem:[%s274 + $0x114] sm:$0xf] %v321
                %v323 = vld [vmem:[%s273 + $0x1d4] sm:$0xf]
                %324 = vst [vmem:[%s274 + $0x120] sm:$0xf] %v323
                %v325 = vld [vmem:[%s273 + $0x1e0] sm:$0xf]
                %326 = vst [vmem:[%s274 + $0x12c] sm:$0xf] %v325
                %v327 = vld [vmem:[%s273 + $0x1ec] sm:$0xf]
                %328 = vst [vmem:[%s274 + $0x138] sm:$0xf] %v327
                %v329 = vld [vmem:[%s273 + $0x1f8] sm:$0xf]
                %330 = vst [vmem:[%s274 + $0x144] sm:$0xf] %v329
                %v331 = vld [vmem:[%s273 + $0x204] sm:$0xf]
                %332 = vst [vmem:[%s274 + $0x150] sm:$0xf] %v331
                %v333 = vld [vmem:[%s273 + $0x210] sm:$0xf]
                %334 = vst [vmem:[%s274 + $0x15c] sm:$0xf] %v333
                %v335 = vld [vmem:[%s273 + $0x21c] sm:$0xf]
                %336 = vst [vmem:[%s274 + $0x168] sm:$0xf] %v335
                %v337 = vld [vmem:[%s273 + $0x228] sm:$0xf]
                %338 = vst [vmem:[%s274 + $0x174] sm:$0xf] %v337
                %s339 = sadd.s32 1, %s272
                %p340 = scmp.ge.s32.totalorder %s339, %s265
                %s341 = scalar_select %p340, 0, %s339
                %s342 = smul.u32 %s341, 96
                %s343 = smul.u32 %s341, 96
                %s344 = scalar_lea.vmem %s150, %s342
                %s345 = scalar_lea.vmem %s151, %s343 [#allocation2]
              $region55: #{cnn_forward.5} parent=35 // loop_footer
                %s269 = sadd.s32 %s267, 1
              $region56: #{cnn_forward.5} parent=35 // loop_footer_branch
                %266 = sbr.rel target = $region52
              $region57: #{cnn_forward.5} parent=35 // loop_exit
                _
              %s346 = sshrl.u32 %s138, 3
              %s347 = sand.u32 %s138, 7
              %s348 = smul.u32 %s346, 8
              %s349 = smul.u32 12, %s348
              %s350 = scalar_lea.vmem %s150, %s349
              %s351 = smul.u32 12, %s348
              %s352 = scalar_lea.vmem %s151, %s351 [#allocation2]
              // While loop
              $region58: #{cnn_forward.5} parent=35 // loop_pre_header
                _
              $region59: #{cnn_forward.5} parent=35 // loop_header
                %s354 = sphi 0, %s356
                %p355 = scmp.ge.s32.totalorder %s354, %s347
                %s359 = sphi 0, %s372
                %s360 = sphi %s350, %s375
                %s361 = sphi %s352, %s376
              $region60: #{cnn_forward.5} parent=35 // loop_header_branch
                %358 = sbr.rel (%p355) target = $region64
              $region61: #{cnn_forward.5} parent=35 // loop_body
                %v362 = vld [vmem:[%s360] sm:$0xf]
                %363 = vst [vmem:[%s361] sm:$0xf] %v362
                %v364 = vld [vmem:[%s360 + $0x9c] sm:$0xf]
                %365 = vst [vmem:[%s361 + $0x60] sm:$0xf] %v364
                %v366 = vld [vmem:[%s360 + $0x138] sm:$0xf]
                %367 = vst [vmem:[%s361 + $0xc0] sm:$0xf] %v366
                %v368 = vld [vmem:[%s360 + $0x1d4] sm:$0xf]
                %369 = vst [vmem:[%s361 + $0x120] sm:$0xf] %v368
                %s370 = sadd.s32 1, %s359
                %p371 = scmp.ge.s32.totalorder %s370, %s347
                %s372 = scalar_select %p371, 0, %s370
                %s373 = smul.u32 %s372, 12
                %s374 = smul.u32 %s372, 12
                %s375 = scalar_lea.vmem %s350, %s373
                %s376 = scalar_lea.vmem %s352, %s374 [#allocation2]
              $region62: #{cnn_forward.5} parent=35 // loop_footer
                %s356 = sadd.s32 %s354, 1
              $region63: #{cnn_forward.5} parent=35 // loop_footer_branch
                %353 = sbr.rel target = $region59
              $region64: #{cnn_forward.5} parent=35 // loop_exit
                _
            $region36: #{cnn_forward.5} parent=31 // pred_fallthru
              _
          $region32: #{cnn_forward.5} parent=27 // pred_fallthru
            _
          %377 = vnop
        $region28: #{cnn_forward.5} parent=23 // pred_fallthru
          _
      $region24: #{cnn_forward.5} parent=5 // pred_fallthru
        _
      %p378 = scmp.le.s32.totalorder 1, %s9
      %p379 = scmp.lt.s32.totalorder %s9, 3
      %p380 = pnand %p378, %p379
      %p381 = pneg %p380
      // Predicated region
      $region65: #{cnn_forward.5} parent=5 // pred_check
        _
      $region66: #{cnn_forward.5} parent=5 // pred_check_branch
        %383 = sbr.rel (%p380) target = $region68
      $region67: #{cnn_forward.5} parent=5 // pred_region
        %s384 = ssub.s32 %s9, 1
        %s385 = sand.u32 %s22, 1
        %s386 = sand.u32 %s22, 1
        %s387 = smul.addr %s386, 384
        %s388 = scalar_lea.vmem [#allocation2], %s387
        // Predicated region
        $region69: #{cnn_forward.5} parent=67 // pred_check
          %p389 = pneg %p35
        $region70: #{cnn_forward.5} parent=67 // pred_check_branch
          %391 = sbr.rel (%p389) target = $region72
        $region71: #{cnn_forward.5} parent=67 // pred_region
          _
        $region72: #{cnn_forward.5} parent=67 // pred_fallthru
          _
        %s392 = sand.u32 %s22, 1
        %s393 = sand.u32 %s22, 1
        %s394 = smul.addr %s393, 384
        %s395 = scalar_lea.vmem [#allocation2], %s394
        %p396 = pneg %p35
        %p397 = pneg %p32
        %p398 = pneg %p56
        %p399 = pneg %p53
        %p400 = pneg %p77
        %p401 = pneg %p74
        %p402 = pneg %p103
        %p403 = pneg %p100
        %s404 = sand.u32 %s90, 1
        %s405 = sand.u32 %s90, 1
        %s406 = smul.addr %s405, 32
        %s407 = scalar_lea.vmem [#allocation3], %s406
        %s408 = smul.u32 8, %s14
        %s409 = ssub.s32 13, %s408
        %p410 = scmp.lt.s32.totalorder %s409, 8
        %s411 = scalar_select %p410, %s409, 8
        %s412 = smul.u32 256, %s411
        %s413 = smul.u32 %s412, 3
        %s414 = smul.u32 8, %s14
        %s415 = ssub.s32 13, %s414
        %p416 = scmp.lt.s32.totalorder %s415, 8
        %s417 = scalar_select %p416, %s415, 8
        %s418 = smul.u32 64, %s417
        %v420 = vld [vmem:[%s1] sm:$0xf]
        %v421 = vld [vmem:[%s1 + $0x4] sm:$0xf]
        %v422 = vld [vmem:[%s1 + $0x8] sm:$0xf]
        %v423 = vld [vmem:[%s1 + $0xc] sm:$0xf]
        %v424 = vld [vmem:[%s1 + $0x10] sm:$0xf]
        %v425 = vld [vmem:[%s1 + $0x14] sm:$0xf]
        %v426 = vld [vmem:[%s1 + $0x18] sm:$0xf]
        %v427 = vld [vmem:[%s1 + $0x1c] sm:$0xf]
        %v428 = vld [vmem:[%s1 + $0x20] sm:$0xf]
        %v429 = vld [vmem:[%s1 + $0x24] sm:$0xf]
        %v430 = vld [vmem:[%s1 + $0x28] sm:$0xf]
        %v431 = vld [vmem:[%s1 + $0x2c] sm:$0xf]
        %v432 = vld [vmem:[%s1 + $0x30] sm:$0xf]
        %v433 = vld [vmem:[%s1 + $0x34] sm:$0xf]
        %v434 = vld [vmem:[%s1 + $0x38] sm:$0xf]
        %v435 = vld [vmem:[%s1 + $0x3c] sm:$0xf]
        %v436 = vld [vmem:[%s1 + $0x40] sm:$0xf]
        %v437 = vld [vmem:[%s1 + $0x44] sm:$0xf]
        %v438 = vld [vmem:[%s1 + $0x48] sm:$0xf]
        %v439 = vld [vmem:[%s1 + $0x4c] sm:$0xf]
        %v440 = vld [vmem:[%s1 + $0x50] sm:$0xf]
        %v441 = vld [vmem:[%s1 + $0x54] sm:$0xf]
        %v442 = vld [vmem:[%s1 + $0x58] sm:$0xf]
        %v443 = vld [vmem:[%s1 + $0x5c] sm:$0xf]
        %v444 = vld [vmem:[%s1 + $0x60] sm:$0xf]
        %v445 = vld [vmem:[%s1 + $0x64] sm:$0xf]
        %v446 = vld [vmem:[%s1 + $0x68] sm:$0xf]
        %v447 = vld [vmem:[%s1 + $0x6c] sm:$0xf]
        %v448 = vld [vmem:[%s1 + $0x70] sm:$0xf]
        %v449 = vld [vmem:[%s1 + $0x74] sm:$0xf]
        %v450 = vld [vmem:[%s1 + $0x78] sm:$0xf]
        %v451 = vld [vmem:[%s1 + $0x7c] sm:$0xf]
        %v452 = vld [vmem:[%s1 + $0x80] sm:$0xf]
        %v453 = vld [vmem:[%s1 + $0x84] sm:$0xf]
        %v454 = vld [vmem:[%s1 + $0x88] sm:$0xf]
        %v455 = vld [vmem:[%s1 + $0x8c] sm:$0xf]
        %v456 = vld [vmem:[%s388] sm:$0xff]
        %v457 = vld [vmem:[%s388 + $0x8] sm:$0xf]
        %v458 = vld [vmem:[%s388 + $0xc] sm:$0xff]
        %v459 = vld [vmem:[%s388 + $0x14] sm:$0xf]
        %v460 = vld [vmem:[%s388 + $0x18] sm:$0xff]
        %v461 = vld [vmem:[%s388 + $0x20] sm:$0xf]
        %v462 = vld [vmem:[%s388 + $0x24] sm:$0xff]
        %v463 = vld [vmem:[%s388 + $0x2c] sm:$0xf]
        %v464 = vld [vmem:[%s388 + $0x30] sm:$0xff]
        %v465 = vld [vmem:[%s388 + $0x38] sm:$0xf]
        %v466 = vld [vmem:[%s388 + $0x3c] sm:$0xff]
        %v467 = vld [vmem:[%s388 + $0x44] sm:$0xf]
        %v468 = vld [vmem:[%s388 + $0x48] sm:$0xff]
        %v469 = vld [vmem:[%s388 + $0x50] sm:$0xf]
        %v470 = vld [vmem:[%s388 + $0x54] sm:$0xff]
        %v471 = vld [vmem:[%s388 + $0x5c] sm:$0xf]
        %v488 = vunpack.c.l.b16 %v456
        %v489 = vunpack.c.h.b16 %v456
        %v490 = vunpack.c.l.b16 %v457
        %v491 = vunpack.c.l.b16 %v458
        %v492 = vunpack.c.h.b16 %v458
        %v493 = vunpack.c.l.b16 %v459
        %v494 = vunpack.c.l.b16 %v460
        %v495 = vunpack.c.h.b16 %v460
        %v496 = vunpack.c.l.b16 %v461
        %v497 = vunpack.c.l.b16 %v462
        %v498 = vunpack.c.h.b16 %v462
        %v499 = vunpack.c.l.b16 %v463
        %v500 = vunpack.c.l.b16 %v464
        %v501 = vunpack.c.h.b16 %v464
        %v502 = vunpack.c.l.b16 %v465
        %v503 = vunpack.c.l.b16 %v466
        %v504 = vunpack.c.h.b16 %v466
        %v505 = vunpack.c.l.b16 %v467
        %v506 = vunpack.c.l.b16 %v468
        %v507 = vunpack.c.h.b16 %v468
        %v508 = vunpack.c.l.b16 %v469
        %v509 = vunpack.c.l.b16 %v470
        %v510 = vunpack.c.h.b16 %v470
        %v511 = vunpack.c.l.b16 %v471
        %v512 = vpack.c.b16 %v491, %v488
        %v513 = vpack.c.b16 %v492, %v489
        %v514 = vpack.c.b16 %v493, %v490
        %v515 = vpack.c.b16 %v497, %v494
        %v516 = vpack.c.b16 %v498, %v495
        %v517 = vpack.c.b16 %v499, %v496
        %v518 = vpack.c.b16 %v503, %v500
        %v519 = vpack.c.b16 %v504, %v501
        %v520 = vpack.c.b16 %v505, %v502
        %v521 = vpack.c.b16 %v509, %v506
        %v522 = vpack.c.b16 %v510, %v507
        %v523 = vpack.c.b16 %v511, %v508
        %v568 = vunpack.c.l.b16 %v420
        %v569 = vunpack.c.l.b16 %v421
        %v570 = vunpack.c.l.b16 %v422
        %v571 = vunpack.c.l.b16 %v423
        %v572 = vunpack.c.l.b16 %v424
        %v573 = vunpack.c.l.b16 %v425
        %v574 = vunpack.c.l.b16 %v426
        %v575 = vunpack.c.l.b16 %v427
        %v576 = vunpack.c.l.b16 %v428
        %v577 = vunpack.c.l.b16 %v429
        %v578 = vunpack.c.l.b16 %v430
        %v579 = vunpack.c.l.b16 %v431
        %v580 = vunpack.c.l.b16 %v432
        %v581 = vunpack.c.l.b16 %v433
        %v582 = vunpack.c.l.b16 %v434
        %v583 = vunpack.c.l.b16 %v435
        %v584 = vunpack.c.l.b16 %v436
        %v585 = vunpack.c.l.b16 %v437
        %v586 = vunpack.c.l.b16 %v438
        %v587 = vunpack.c.l.b16 %v439
        %v588 = vunpack.c.l.b16 %v440
        %v589 = vunpack.c.l.b16 %v441
        %v590 = vunpack.c.l.b16 %v442
        %v591 = vunpack.c.l.b16 %v443
        %v592 = vunpack.c.l.b16 %v444
        %v593 = vunpack.c.l.b16 %v445
        %v594 = vunpack.c.l.b16 %v446
        %v595 = vunpack.c.l.b16 %v447
        %v596 = vunpack.c.l.b16 %v448
        %v597 = vunpack.c.l.b16 %v449
        %v598 = vunpack.c.l.b16 %v450
        %v599 = vunpack.c.l.b16 %v451
        %v600 = vunpack.c.l.b16 %v452
        %v601 = vunpack.c.l.b16 %v453
        %v602 = vunpack.c.l.b16 %v454
        %v603 = vunpack.c.l.b16 %v455
        %v604 = vpack.c.b16 %v569, %v568
        %v605 = vpack.c.b16 %v571, %v570
        %v606 = vpack.c.b16 %v573, %v572
        %v607 = vpack.c.b16 %v575, %v574
        %v608 = vpack.c.b16 %v577, %v576
        %v609 = vpack.c.b16 %v579, %v578
        %v610 = vpack.c.b16 %v581, %v580
        %v611 = vpack.c.b16 %v583, %v582
        %v612 = vpack.c.b16 %v585, %v584
        %v613 = vpack.c.b16 %v587, %v586
        %v614 = vpack.c.b16 %v589, %v588
        %v615 = vpack.c.b16 %v591, %v590
        %v616 = vpack.c.b16 %v593, %v592
        %v617 = vpack.c.b16 %v595, %v594
        %v618 = vpack.c.b16 %v597, %v596
        %v619 = vpack.c.b16 %v599, %v598
        %v620 = vpack.c.b16 %v601, %v600
        %v621 = vpack.c.b16 %v603, %v602
        %vm640 = vcmask 261120
        %v642 = vsel %vm640, %v514, 0
        %v645 = vsel %vm640, %v517, 0
        %v648 = vsel %vm640, %v520, 0
        %v651 = vsel %vm640, %v523, 0
        %653 = vmatprep.subr.bf16.mxu0 0
        %654 = vmatpush1.bf16.msra.mxu0 %v604
        %655 = vmatprep.subr.bf16.mxu0 0
        %656 = vmatpush1.bf16.msra.mxu0 %v605
        %657 = vmatprep.subr.bf16.mxu0 0
        %658 = vmatpush1.bf16.msra.mxu0 %v606
        %659 = vmatprep.subr.bf16.mxu0 0
        %660 = vmatpush1.bf16.msra.mxu0 %v607
        %661 = vmatprep.subr.bf16.mxu0 0
        %662 = vmatpush1.bf16.msra.mxu0 %v608
        %663 = vmatprep.subr.bf16.mxu0 0
        %664 = vmatpush1.bf16.msra.mxu0 %v609
        %665 = vmatprep.subr.bf16.mxu0 0
        %666 = vmatpush1.bf16.msra.mxu0 %v610
        %667 = vmatprep.subr.bf16.mxu0 0
        %668 = vmatpush1.bf16.msra.mxu0 %v611
        %669 = vmatprep.subr.bf16.mxu0 0
        %670 = vmatpush1.bf16.msra.mxu0 %v612
        %671 = vmatprep.subr.bf16.mxu0 0
        %672 = vmatpush1.bf16.msra.mxu0 %v613
        %673 = vmatprep.subr.bf16.mxu0 0
        %674 = vmatpush1.bf16.msra.mxu0 %v614
        %675 = vmatprep.subr.bf16.mxu0 0
        %676 = vmatpush1.bf16.msra.mxu0 %v615
        %677 = vmatprep.subr.bf16.mxu0 0
        %678 = vmatpush1.bf16.msra.mxu0 %v616
        %679 = vmatprep.subr.bf16.mxu0 0
        %680 = vmatpush1.bf16.msra.mxu0 %v617
        %681 = vmatprep.subr.bf16.mxu0 0
        %682 = vmatpush1.bf16.msra.mxu0 %v618
        %683 = vmatprep.subr.bf16.mxu0 0
        %684 = vmatpush1.bf16.msra.mxu0 %v619
        %685 = vmatprep.mubr.bf16.mxu0 %v513
        %686 = vmatmul.mubr.bf16.gmra.mrb[0].mxu0 %v512
        %v687 = vpop.f32.mrb[0].mxu0
        %v688 = vadd.f32 0.0, %v687
        %v689 = vpop.f32.mrb[0].mxu0
        %v690 = vpop.f32.mrb[0].mxu0
        %v691 = vadd.f32 0.0, %v690
        %v692 = vpop.f32.mrb[0].mxu0
        %693 = vmatprep.mubr.bf16.mxu0 %v516
        %694 = vmatmul.mubr.bf16.gmra.mrb[0].mxu0 %v515
        %v695 = vpop.f32.mrb[0].mxu0
        %v696 = vadd.f32 0.0, %v695
        %v697 = vpop.f32.mrb[0].mxu0
        %v698 = vpop.f32.mrb[0].mxu0
        %v699 = vadd.f32 0.0, %v698
        %v700 = vpop.f32.mrb[0].mxu0
        %701 = vmatprep.mubr.bf16.mxu0 %v519
        %702 = vmatmul.mubr.bf16.gmra.mrb[0].mxu0 %v518
        %v703 = vpop.f32.mrb[0].mxu0
        %v704 = vadd.f32 0.0, %v703
        %v705 = vpop.f32.mrb[0].mxu0
        %v706 = vpop.f32.mrb[0].mxu0
        %v707 = vadd.f32 0.0, %v706
        %v708 = vpop.f32.mrb[0].mxu0
        %709 = vmatprep.mubr.bf16.mxu0 %v522
        %710 = vmatmul.mubr.bf16.gmra.mrb[0].mxu0 %v521
        %v711 = vpop.f32.mrb[0].mxu0
        %v712 = vadd.f32 0.0, %v711
        %v713 = vpop.f32.mrb[0].mxu0
        %v714 = vpop.f32.mrb[0].mxu0
        %v715 = vadd.f32 0.0, %v714
        %v716 = vpop.f32.mrb[0].mxu0
        %717 = vdwg.mxu0
        %718 = vmatprep.subr.bf16.mxu0 0
        %719 = vmatpush1.bf16.msra.mxu0 %v620
        %720 = vmatprep.subr.bf16.mxu0 0
        %721 = vmatpush1.bf16.msra.mxu0 %v621
        %722 = vmatprep.subr.bf16.mxu0 0
        %723 = vmatpush1.bf16.msra.mxu0 0
        %724 = vmatprep.subr.bf16.mxu0 0
        %725 = vmatpush1.bf16.msra.mxu0 0
        %726 = vmatprep.subr.bf16.mxu0 0
        %727 = vmatpush1.bf16.msra.mxu0 0
        %728 = vmatprep.subr.bf16.mxu0 0
        %729 = vmatpush1.bf16.msra.mxu0 0
        %730 = vmatprep.subr.bf16.mxu0 0
        %731 = vmatpush1.bf16.msra.mxu0 0
        %732 = vmatprep.subr.bf16.mxu0 0
        %733 = vmatpush1.bf16.msra.mxu0 0
        %734 = vmatprep.subr.bf16.mxu0 0
        %735 = vmatpush1.bf16.msra.mxu0 0
        %736 = vmatprep.subr.bf16.mxu0 0
        %737 = vmatpush1.bf16.msra.mxu0 0
        %738 = vmatprep.subr.bf16.mxu0 0
        %739 = vmatpush1.bf16.msra.mxu0 0
        %740 = vmatprep.subr.bf16.mxu0 0
        %741 = vmatpush1.bf16.msra.mxu0 0
        %742 = vmatprep.subr.bf16.mxu0 0
        %743 = vmatpush1.bf16.msra.mxu0 0
        %744 = vmatprep.subr.bf16.mxu0 0
        %745 = vmatpush1.bf16.msra.mxu0 0
        %746 = vmatprep.subr.bf16.mxu0 0
        %747 = vmatpush1.bf16.msra.mxu0 0
        %748 = vmatprep.subr.bf16.mxu0 0
        %749 = vmatpush1.bf16.msra.mxu0 0
        %750 = vmatprep.mubr.bf16.mxu0 0
        %751 = vmatmul.mubr.bf16.gmra.mrb[0].mxu0 %v642
        %v752 = vpop.f32.mrb[0].mxu0
        %v753 = vadd.f32 %v688, %v752
        %v754 = vpop.f32.mrb[0].mxu0
        %v755 = vpop.f32.mrb[0].mxu0
        %v756 = vadd.f32 %v691, %v755
        %v757 = vpop.f32.mrb[0].mxu0
        %758 = vmatprep.mubr.bf16.mxu0 0
        %759 = vmatmul.mubr.bf16.gmra.mrb[0].mxu0 %v645
        %v760 = vpop.f32.mrb[0].mxu0
        %v761 = vadd.f32 %v696, %v760
        %v762 = vpop.f32.mrb[0].mxu0
        %v763 = vpop.f32.mrb[0].mxu0
        %v764 = vadd.f32 %v699, %v763
        %v765 = vpop.f32.mrb[0].mxu0
        %766 = vmatprep.mubr.bf16.mxu0 0
        %767 = vmatmul.mubr.bf16.gmra.mrb[0].mxu0 %v648
        %v768 = vpop.f32.mrb[0].mxu0
        %v769 = vadd.f32 %v704, %v768
        %v770 = vpop.f32.mrb[0].mxu0
        %v771 = vpop.f32.mrb[0].mxu0
        %v772 = vadd.f32 %v707, %v771
        %v773 = vpop.f32.mrb[0].mxu0
        %774 = vmatprep.mubr.bf16.mxu0 0
        %775 = vmatmul.mubr.bf16.gmra.mrb[0].mxu0 %v651
        %v776 = vpop.f32.mrb[0].mxu0
        %v777 = vadd.f32 %v712, %v776
        %v778 = vpop.f32.mrb[0].mxu0
        %v779 = vpop.f32.mrb[0].mxu0
        %v780 = vadd.f32 %v715, %v779
        %v781 = vpop.f32.mrb[0].mxu0
        %782 = vdwg.mxu0
        %s783 = scalar_lea.vmem %s388, 96 [#allocation2]
        %v784 = vld [vmem:[%s783] sm:$0xff]
        %v785 = vld [vmem:[%s783 + $0x8] sm:$0xf]
        %v786 = vld [vmem:[%s783 + $0xc] sm:$0xff]
        %v787 = vld [vmem:[%s783 + $0x14] sm:$0xf]
        %v788 = vld [vmem:[%s783 + $0x18] sm:$0xff]
        %v789 = vld [vmem:[%s783 + $0x20] sm:$0xf]
        %v790 = vld [vmem:[%s783 + $0x24] sm:$0xff]
        %v791 = vld [vmem:[%s783 + $0x2c] sm:$0xf]
        %v792 = vld [vmem:[%s783 + $0x30] sm:$0xff]
        %v793 = vld [vmem:[%s783 + $0x38] sm:$0xf]
        %v794 = vld [vmem:[%s783 + $0x3c] sm:$0xff]
        %v795 = vld [vmem:[%s783 + $0x44] sm:$0xf]
        %v796 = vld [vmem:[%s783 + $0x48] sm:$0xff]
        %v797 = vld [vmem:[%s783 + $0x50] sm:$0xf]
        %v798 = vld [vmem:[%s783 + $0x54] sm:$0xff]
        %v799 = vld [vmem:[%s783 + $0x5c] sm:$0xf]
        %v816 = vunpack.c.l.b16 %v784
        %v817 = vunpack.c.h.b16 %v784
        %v818 = vunpack.c.l.b16 %v785
        %v819 = vunpack.c.l.b16 %v786
        %v820 = vunpack.c.h.b16 %v786
        %v821 = vunpack.c.l.b16 %v787
        %v822 = vunpack.c.l.b16 %v788
        %v823 = vunpack.c.h.b16 %v788
        %v824 = vunpack.c.l.b16 %v789
        %v825 = vunpack.c.l.b16 %v790
        %v826 = vunpack.c.h.b16 %v790
        %v827 = vunpack.c.l.b16 %v791
        %v828 = vunpack.c.l.b16 %v792
        %v829 = vunpack.c.h.b16 %v792
        %v830 = vunpack.c.l.b16 %v793
        %v831 = vunpack.c.l.b16 %v794
        %v832 = vunpack.c.h.b16 %v794
        %v833 = vunpack.c.l.b16 %v795
        %v834 = vunpack.c.l.b16 %v796
        %v835 = vunpack.c.h.b16 %v796
        %v836 = vunpack.c.l.b16 %v797
        %v837 = vunpack.c.l.b16 %v798
        %v838 = vunpack.c.h.b16 %v798
        %v839 = vunpack.c.l.b16 %v799
        %v840 = vpack.c.b16 %v819, %v816
        %v841 = vpack.c.b16 %v820, %v817
        %v842 = vpack.c.b16 %v821, %v818
        %v843 = vpack.c.b16 %v825, %v822
        %v844 = vpack.c.b16 %v826, %v823
        %v845 = vpack.c.b16 %v827, %v824
        %v846 = vpack.c.b16 %v831, %v828
        %v847 = vpack.c.b16 %v832, %v829
        %v848 = vpack.c.b16 %v833, %v830
        %v849 = vpack.c.b16 %v837, %v834
        %v850 = vpack.c.b16 %v838, %v835
        %v851 = vpack.c.b16 %v839, %v836
        %v861 = vsel %vm640, %v842, 0
        %v864 = vsel %vm640, %v845, 0
        %v867 = vsel %vm640, %v848, 0
        %v870 = vsel %vm640, %v851, 0
        %872 = vmatprep.subr.bf16.mxu0 0
        %873 = vmatpush1.bf16.msra.mxu0 %v604
        %874 = vmatprep.subr.bf16.mxu0 0
        %875 = vmatpush1.bf16.msra.mxu0 %v605
        %876 = vmatprep.subr.bf16.mxu0 0
        %877 = vmatpush1.bf16.msra.mxu0 %v606
        %878 = vmatprep.subr.bf16.mxu0 0
        %879 = vmatpush1.bf16.msra.mxu0 %v607
        %880 = vmatprep.subr.bf16.mxu0 0
        %881 = vmatpush1.bf16.msra.mxu0 %v608
        %882 = vmatprep.subr.bf16.mxu0 0
        %883 = vmatpush1.bf16.msra.mxu0 %v609
        %884 = vmatprep.subr.bf16.mxu0 0
        %885 = vmatpush1.bf16.msra.mxu0 %v610
        %886 = vmatprep.subr.bf16.mxu0 0
        %887 = vmatpush1.bf16.msra.mxu0 %v611
        %888 = vmatprep.subr.bf16.mxu0 0
        %889 = vmatpush1.bf16.msra.mxu0 %v612
        %890 = vmatprep.subr.bf16.mxu0 0
        %891 = vmatpush1.bf16.msra.mxu0 %v613
        %892 = vmatprep.subr.bf16.mxu0 0
        %893 = vmatpush1.bf16.msra.mxu0 %v614
        %894 = vmatprep.subr.bf16.mxu0 0
        %895 = vmatpush1.bf16.msra.mxu0 %v615
        %896 = vmatprep.subr.bf16.mxu0 0
        %897 = vmatpush1.bf16.msra.mxu0 %v616
        %898 = vmatprep.subr.bf16.mxu0 0
        %899 = vmatpush1.bf16.msra.mxu0 %v617
        %900 = vmatprep.subr.bf16.mxu0 0
        %901 = vmatpush1.bf16.msra.mxu0 %v618
        %902 = vmatprep.subr.bf16.mxu0 0
        %903 = vmatpush1.bf16.msra.mxu0 %v619
        %904 = vmatprep.mubr.bf16.mxu0 %v841
        %905 = vmatmul.mubr.bf16.gmra.mrb[0].mxu0 %v840
        %v906 = vpop.f32.mrb[0].mxu0
        %v907 = vadd.f32 0.0, %v906
        %v908 = vpop.f32.mrb[0].mxu0
        %v909 = vpop.f32.mrb[0].mxu0
        %v910 = vadd.f32 0.0, %v909
        %v911 = vpop.f32.mrb[0].mxu0
        %912 = vmatprep.mubr.bf16.mxu0 %v844
        %913 = vmatmul.mubr.bf16.gmra.mrb[0].mxu0 %v843
        %v914 = vpop.f32.mrb[0].mxu0
        %v915 = vadd.f32 0.0, %v914
        %v916 = vpop.f32.mrb[0].mxu0
        %v917 = vpop.f32.mrb[0].mxu0
        %v918 = vadd.f32 0.0, %v917
        %v919 = vpop.f32.mrb[0].mxu0
        %920 = vmatprep.mubr.bf16.mxu0 %v847
        %921 = vmatmul.mubr.bf16.gmra.mrb[0].mxu0 %v846
        %v922 = vpop.f32.mrb[0].mxu0
        %v923 = vadd.f32 0.0, %v922
        %v924 = vpop.f32.mrb[0].mxu0
        %v925 = vpop.f32.mrb[0].mxu0
        %v926 = vadd.f32 0.0, %v925
        %v927 = vpop.f32.mrb[0].mxu0
        %928 = vmatprep.mubr.bf16.mxu0 %v850
        %929 = vmatmul.mubr.bf16.gmra.mrb[0].mxu0 %v849
        %v930 = vpop.f32.mrb[0].mxu0
        %v931 = vadd.f32 0.0, %v930
        %v932 = vpop.f32.mrb[0].mxu0
        %v933 = vpop.f32.mrb[0].mxu0
        %v934 = vadd.f32 0.0, %v933
        %v935 = vpop.f32.mrb[0].mxu0
        %936 = vdwg.mxu0
        %937 = vmatprep.subr.bf16.mxu0 0
        %938 = vmatpush1.bf16.msra.mxu0 %v620
        %939 = vmatprep.subr.bf16.mxu0 0
        %940 = vmatpush1.bf16.msra.mxu0 %v621
        %941 = vmatprep.subr.bf16.mxu0 0
        %942 = vmatpush1.bf16.msra.mxu0 0
        %943 = vmatprep.subr.bf16.mxu0 0
        %944 = vmatpush1.bf16.msra.mxu0 0
        %945 = vmatprep.subr.bf16.mxu0 0
        %946 = vmatpush1.bf16.msra.mxu0 0
        %947 = vmatprep.subr.bf16.mxu0 0
        %948 = vmatpush1.bf16.msra.mxu0 0
        %949 = vmatprep.subr.bf16.mxu0 0
        %950 = vmatpush1.bf16.msra.mxu0 0
        %951 = vmatprep.subr.bf16.mxu0 0
        %952 = vmatpush1.bf16.msra.mxu0 0
        %953 = vmatprep.subr.bf16.mxu0 0
        %954 = vmatpush1.bf16.msra.mxu0 0
        %955 = vmatprep.subr.bf16.mxu0 0
        %956 = vmatpush1.bf16.msra.mxu0 0
        %957 = vmatprep.subr.bf16.mxu0 0
        %958 = vmatpush1.bf16.msra.mxu0 0
        %959 = vmatprep.subr.bf16.mxu0 0
        %960 = vmatpush1.bf16.msra.mxu0 0
        %961 = vmatprep.subr.bf16.mxu0 0
        %962 = vmatpush1.bf16.msra.mxu0 0
        %963 = vmatprep.subr.bf16.mxu0 0
        %964 = vmatpush1.bf16.msra.mxu0 0
        %965 = vmatprep.subr.bf16.mxu0 0
        %966 = vmatpush1.bf16.msra.mxu0 0
        %967 = vmatprep.subr.bf16.mxu0 0
        %968 = vmatpush1.bf16.msra.mxu0 0
        %969 = vmatprep.mubr.bf16.mxu0 0
        %970 = vmatmul.mubr.bf16.gmra.mrb[0].mxu0 %v861
        %v971 = vpop.f32.mrb[0].mxu0
        %v972 = vadd.f32 %v907, %v971
        %v973 = vpop.f32.mrb[0].mxu0
        %v974 = vpop.f32.mrb[0].mxu0
        %v975 = vadd.f32 %v910, %v974
        %v976 = vpop.f32.mrb[0].mxu0
        %977 = vmatprep.mubr.bf16.mxu0 0
        %978 = vmatmul.mubr.bf16.gmra.mrb[0].mxu0 %v864
        %v979 = vpop.f32.mrb[0].mxu0
        %v980 = vadd.f32 %v915, %v979
        %v981 = vpop.f32.mrb[0].mxu0
        %v982 = vpop.f32.mrb[0].mxu0
        %v983 = vadd.f32 %v918, %v982
        %v984 = vpop.f32.mrb[0].mxu0
        %985 = vmatprep.mubr.bf16.mxu0 0
        %986 = vmatmul.mubr.bf16.gmra.mrb[0].mxu0 %v867
        %v987 = vpop.f32.mrb[0].mxu0
        %v988 = vadd.f32 %v923, %v987
        %v989 = vpop.f32.mrb[0].mxu0
        %v990 = vpop.f32.mrb[0].mxu0
        %v991 = vadd.f32 %v926, %v990
        %v992 = vpop.f32.mrb[0].mxu0
        %993 = vmatprep.mubr.bf16.mxu0 0
        %994 = vmatmul.mubr.bf16.gmra.mrb[0].mxu0 %v870
        %v995 = vpop.f32.mrb[0].mxu0
        %v996 = vadd.f32 %v931, %v995
        %v997 = vpop.f32.mrb[0].mxu0
        %v998 = vpop.f32.mrb[0].mxu0
        %v999 = vadd.f32 %v934, %v998
        %v1000 = vpop.f32.mrb[0].mxu0
        %1001 = vdwg.mxu0
        %v1002 = vmax.f32 %v753, %v972
        %v1003 = vmax.f32 %v756, %v975
        %v1004 = vmax.f32 %v761, %v980
        %v1005 = vmax.f32 %v764, %v983
        %v1006 = vmax.f32 %v769, %v988
        %v1007 = vmax.f32 %v772, %v991
        %v1008 = vmax.f32 %v777, %v996
        %v1009 = vmax.f32 %v780, %v999
        %s1010 = scalar_lea.vmem %s388, 192 [#allocation2]
        %v1011 = vld [vmem:[%s1010] sm:$0xff]
        %v1012 = vld [vmem:[%s1010 + $0x8] sm:$0xf]
        %v1013 = vld [vmem:[%s1010 + $0xc] sm:$0xff]
        %v1014 = vld [vmem:[%s1010 + $0x14] sm:$0xf]
        %v1015 = vld [vmem:[%s1010 + $0x18] sm:$0xff]
        %v1016 = vld [vmem:[%s1010 + $0x20] sm:$0xf]
        %v1017 = vld [vmem:[%s1010 + $0x24] sm:$0xff]
        %v1018 = vld [vmem:[%s1010 + $0x2c] sm:$0xf]
        %v1019 = vld [vmem:[%s1010 + $0x30] sm:$0xff]
        %v1020 = vld [vmem:[%s1010 + $0x38] sm:$0xf]
        %v1021 = vld [vmem:[%s1010 + $0x3c] sm:$0xff]
        %v1022 = vld [vmem:[%s1010 + $0x44] sm:$0xf]
        %v1023 = vld [vmem:[%s1010 + $0x48] sm:$0xff]
        %v1024 = vld [vmem:[%s1010 + $0x50] sm:$0xf]
        %v1025 = vld [vmem:[%s1010 + $0x54] sm:$0xff]
        %v1026 = vld [vmem:[%s1010 + $0x5c] sm:$0xf]
        %v1043 = vunpack.c.l.b16 %v1011
        %v1044 = vunpack.c.h.b16 %v1011
        %v1045 = vunpack.c.l.b16 %v1012
        %v1046 = vunpack.c.l.b16 %v1013
        %v1047 = vunpack.c.h.b16 %v1013
        %v1048 = vunpack.c.l.b16 %v1014
        %v1049 = vunpack.c.l.b16 %v1015
        %v1050 = vunpack.c.h.b16 %v1015
        %v1051 = vunpack.c.l.b16 %v1016
        %v1052 = vunpack.c.l.b16 %v1017
        %v1053 = vunpack.c.h.b16 %v1017
        %v1054 = vunpack.c.l.b16 %v1018
        %v1055 = vunpack.c.l.b16 %v1019
        %v1056 = vunpack.c.h.b16 %v1019
        %v1057 = vunpack.c.l.b16 %v1020
        %v1058 = vunpack.c.l.b16 %v1021
        %v1059 = vunpack.c.h.b16 %v1021
        %v1060 = vunpack.c.l.b16 %v1022
        %v1061 = vunpack.c.l.b16 %v1023
        %v1062 = vunpack.c.h.b16 %v1023
        %v1063 = vunpack.c.l.b16 %v1024
        %v1064 = vunpack.c.l.b16 %v1025
        %v1065 = vunpack.c.h.b16 %v1025
        %v1066 = vunpack.c.l.b16 %v1026
        %v1067 = vpack.c.b16 %v1046, %v1043
        %v1068 = vpack.c.b16 %v1047, %v1044
        %v1069 = vpack.c.b16 %v1048, %v1045
        %v1070 = vpack.c.b16 %v1052, %v1049
        %v1071 = vpack.c.b16 %v1053, %v1050
        %v1072 = vpack.c.b16 %v1054, %v1051
        %v1073 = vpack.c.b16 %v1058, %v1055
        %v1074 = vpack.c.b16 %v1059, %v1056
        %v1075 = vpack.c.b16 %v1060, %v1057
        %v1076 = vpack.c.b16 %v1064, %v1061
        %v1077 = vpack.c.b16 %v1065, %v1062
        %v1078 = vpack.c.b16 %v1066, %v1063
        %v1088 = vsel %vm640, %v1069, 0
        %v1091 = vsel %vm640, %v1072, 0
        %v1094 = vsel %vm640, %v1075, 0
        %v1097 = vsel %vm640, %v1078, 0
        %1099 = vmatprep.subr.bf16.mxu0 0
        %1100 = vmatpush1.bf16.msra.mxu0 %v604
        %1101 = vmatprep.subr.bf16.mxu0 0
        %1102 = vmatpush1.bf16.msra.mxu0 %v605
        %1103 = vmatprep.subr.bf16.mxu0 0
        %1104 = vmatpush1.bf16.msra.mxu0 %v606
        %1105 = vmatprep.subr.bf16.mxu0 0
        %1106 = vmatpush1.bf16.msra.mxu0 %v607
        %1107 = vmatprep.subr.bf16.mxu0 0
        %1108 = vmatpush1.bf16.msra.mxu0 %v608
        %1109 = vmatprep.subr.bf16.mxu0 0
        %1110 = vmatpush1.bf16.msra.mxu0 %v609
        %1111 = vmatprep.subr.bf16.mxu0 0
        %1112 = vmatpush1.bf16.msra.mxu0 %v610
        %1113 = vmatprep.subr.bf16.mxu0 0
        %1114 = vmatpush1.bf16.msra.mxu0 %v611
        %1115 = vmatprep.subr.bf16.mxu0 0
        %1116 = vmatpush1.bf16.msra.mxu0 %v612
        %1117 = vmatprep.subr.bf16.mxu0 0
        %1118 = vmatpush1.bf16.msra.mxu0 %v613
        %1119 = vmatprep.subr.bf16.mxu0 0
        %1120 = vmatpush1.bf16.msra.mxu0 %v614
        %1121 = vmatprep.subr.bf16.mxu0 0
        %1122 = vmatpush1.bf16.msra.mxu0 %v615
        %1123 = vmatprep.subr.bf16.mxu0 0
        %1124 = vmatpush1.bf16.msra.mxu0 %v616
        %1125 = vmatprep.subr.bf16.mxu0 0
        %1126 = vmatpush1.bf16.msra.mxu0 %v617
        %1127 = vmatprep.subr.bf16.mxu0 0
        %1128 = vmatpush1.bf16.msra.mxu0 %v618
        %1129 = vmatprep.subr.bf16.mxu0 0
        %1130 = vmatpush1.bf16.msra.mxu0 %v619
        %1131 = vmatprep.mubr.bf16.mxu0 %v1068
        %1132 = vmatmul.mubr.bf16.gmra.mrb[0].mxu0 %v1067
        %v1133 = vpop.f32.mrb[0].mxu0
        %v1134 = vadd.f32 0.0, %v1133
        %v1135 = vpop.f32.mrb[0].mxu0
        %v1136 = vpop.f32.mrb[0].mxu0
        %v1137 = vadd.f32 0.0, %v1136
        %v1138 = vpop.f32.mrb[0].mxu0
        %1139 = vmatprep.mubr.bf16.mxu0 %v1071
        %1140 = vmatmul.mubr.bf16.gmra.mrb[0].mxu0 %v1070
        %v1141 = vpop.f32.mrb[0].mxu0
        %v1142 = vadd.f32 0.0, %v1141
        %v1143 = vpop.f32.mrb[0].mxu0
        %v1144 = vpop.f32.mrb[0].mxu0
        %v1145 = vadd.f32 0.0, %v1144
        %v1146 = vpop.f32.mrb[0].mxu0
        %1147 = vmatprep.mubr.bf16.mxu0 %v1074
        %1148 = vmatmul.mubr.bf16.gmra.mrb[0].mxu0 %v1073
        %v1149 = vpop.f32.mrb[0].mxu0
        %v1150 = vadd.f32 0.0, %v1149
        %v1151 = vpop.f32.mrb[0].mxu0
        %v1152 = vpop.f32.mrb[0].mxu0
        %v1153 = vadd.f32 0.0, %v1152
        %v1154 = vpop.f32.mrb[0].mxu0
        %1155 = vmatprep.mubr.bf16.mxu0 %v1077
        %1156 = vmatmul.mubr.bf16.gmra.mrb[0].mxu0 %v1076
        %v1157 = vpop.f32.mrb[0].mxu0
        %v1158 = vadd.f32 0.0, %v1157
        %v1159 = vpop.f32.mrb[0].mxu0
        %v1160 = vpop.f32.mrb[0].mxu0
        %v1161 = vadd.f32 0.0, %v1160
        %v1162 = vpop.f32.mrb[0].mxu0
        %1163 = vdwg.mxu0
        %1164 = vmatprep.subr.bf16.mxu0 0
        %1165 = vmatpush1.bf16.msra.mxu0 %v620
        %1166 = vmatprep.subr.bf16.mxu0 0
        %1167 = vmatpush1.bf16.msra.mxu0 %v621
        %1168 = vmatprep.subr.bf16.mxu0 0
        %1169 = vmatpush1.bf16.msra.mxu0 0
        %1170 = vmatprep.subr.bf16.mxu0 0
        %1171 = vmatpush1.bf16.msra.mxu0 0
        %1172 = vmatprep.subr.bf16.mxu0 0
        %1173 = vmatpush1.bf16.msra.mxu0 0
        %1174 = vmatprep.subr.bf16.mxu0 0
        %1175 = vmatpush1.bf16.msra.mxu0 0
        %1176 = vmatprep.subr.bf16.mxu0 0
        %1177 = vmatpush1.bf16.msra.mxu0 0
        %1178 = vmatprep.subr.bf16.mxu0 0
        %1179 = vmatpush1.bf16.msra.mxu0 0
        %1180 = vmatprep.subr.bf16.mxu0 0
        %1181 = vmatpush1.bf16.msra.mxu0 0
        %1182 = vmatprep.subr.bf16.mxu0 0
        %1183 = vmatpush1.bf16.msra.mxu0 0
        %1184 = vmatprep.subr.bf16.mxu0 0
        %1185 = vmatpush1.bf16.msra.mxu0 0
        %1186 = vmatprep.subr.bf16.mxu0 0
        %1187 = vmatpush1.bf16.msra.mxu0 0
        %1188 = vmatprep.subr.bf16.mxu0 0
        %1189 = vmatpush1.bf16.msra.mxu0 0
        %1190 = vmatprep.subr.bf16.mxu0 0
        %1191 = vmatpush1.bf16.msra.mxu0 0
        %1192 = vmatprep.subr.bf16.mxu0 0
        %1193 = vmatpush1.bf16.msra.mxu0 0
        %1194 = vmatprep.subr.bf16.mxu0 0
        %1195 = vmatpush1.bf16.msra.mxu0 0
        %1196 = vmatprep.mubr.bf16.mxu0 0
        %1197 = vmatmul.mubr.bf16.gmra.mrb[0].mxu0 %v1088
        %v1198 = vpop.f32.mrb[0].mxu0
        %v1199 = vadd.f32 %v1134, %v1198
        %v1200 = vpop.f32.mrb[0].mxu0
        %v1201 = vpop.f32.mrb[0].mxu0
        %v1202 = vadd.f32 %v1137, %v1201
        %v1203 = vpop.f32.mrb[0].mxu0
        %1204 = vmatprep.mubr.bf16.mxu0 0
        %1205 = vmatmul.mubr.bf16.gmra.mrb[0].mxu0 %v1091
        %v1206 = vpop.f32.mrb[0].mxu0
        %v1207 = vadd.f32 %v1142, %v1206
        %v1208 = vpop.f32.mrb[0].mxu0
        %v1209 = vpop.f32.mrb[0].mxu0
        %v1210 = vadd.f32 %v1145, %v1209
        %v1211 = vpop.f32.mrb[0].mxu0
        %1212 = vmatprep.mubr.bf16.mxu0 0
        %1213 = vmatmul.mubr.bf16.gmra.mrb[0].mxu0 %v1094
        %v1214 = vpop.f32.mrb[0].mxu0
        %v1215 = vadd.f32 %v1150, %v1214
        %v1216 = vpop.f32.mrb[0].mxu0
        %v1217 = vpop.f32.mrb[0].mxu0
        %v1218 = vadd.f32 %v1153, %v1217
        %v1219 = vpop.f32.mrb[0].mxu0
        %1220 = vmatprep.mubr.bf16.mxu0 0
        %1221 = vmatmul.mubr.bf16.gmra.mrb[0].mxu0 %v1097
        %v1222 = vpop.f32.mrb[0].mxu0
        %v1223 = vadd.f32 %v1158, %v1222
        %v1224 = vpop.f32.mrb[0].mxu0
        %v1225 = vpop.f32.mrb[0].mxu0
        %v1226 = vadd.f32 %v1161, %v1225
        %v1227 = vpop.f32.mrb[0].mxu0
        %1228 = vdwg.mxu0
        %v1229 = vmax.f32 %v1002, %v1199
        %v1230 = vmax.f32 %v1003, %v1202
        %v1231 = vmax.f32 %v1004, %v1207
        %v1232 = vmax.f32 %v1005, %v1210
        %v1233 = vmax.f32 %v1006, %v1215
        %v1234 = vmax.f32 %v1007, %v1218
        %v1235 = vmax.f32 %v1008, %v1223
        %v1236 = vmax.f32 %v1009, %v1226
        %s1237 = scalar_lea.vmem %s388, 288 [#allocation2]
        %v1238 = vld [vmem:[%s1237] sm:$0xff]
        %v1239 = vld [vmem:[%s1237 + $0x8] sm:$0xf]
        %v1240 = vld [vmem:[%s1237 + $0xc] sm:$0xff]
        %v1241 = vld [vmem:[%s1237 + $0x14] sm:$0xf]
        %v1242 = vld [vmem:[%s1237 + $0x18] sm:$0xff]
        %v1243 = vld [vmem:[%s1237 + $0x20] sm:$0xf]
        %v1244 = vld [vmem:[%s1237 + $0x24] sm:$0xff]
        %v1245 = vld [vmem:[%s1237 + $0x2c] sm:$0xf]
        %v1246 = vld [vmem:[%s1237 + $0x30] sm:$0xff]
        %v1247 = vld [vmem:[%s1237 + $0x38] sm:$0xf]
        %v1248 = vld [vmem:[%s1237 + $0x3c] sm:$0xff]
        %v1249 = vld [vmem:[%s1237 + $0x44] sm:$0xf]
        %v1250 = vld [vmem:[%s1237 + $0x48] sm:$0xff]
        %v1251 = vld [vmem:[%s1237 + $0x50] sm:$0xf]
        %v1252 = vld [vmem:[%s1237 + $0x54] sm:$0xff]
        %v1253 = vld [vmem:[%s1237 + $0x5c] sm:$0xf]
        %v1270 = vunpack.c.l.b16 %v1238
        %v1271 = vunpack.c.h.b16 %v1238
        %v1272 = vunpack.c.l.b16 %v1239
        %v1273 = vunpack.c.l.b16 %v1240
        %v1274 = vunpack.c.h.b16 %v1240
        %v1275 = vunpack.c.l.b16 %v1241
        %v1276 = vunpack.c.l.b16 %v1242
        %v1277 = vunpack.c.h.b16 %v1242
        %v1278 = vunpack.c.l.b16 %v1243
        %v1279 = vunpack.c.l.b16 %v1244
        %v1280 = vunpack.c.h.b16 %v1244
        %v1281 = vunpack.c.l.b16 %v1245
        %v1282 = vunpack.c.l.b16 %v1246
        %v1283 = vunpack.c.h.b16 %v1246
        %v1284 = vunpack.c.l.b16 %v1247
        %v1285 = vunpack.c.l.b16 %v1248
        %v1286 = vunpack.c.h.b16 %v1248
        %v1287 = vunpack.c.l.b16 %v1249
        %v1288 = vunpack.c.l.b16 %v1250
        %v1289 = vunpack.c.h.b16 %v1250
        %v1290 = vunpack.c.l.b16 %v1251
        %v1291 = vunpack.c.l.b16 %v1252
        %v1292 = vunpack.c.h.b16 %v1252
        %v1293 = vunpack.c.l.b16 %v1253
        %v1294 = vpack.c.b16 %v1273, %v1270
        %v1295 = vpack.c.b16 %v1274, %v1271
        %v1296 = vpack.c.b16 %v1275, %v1272
        %v1297 = vpack.c.b16 %v1279, %v1276
        %v1298 = vpack.c.b16 %v1280, %v1277
        %v1299 = vpack.c.b16 %v1281, %v1278
        %v1300 = vpack.c.b16 %v1285, %v1282
        %v1301 = vpack.c.b16 %v1286, %v1283
        %v1302 = vpack.c.b16 %v1287, %v1284
        %v1303 = vpack.c.b16 %v1291, %v1288
        %v1304 = vpack.c.b16 %v1292, %v1289
        %v1305 = vpack.c.b16 %v1293, %v1290
        %v1315 = vsel %vm640, %v1296, 0
        %v1318 = vsel %vm640, %v1299, 0
        %v1321 = vsel %vm640, %v1302, 0
        %v1324 = vsel %vm640, %v1305, 0
        %1326 = vmatprep.subr.bf16.mxu0 0
        %1327 = vmatpush1.bf16.msra.mxu0 %v604
        %1328 = vmatprep.subr.bf16.mxu0 0
        %1329 = vmatpush1.bf16.msra.mxu0 %v605
        %1330 = vmatprep.subr.bf16.mxu0 0
        %1331 = vmatpush1.bf16.msra.mxu0 %v606
        %1332 = vmatprep.subr.bf16.mxu0 0
        %1333 = vmatpush1.bf16.msra.mxu0 %v607
        %1334 = vmatprep.subr.bf16.mxu0 0
        %1335 = vmatpush1.bf16.msra.mxu0 %v608
        %1336 = vmatprep.subr.bf16.mxu0 0
        %1337 = vmatpush1.bf16.msra.mxu0 %v609
        %1338 = vmatprep.subr.bf16.mxu0 0
        %1339 = vmatpush1.bf16.msra.mxu0 %v610
        %1340 = vmatprep.subr.bf16.mxu0 0
        %1341 = vmatpush1.bf16.msra.mxu0 %v611
        %1342 = vmatprep.subr.bf16.mxu0 0
        %1343 = vmatpush1.bf16.msra.mxu0 %v612
        %1344 = vmatprep.subr.bf16.mxu0 0
        %1345 = vmatpush1.bf16.msra.mxu0 %v613
        %1346 = vmatprep.subr.bf16.mxu0 0
        %1347 = vmatpush1.bf16.msra.mxu0 %v614
        %1348 = vmatprep.subr.bf16.mxu0 0
        %1349 = vmatpush1.bf16.msra.mxu0 %v615
        %1350 = vmatprep.subr.bf16.mxu0 0
        %1351 = vmatpush1.bf16.msra.mxu0 %v616
        %1352 = vmatprep.subr.bf16.mxu0 0
        %1353 = vmatpush1.bf16.msra.mxu0 %v617
        %1354 = vmatprep.subr.bf16.mxu0 0
        %1355 = vmatpush1.bf16.msra.mxu0 %v618
        %1356 = vmatprep.subr.bf16.mxu0 0
        %1357 = vmatpush1.bf16.msra.mxu0 %v619
        %1358 = vmatprep.mubr.bf16.mxu0 %v1295
        %1359 = vmatmul.mubr.bf16.gmra.mrb[0].mxu0 %v1294
        %v1360 = vpop.f32.mrb[0].mxu0
        %v1361 = vadd.f32 0.0, %v1360
        %v1362 = vpop.f32.mrb[0].mxu0
        %v1363 = vpop.f32.mrb[0].mxu0
        %v1364 = vadd.f32 0.0, %v1363
        %v1365 = vpop.f32.mrb[0].mxu0
        %1366 = vmatprep.mubr.bf16.mxu0 %v1298
        %1367 = vmatmul.mubr.bf16.gmra.mrb[0].mxu0 %v1297
        %v1368 = vpop.f32.mrb[0].mxu0
        %v1369 = vadd.f32 0.0, %v1368
        %v1370 = vpop.f32.mrb[0].mxu0
        %v1371 = vpop.f32.mrb[0].mxu0
        %v1372 = vadd.f32 0.0, %v1371
        %v1373 = vpop.f32.mrb[0].mxu0
        %1374 = vmatprep.mubr.bf16.mxu0 %v1301
        %1375 = vmatmul.mubr.bf16.gmra.mrb[0].mxu0 %v1300
        %v1376 = vpop.f32.mrb[0].mxu0
        %v1377 = vadd.f32 0.0, %v1376
        %v1378 = vpop.f32.mrb[0].mxu0
        %v1379 = vpop.f32.mrb[0].mxu0
        %v1380 = vadd.f32 0.0, %v1379
        %v1381 = vpop.f32.mrb[0].mxu0
        %1382 = vmatprep.mubr.bf16.mxu0 %v1304
        %1383 = vmatmul.mubr.bf16.gmra.mrb[0].mxu0 %v1303
        %v1384 = vpop.f32.mrb[0].mxu0
        %v1385 = vadd.f32 0.0, %v1384
        %v1386 = vpop.f32.mrb[0].mxu0
        %v1387 = vpop.f32.mrb[0].mxu0
        %v1388 = vadd.f32 0.0, %v1387
        %v1389 = vpop.f32.mrb[0].mxu0
        %1390 = vdwg.mxu0
        %1391 = vmatprep.subr.bf16.mxu0 0
        %1392 = vmatpush1.bf16.msra.mxu0 %v620
        %1393 = vmatprep.subr.bf16.mxu0 0
        %1394 = vmatpush1.bf16.msra.mxu0 %v621
        %1395 = vmatprep.subr.bf16.mxu0 0
        %1396 = vmatpush1.bf16.msra.mxu0 0
        %1397 = vmatprep.subr.bf16.mxu0 0
        %1398 = vmatpush1.bf16.msra.mxu0 0
        %1399 = vmatprep.subr.bf16.mxu0 0
        %1400 = vmatpush1.bf16.msra.mxu0 0
        %1401 = vmatprep.subr.bf16.mxu0 0
        %1402 = vmatpush1.bf16.msra.mxu0 0
        %1403 = vmatprep.subr.bf16.mxu0 0
        %1404 = vmatpush1.bf16.msra.mxu0 0
        %1405 = vmatprep.subr.bf16.mxu0 0
        %1406 = vmatpush1.bf16.msra.mxu0 0
        %1407 = vmatprep.subr.bf16.mxu0 0
        %1408 = vmatpush1.bf16.msra.mxu0 0
        %1409 = vmatprep.subr.bf16.mxu0 0
        %1410 = vmatpush1.bf16.msra.mxu0 0
        %1411 = vmatprep.subr.bf16.mxu0 0
        %1412 = vmatpush1.bf16.msra.mxu0 0
        %1413 = vmatprep.subr.bf16.mxu0 0
        %1414 = vmatpush1.bf16.msra.mxu0 0
        %1415 = vmatprep.subr.bf16.mxu0 0
        %1416 = vmatpush1.bf16.msra.mxu0 0
        %1417 = vmatprep.subr.bf16.mxu0 0
        %1418 = vmatpush1.bf16.msra.mxu0 0
        %1419 = vmatprep.subr.bf16.mxu0 0
        %1420 = vmatpush1.bf16.msra.mxu0 0
        %1421 = vmatprep.subr.bf16.mxu0 0
        %1422 = vmatpush1.bf16.msra.mxu0 0
        %1423 = vmatprep.mubr.bf16.mxu0 0
        %1424 = vmatmul.mubr.bf16.gmra.mrb[0].mxu0 %v1315
        %v1425 = vpop.f32.mrb[0].mxu0
        %v1426 = vadd.f32 %v1361, %v1425
        %v1427 = vpop.f32.mrb[0].mxu0
        %v1428 = vpop.f32.mrb[0].mxu0
        %v1429 = vadd.f32 %v1364, %v1428
        %v1430 = vpop.f32.mrb[0].mxu0
        %1431 = vmatprep.mubr.bf16.mxu0 0
        %1432 = vmatmul.mubr.bf16.gmra.mrb[0].mxu0 %v1318
        %v1433 = vpop.f32.mrb[0].mxu0
        %v1434 = vadd.f32 %v1369, %v1433
        %v1435 = vpop.f32.mrb[0].mxu0
        %v1436 = vpop.f32.mrb[0].mxu0
        %v1437 = vadd.f32 %v1372, %v1436
        %v1438 = vpop.f32.mrb[0].mxu0
        %1439 = vmatprep.mubr.bf16.mxu0 0
        %1440 = vmatmul.mubr.bf16.gmra.mrb[0].mxu0 %v1321
        %v1441 = vpop.f32.mrb[0].mxu0
        %v1442 = vadd.f32 %v1377, %v1441
        %v1443 = vpop.f32.mrb[0].mxu0
        %v1444 = vpop.f32.mrb[0].mxu0
        %v1445 = vadd.f32 %v1380, %v1444
        %v1446 = vpop.f32.mrb[0].mxu0
        %1447 = vmatprep.mubr.bf16.mxu0 0
        %1448 = vmatmul.mubr.bf16.gmra.mrb[0].mxu0 %v1324
        %v1449 = vpop.f32.mrb[0].mxu0
        %v1450 = vadd.f32 %v1385, %v1449
        %v1451 = vpop.f32.mrb[0].mxu0
        %v1452 = vpop.f32.mrb[0].mxu0
        %v1453 = vadd.f32 %v1388, %v1452
        %v1454 = vpop.f32.mrb[0].mxu0
        %1455 = vdwg.mxu0
        %v1456 = vmax.f32 %v1229, %v1426
        %v1457 = vmax.f32 %v1230, %v1429
        %v1458 = vmax.f32 %v1231, %v1434
        %v1459 = vmax.f32 %v1232, %v1437
        %v1460 = vmax.f32 %v1233, %v1442
        %v1461 = vmax.f32 %v1234, %v1445
        %v1462 = vmax.f32 %v1235, %v1450
        %v1463 = vmax.f32 %v1236, %v1453
        %v1464 = vld [vmem:[%s2] sm:$0x1]
        %v1466 = vlaneseq
        %v1467 = vshrl.u32 %v1466, 7
        %v1468 = vsub.s32 0, %v1467
        %v1469 = vrot.slane %v1464, %v1468
        %v1471 = vadd.f32 %v1456, %v1469
        %v1472 = vadd.f32 %v1457, %v1469
        %v1473 = vadd.f32 %v1458, %v1469
        %v1474 = vadd.f32 %v1459, %v1469
        %v1475 = vadd.f32 %v1460, %v1469
        %v1476 = vadd.f32 %v1461, %v1469
        %v1477 = vadd.f32 %v1462, %v1469
        %v1478 = vadd.f32 %v1463, %v1469
        %v1479 = vmax.f32 %v1471, 0.0
        %v1480 = vmax.f32 %v1472, 0.0
        %v1481 = vmax.f32 %v1473, 0.0
        %v1482 = vmax.f32 %v1474, 0.0
        %v1483 = vmax.f32 %v1475, 0.0
        %v1484 = vmax.f32 %v1476, 0.0
        %v1485 = vmax.f32 %v1477, 0.0
        %v1486 = vmax.f32 %v1478, 0.0
        %v1487 = vpack.c.bf16 %v1480, %v1479
        %v1488 = vpack.c.bf16 %v1482, %v1481
        %v1489 = vpack.c.bf16 %v1484, %v1483
        %v1490 = vpack.c.bf16 %v1486, %v1485
        %v1495 = vunpack.c.l.b16 %v1487
        %v1496 = vunpack.c.h.b16 %v1487
        %v1497 = vunpack.c.l.b16 %v1488
        %v1498 = vunpack.c.h.b16 %v1488
        %v1499 = vunpack.c.l.b16 %v1489
        %v1500 = vunpack.c.h.b16 %v1489
        %v1501 = vunpack.c.l.b16 %v1490
        %v1502 = vunpack.c.h.b16 %v1490
        %v1503 = vpack.c.b16 %v1495, %v1495
        %v1504 = vpack.c.b16 %v1496, %v1496
        %v1505 = vpack.c.b16 %v1497, %v1497
        %v1506 = vpack.c.b16 %v1498, %v1498
        %v1507 = vpack.c.b16 %v1499, %v1499
        %v1508 = vpack.c.b16 %v1500, %v1500
        %v1509 = vpack.c.b16 %v1501, %v1501
        %v1510 = vpack.c.b16 %v1502, %v1502
        %vm1519 = vcmask 519168
        %1520 = vst.msk [vmem:[%s407] sm:$0xf] %vm1519, %v1503
        %1521 = vst.msk [vmem:[%s407 + $0x4] sm:$0xf] %vm1519, %v1504
        %1522 = vst.msk [vmem:[%s407 + $0x8] sm:$0xf] %vm1519, %v1505
        %1523 = vst.msk [vmem:[%s407 + $0xc] sm:$0xf] %vm1519, %v1506
        %1524 = vst.msk [vmem:[%s407 + $0x10] sm:$0xf] %vm1519, %v1507
        %1525 = vst.msk [vmem:[%s407 + $0x14] sm:$0xf] %vm1519, %v1508
        %1526 = vst.msk [vmem:[%s407 + $0x18] sm:$0xf] %vm1519, %v1509
        %1527 = vst.msk [vmem:[%s407 + $0x1c] sm:$0xf] %vm1519, %v1510
        %s1528 = sand.u32 %s90, 1
        %s1529 = sand.u32 %s90, 1
        %s1530 = smul.addr %s1529, 32
        %s1531 = scalar_lea.vmem [#allocation3], %s1530
        // Predicated region
        $region73: #{cnn_forward.5} parent=67 // pred_check
          %p1532 = pneg %p100
        $region74: #{cnn_forward.5} parent=67 // pred_check_branch
          %1534 = sbr.rel (%p1532) target = $region76
        $region75: #{cnn_forward.5} parent=67 // pred_region
          %s1535 = smul.u32 8, %s14
          %s1536 = ssub.s32 13, %s1535
          %p1537 = scmp.lt.s32.totalorder %s1536, 8
          %s1538 = scalar_select %p1537, %s1536, 8
          %s1539 = smul.u32 64, %s1538
          %p1540 = scmp.ne.s32.totalorder 0, %s1539
          %s1541 = smul.addr %s1535, 4
          %s1542 = scalar_lea.vmem %s3, %s1541
          // Predicated region
          $region77: #{cnn_forward.5} parent=75 // pred_check
            %p1543 = pneg %p1540
          $region78: #{cnn_forward.5} parent=75 // pred_check_branch
            %1545 = sbr.rel (%p1543) target = $region80
          $region79: #{cnn_forward.5} parent=75 // pred_region
            // Predicated region
            $region81: #{cnn_forward.5} parent=79 // pred_check
              _
            $region82: #{cnn_forward.5} parent=79 // pred_check_branch
              %1547 = sbr.rel target = $region84
            $region83: #{cnn_forward.5} parent=79 // pred_region
              // Predicated region
              $region103: #{cnn_forward.5} parent=83 // pred_check
                _
              $region104: #{cnn_forward.5} parent=83 // pred_check_branch
                %1610 = sbr.rel (0) target = $region106
              $region105: #{cnn_forward.5} parent=83 // pred_region
                %s1612 = sshrl.u32 %s1538, 3
                // While loop
                $region107: #{cnn_forward.5} parent=105 // loop_pre_header
                  _
                $region108: #{cnn_forward.5} parent=105 // loop_header
                  %s1614 = sphi 0, %s1616
                  %p1615 = scmp.ge.s32.totalorder %s1614, %s1612
                  %s1619 = sphi 0, %s1640
                  %s1620 = sphi %s1531, %s1643
                  %s1621 = sphi %s1542, %s1644
                $region109: #{cnn_forward.5} parent=105 // loop_header_branch
                  %1618 = sbr.rel (%p1615) target = $region113
                $region110: #{cnn_forward.5} parent=105 // loop_body
                  %v1622 = vld [vmem:[%s1620] sm:$0xf]
                  %1623 = vst [vmem:[%s1621] sm:$0xf] %v1622
                  %v1624 = vld [vmem:[%s1620 + $0x4] sm:$0xf]
                  %1625 = vst [vmem:[%s1621 + $0x4] sm:$0xf] %v1624
                  %v1626 = vld [vmem:[%s1620 + $0x8] sm:$0xf]
                  %1627 = vst [vmem:[%s1621 + $0x8] sm:$0xf] %v1626
                  %v1628 = vld [vmem:[%s1620 + $0xc] sm:$0xf]
                  %1629 = vst [vmem:[%s1621 + $0xc] sm:$0xf] %v1628
                  %v1630 = vld [vmem:[%s1620 + $0x10] sm:$0xf]
                  %1631 = vst [vmem:[%s1621 + $0x10] sm:$0xf] %v1630
                  %v1632 = vld [vmem:[%s1620 + $0x14] sm:$0xf]
                  %1633 = vst [vmem:[%s1621 + $0x14] sm:$0xf] %v1632
                  %v1634 = vld [vmem:[%s1620 + $0x18] sm:$0xf]
                  %1635 = vst [vmem:[%s1621 + $0x18] sm:$0xf] %v1634
                  %v1636 = vld [vmem:[%s1620 + $0x1c] sm:$0xf]
                  %1637 = vst [vmem:[%s1621 + $0x1c] sm:$0xf] %v1636
                  %s1638 = sadd.s32 1, %s1619
                  %p1639 = scmp.ge.s32.totalorder %s1638, %s1612
                  %s1640 = scalar_select %p1639, 0, %s1638
                  %s1641 = smul.u32 %s1640, 32
                  %s1642 = smul.u32 %s1640, 32
                  %s1643 = scalar_lea.vmem %s1531, %s1641 [#allocation3]
                  %s1644 = scalar_lea.vmem %s1542, %s1642
                $region111: #{cnn_forward.5} parent=105 // loop_footer
                  %s1616 = sadd.s32 %s1614, 1
                $region112: #{cnn_forward.5} parent=105 // loop_footer_branch
                  %1613 = sbr.rel target = $region108
                $region113: #{cnn_forward.5} parent=105 // loop_exit
                  _
                %s1645 = sshrl.u32 %s1538, 3
                %s1646 = sand.u32 %s1538, 7
                %s1647 = smul.u32 %s1645, 8
                %s1648 = smul.u32 4, %s1647
                %s1649 = scalar_lea.vmem %s1531, %s1648 [#allocation3]
                %s1650 = smul.u32 4, %s1647
                %s1651 = scalar_lea.vmem %s1542, %s1650
                // While loop
                $region114: #{cnn_forward.5} parent=105 // loop_pre_header
                  _
                $region115: #{cnn_forward.5} parent=105 // loop_header
                  %s1653 = sphi 0, %s1655
                  %p1654 = scmp.ge.s32.totalorder %s1653, %s1646
                  %s1658 = sphi 0, %s1665
                  %s1659 = sphi %s1649, %s1668
                  %s1660 = sphi %s1651, %s1669
                $region116: #{cnn_forward.5} parent=105 // loop_header_branch
                  %1657 = sbr.rel (%p1654) target = $region120
                $region117: #{cnn_forward.5} parent=105 // loop_body
                  %v1661 = vld [vmem:[%s1659] sm:$0xf]
                  %1662 = vst [vmem:[%s1660] sm:$0xf] %v1661
                  %s1663 = sadd.s32 1, %s1658
                  %p1664 = scmp.ge.s32.totalorder %s1663, %s1646
                  %s1665 = scalar_select %p1664, 0, %s1663
                  %s1666 = smul.u32 %s1665, 4
                  %s1667 = smul.u32 %s1665, 4
                  %s1668 = scalar_lea.vmem %s1649, %s1666 [#allocation3]
                  %s1669 = scalar_lea.vmem %s1651, %s1667
                $region118: #{cnn_forward.5} parent=105 // loop_footer
                  %s1655 = sadd.s32 %s1653, 1
                $region119: #{cnn_forward.5} parent=105 // loop_footer_branch
                  %1652 = sbr.rel target = $region115
                $region120: #{cnn_forward.5} parent=105 // loop_exit
                  _
              $region106: #{cnn_forward.5} parent=83 // pred_fallthru
                _
            $region84: #{cnn_forward.5} parent=79 // pred_fallthru
              _
            // Predicated region
            $region85: #{cnn_forward.5} parent=79 // pred_check
              _
            $region86: #{cnn_forward.5} parent=79 // pred_check_branch
              %1549 = sbr.rel (0) target = $region88
            $region87: #{cnn_forward.5} parent=79 // pred_region
              %s1551 = sshrl.u32 %s1538, 3
              // While loop
              $region89: #{cnn_forward.5} parent=87 // loop_pre_header
                _
              $region90: #{cnn_forward.5} parent=87 // loop_header
                %s1553 = sphi 0, %s1555
                %p1554 = scmp.ge.s32.totalorder %s1553, %s1551
                %s1558 = sphi 0, %s1579
                %s1559 = sphi %s1531, %s1582
                %s1560 = sphi %s1542, %s1583
              $region91: #{cnn_forward.5} parent=87 // loop_header_branch
                %1557 = sbr.rel (%p1554) target = $region95
              $region92: #{cnn_forward.5} parent=87 // loop_body
                %v1561 = vld [vmem:[%s1559] sm:$0xf]
                %1562 = vst [vmem:[%s1560] sm:$0xf] %v1561
                %v1563 = vld [vmem:[%s1559 + $0x4] sm:$0xf]
                %1564 = vst [vmem:[%s1560 + $0x4] sm:$0xf] %v1563
                %v1565 = vld [vmem:[%s1559 + $0x8] sm:$0xf]
                %1566 = vst [vmem:[%s1560 + $0x8] sm:$0xf] %v1565
                %v1567 = vld [vmem:[%s1559 + $0xc] sm:$0xf]
                %1568 = vst [vmem:[%s1560 + $0xc] sm:$0xf] %v1567
                %v1569 = vld [vmem:[%s1559 + $0x10] sm:$0xf]
                %1570 = vst [vmem:[%s1560 + $0x10] sm:$0xf] %v1569
                %v1571 = vld [vmem:[%s1559 + $0x14] sm:$0xf]
                %1572 = vst [vmem:[%s1560 + $0x14] sm:$0xf] %v1571
                %v1573 = vld [vmem:[%s1559 + $0x18] sm:$0xf]
                %1574 = vst [vmem:[%s1560 + $0x18] sm:$0xf] %v1573
                %v1575 = vld [vmem:[%s1559 + $0x1c] sm:$0xf]
                %1576 = vst [vmem:[%s1560 + $0x1c] sm:$0xf] %v1575
                %s1577 = sadd.s32 1, %s1558
                %p1578 = scmp.ge.s32.totalorder %s1577, %s1551
                %s1579 = scalar_select %p1578, 0, %s1577
                %s1580 = smul.u32 %s1579, 32
                %s1581 = smul.u32 %s1579, 32
                %s1582 = scalar_lea.vmem %s1531, %s1580 [#allocation3]
                %s1583 = scalar_lea.vmem %s1542, %s1581
              $region93: #{cnn_forward.5} parent=87 // loop_footer
                %s1555 = sadd.s32 %s1553, 1
              $region94: #{cnn_forward.5} parent=87 // loop_footer_branch
                %1552 = sbr.rel target = $region90
              $region95: #{cnn_forward.5} parent=87 // loop_exit
                _
              %s1584 = sshrl.u32 %s1538, 3
              %s1585 = sand.u32 %s1538, 7
              %s1586 = smul.u32 %s1584, 8
              %s1587 = smul.u32 4, %s1586
              %s1588 = scalar_lea.vmem %s1531, %s1587 [#allocation3]
              %s1589 = smul.u32 4, %s1586
              %s1590 = scalar_lea.vmem %s1542, %s1589
              // While loop
              $region96: #{cnn_forward.5} parent=87 // loop_pre_header
                _
              $region97: #{cnn_forward.5} parent=87 // loop_header
                %s1592 = sphi 0, %s1594
                %p1593 = scmp.ge.s32.totalorder %s1592, %s1585
                %s1597 = sphi 0, %s1604
                %s1598 = sphi %s1588, %s1607
                %s1599 = sphi %s1590, %s1608
              $region98: #{cnn_forward.5} parent=87 // loop_header_branch
                %1596 = sbr.rel (%p1593) target = $region102
              $region99: #{cnn_forward.5} parent=87 // loop_body
                %v1600 = vld [vmem:[%s1598] sm:$0xf]
                %1601 = vst [vmem:[%s1599] sm:$0xf] %v1600
                %s1602 = sadd.s32 1, %s1597
                %p1603 = scmp.ge.s32.totalorder %s1602, %s1585
                %s1604 = scalar_select %p1603, 0, %s1602
                %s1605 = smul.u32 %s1604, 4
                %s1606 = smul.u32 %s1604, 4
                %s1607 = scalar_lea.vmem %s1588, %s1605 [#allocation3]
                %s1608 = scalar_lea.vmem %s1590, %s1606
              $region100: #{cnn_forward.5} parent=87 // loop_footer
                %s1594 = sadd.s32 %s1592, 1
              $region101: #{cnn_forward.5} parent=87 // loop_footer_branch
                %1591 = sbr.rel target = $region97
              $region102: #{cnn_forward.5} parent=87 // loop_exit
                _
            $region88: #{cnn_forward.5} parent=79 // pred_fallthru
              _
          $region80: #{cnn_forward.5} parent=75 // pred_fallthru
            _
          %1670 = vnop
        $region76: #{cnn_forward.5} parent=67 // pred_fallthru
          _
      $region68: #{cnn_forward.5} parent=5 // pred_fallthru
        _
      %p1671 = scmp.le.s32.totalorder 2, %s9
      // Predicated region
      $region121: #{cnn_forward.5} parent=5 // pred_check
        %p1672 = pneg %p1671
      $region122: #{cnn_forward.5} parent=5 // pred_check_branch
        %1674 = sbr.rel (%p1672) target = $region124
      $region123: #{cnn_forward.5} parent=5 // pred_region
        %s1675 = ssub.s32 %s9, 2
        // Predicated region
        $region125: #{cnn_forward.5} parent=123 // pred_check
          %p1676 = pneg %p106
        $region126: #{cnn_forward.5} parent=123 // pred_check_branch
          %1678 = sbr.rel (%p1676) target = $region128
        $region127: #{cnn_forward.5} parent=123 // pred_region
          %s1679 = sand.u32 %s91, 1
          %s1680 = sand.u32 %s91, 1
          %s1681 = smul.addr %s1680, 32
          %s1682 = scalar_lea.vmem [#allocation3], %s1681
        $region128: #{cnn_forward.5} parent=123 // pred_fallthru
          _
      $region124: #{cnn_forward.5} parent=5 // pred_fallthru
        _
    $region6: #{cnn_forward.5} parent=1 // loop_footer
      %s13 = sadd.s32 1, %s9
    $region7: #{cnn_forward.5} parent=1 // loop_footer_branch
      %8 = sbr.rel target = $region3
    $region8: #{cnn_forward.5} parent=1 // loop_exit
      _

// kernel: cnn_forward.6
$region0: #{cnn_forward.6}
  #allocation0 [shape = 'u32[]', space=smem, size = 0x4, offset = 0x4, fixed_abs, tag = 'smem constant byte address 0x4 - core index']
  #allocation1 [shape = 'u32[144,128]{1,0:T(1,128)}', space=vmem, size = 0x12000, scoped, tag = 'internal scratch']
  %s0 = inlined_call_operand.vmem [shape: bf16[4,18,576], index: 0, kind: input, shape index: {}]
  %s1 = inlined_call_operand.vmem [shape: bf16[576,128], index: 1, kind: input, shape index: {}]
  %s2 = inlined_call_operand.vmem [shape: f32[1,128], index: 2, kind: input, shape index: {}]
  %s3 = inlined_call_operand.vmem [shape: bf16[18,128], index: 3, kind: output, shape index: {}]
  %s4 = sld [smem:[#allocation0]]
  $region22: #{cnn_forward.6} parent=0
    _
  %s6 = ssub.s32 1, %s4
  %s7 = scalar_select 0, %s6, %s4
  // Predicated region
  $region2: #{cnn_forward.6} parent=0 // pred_check
    _
  $region3: #{cnn_forward.6} parent=0 // pred_check_branch
    %9 = sbr.rel (0) target = $region5
  $region4: #{cnn_forward.6} parent=0 // pred_region
    _
  $region5: #{cnn_forward.6} parent=0 // pred_fallthru
    _
  // Predicated region
  $region6: #{cnn_forward.6} parent=0 // pred_check
    _
  $region7: #{cnn_forward.6} parent=0 // pred_check_branch
    %11 = sbr.rel (0) target = $region9
  $region8: #{cnn_forward.6} parent=0 // pred_region
    _
  $region9: #{cnn_forward.6} parent=0 // pred_fallthru
    _
  // Predicated region
  $region10: #{cnn_forward.6} parent=0 // pred_check
    _
  $region11: #{cnn_forward.6} parent=0 // pred_check_branch
    %13 = sbr.rel (0) target = $region13
  $region12: #{cnn_forward.6} parent=0 // pred_region
    _
  $region13: #{cnn_forward.6} parent=0 // pred_fallthru
    _
  %v15 = vld [vmem:[%s1] sm:$0xf]
  %v16 = vld [vmem:[%s1 + $0x4] sm:$0xf]
  %v17 = vld [vmem:[%s1 + $0x8] sm:$0xf]
  %v18 = vld [vmem:[%s1 + $0xc] sm:$0xf]
  %v19 = vld [vmem:[%s1 + $0x10] sm:$0xf]
  %v20 = vld [vmem:[%s1 + $0x14] sm:$0xf]
  %v21 = vld [vmem:[%s1 + $0x18] sm:$0xf]
  %v22 = vld [vmem:[%s1 + $0x1c] sm:$0xf]
  %v23 = vld [vmem:[%s1 + $0x20] sm:$0xf]
  %v24 = vld [vmem:[%s1 + $0x24] sm:$0xf]
  %v25 = vld [vmem:[%s1 + $0x28] sm:$0xf]
  %v26 = vld [vmem:[%s1 + $0x2c] sm:$0xf]
  %v27 = vld [vmem:[%s1 + $0x30] sm:$0xf]
  %v28 = vld [vmem:[%s1 + $0x34] sm:$0xf]
  %v29 = vld [vmem:[%s1 + $0x38] sm:$0xf]
  %v30 = vld [vmem:[%s1 + $0x3c] sm:$0xf]
  %v31 = vld [vmem:[%s1 + $0x40] sm:$0xf]
  %v32 = vld [vmem:[%s1 + $0x44] sm:$0xf]
  %v33 = vld [vmem:[%s1 + $0x48] sm:$0xf]
  %v34 = vld [vmem:[%s1 + $0x4c] sm:$0xf]
  %v35 = vld [vmem:[%s1 + $0x50] sm:$0xf]
  %v36 = vld [vmem:[%s1 + $0x54] sm:$0xf]
  %v37 = vld [vmem:[%s1 + $0x58] sm:$0xf]
  %v38 = vld [vmem:[%s1 + $0x5c] sm:$0xf]
  %v39 = vld [vmem:[%s1 + $0x60] sm:$0xf]
  %v40 = vld [vmem:[%s1 + $0x64] sm:$0xf]
  %v41 = vld [vmem:[%s1 + $0x68] sm:$0xf]
  %v42 = vld [vmem:[%s1 + $0x6c] sm:$0xf]
  %v43 = vld [vmem:[%s1 + $0x70] sm:$0xf]
  %v44 = vld [vmem:[%s1 + $0x74] sm:$0xf]
  %v45 = vld [vmem:[%s1 + $0x78] sm:$0xf]
  %v46 = vld [vmem:[%s1 + $0x7c] sm:$0xf]
  %v47 = vld [vmem:[%s1 + $0x80] sm:$0xf]
  %v48 = vld [vmem:[%s1 + $0x84] sm:$0xf]
  %v49 = vld [vmem:[%s1 + $0x88] sm:$0xf]
  %v50 = vld [vmem:[%s1 + $0x8c] sm:$0xf]
  %v51 = vld [vmem:[%s1 + $0x90] sm:$0xf]
  %v52 = vld [vmem:[%s1 + $0x94] sm:$0xf]
  %v53 = vld [vmem:[%s1 + $0x98] sm:$0xf]
  %v54 = vld [vmem:[%s1 + $0x9c] sm:$0xf]
  %v55 = vld [vmem:[%s1 + $0xa0] sm:$0xf]
  %v56 = vld [vmem:[%s1 + $0xa4] sm:$0xf]
  %v57 = vld [vmem:[%s1 + $0xa8] sm:$0xf]
  %v58 = vld [vmem:[%s1 + $0xac] sm:$0xf]
  %v59 = vld [vmem:[%s1 + $0xb0] sm:$0xf]
  %v60 = vld [vmem:[%s1 + $0xb4] sm:$0xf]
  %v61 = vld [vmem:[%s1 + $0xb8] sm:$0xf]
  %v62 = vld [vmem:[%s1 + $0xbc] sm:$0xf]
  %v63 = vld [vmem:[%s1 + $0xc0] sm:$0xf]
  %v64 = vld [vmem:[%s1 + $0xc4] sm:$0xf]
  %v65 = vld [vmem:[%s1 + $0xc8] sm:$0xf]
  %v66 = vld [vmem:[%s1 + $0xcc] sm:$0xf]
  %v67 = vld [vmem:[%s1 + $0xd0] sm:$0xf]
  %v68 = vld [vmem:[%s1 + $0xd4] sm:$0xf]
  %v69 = vld [vmem:[%s1 + $0xd8] sm:$0xf]
  %v70 = vld [vmem:[%s1 + $0xdc] sm:$0xf]
  %v71 = vld [vmem:[%s1 + $0xe0] sm:$0xf]
  %v72 = vld [vmem:[%s1 + $0xe4] sm:$0xf]
  %v73 = vld [vmem:[%s1 + $0xe8] sm:$0xf]
  %v74 = vld [vmem:[%s1 + $0xec] sm:$0xf]
  %v75 = vld [vmem:[%s1 + $0xf0] sm:$0xf]
  %v76 = vld [vmem:[%s1 + $0xf4] sm:$0xf]
  %v77 = vld [vmem:[%s1 + $0xf8] sm:$0xf]
  %v78 = vld [vmem:[%s1 + $0xfc] sm:$0xf]
  %v79 = vld [vmem:[%s1 + $0x100] sm:$0xf]
  %v80 = vld [vmem:[%s1 + $0x104] sm:$0xf]
  %v81 = vld [vmem:[%s1 + $0x108] sm:$0xf]
  %v82 = vld [vmem:[%s1 + $0x10c] sm:$0xf]
  %v83 = vld [vmem:[%s1 + $0x110] sm:$0xf]
  %v84 = vld [vmem:[%s1 + $0x114] sm:$0xf]
  %v85 = vld [vmem:[%s1 + $0x118] sm:$0xf]
  %v86 = vld [vmem:[%s1 + $0x11c] sm:$0xf]
  %v87 = vld [vmem:[%s0] sm:$0xff]
  %v88 = vld [vmem:[%s0 + $0x8] sm:$0xff]
  %v89 = vld [vmem:[%s0 + $0x10] sm:$0xf]
  %v90 = vld [vmem:[%s0 + $0x14] sm:$0xff]
  %v91 = vld [vmem:[%s0 + $0x1c] sm:$0xff]
  %v92 = vld [vmem:[%s0 + $0x24] sm:$0xf]
  %v93 = vld [vmem:[%s0 + $0x28] sm:$0x11]
  %v94 = vld [vmem:[%s0 + $0x30] sm:$0x11]
  %v95 = vld [vmem:[%s0 + $0x38] sm:$0x1]
  %v105 = vunpack.c.l.b16 %v87
  %v106 = vunpack.c.h.b16 %v87
  %v107 = vunpack.c.l.b16 %v88
  %v108 = vunpack.c.h.b16 %v88
  %v109 = vunpack.c.l.b16 %v89
  %v110 = vunpack.c.l.b16 %v90
  %v111 = vunpack.c.h.b16 %v90
  %v112 = vunpack.c.l.b16 %v91
  %v113 = vunpack.c.h.b16 %v91
  %v114 = vunpack.c.l.b16 %v92
  %v115 = vunpack.c.l.b16 %v93
  %v116 = vunpack.c.h.b16 %v93
  %v117 = vunpack.c.l.b16 %v94
  %v118 = vunpack.c.h.b16 %v94
  %v119 = vunpack.c.l.b16 %v95
  %v120 = vpack.c.b16 %v110, %v105
  %v121 = vpack.c.b16 %v111, %v106
  %v122 = vpack.c.b16 %v112, %v107
  %v123 = vpack.c.b16 %v113, %v108
  %v124 = vpack.c.b16 %v114, %v109
  %v125 = vpack.c.b16 %v115, %v115
  %v126 = vpack.c.b16 %v116, %v116
  %v127 = vpack.c.b16 %v117, %v117
  %v128 = vpack.c.b16 %v118, %v118
  %v129 = vpack.c.b16 %v119, %v119
  %v210 = vunpack.c.l.b16 %v15
  %v211 = vunpack.c.l.b16 %v16
  %v212 = vunpack.c.l.b16 %v17
  %v213 = vunpack.c.l.b16 %v18
  %v214 = vunpack.c.l.b16 %v19
  %v215 = vunpack.c.l.b16 %v20
  %v216 = vunpack.c.l.b16 %v21
  %v217 = vunpack.c.l.b16 %v22
  %v218 = vunpack.c.l.b16 %v23
  %v219 = vunpack.c.l.b16 %v24
  %v220 = vunpack.c.l.b16 %v25
  %v221 = vunpack.c.l.b16 %v26
  %v222 = vunpack.c.l.b16 %v27
  %v223 = vunpack.c.l.b16 %v28
  %v224 = vunpack.c.l.b16 %v29
  %v225 = vunpack.c.l.b16 %v30
  %v226 = vunpack.c.l.b16 %v31
  %v227 = vunpack.c.l.b16 %v32
  %v228 = vunpack.c.l.b16 %v33
  %v229 = vunpack.c.l.b16 %v34
  %v230 = vunpack.c.l.b16 %v35
  %v231 = vunpack.c.l.b16 %v36
  %v232 = vunpack.c.l.b16 %v37
  %v233 = vunpack.c.l.b16 %v38
  %v234 = vunpack.c.l.b16 %v39
  %v235 = vunpack.c.l.b16 %v40
  %v236 = vunpack.c.l.b16 %v41
  %v237 = vunpack.c.l.b16 %v42
  %v238 = vunpack.c.l.b16 %v43
  %v239 = vunpack.c.l.b16 %v44
  %v240 = vunpack.c.l.b16 %v45
  %v241 = vunpack.c.l.b16 %v46
  %v242 = vunpack.c.l.b16 %v47
  %v243 = vunpack.c.l.b16 %v48
  %v244 = vunpack.c.l.b16 %v49
  %v245 = vunpack.c.l.b16 %v50
  %v246 = vunpack.c.l.b16 %v51
  %v247 = vunpack.c.l.b16 %v52
  %v248 = vunpack.c.l.b16 %v53
  %v249 = vunpack.c.l.b16 %v54
  %v250 = vunpack.c.l.b16 %v55
  %v251 = vunpack.c.l.b16 %v56
  %v252 = vunpack.c.l.b16 %v57
  %v253 = vunpack.c.l.b16 %v58
  %v254 = vunpack.c.l.b16 %v59
  %v255 = vunpack.c.l.b16 %v60
  %v256 = vunpack.c.l.b16 %v61
  %v257 = vunpack.c.l.b16 %v62
  %v258 = vunpack.c.l.b16 %v63
  %v259 = vunpack.c.l.b16 %v64
  %v260 = vunpack.c.l.b16 %v65
  %v261 = vunpack.c.l.b16 %v66
  %v262 = vunpack.c.l.b16 %v67
  %v263 = vunpack.c.l.b16 %v68
  %v264 = vunpack.c.l.b16 %v69
  %v265 = vunpack.c.l.b16 %v70
  %v266 = vunpack.c.l.b16 %v71
  %v267 = vunpack.c.l.b16 %v72
  %v268 = vunpack.c.l.b16 %v73
  %v269 = vunpack.c.l.b16 %v74
  %v270 = vunpack.c.l.b16 %v75
  %v271 = vunpack.c.l.b16 %v76
  %v272 = vunpack.c.l.b16 %v77
  %v273 = vunpack.c.l.b16 %v78
  %v274 = vunpack.c.l.b16 %v79
  %v275 = vunpack.c.l.b16 %v80
  %v276 = vunpack.c.l.b16 %v81
  %v277 = vunpack.c.l.b16 %v82
  %v278 = vunpack.c.l.b16 %v83
  %v279 = vunpack.c.l.b16 %v84
  %v280 = vunpack.c.l.b16 %v85
  %v281 = vunpack.c.l.b16 %v86
  %v282 = vpack.c.b16 %v211, %v210
  %v283 = vpack.c.b16 %v213, %v212
  %v284 = vpack.c.b16 %v215, %v214
  %v285 = vpack.c.b16 %v217, %v216
  %v286 = vpack.c.b16 %v219, %v218
  %v287 = vpack.c.b16 %v221, %v220
  %v288 = vpack.c.b16 %v223, %v222
  %v289 = vpack.c.b16 %v225, %v224
  %v290 = vpack.c.b16 %v227, %v226
  %v291 = vpack.c.b16 %v229, %v228
  %v292 = vpack.c.b16 %v231, %v230
  %v293 = vpack.c.b16 %v233, %v232
  %v294 = vpack.c.b16 %v235, %v234
  %v295 = vpack.c.b16 %v237, %v236
  %v296 = vpack.c.b16 %v239, %v238
  %v297 = vpack.c.b16 %v241, %v240
  %v298 = vpack.c.b16 %v243, %v242
  %v299 = vpack.c.b16 %v245, %v244
  %v300 = vpack.c.b16 %v247, %v246
  %v301 = vpack.c.b16 %v249, %v248
  %v302 = vpack.c.b16 %v251, %v250
  %v303 = vpack.c.b16 %v253, %v252
  %v304 = vpack.c.b16 %v255, %v254
  %v305 = vpack.c.b16 %v257, %v256
  %v306 = vpack.c.b16 %v259, %v258
  %v307 = vpack.c.b16 %v261, %v260
  %v308 = vpack.c.b16 %v263, %v262
  %v309 = vpack.c.b16 %v265, %v264
  %v310 = vpack.c.b16 %v267, %v266
  %v311 = vpack.c.b16 %v269, %v268
  %v312 = vpack.c.b16 %v271, %v270
  %v313 = vpack.c.b16 %v273, %v272
  %v314 = vpack.c.b16 %v275, %v274
  %v315 = vpack.c.b16 %v277, %v276
  %v316 = vpack.c.b16 %v279, %v278
  %v317 = vpack.c.b16 %v281, %v280
  %vm354 = vcmask 523264
  %v356 = vsel %vm354, %v124, 0
  %v359 = vsel %vm354, %v129, 0
  %361 = vmatprep.subr.bf16.mxu0 0
  %362 = vmatpush1.bf16.msra.mxu0 %v282
  %363 = vmatprep.subr.bf16.mxu0 0
  %364 = vmatpush1.bf16.msra.mxu0 %v283
  %365 = vmatprep.subr.bf16.mxu0 0
  %366 = vmatpush1.bf16.msra.mxu0 %v284
  %367 = vmatprep.subr.bf16.mxu0 0
  %368 = vmatpush1.bf16.msra.mxu0 %v285
  %369 = vmatprep.subr.bf16.mxu0 0
  %370 = vmatpush1.bf16.msra.mxu0 %v286
  %371 = vmatprep.subr.bf16.mxu0 0
  %372 = vmatpush1.bf16.msra.mxu0 %v287
  %373 = vmatprep.subr.bf16.mxu0 0
  %374 = vmatpush1.bf16.msra.mxu0 %v288
  %375 = vmatprep.subr.bf16.mxu0 0
  %376 = vmatpush1.bf16.msra.mxu0 %v289
  %377 = vmatprep.subr.bf16.mxu0 0
  %378 = vmatpush1.bf16.msra.mxu0 %v290
  %379 = vmatprep.subr.bf16.mxu0 0
  %380 = vmatpush1.bf16.msra.mxu0 %v291
  %381 = vmatprep.subr.bf16.mxu0 0
  %382 = vmatpush1.bf16.msra.mxu0 %v292
  %383 = vmatprep.subr.bf16.mxu0 0
  %384 = vmatpush1.bf16.msra.mxu0 %v293
  %385 = vmatprep.subr.bf16.mxu0 0
  %386 = vmatpush1.bf16.msra.mxu0 %v294
  %387 = vmatprep.subr.bf16.mxu0 0
  %388 = vmatpush1.bf16.msra.mxu0 %v295
  %389 = vmatprep.subr.bf16.mxu0 0
  %390 = vmatpush1.bf16.msra.mxu0 %v296
  %391 = vmatprep.subr.bf16.mxu0 0
  %392 = vmatpush1.bf16.msra.mxu0 %v297
  %393 = vmatprep.mubr.bf16.mxu0 %v121
  %394 = vmatmul.mubr.bf16.gmra.mrb[0].mxu0 %v120
  %v395 = vpop.f32.mrb[0].mxu0
  %v396 = vadd.f32 0.0, %v395
  %v397 = vpop.f32.mrb[0].mxu0
  %v398 = vpop.f32.mrb[0].mxu0
  %v399 = vadd.f32 0.0, %v398
  %v400 = vpop.f32.mrb[0].mxu0
  %401 = vmatprep.mubr.bf16.mxu0 %v126
  %402 = vmatmul.mubr.bf16.gmra.mrb[0].mxu0 %v125
  %v403 = vpop.f32.mrb[0].mxu0
  %v404 = vadd.f32 0.0, %v403
  %v405 = vpop.f32.mrb[0].mxu0
  %v406 = vpop.f32.mrb[0].mxu0
  %v407 = vpop.f32.mrb[0].mxu0
  %408 = vdwg.mxu0
  %409 = vmatprep.subr.bf16.mxu0 0
  %410 = vmatpush1.bf16.msra.mxu0 %v298
  %411 = vmatprep.subr.bf16.mxu0 0
  %412 = vmatpush1.bf16.msra.mxu0 %v299
  %413 = vmatprep.subr.bf16.mxu0 0
  %414 = vmatpush1.bf16.msra.mxu0 %v300
  %415 = vmatprep.subr.bf16.mxu0 0
  %416 = vmatpush1.bf16.msra.mxu0 %v301
  %417 = vmatprep.subr.bf16.mxu0 0
  %418 = vmatpush1.bf16.msra.mxu0 %v302
  %419 = vmatprep.subr.bf16.mxu0 0
  %420 = vmatpush1.bf16.msra.mxu0 %v303
  %421 = vmatprep.subr.bf16.mxu0 0
  %422 = vmatpush1.bf16.msra.mxu0 %v304
  %423 = vmatprep.subr.bf16.mxu0 0
  %424 = vmatpush1.bf16.msra.mxu0 %v305
  %425 = vmatprep.subr.bf16.mxu0 0
  %426 = vmatpush1.bf16.msra.mxu0 %v306
  %427 = vmatprep.subr.bf16.mxu0 0
  %428 = vmatpush1.bf16.msra.mxu0 %v307
  %429 = vmatprep.subr.bf16.mxu0 0
  %430 = vmatpush1.bf16.msra.mxu0 %v308
  %431 = vmatprep.subr.bf16.mxu0 0
  %432 = vmatpush1.bf16.msra.mxu0 %v309
  %433 = vmatprep.subr.bf16.mxu0 0
  %434 = vmatpush1.bf16.msra.mxu0 %v310
  %435 = vmatprep.subr.bf16.mxu0 0
  %436 = vmatpush1.bf16.msra.mxu0 %v311
  %437 = vmatprep.subr.bf16.mxu0 0
  %438 = vmatpush1.bf16.msra.mxu0 %v312
  %439 = vmatprep.subr.bf16.mxu0 0
  %440 = vmatpush1.bf16.msra.mxu0 %v313
  %441 = vmatprep.mubr.bf16.mxu0 %v123
  %442 = vmatmul.mubr.bf16.gmra.mrb[0].mxu0 %v122
  %v443 = vpop.f32.mrb[0].mxu0
  %v444 = vadd.f32 %v396, %v443
  %v445 = vpop.f32.mrb[0].mxu0
  %v446 = vpop.f32.mrb[0].mxu0
  %v447 = vadd.f32 %v399, %v446
  %v448 = vpop.f32.mrb[0].mxu0
  %449 = vmatprep.mubr.bf16.mxu0 %v128
  %450 = vmatmul.mubr.bf16.gmra.mrb[0].mxu0 %v127
  %v451 = vpop.f32.mrb[0].mxu0
  %v452 = vadd.f32 %v404, %v451
  %v453 = vpop.f32.mrb[0].mxu0
  %v454 = vpop.f32.mrb[0].mxu0
  %v455 = vpop.f32.mrb[0].mxu0
  %456 = vdwg.mxu0
  %457 = vmatprep.subr.bf16.mxu0 0
  %458 = vmatpush1.bf16.msra.mxu0 %v314
  %459 = vmatprep.subr.bf16.mxu0 0
  %460 = vmatpush1.bf16.msra.mxu0 %v315
  %461 = vmatprep.subr.bf16.mxu0 0
  %462 = vmatpush1.bf16.msra.mxu0 %v316
  %463 = vmatprep.subr.bf16.mxu0 0
  %464 = vmatpush1.bf16.msra.mxu0 %v317
  %465 = vmatprep.subr.bf16.mxu0 0
  %466 = vmatpush1.bf16.msra.mxu0 0
  %467 = vmatprep.subr.bf16.mxu0 0
  %468 = vmatpush1.bf16.msra.mxu0 0
  %469 = vmatprep.subr.bf16.mxu0 0
  %470 = vmatpush1.bf16.msra.mxu0 0
  %471 = vmatprep.subr.bf16.mxu0 0
  %472 = vmatpush1.bf16.msra.mxu0 0
  %473 = vmatprep.subr.bf16.mxu0 0
  %474 = vmatpush1.bf16.msra.mxu0 0
  %475 = vmatprep.subr.bf16.mxu0 0
  %476 = vmatpush1.bf16.msra.mxu0 0
  %477 = vmatprep.subr.bf16.mxu0 0
  %478 = vmatpush1.bf16.msra.mxu0 0
  %479 = vmatprep.subr.bf16.mxu0 0
  %480 = vmatpush1.bf16.msra.mxu0 0
  %481 = vmatprep.subr.bf16.mxu0 0
  %482 = vmatpush1.bf16.msra.mxu0 0
  %483 = vmatprep.subr.bf16.mxu0 0
  %484 = vmatpush1.bf16.msra.mxu0 0
  %485 = vmatprep.subr.bf16.mxu0 0
  %486 = vmatpush1.bf16.msra.mxu0 0
  %487 = vmatprep.subr.bf16.mxu0 0
  %488 = vmatpush1.bf16.msra.mxu0 0
  %489 = vmatprep.mubr.bf16.mxu0 0
  %490 = vmatmul.mubr.bf16.gmra.mrb[0].mxu0 %v356
  %v491 = vpop.f32.mrb[0].mxu0
  %v492 = vadd.f32 %v444, %v491
  %v493 = vpop.f32.mrb[0].mxu0
  %v494 = vpop.f32.mrb[0].mxu0
  %v495 = vadd.f32 %v447, %v494
  %v496 = vpop.f32.mrb[0].mxu0
  %497 = vmatprep.mubr.bf16.mxu0 0
  %498 = vmatmul.mubr.bf16.gmra.mrb[0].mxu0 %v359
  %v499 = vpop.f32.mrb[0].mxu0
  %v500 = vadd.f32 %v452, %v499
  %v501 = vpop.f32.mrb[0].mxu0
  %v502 = vpop.f32.mrb[0].mxu0
  %v503 = vpop.f32.mrb[0].mxu0
  %504 = vdwg.mxu0
  %s505 = scalar_lea.vmem %s0, 60
  %v506 = vld [vmem:[%s505] sm:$0xff]
  %v507 = vld [vmem:[%s505 + $0x8] sm:$0xff]
  %v508 = vld [vmem:[%s505 + $0x10] sm:$0xf]
  %v509 = vld [vmem:[%s505 + $0x14] sm:$0xff]
  %v510 = vld [vmem:[%s505 + $0x1c] sm:$0xff]
  %v511 = vld [vmem:[%s505 + $0x24] sm:$0xf]
  %v512 = vld [vmem:[%s505 + $0x28] sm:$0x11]
  %v513 = vld [vmem:[%s505 + $0x30] sm:$0x11]
  %v514 = vld [vmem:[%s505 + $0x38] sm:$0x1]
  %v524 = vunpack.c.l.b16 %v506
  %v525 = vunpack.c.h.b16 %v506
  %v526 = vunpack.c.l.b16 %v507
  %v527 = vunpack.c.h.b16 %v507
  %v528 = vunpack.c.l.b16 %v508
  %v529 = vunpack.c.l.b16 %v509
  %v530 = vunpack.c.h.b16 %v509
  %v531 = vunpack.c.l.b16 %v510
  %v532 = vunpack.c.h.b16 %v510
  %v533 = vunpack.c.l.b16 %v511
  %v534 = vunpack.c.l.b16 %v512
  %v535 = vunpack.c.h.b16 %v512
  %v536 = vunpack.c.l.b16 %v513
  %v537 = vunpack.c.h.b16 %v513
  %v538 = vunpack.c.l.b16 %v514
  %v539 = vpack.c.b16 %v529, %v524
  %v540 = vpack.c.b16 %v530, %v525
  %v541 = vpack.c.b16 %v531, %v526
  %v542 = vpack.c.b16 %v532, %v527
  %v543 = vpack.c.b16 %v533, %v528
  %v544 = vpack.c.b16 %v534, %v534
  %v545 = vpack.c.b16 %v535, %v535
  %v546 = vpack.c.b16 %v536, %v536
  %v547 = vpack.c.b16 %v537, %v537
  %v548 = vpack.c.b16 %v538, %v538
  %v558 = vsel %vm354, %v543, 0
  %v561 = vsel %vm354, %v548, 0
  %563 = vmatprep.subr.bf16.mxu0 0
  %564 = vmatpush1.bf16.msra.mxu0 %v282
  %565 = vmatprep.subr.bf16.mxu0 0
  %566 = vmatpush1.bf16.msra.mxu0 %v283
  %567 = vmatprep.subr.bf16.mxu0 0
  %568 = vmatpush1.bf16.msra.mxu0 %v284
  %569 = vmatprep.subr.bf16.mxu0 0
  %570 = vmatpush1.bf16.msra.mxu0 %v285
  %571 = vmatprep.subr.bf16.mxu0 0
  %572 = vmatpush1.bf16.msra.mxu0 %v286
  %573 = vmatprep.subr.bf16.mxu0 0
  %574 = vmatpush1.bf16.msra.mxu0 %v287
  %575 = vmatprep.subr.bf16.mxu0 0
  %576 = vmatpush1.bf16.msra.mxu0 %v288
  %577 = vmatprep.subr.bf16.mxu0 0
  %578 = vmatpush1.bf16.msra.mxu0 %v289
  %579 = vmatprep.subr.bf16.mxu0 0
  %580 = vmatpush1.bf16.msra.mxu0 %v290
  %581 = vmatprep.subr.bf16.mxu0 0
  %582 = vmatpush1.bf16.msra.mxu0 %v291
  %583 = vmatprep.subr.bf16.mxu0 0
  %584 = vmatpush1.bf16.msra.mxu0 %v292
  %585 = vmatprep.subr.bf16.mxu0 0
  %586 = vmatpush1.bf16.msra.mxu0 %v293
  %587 = vmatprep.subr.bf16.mxu0 0
  %588 = vmatpush1.bf16.msra.mxu0 %v294
  %589 = vmatprep.subr.bf16.mxu0 0
  %590 = vmatpush1.bf16.msra.mxu0 %v295
  %591 = vmatprep.subr.bf16.mxu0 0
  %592 = vmatpush1.bf16.msra.mxu0 %v296
  %593 = vmatprep.subr.bf16.mxu0 0
  %594 = vmatpush1.bf16.msra.mxu0 %v297
  %595 = vmatprep.mubr.bf16.mxu0 %v540
  %596 = vmatmul.mubr.bf16.gmra.mrb[0].mxu0 %v539
  %v597 = vpop.f32.mrb[0].mxu0
  %v598 = vadd.f32 0.0, %v597
  %v599 = vpop.f32.mrb[0].mxu0
  %v600 = vpop.f32.mrb[0].mxu0
  %v601 = vadd.f32 0.0, %v600
  %v602 = vpop.f32.mrb[0].mxu0
  %603 = vmatprep.mubr.bf16.mxu0 %v545
  %604 = vmatmul.mubr.bf16.gmra.mrb[0].mxu0 %v544
  %v605 = vpop.f32.mrb[0].mxu0
  %v606 = vadd.f32 0.0, %v605
  %v607 = vpop.f32.mrb[0].mxu0
  %v608 = vpop.f32.mrb[0].mxu0
  %v609 = vpop.f32.mrb[0].mxu0
  %610 = vdwg.mxu0
  %611 = vmatprep.subr.bf16.mxu0 0
  %612 = vmatpush1.bf16.msra.mxu0 %v298
  %613 = vmatprep.subr.bf16.mxu0 0
  %614 = vmatpush1.bf16.msra.mxu0 %v299
  %615 = vmatprep.subr.bf16.mxu0 0
  %616 = vmatpush1.bf16.msra.mxu0 %v300
  %617 = vmatprep.subr.bf16.mxu0 0
  %618 = vmatpush1.bf16.msra.mxu0 %v301
  %619 = vmatprep.subr.bf16.mxu0 0
  %620 = vmatpush1.bf16.msra.mxu0 %v302
  %621 = vmatprep.subr.bf16.mxu0 0
  %622 = vmatpush1.bf16.msra.mxu0 %v303
  %623 = vmatprep.subr.bf16.mxu0 0
  %624 = vmatpush1.bf16.msra.mxu0 %v304
  %625 = vmatprep.subr.bf16.mxu0 0
  %626 = vmatpush1.bf16.msra.mxu0 %v305
  %627 = vmatprep.subr.bf16.mxu0 0
  %628 = vmatpush1.bf16.msra.mxu0 %v306
  %629 = vmatprep.subr.bf16.mxu0 0
  %630 = vmatpush1.bf16.msra.mxu0 %v307
  %631 = vmatprep.subr.bf16.mxu0 0
  %632 = vmatpush1.bf16.msra.mxu0 %v308
  %633 = vmatprep.subr.bf16.mxu0 0
  %634 = vmatpush1.bf16.msra.mxu0 %v309
  %635 = vmatprep.subr.bf16.mxu0 0
  %636 = vmatpush1.bf16.msra.mxu0 %v310
  %637 = vmatprep.subr.bf16.mxu0 0
  %638 = vmatpush1.bf16.msra.mxu0 %v311
  %639 = vmatprep.subr.bf16.mxu0 0
  %640 = vmatpush1.bf16.msra.mxu0 %v312
  %641 = vmatprep.subr.bf16.mxu0 0
  %642 = vmatpush1.bf16.msra.mxu0 %v313
  %643 = vmatprep.mubr.bf16.mxu0 %v542
  %644 = vmatmul.mubr.bf16.gmra.mrb[0].mxu0 %v541
  %v645 = vpop.f32.mrb[0].mxu0
  %v646 = vadd.f32 %v598, %v645
  %v647 = vpop.f32.mrb[0].mxu0
  %v648 = vpop.f32.mrb[0].mxu0
  %v649 = vadd.f32 %v601, %v648
  %v650 = vpop.f32.mrb[0].mxu0
  %651 = vmatprep.mubr.bf16.mxu0 %v547
  %652 = vmatmul.mubr.bf16.gmra.mrb[0].mxu0 %v546
  %v653 = vpop.f32.mrb[0].mxu0
  %v654 = vadd.f32 %v606, %v653
  %v655 = vpop.f32.mrb[0].mxu0
  %v656 = vpop.f32.mrb[0].mxu0
  %v657 = vpop.f32.mrb[0].mxu0
  %658 = vdwg.mxu0
  %659 = vmatprep.subr.bf16.mxu0 0
  %660 = vmatpush1.bf16.msra.mxu0 %v314
  %661 = vmatprep.subr.bf16.mxu0 0
  %662 = vmatpush1.bf16.msra.mxu0 %v315
  %663 = vmatprep.subr.bf16.mxu0 0
  %664 = vmatpush1.bf16.msra.mxu0 %v316
  %665 = vmatprep.subr.bf16.mxu0 0
  %666 = vmatpush1.bf16.msra.mxu0 %v317
  %667 = vmatprep.subr.bf16.mxu0 0
  %668 = vmatpush1.bf16.msra.mxu0 0
  %669 = vmatprep.subr.bf16.mxu0 0
  %670 = vmatpush1.bf16.msra.mxu0 0
  %671 = vmatprep.subr.bf16.mxu0 0
  %672 = vmatpush1.bf16.msra.mxu0 0
  %673 = vmatprep.subr.bf16.mxu0 0
  %674 = vmatpush1.bf16.msra.mxu0 0
  %675 = vmatprep.subr.bf16.mxu0 0
  %676 = vmatpush1.bf16.msra.mxu0 0
  %677 = vmatprep.subr.bf16.mxu0 0
  %678 = vmatpush1.bf16.msra.mxu0 0
  %679 = vmatprep.subr.bf16.mxu0 0
  %680 = vmatpush1.bf16.msra.mxu0 0
  %681 = vmatprep.subr.bf16.mxu0 0
  %682 = vmatpush1.bf16.msra.mxu0 0
  %683 = vmatprep.subr.bf16.mxu0 0
  %684 = vmatpush1.bf16.msra.mxu0 0
  %685 = vmatprep.subr.bf16.mxu0 0
  %686 = vmatpush1.bf16.msra.mxu0 0
  %687 = vmatprep.subr.bf16.mxu0 0
  %688 = vmatpush1.bf16.msra.mxu0 0
  %689 = vmatprep.subr.bf16.mxu0 0
  %690 = vmatpush1.bf16.msra.mxu0 0
  %691 = vmatprep.mubr.bf16.mxu0 0
  %692 = vmatmul.mubr.bf16.gmra.mrb[0].mxu0 %v558
  %v693 = vpop.f32.mrb[0].mxu0
  %v694 = vadd.f32 %v646, %v693
  %v695 = vpop.f32.mrb[0].mxu0
  %v696 = vpop.f32.mrb[0].mxu0
  %v697 = vadd.f32 %v649, %v696
  %v698 = vpop.f32.mrb[0].mxu0
  %699 = vmatprep.mubr.bf16.mxu0 0
  %700 = vmatmul.mubr.bf16.gmra.mrb[0].mxu0 %v561
  %v701 = vpop.f32.mrb[0].mxu0
  %v702 = vadd.f32 %v654, %v701
  %v703 = vpop.f32.mrb[0].mxu0
  %v704 = vpop.f32.mrb[0].mxu0
  %v705 = vpop.f32.mrb[0].mxu0
  %706 = vdwg.mxu0
  %v707 = vmax.f32 %v492, %v694
  %v708 = vmax.f32 %v495, %v697
  %v709 = vmax.f32 %v500, %v702
  %s710 = scalar_lea.vmem %s0, 120
  %v711 = vld [vmem:[%s710] sm:$0xff]
  %v712 = vld [vmem:[%s710 + $0x8] sm:$0xff]
  %v713 = vld [vmem:[%s710 + $0x10] sm:$0xf]
  %v714 = vld [vmem:[%s710 + $0x14] sm:$0xff]
  %v715 = vld [vmem:[%s710 + $0x1c] sm:$0xff]
  %v716 = vld [vmem:[%s710 + $0x24] sm:$0xf]
  %v717 = vld [vmem:[%s710 + $0x28] sm:$0x11]
  %v718 = vld [vmem:[%s710 + $0x30] sm:$0x11]
  %v719 = vld [vmem:[%s710 + $0x38] sm:$0x1]
  %v729 = vunpack.c.l.b16 %v711
  %v730 = vunpack.c.h.b16 %v711
  %v731 = vunpack.c.l.b16 %v712
  %v732 = vunpack.c.h.b16 %v712
  %v733 = vunpack.c.l.b16 %v713
  %v734 = vunpack.c.l.b16 %v714
  %v735 = vunpack.c.h.b16 %v714
  %v736 = vunpack.c.l.b16 %v715
  %v737 = vunpack.c.h.b16 %v715
  %v738 = vunpack.c.l.b16 %v716
  %v739 = vunpack.c.l.b16 %v717
  %v740 = vunpack.c.h.b16 %v717
  %v741 = vunpack.c.l.b16 %v718
  %v742 = vunpack.c.h.b16 %v718
  %v743 = vunpack.c.l.b16 %v719
  %v744 = vpack.c.b16 %v734, %v729
  %v745 = vpack.c.b16 %v735, %v730
  %v746 = vpack.c.b16 %v736, %v731
  %v747 = vpack.c.b16 %v737, %v732
  %v748 = vpack.c.b16 %v738, %v733
  %v749 = vpack.c.b16 %v739, %v739
  %v750 = vpack.c.b16 %v740, %v740
  %v751 = vpack.c.b16 %v741, %v741
  %v752 = vpack.c.b16 %v742, %v742
  %v753 = vpack.c.b16 %v743, %v743
  %v763 = vsel %vm354, %v748, 0
  %v766 = vsel %vm354, %v753, 0
  %768 = vmatprep.subr.bf16.mxu0 0
  %769 = vmatpush1.bf16.msra.mxu0 %v282
  %770 = vmatprep.subr.bf16.mxu0 0
  %771 = vmatpush1.bf16.msra.mxu0 %v283
  %772 = vmatprep.subr.bf16.mxu0 0
  %773 = vmatpush1.bf16.msra.mxu0 %v284
  %774 = vmatprep.subr.bf16.mxu0 0
  %775 = vmatpush1.bf16.msra.mxu0 %v285
  %776 = vmatprep.subr.bf16.mxu0 0
  %777 = vmatpush1.bf16.msra.mxu0 %v286
  %778 = vmatprep.subr.bf16.mxu0 0
  %779 = vmatpush1.bf16.msra.mxu0 %v287
  %780 = vmatprep.subr.bf16.mxu0 0
  %781 = vmatpush1.bf16.msra.mxu0 %v288
  %782 = vmatprep.subr.bf16.mxu0 0
  %783 = vmatpush1.bf16.msra.mxu0 %v289
  %784 = vmatprep.subr.bf16.mxu0 0
  %785 = vmatpush1.bf16.msra.mxu0 %v290
  %786 = vmatprep.subr.bf16.mxu0 0
  %787 = vmatpush1.bf16.msra.mxu0 %v291
  %788 = vmatprep.subr.bf16.mxu0 0
  %789 = vmatpush1.bf16.msra.mxu0 %v292
  %790 = vmatprep.subr.bf16.mxu0 0
  %791 = vmatpush1.bf16.msra.mxu0 %v293
  %792 = vmatprep.subr.bf16.mxu0 0
  %793 = vmatpush1.bf16.msra.mxu0 %v294
  %794 = vmatprep.subr.bf16.mxu0 0
  %795 = vmatpush1.bf16.msra.mxu0 %v295
  %796 = vmatprep.subr.bf16.mxu0 0
  %797 = vmatpush1.bf16.msra.mxu0 %v296
  %798 = vmatprep.subr.bf16.mxu0 0
  %799 = vmatpush1.bf16.msra.mxu0 %v297
  %800 = vmatprep.mubr.bf16.mxu0 %v745
  %801 = vmatmul.mubr.bf16.gmra.mrb[0].mxu0 %v744
  %v802 = vpop.f32.mrb[0].mxu0
  %v803 = vadd.f32 0.0, %v802
  %v804 = vpop.f32.mrb[0].mxu0
  %v805 = vpop.f32.mrb[0].mxu0
  %v806 = vadd.f32 0.0, %v805
  %v807 = vpop.f32.mrb[0].mxu0
  %808 = vmatprep.mubr.bf16.mxu0 %v750
  %809 = vmatmul.mubr.bf16.gmra.mrb[0].mxu0 %v749
  %v810 = vpop.f32.mrb[0].mxu0
  %v811 = vadd.f32 0.0, %v810
  %v812 = vpop.f32.mrb[0].mxu0
  %v813 = vpop.f32.mrb[0].mxu0
  %v814 = vpop.f32.mrb[0].mxu0
  %815 = vdwg.mxu0
  %816 = vmatprep.subr.bf16.mxu0 0
  %817 = vmatpush1.bf16.msra.mxu0 %v298
  %818 = vmatprep.subr.bf16.mxu0 0
  %819 = vmatpush1.bf16.msra.mxu0 %v299
  %820 = vmatprep.subr.bf16.mxu0 0
  %821 = vmatpush1.bf16.msra.mxu0 %v300
  %822 = vmatprep.subr.bf16.mxu0 0
  %823 = vmatpush1.bf16.msra.mxu0 %v301
  %824 = vmatprep.subr.bf16.mxu0 0
  %825 = vmatpush1.bf16.msra.mxu0 %v302
  %826 = vmatprep.subr.bf16.mxu0 0
  %827 = vmatpush1.bf16.msra.mxu0 %v303
  %828 = vmatprep.subr.bf16.mxu0 0
  %829 = vmatpush1.bf16.msra.mxu0 %v304
  %830 = vmatprep.subr.bf16.mxu0 0
  %831 = vmatpush1.bf16.msra.mxu0 %v305
  %832 = vmatprep.subr.bf16.mxu0 0
  %833 = vmatpush1.bf16.msra.mxu0 %v306
  %834 = vmatprep.subr.bf16.mxu0 0
  %835 = vmatpush1.bf16.msra.mxu0 %v307
  %836 = vmatprep.subr.bf16.mxu0 0
  %837 = vmatpush1.bf16.msra.mxu0 %v308
  %838 = vmatprep.subr.bf16.mxu0 0
  %839 = vmatpush1.bf16.msra.mxu0 %v309
  %840 = vmatprep.subr.bf16.mxu0 0
  %841 = vmatpush1.bf16.msra.mxu0 %v310
  %842 = vmatprep.subr.bf16.mxu0 0
  %843 = vmatpush1.bf16.msra.mxu0 %v311
  %844 = vmatprep.subr.bf16.mxu0 0
  %845 = vmatpush1.bf16.msra.mxu0 %v312
  %846 = vmatprep.subr.bf16.mxu0 0
  %847 = vmatpush1.bf16.msra.mxu0 %v313
  %848 = vmatprep.mubr.bf16.mxu0 %v747
  %849 = vmatmul.mubr.bf16.gmra.mrb[0].mxu0 %v746
  %v850 = vpop.f32.mrb[0].mxu0
  %v851 = vadd.f32 %v803, %v850
  %v852 = vpop.f32.mrb[0].mxu0
  %v853 = vpop.f32.mrb[0].mxu0
  %v854 = vadd.f32 %v806, %v853
  %v855 = vpop.f32.mrb[0].mxu0
  %856 = vmatprep.mubr.bf16.mxu0 %v752
  %857 = vmatmul.mubr.bf16.gmra.mrb[0].mxu0 %v751
  %v858 = vpop.f32.mrb[0].mxu0
  %v859 = vadd.f32 %v811, %v858
  %v860 = vpop.f32.mrb[0].mxu0
  %v861 = vpop.f32.mrb[0].mxu0
  %v862 = vpop.f32.mrb[0].mxu0
  %863 = vdwg.mxu0
  %864 = vmatprep.subr.bf16.mxu0 0
  %865 = vmatpush1.bf16.msra.mxu0 %v314
  %866 = vmatprep.subr.bf16.mxu0 0
  %867 = vmatpush1.bf16.msra.mxu0 %v315
  %868 = vmatprep.subr.bf16.mxu0 0
  %869 = vmatpush1.bf16.msra.mxu0 %v316
  %870 = vmatprep.subr.bf16.mxu0 0
  %871 = vmatpush1.bf16.msra.mxu0 %v317
  %872 = vmatprep.subr.bf16.mxu0 0
  %873 = vmatpush1.bf16.msra.mxu0 0
  %874 = vmatprep.subr.bf16.mxu0 0
  %875 = vmatpush1.bf16.msra.mxu0 0
  %876 = vmatprep.subr.bf16.mxu0 0
  %877 = vmatpush1.bf16.msra.mxu0 0
  %878 = vmatprep.subr.bf16.mxu0 0
  %879 = vmatpush1.bf16.msra.mxu0 0
  %880 = vmatprep.subr.bf16.mxu0 0
  %881 = vmatpush1.bf16.msra.mxu0 0
  %882 = vmatprep.subr.bf16.mxu0 0
  %883 = vmatpush1.bf16.msra.mxu0 0
  %884 = vmatprep.subr.bf16.mxu0 0
  %885 = vmatpush1.bf16.msra.mxu0 0
  %886 = vmatprep.subr.bf16.mxu0 0
  %887 = vmatpush1.bf16.msra.mxu0 0
  %888 = vmatprep.subr.bf16.mxu0 0
  %889 = vmatpush1.bf16.msra.mxu0 0
  %890 = vmatprep.subr.bf16.mxu0 0
  %891 = vmatpush1.bf16.msra.mxu0 0
  %892 = vmatprep.subr.bf16.mxu0 0
  %893 = vmatpush1.bf16.msra.mxu0 0
  %894 = vmatprep.subr.bf16.mxu0 0
  %895 = vmatpush1.bf16.msra.mxu0 0
  %896 = vmatprep.mubr.bf16.mxu0 0
  %897 = vmatmul.mubr.bf16.gmra.mrb[0].mxu0 %v763
  %v898 = vpop.f32.mrb[0].mxu0
  %v899 = vadd.f32 %v851, %v898
  %v900 = vpop.f32.mrb[0].mxu0
  %v901 = vpop.f32.mrb[0].mxu0
  %v902 = vadd.f32 %v854, %v901
  %v903 = vpop.f32.mrb[0].mxu0
  %904 = vmatprep.mubr.bf16.mxu0 0
  %905 = vmatmul.mubr.bf16.gmra.mrb[0].mxu0 %v766
  %v906 = vpop.f32.mrb[0].mxu0
  %v907 = vadd.f32 %v859, %v906
  %v908 = vpop.f32.mrb[0].mxu0
  %v909 = vpop.f32.mrb[0].mxu0
  %v910 = vpop.f32.mrb[0].mxu0
  %911 = vdwg.mxu0
  %v912 = vmax.f32 %v707, %v899
  %v913 = vmax.f32 %v708, %v902
  %v914 = vmax.f32 %v709, %v907
  %s915 = scalar_lea.vmem %s0, 180
  %v916 = vld [vmem:[%s915] sm:$0xff]
  %v917 = vld [vmem:[%s915 + $0x8] sm:$0xff]
  %v918 = vld [vmem:[%s915 + $0x10] sm:$0xf]
  %v919 = vld [vmem:[%s915 + $0x14] sm:$0xff]
  %v920 = vld [vmem:[%s915 + $0x1c] sm:$0xff]
  %v921 = vld [vmem:[%s915 + $0x24] sm:$0xf]
  %v922 = vld [vmem:[%s915 + $0x28] sm:$0x11]
  %v923 = vld [vmem:[%s915 + $0x30] sm:$0x11]
  %v924 = vld [vmem:[%s915 + $0x38] sm:$0x1]
  %v934 = vunpack.c.l.b16 %v916
  %v935 = vunpack.c.h.b16 %v916
  %v936 = vunpack.c.l.b16 %v917
  %v937 = vunpack.c.h.b16 %v917
  %v938 = vunpack.c.l.b16 %v918
  %v939 = vunpack.c.l.b16 %v919
  %v940 = vunpack.c.h.b16 %v919
  %v941 = vunpack.c.l.b16 %v920
  %v942 = vunpack.c.h.b16 %v920
  %v943 = vunpack.c.l.b16 %v921
  %v944 = vunpack.c.l.b16 %v922
  %v945 = vunpack.c.h.b16 %v922
  %v946 = vunpack.c.l.b16 %v923
  %v947 = vunpack.c.h.b16 %v923
  %v948 = vunpack.c.l.b16 %v924
  %v949 = vpack.c.b16 %v939, %v934
  %v950 = vpack.c.b16 %v940, %v935
  %v951 = vpack.c.b16 %v941, %v936
  %v952 = vpack.c.b16 %v942, %v937
  %v953 = vpack.c.b16 %v943, %v938
  %v954 = vpack.c.b16 %v944, %v944
  %v955 = vpack.c.b16 %v945, %v945
  %v956 = vpack.c.b16 %v946, %v946
  %v957 = vpack.c.b16 %v947, %v947
  %v958 = vpack.c.b16 %v948, %v948
  %v968 = vsel %vm354, %v953, 0
  %v971 = vsel %vm354, %v958, 0
  %973 = vmatprep.subr.bf16.mxu0 0
  %974 = vmatpush1.bf16.msra.mxu0 %v282
  %975 = vmatprep.subr.bf16.mxu0 0
  %976 = vmatpush1.bf16.msra.mxu0 %v283
  %977 = vmatprep.subr.bf16.mxu0 0
  %978 = vmatpush1.bf16.msra.mxu0 %v284
  %979 = vmatprep.subr.bf16.mxu0 0
  %980 = vmatpush1.bf16.msra.mxu0 %v285
  %981 = vmatprep.subr.bf16.mxu0 0
  %982 = vmatpush1.bf16.msra.mxu0 %v286
  %983 = vmatprep.subr.bf16.mxu0 0
  %984 = vmatpush1.bf16.msra.mxu0 %v287
  %985 = vmatprep.subr.bf16.mxu0 0
  %986 = vmatpush1.bf16.msra.mxu0 %v288
  %987 = vmatprep.subr.bf16.mxu0 0
  %988 = vmatpush1.bf16.msra.mxu0 %v289
  %989 = vmatprep.subr.bf16.mxu0 0
  %990 = vmatpush1.bf16.msra.mxu0 %v290
  %991 = vmatprep.subr.bf16.mxu0 0
  %992 = vmatpush1.bf16.msra.mxu0 %v291
  %993 = vmatprep.subr.bf16.mxu0 0
  %994 = vmatpush1.bf16.msra.mxu0 %v292
  %995 = vmatprep.subr.bf16.mxu0 0
  %996 = vmatpush1.bf16.msra.mxu0 %v293
  %997 = vmatprep.subr.bf16.mxu0 0
  %998 = vmatpush1.bf16.msra.mxu0 %v294
  %999 = vmatprep.subr.bf16.mxu0 0
  %1000 = vmatpush1.bf16.msra.mxu0 %v295
  %1001 = vmatprep.subr.bf16.mxu0 0
  %1002 = vmatpush1.bf16.msra.mxu0 %v296
  %1003 = vmatprep.subr.bf16.mxu0 0
  %1004 = vmatpush1.bf16.msra.mxu0 %v297
  %1005 = vmatprep.mubr.bf16.mxu0 %v950
  %1006 = vmatmul.mubr.bf16.gmra.mrb[0].mxu0 %v949
  %v1007 = vpop.f32.mrb[0].mxu0
  %v1008 = vadd.f32 0.0, %v1007
  %v1009 = vpop.f32.mrb[0].mxu0
  %v1010 = vpop.f32.mrb[0].mxu0
  %v1011 = vadd.f32 0.0, %v1010
  %v1012 = vpop.f32.mrb[0].mxu0
  %1013 = vmatprep.mubr.bf16.mxu0 %v955
  %1014 = vmatmul.mubr.bf16.gmra.mrb[0].mxu0 %v954
  %v1015 = vpop.f32.mrb[0].mxu0
  %v1016 = vadd.f32 0.0, %v1015
  %v1017 = vpop.f32.mrb[0].mxu0
  %v1018 = vpop.f32.mrb[0].mxu0
  %v1019 = vpop.f32.mrb[0].mxu0
  %1020 = vdwg.mxu0
  %1021 = vmatprep.subr.bf16.mxu0 0
  %1022 = vmatpush1.bf16.msra.mxu0 %v298
  %1023 = vmatprep.subr.bf16.mxu0 0
  %1024 = vmatpush1.bf16.msra.mxu0 %v299
  %1025 = vmatprep.subr.bf16.mxu0 0
  %1026 = vmatpush1.bf16.msra.mxu0 %v300
  %1027 = vmatprep.subr.bf16.mxu0 0
  %1028 = vmatpush1.bf16.msra.mxu0 %v301
  %1029 = vmatprep.subr.bf16.mxu0 0
  %1030 = vmatpush1.bf16.msra.mxu0 %v302
  %1031 = vmatprep.subr.bf16.mxu0 0
  %1032 = vmatpush1.bf16.msra.mxu0 %v303
  %1033 = vmatprep.subr.bf16.mxu0 0
  %1034 = vmatpush1.bf16.msra.mxu0 %v304
  %1035 = vmatprep.subr.bf16.mxu0 0
  %1036 = vmatpush1.bf16.msra.mxu0 %v305
  %1037 = vmatprep.subr.bf16.mxu0 0
  %1038 = vmatpush1.bf16.msra.mxu0 %v306
  %1039 = vmatprep.subr.bf16.mxu0 0
  %1040 = vmatpush1.bf16.msra.mxu0 %v307
  %1041 = vmatprep.subr.bf16.mxu0 0
  %1042 = vmatpush1.bf16.msra.mxu0 %v308
  %1043 = vmatprep.subr.bf16.mxu0 0
  %1044 = vmatpush1.bf16.msra.mxu0 %v309
  %1045 = vmatprep.subr.bf16.mxu0 0
  %1046 = vmatpush1.bf16.msra.mxu0 %v310
  %1047 = vmatprep.subr.bf16.mxu0 0
  %1048 = vmatpush1.bf16.msra.mxu0 %v311
  %1049 = vmatprep.subr.bf16.mxu0 0
  %1050 = vmatpush1.bf16.msra.mxu0 %v312
  %1051 = vmatprep.subr.bf16.mxu0 0
  %1052 = vmatpush1.bf16.msra.mxu0 %v313
  %1053 = vmatprep.mubr.bf16.mxu0 %v952
  %1054 = vmatmul.mubr.bf16.gmra.mrb[0].mxu0 %v951
  %v1055 = vpop.f32.mrb[0].mxu0
  %v1056 = vadd.f32 %v1008, %v1055
  %v1057 = vpop.f32.mrb[0].mxu0
  %v1058 = vpop.f32.mrb[0].mxu0
  %v1059 = vadd.f32 %v1011, %v1058
  %v1060 = vpop.f32.mrb[0].mxu0
  %1061 = vmatprep.mubr.bf16.mxu0 %v957
  %1062 = vmatmul.mubr.bf16.gmra.mrb[0].mxu0 %v956
  %v1063 = vpop.f32.mrb[0].mxu0
  %v1064 = vadd.f32 %v1016, %v1063
  %v1065 = vpop.f32.mrb[0].mxu0
  %v1066 = vpop.f32.mrb[0].mxu0
  %v1067 = vpop.f32.mrb[0].mxu0
  %1068 = vdwg.mxu0
  %1069 = vmatprep.subr.bf16.mxu0 0
  %1070 = vmatpush1.bf16.msra.mxu0 %v314
  %1071 = vmatprep.subr.bf16.mxu0 0
  %1072 = vmatpush1.bf16.msra.mxu0 %v315
  %1073 = vmatprep.subr.bf16.mxu0 0
  %1074 = vmatpush1.bf16.msra.mxu0 %v316
  %1075 = vmatprep.subr.bf16.mxu0 0
  %1076 = vmatpush1.bf16.msra.mxu0 %v317
  %1077 = vmatprep.subr.bf16.mxu0 0
  %1078 = vmatpush1.bf16.msra.mxu0 0
  %1079 = vmatprep.subr.bf16.mxu0 0
  %1080 = vmatpush1.bf16.msra.mxu0 0
  %1081 = vmatprep.subr.bf16.mxu0 0
  %1082 = vmatpush1.bf16.msra.mxu0 0
  %1083 = vmatprep.subr.bf16.mxu0 0
  %1084 = vmatpush1.bf16.msra.mxu0 0
  %1085 = vmatprep.subr.bf16.mxu0 0
  %1086 = vmatpush1.bf16.msra.mxu0 0
  %1087 = vmatprep.subr.bf16.mxu0 0
  %1088 = vmatpush1.bf16.msra.mxu0 0
  %1089 = vmatprep.subr.bf16.mxu0 0
  %1090 = vmatpush1.bf16.msra.mxu0 0
  %1091 = vmatprep.subr.bf16.mxu0 0
  %1092 = vmatpush1.bf16.msra.mxu0 0
  %1093 = vmatprep.subr.bf16.mxu0 0
  %1094 = vmatpush1.bf16.msra.mxu0 0
  %1095 = vmatprep.subr.bf16.mxu0 0
  %1096 = vmatpush1.bf16.msra.mxu0 0
  %1097 = vmatprep.subr.bf16.mxu0 0
  %1098 = vmatpush1.bf16.msra.mxu0 0
  %1099 = vmatprep.subr.bf16.mxu0 0
  %1100 = vmatpush1.bf16.msra.mxu0 0
  %1101 = vmatprep.mubr.bf16.mxu0 0
  %1102 = vmatmul.mubr.bf16.gmra.mrb[0].mxu0 %v968
  %v1103 = vpop.f32.mrb[0].mxu0
  %v1104 = vadd.f32 %v1056, %v1103
  %v1105 = vpop.f32.mrb[0].mxu0
  %v1106 = vpop.f32.mrb[0].mxu0
  %v1107 = vadd.f32 %v1059, %v1106
  %v1108 = vpop.f32.mrb[0].mxu0
  %1109 = vmatprep.mubr.bf16.mxu0 0
  %1110 = vmatmul.mubr.bf16.gmra.mrb[0].mxu0 %v971
  %v1111 = vpop.f32.mrb[0].mxu0
  %v1112 = vadd.f32 %v1064, %v1111
  %v1113 = vpop.f32.mrb[0].mxu0
  %v1114 = vpop.f32.mrb[0].mxu0
  %v1115 = vpop.f32.mrb[0].mxu0
  %1116 = vdwg.mxu0
  %v1117 = vmax.f32 %v912, %v1104
  %v1118 = vmax.f32 %v913, %v1107
  %v1119 = vmax.f32 %v914, %v1112
  %v1120 = vld [vmem:[%s2] sm:$0x1]
  %v1122 = vlaneseq
  %v1123 = vshrl.u32 %v1122, 7
  %v1124 = vsub.s32 0, %v1123
  %v1125 = vrot.slane %v1120, %v1124
  %v1127 = vadd.f32 %v1117, %v1125
  %v1128 = vadd.f32 %v1118, %v1125
  %v1129 = vadd.f32 %v1119, %v1125
  %v1130 = vmax.f32 %v1127, 0.0
  %v1131 = vmax.f32 %v1128, 0.0
  %v1132 = vmax.f32 %v1129, 0.0
  %v1133 = vpack.c.bf16 %v1131, %v1130
  %v1134 = vpack.c.bf16 %v1132, %v1132
  %v1137 = vunpack.c.l.b16 %v1133
  %v1138 = vunpack.c.h.b16 %v1133
  %v1139 = vunpack.c.l.b16 %v1134
  %v1140 = vpack.c.b16 %v1137, %v1137
  %v1141 = vpack.c.b16 %v1138, %v1138
  %v1142 = vpack.c.b16 %v1139, %v1139
  %1146 = vst [vmem:[%s3] sm:$0xf] %v1140
  %1147 = vst [vmem:[%s3 + $0x4] sm:$0xf] %v1141
  %1148 = vst [vmem:[%s3 + $0x8] sm:$0x1] %v1142
  // Predicated region
  $region14: #{cnn_forward.6} parent=0 // pred_check
    _
  $region15: #{cnn_forward.6} parent=0 // pred_check_branch
    %1150 = sbr.rel (0) target = $region17
  $region16: #{cnn_forward.6} parent=0 // pred_region
    _
  $region17: #{cnn_forward.6} parent=0 // pred_fallthru
    _
  // Predicated region
  $region18: #{cnn_forward.6} parent=0 // pred_check
    _
  $region19: #{cnn_forward.6} parent=0 // pred_check_branch
    %1152 = sbr.rel (0) target = $region21
  $region20: #{cnn_forward.6} parent=0 // pred_region
    _
  $region21: #{cnn_forward.6} parent=0 // pred_fallthru
    _

// kernel: cnn_forward.7
$region0: #{cnn_forward.7}
  #allocation0 [shape = 'u32[]', space=smem, size = 0x4, offset = 0x4, fixed_abs, tag = 'smem constant byte address 0x4 - core index']
  #allocation1 [shape = 'u32[144,128]{1,0:T(1,128)}', space=vmem, size = 0x12000, scoped, tag = 'internal scratch']
  %s0 = inlined_call_operand.vmem [shape: bf16[2,1152], index: 0, kind: input, shape index: {}]
  %s1 = inlined_call_operand.vmem [shape: bf16[1152,512], index: 1, kind: input, shape index: {}]
  %s2 = inlined_call_operand.vmem [shape: f32[1,512], index: 2, kind: input, shape index: {}]
  %s3 = inlined_call_operand.vmem [shape: bf16[512,128], index: 3, kind: input, shape index: {}]
  %s4 = inlined_call_operand.vmem [shape: f32[1,128], index: 4, kind: input, shape index: {}]
  %s5 = inlined_call_operand.hbm [shape: f32[2,128], index: 5, kind: output, shape index: {}]
  %s6 = sld [smem:[#allocation0]]
  $region30: #{cnn_forward.7} parent=0
    _
  %s8 = ssub.s32 1, %s6
  %s9 = scalar_select 0, %s8, %s6
  $region1: #{cnn_forward.7} parent=0
    #allocation2 [shape = 'u8[1024]{0}', space=vmem, size = 0x400, scoped, tag = 'output window, operand 0, single buffered']
    #allocation3 [shape = 's32[1]{0}', space=sflag, size = 0x4, scoped, tag = 'scoped memory for cnn_forward.7']
    %10 = vsyncpa [#allocation3], 0
    // Predicated region
    $region2: #{cnn_forward.7} parent=1 // pred_check
      _
    $region3: #{cnn_forward.7} parent=1 // pred_check_branch
      %12 = sbr.rel (0) target = $region5
    $region4: #{cnn_forward.7} parent=1 // pred_region
      _
    $region5: #{cnn_forward.7} parent=1 // pred_fallthru
      _
    // Predicated region
    $region6: #{cnn_forward.7} parent=1 // pred_check
      _
    $region7: #{cnn_forward.7} parent=1 // pred_check_branch
      %14 = sbr.rel (0) target = $region9
    $region8: #{cnn_forward.7} parent=1 // pred_region
      _
    $region9: #{cnn_forward.7} parent=1 // pred_fallthru
      _
    // Predicated region
    $region10: #{cnn_forward.7} parent=1 // pred_check
      _
    $region11: #{cnn_forward.7} parent=1 // pred_check_branch
      %16 = sbr.rel (0) target = $region13
    $region12: #{cnn_forward.7} parent=1 // pred_region
      _
    $region13: #{cnn_forward.7} parent=1 // pred_fallthru
      _
    // Predicated region
    $region14: #{cnn_forward.7} parent=1 // pred_check
      _
    $region15: #{cnn_forward.7} parent=1 // pred_check_branch
      %18 = sbr.rel (0) target = $region17
    $region16: #{cnn_forward.7} parent=1 // pred_region
      _
    $region17: #{cnn_forward.7} parent=1 // pred_fallthru
      _
    // Predicated region
    $region18: #{cnn_forward.7} parent=1 // pred_check
      _
    $region19: #{cnn_forward.7} parent=1 // pred_check_branch
      %20 = sbr.rel (0) target = $region21
    $region20: #{cnn_forward.7} parent=1 // pred_region
      _
    $region21: #{cnn_forward.7} parent=1 // pred_fallthru
      _
    %v22 = vld [vmem:[%s0] sm:$0xff]
    %v23 = vld [vmem:[%s0 + $0x8] sm:$0x1]
    %v24 = vld [vmem:[%s1] sm:$0xff]
    %v25 = vld [vmem:[%s1 + $0x8] sm:$0xff]
    %v26 = vld [vmem:[%s1 + $0x10] sm:$0xff]
    %v27 = vld [vmem:[%s1 + $0x18] sm:$0xff]
    %v28 = vld [vmem:[%s1 + $0x20] sm:$0xff]
    %v29 = vld [vmem:[%s1 + $0x28] sm:$0xff]
    %v30 = vld [vmem:[%s1 + $0x30] sm:$0xff]
    %v31 = vld [vmem:[%s1 + $0x38] sm:$0xff]
    %v32 = vld [vmem:[%s1 + $0x40] sm:$0xff]
    %v33 = vld [vmem:[%s1 + $0x48] sm:$0xff]
    %v34 = vld [vmem:[%s1 + $0x50] sm:$0xff]
    %v35 = vld [vmem:[%s1 + $0x58] sm:$0xff]
    %v36 = vld [vmem:[%s1 + $0x60] sm:$0xff]
    %v37 = vld [vmem:[%s1 + $0x68] sm:$0xff]
    %v38 = vld [vmem:[%s1 + $0x70] sm:$0xff]
    %v39 = vld [vmem:[%s1 + $0x78] sm:$0xff]
    %v40 = vld [vmem:[%s1 + $0x80] sm:$0xff]
    %v41 = vld [vmem:[%s1 + $0x88] sm:$0xff]
    %v42 = vld [vmem:[%s1 + $0x90] sm:$0xff]
    %v43 = vld [vmem:[%s1 + $0x98] sm:$0xff]
    %v44 = vld [vmem:[%s1 + $0xa0] sm:$0xff]
    %v45 = vld [vmem:[%s1 + $0xa8] sm:$0xff]
    %v46 = vld [vmem:[%s1 + $0xb0] sm:$0xff]
    %v47 = vld [vmem:[%s1 + $0xb8] sm:$0xff]
    %v48 = vld [vmem:[%s1 + $0xc0] sm:$0xff]
    %v49 = vld [vmem:[%s1 + $0xc8] sm:$0xff]
    %v50 = vld [vmem:[%s1 + $0xd0] sm:$0xff]
    %v51 = vld [vmem:[%s1 + $0xd8] sm:$0xff]
    %v52 = vld [vmem:[%s1 + $0xe0] sm:$0xff]
    %v53 = vld [vmem:[%s1 + $0xe8] sm:$0xff]
    %v54 = vld [vmem:[%s1 + $0xf0] sm:$0xff]
    %v55 = vld [vmem:[%s1 + $0xf8] sm:$0xff]
    %v56 = vld [vmem:[%s1 + $0x100] sm:$0xff]
    %v57 = vld [vmem:[%s1 + $0x108] sm:$0xff]
    %v58 = vld [vmem:[%s1 + $0x110] sm:$0xff]
    %v59 = vld [vmem:[%s1 + $0x118] sm:$0xff]
    %v60 = vld [vmem:[%s1 + $0x120] sm:$0xff]
    %v61 = vld [vmem:[%s1 + $0x128] sm:$0xff]
    %v62 = vld [vmem:[%s1 + $0x130] sm:$0xff]
    %v63 = vld [vmem:[%s1 + $0x138] sm:$0xff]
    %v64 = vld [vmem:[%s1 + $0x140] sm:$0xff]
    %v65 = vld [vmem:[%s1 + $0x148] sm:$0xff]
    %v66 = vld [vmem:[%s1 + $0x150] sm:$0xff]
    %v67 = vld [vmem:[%s1 + $0x158] sm:$0xff]
    %v68 = vld [vmem:[%s1 + $0x160] sm:$0xff]
    %v69 = vld [vmem:[%s1 + $0x168] sm:$0xff]
    %v70 = vld [vmem:[%s1 + $0x170] sm:$0xff]
    %v71 = vld [vmem:[%s1 + $0x178] sm:$0xff]
    %v72 = vld [vmem:[%s1 + $0x180] sm:$0xff]
    %v73 = vld [vmem:[%s1 + $0x188] sm:$0xff]
    %v74 = vld [vmem:[%s1 + $0x190] sm:$0xff]
    %v75 = vld [vmem:[%s1 + $0x198] sm:$0xff]
    %v76 = vld [vmem:[%s1 + $0x1a0] sm:$0xff]
    %v77 = vld [vmem:[%s1 + $0x1a8] sm:$0xff]
    %v78 = vld [vmem:[%s1 + $0x1b0] sm:$0xff]
    %v79 = vld [vmem:[%s1 + $0x1b8] sm:$0xff]
    %v80 = vld [vmem:[%s1 + $0x1c0] sm:$0xff]
    %v81 = vld [vmem:[%s1 + $0x1c8] sm:$0xff]
    %v82 = vld [vmem:[%s1 + $0x1d0] sm:$0xff]
    %v83 = vld [vmem:[%s1 + $0x1d8] sm:$0xff]
    %v84 = vld [vmem:[%s1 + $0x1e0] sm:$0xff]
    %v85 = vld [vmem:[%s1 + $0x1e8] sm:$0xff]
    %v86 = vld [vmem:[%s1 + $0x1f0] sm:$0xff]
    %v87 = vld [vmem:[%s1 + $0x1f8] sm:$0xff]
    %v88 = vld [vmem:[%s1 + $0x200] sm:$0xff]
    %v89 = vld [vmem:[%s1 + $0x208] sm:$0xff]
    %v90 = vld [vmem:[%s1 + $0x210] sm:$0xff]
    %v91 = vld [vmem:[%s1 + $0x218] sm:$0xff]
    %v92 = vld [vmem:[%s1 + $0x220] sm:$0xff]
    %v93 = vld [vmem:[%s1 + $0x228] sm:$0xff]
    %v94 = vld [vmem:[%s1 + $0x230] sm:$0xff]
    %v95 = vld [vmem:[%s1 + $0x238] sm:$0xff]
    %v96 = vld [vmem:[%s1 + $0x240] sm:$0xff]
    %v97 = vld [vmem:[%s1 + $0x248] sm:$0xff]
    %v98 = vld [vmem:[%s1 + $0x250] sm:$0xff]
    %v99 = vld [vmem:[%s1 + $0x258] sm:$0xff]
    %v100 = vld [vmem:[%s1 + $0x260] sm:$0xff]
    %v101 = vld [vmem:[%s1 + $0x268] sm:$0xff]
    %v102 = vld [vmem:[%s1 + $0x270] sm:$0xff]
    %v103 = vld [vmem:[%s1 + $0x278] sm:$0xff]
    %v104 = vld [vmem:[%s1 + $0x280] sm:$0xff]
    %v105 = vld [vmem:[%s1 + $0x288] sm:$0xff]
    %v106 = vld [vmem:[%s1 + $0x290] sm:$0xff]
    %v107 = vld [vmem:[%s1 + $0x298] sm:$0xff]
    %v108 = vld [vmem:[%s1 + $0x2a0] sm:$0xff]
    %v109 = vld [vmem:[%s1 + $0x2a8] sm:$0xff]
    %v110 = vld [vmem:[%s1 + $0x2b0] sm:$0xff]
    %v111 = vld [vmem:[%s1 + $0x2b8] sm:$0xff]
    %v112 = vld [vmem:[%s1 + $0x2c0] sm:$0xff]
    %v113 = vld [vmem:[%s1 + $0x2c8] sm:$0xff]
    %v114 = vld [vmem:[%s1 + $0x2d0] sm:$0xff]
    %v115 = vld [vmem:[%s1 + $0x2d8] sm:$0xff]
    %v116 = vld [vmem:[%s1 + $0x2e0] sm:$0xff]
    %v117 = vld [vmem:[%s1 + $0x2e8] sm:$0xff]
    %v118 = vld [vmem:[%s1 + $0x2f0] sm:$0xff]
    %v119 = vld [vmem:[%s1 + $0x2f8] sm:$0xff]
    %v120 = vld [vmem:[%s1 + $0x300] sm:$0xff]
    %v121 = vld [vmem:[%s1 + $0x308] sm:$0xff]
    %v122 = vld [vmem:[%s1 + $0x310] sm:$0xff]
    %v123 = vld [vmem:[%s1 + $0x318] sm:$0xff]
    %v124 = vld [vmem:[%s1 + $0x320] sm:$0xff]
    %v125 = vld [vmem:[%s1 + $0x328] sm:$0xff]
    %v126 = vld [vmem:[%s1 + $0x330] sm:$0xff]
    %v127 = vld [vmem:[%s1 + $0x338] sm:$0xff]
    %v128 = vld [vmem:[%s1 + $0x340] sm:$0xff]
    %v129 = vld [vmem:[%s1 + $0x348] sm:$0xff]
    %v130 = vld [vmem:[%s1 + $0x350] sm:$0xff]
    %v131 = vld [vmem:[%s1 + $0x358] sm:$0xff]
    %v132 = vld [vmem:[%s1 + $0x360] sm:$0xff]
    %v133 = vld [vmem:[%s1 + $0x368] sm:$0xff]
    %v134 = vld [vmem:[%s1 + $0x370] sm:$0xff]
    %v135 = vld [vmem:[%s1 + $0x378] sm:$0xff]
    %v136 = vld [vmem:[%s1 + $0x380] sm:$0xff]
    %v137 = vld [vmem:[%s1 + $0x388] sm:$0xff]
    %v138 = vld [vmem:[%s1 + $0x390] sm:$0xff]
    %v139 = vld [vmem:[%s1 + $0x398] sm:$0xff]
    %v140 = vld [vmem:[%s1 + $0x3a0] sm:$0xff]
    %v141 = vld [vmem:[%s1 + $0x3a8] sm:$0xff]
    %v142 = vld [vmem:[%s1 + $0x3b0] sm:$0xff]
    %v143 = vld [vmem:[%s1 + $0x3b8] sm:$0xff]
    %v144 = vld [vmem:[%s1 + $0x3c0] sm:$0xff]
    %v145 = vld [vmem:[%s1 + $0x3c8] sm:$0xff]
    %v146 = vld [vmem:[%s1 + $0x3d0] sm:$0xff]
    %v147 = vld [vmem:[%s1 + $0x3d8] sm:$0xff]
    %v148 = vld [vmem:[%s1 + $0x3e0] sm:$0xff]
    %v149 = vld [vmem:[%s1 + $0x3e8] sm:$0xff]
    %v150 = vld [vmem:[%s1 + $0x3f0] sm:$0xff]
    %v151 = vld [vmem:[%s1 + $0x3f8] sm:$0xff]
    %v152 = vld [vmem:[%s1 + $0x400] sm:$0xff]
    %v153 = vld [vmem:[%s1 + $0x408] sm:$0xff]
    %v154 = vld [vmem:[%s1 + $0x410] sm:$0xff]
    %v155 = vld [vmem:[%s1 + $0x418] sm:$0xff]
    %v156 = vld [vmem:[%s1 + $0x420] sm:$0xff]
    %v157 = vld [vmem:[%s1 + $0x428] sm:$0xff]
    %v158 = vld [vmem:[%s1 + $0x430] sm:$0xff]
    %v159 = vld [vmem:[%s1 + $0x438] sm:$0xff]
    %v160 = vld [vmem:[%s1 + $0x440] sm:$0xff]
    %v161 = vld [vmem:[%s1 + $0x448] sm:$0xff]
    %v162 = vld [vmem:[%s1 + $0x450] sm:$0xff]
    %v163 = vld [vmem:[%s1 + $0x458] sm:$0xff]
    %v164 = vld [vmem:[%s1 + $0x460] sm:$0xff]
    %v165 = vld [vmem:[%s1 + $0x468] sm:$0xff]
    %v166 = vld [vmem:[%s1 + $0x470] sm:$0xff]
    %v167 = vld [vmem:[%s1 + $0x478] sm:$0xff]
    %v168 = vld [vmem:[%s1 + $0x480] sm:$0xff]
    %v169 = vld [vmem:[%s1 + $0x488] sm:$0xff]
    %v170 = vld [vmem:[%s1 + $0x490] sm:$0xff]
    %v171 = vld [vmem:[%s1 + $0x498] sm:$0xff]
    %v172 = vld [vmem:[%s1 + $0x4a0] sm:$0xff]
    %v173 = vld [vmem:[%s1 + $0x4a8] sm:$0xff]
    %v174 = vld [vmem:[%s1 + $0x4b0] sm:$0xff]
    %v175 = vld [vmem:[%s1 + $0x4b8] sm:$0xff]
    %v176 = vld [vmem:[%s1 + $0x4c0] sm:$0xff]
    %v177 = vld [vmem:[%s1 + $0x4c8] sm:$0xff]
    %v178 = vld [vmem:[%s1 + $0x4d0] sm:$0xff]
    %v179 = vld [vmem:[%s1 + $0x4d8] sm:$0xff]
    %v180 = vld [vmem:[%s1 + $0x4e0] sm:$0xff]
    %v181 = vld [vmem:[%s1 + $0x4e8] sm:$0xff]
    %v182 = vld [vmem:[%s1 + $0x4f0] sm:$0xff]
    %v183 = vld [vmem:[%s1 + $0x4f8] sm:$0xff]
    %v184 = vld [vmem:[%s1 + $0x500] sm:$0xff]
    %v185 = vld [vmem:[%s1 + $0x508] sm:$0xff]
    %v186 = vld [vmem:[%s1 + $0x510] sm:$0xff]
    %v187 = vld [vmem:[%s1 + $0x518] sm:$0xff]
    %v188 = vld [vmem:[%s1 + $0x520] sm:$0xff]
    %v189 = vld [vmem:[%s1 + $0x528] sm:$0xff]
    %v190 = vld [vmem:[%s1 + $0x530] sm:$0xff]
    %v191 = vld [vmem:[%s1 + $0x538] sm:$0xff]
    %v192 = vld [vmem:[%s1 + $0x540] sm:$0xff]
    %v193 = vld [vmem:[%s1 + $0x548] sm:$0xff]
    %v194 = vld [vmem:[%s1 + $0x550] sm:$0xff]
    %v195 = vld [vmem:[%s1 + $0x558] sm:$0xff]
    %v196 = vld [vmem:[%s1 + $0x560] sm:$0xff]
    %v197 = vld [vmem:[%s1 + $0x568] sm:$0xff]
    %v198 = vld [vmem:[%s1 + $0x570] sm:$0xff]
    %v199 = vld [vmem:[%s1 + $0x578] sm:$0xff]
    %v200 = vld [vmem:[%s1 + $0x580] sm:$0xff]
    %v201 = vld [vmem:[%s1 + $0x588] sm:$0xff]
    %v202 = vld [vmem:[%s1 + $0x590] sm:$0xff]
    %v203 = vld [vmem:[%s1 + $0x598] sm:$0xff]
    %v204 = vld [vmem:[%s1 + $0x5a0] sm:$0xff]
    %v205 = vld [vmem:[%s1 + $0x5a8] sm:$0xff]
    %v206 = vld [vmem:[%s1 + $0x5b0] sm:$0xff]
    %v207 = vld [vmem:[%s1 + $0x5b8] sm:$0xff]
    %v208 = vld [vmem:[%s1 + $0x5c0] sm:$0xff]
    %v209 = vld [vmem:[%s1 + $0x5c8] sm:$0xff]
    %v210 = vld [vmem:[%s1 + $0x5d0] sm:$0xff]
    %v211 = vld [vmem:[%s1 + $0x5d8] sm:$0xff]
    %v212 = vld [vmem:[%s1 + $0x5e0] sm:$0xff]
    %v213 = vld [vmem:[%s1 + $0x5e8] sm:$0xff]
    %v214 = vld [vmem:[%s1 + $0x5f0] sm:$0xff]
    %v215 = vld [vmem:[%s1 + $0x5f8] sm:$0xff]
    %v216 = vld [vmem:[%s1 + $0x600] sm:$0xff]
    %v217 = vld [vmem:[%s1 + $0x608] sm:$0xff]
    %v218 = vld [vmem:[%s1 + $0x610] sm:$0xff]
    %v219 = vld [vmem:[%s1 + $0x618] sm:$0xff]
    %v220 = vld [vmem:[%s1 + $0x620] sm:$0xff]
    %v221 = vld [vmem:[%s1 + $0x628] sm:$0xff]
    %v222 = vld [vmem:[%s1 + $0x630] sm:$0xff]
    %v223 = vld [vmem:[%s1 + $0x638] sm:$0xff]
    %v224 = vld [vmem:[%s1 + $0x640] sm:$0xff]
    %v225 = vld [vmem:[%s1 + $0x648] sm:$0xff]
    %v226 = vld [vmem:[%s1 + $0x650] sm:$0xff]
    %v227 = vld [vmem:[%s1 + $0x658] sm:$0xff]
    %v228 = vld [vmem:[%s1 + $0x660] sm:$0xff]
    %v229 = vld [vmem:[%s1 + $0x668] sm:$0xff]
    %v230 = vld [vmem:[%s1 + $0x670] sm:$0xff]
    %v231 = vld [vmem:[%s1 + $0x678] sm:$0xff]
    %v232 = vld [vmem:[%s1 + $0x680] sm:$0xff]
    %v233 = vld [vmem:[%s1 + $0x688] sm:$0xff]
    %v234 = vld [vmem:[%s1 + $0x690] sm:$0xff]
    %v235 = vld [vmem:[%s1 + $0x698] sm:$0xff]
    %v236 = vld [vmem:[%s1 + $0x6a0] sm:$0xff]
    %v237 = vld [vmem:[%s1 + $0x6a8] sm:$0xff]
    %v238 = vld [vmem:[%s1 + $0x6b0] sm:$0xff]
    %v239 = vld [vmem:[%s1 + $0x6b8] sm:$0xff]
    %v240 = vld [vmem:[%s1 + $0x6c0] sm:$0xff]
    %v241 = vld [vmem:[%s1 + $0x6c8] sm:$0xff]
    %v242 = vld [vmem:[%s1 + $0x6d0] sm:$0xff]
    %v243 = vld [vmem:[%s1 + $0x6d8] sm:$0xff]
    %v244 = vld [vmem:[%s1 + $0x6e0] sm:$0xff]
    %v245 = vld [vmem:[%s1 + $0x6e8] sm:$0xff]
    %v246 = vld [vmem:[%s1 + $0x6f0] sm:$0xff]
    %v247 = vld [vmem:[%s1 + $0x6f8] sm:$0xff]
    %v248 = vld [vmem:[%s1 + $0x700] sm:$0xff]
    %v249 = vld [vmem:[%s1 + $0x708] sm:$0xff]
    %v250 = vld [vmem:[%s1 + $0x710] sm:$0xff]
    %v251 = vld [vmem:[%s1 + $0x718] sm:$0xff]
    %v252 = vld [vmem:[%s1 + $0x720] sm:$0xff]
    %v253 = vld [vmem:[%s1 + $0x728] sm:$0xff]
    %v254 = vld [vmem:[%s1 + $0x730] sm:$0xff]
    %v255 = vld [vmem:[%s1 + $0x738] sm:$0xff]
    %v256 = vld [vmem:[%s1 + $0x740] sm:$0xff]
    %v257 = vld [vmem:[%s1 + $0x748] sm:$0xff]
    %v258 = vld [vmem:[%s1 + $0x750] sm:$0xff]
    %v259 = vld [vmem:[%s1 + $0x758] sm:$0xff]
    %v260 = vld [vmem:[%s1 + $0x760] sm:$0xff]
    %v261 = vld [vmem:[%s1 + $0x768] sm:$0xff]
    %v262 = vld [vmem:[%s1 + $0x770] sm:$0xff]
    %v263 = vld [vmem:[%s1 + $0x778] sm:$0xff]
    %v264 = vld [vmem:[%s1 + $0x780] sm:$0xff]
    %v265 = vld [vmem:[%s1 + $0x788] sm:$0xff]
    %v266 = vld [vmem:[%s1 + $0x790] sm:$0xff]
    %v267 = vld [vmem:[%s1 + $0x798] sm:$0xff]
    %v268 = vld [vmem:[%s1 + $0x7a0] sm:$0xff]
    %v269 = vld [vmem:[%s1 + $0x7a8] sm:$0xff]
    %v270 = vld [vmem:[%s1 + $0x7b0] sm:$0xff]
    %v271 = vld [vmem:[%s1 + $0x7b8] sm:$0xff]
    %v272 = vld [vmem:[%s1 + $0x7c0] sm:$0xff]
    %v273 = vld [vmem:[%s1 + $0x7c8] sm:$0xff]
    %v274 = vld [vmem:[%s1 + $0x7d0] sm:$0xff]
    %v275 = vld [vmem:[%s1 + $0x7d8] sm:$0xff]
    %v276 = vld [vmem:[%s1 + $0x7e0] sm:$0xff]
    %v277 = vld [vmem:[%s1 + $0x7e8] sm:$0xff]
    %v278 = vld [vmem:[%s1 + $0x7f0] sm:$0xff]
    %v279 = vld [vmem:[%s1 + $0x7f8] sm:$0xff]
    %v280 = vld [vmem:[%s1 + $0x800] sm:$0xff]
    %v281 = vld [vmem:[%s1 + $0x808] sm:$0xff]
    %v282 = vld [vmem:[%s1 + $0x810] sm:$0xff]
    %v283 = vld [vmem:[%s1 + $0x818] sm:$0xff]
    %v284 = vld [vmem:[%s1 + $0x820] sm:$0xff]
    %v285 = vld [vmem:[%s1 + $0x828] sm:$0xff]
    %v286 = vld [vmem:[%s1 + $0x830] sm:$0xff]
    %v287 = vld [vmem:[%s1 + $0x838] sm:$0xff]
    %v288 = vld [vmem:[%s1 + $0x840] sm:$0xff]
    %v289 = vld [vmem:[%s1 + $0x848] sm:$0xff]
    %v290 = vld [vmem:[%s1 + $0x850] sm:$0xff]
    %v291 = vld [vmem:[%s1 + $0x858] sm:$0xff]
    %v292 = vld [vmem:[%s1 + $0x860] sm:$0xff]
    %v293 = vld [vmem:[%s1 + $0x868] sm:$0xff]
    %v294 = vld [vmem:[%s1 + $0x870] sm:$0xff]
    %v295 = vld [vmem:[%s1 + $0x878] sm:$0xff]
    %v296 = vld [vmem:[%s1 + $0x880] sm:$0xff]
    %v297 = vld [vmem:[%s1 + $0x888] sm:$0xff]
    %v298 = vld [vmem:[%s1 + $0x890] sm:$0xff]
    %v299 = vld [vmem:[%s1 + $0x898] sm:$0xff]
    %v300 = vld [vmem:[%s1 + $0x8a0] sm:$0xff]
    %v301 = vld [vmem:[%s1 + $0x8a8] sm:$0xff]
    %v302 = vld [vmem:[%s1 + $0x8b0] sm:$0xff]
    %v303 = vld [vmem:[%s1 + $0x8b8] sm:$0xff]
    %v304 = vld [vmem:[%s1 + $0x8c0] sm:$0xff]
    %v305 = vld [vmem:[%s1 + $0x8c8] sm:$0xff]
    %v306 = vld [vmem:[%s1 + $0x8d0] sm:$0xff]
    %v307 = vld [vmem:[%s1 + $0x8d8] sm:$0xff]
    %v308 = vld [vmem:[%s1 + $0x8e0] sm:$0xff]
    %v309 = vld [vmem:[%s1 + $0x8e8] sm:$0xff]
    %v310 = vld [vmem:[%s1 + $0x8f0] sm:$0xff]
    %v311 = vld [vmem:[%s1 + $0x8f8] sm:$0xff]
    %v312 = vld [vmem:[%s2] sm:$0xf]
    %v314 = vlaneseq
    %v315 = vshrl.u32 %v314, 7
    %v316 = vsub.s32 0, %v315
    %v317 = vrot.slane %v312, %v316
    %v318 = vlaneseq
    %v319 = vshrl.u32 %v318, 7
    %v320 = vsub.s32 1, %v319
    %v321 = vrot.slane %v312, %v320
    %v322 = vlaneseq
    %v323 = vshrl.u32 %v322, 7
    %v324 = vsub.s32 2, %v323
    %v325 = vrot.slane %v312, %v324
    %v326 = vlaneseq
    %v327 = vshrl.u32 %v326, 7
    %v328 = vsub.s32 3, %v327
    %v329 = vrot.slane %v312, %v328
    %v336 = vcombine.high %v22, %v22
    %v338 = vunpack.c.l.s4 1966171168
    %v339 = vunpack.c.0.s8 %v338
    %v340 = vlaneseq
    %v341 = vshrl.u32 %v340, 7
    %v342 = vsub.s32 %v339, %v341
    %v343 = vrot.slane %v22, %v342
    %v345 = vunpack.c.l.s4 1966171168
    %v346 = vunpack.c.0.s8 %v345
    %v347 = vlaneseq
    %v348 = vshrl.u32 %v347, 7
    %v349 = vsub.s32 %v346, %v348
    %v350 = vrot.slane %v336, %v349
    %v351 = vcombine.high %v343, %v343
    %v352 = vcombine.high %v350, %v350
    %v354 = vunpack.c.l.s4 1966171168
    %v355 = vunpack.c.0.s8 %v354
    %v356 = vlaneseq
    %v357 = vshrl.u32 %v356, 7
    %v358 = vsub.s32 %v355, %v357
    %v359 = vrot.slane %v343, %v358
    %v361 = vunpack.c.l.s4 1966171168
    %v362 = vunpack.c.0.s8 %v361
    %v363 = vlaneseq
    %v364 = vshrl.u32 %v363, 7
    %v365 = vsub.s32 %v362, %v364
    %v366 = vrot.slane %v350, %v365
    %v368 = vunpack.c.l.s4 1966171168
    %v369 = vunpack.c.0.s8 %v368
    %v370 = vlaneseq
    %v371 = vshrl.u32 %v370, 7
    %v372 = vsub.s32 %v369, %v371
    %v373 = vrot.slane %v351, %v372
    %v375 = vunpack.c.l.s4 1966171168
    %v376 = vunpack.c.0.s8 %v375
    %v377 = vlaneseq
    %v378 = vshrl.u32 %v377, 7
    %v379 = vsub.s32 %v376, %v378
    %v380 = vrot.slane %v352, %v379
    %v381 = vcombine.high %v359, %v359
    %v382 = vcombine.high %v366, %v366
    %v383 = vcombine.high %v373, %v373
    %v384 = vcombine.high %v380, %v380
    %v386 = vunpack.c.l.s4 1966171168
    %v387 = vunpack.c.0.s8 %v386
    %v388 = vlaneseq
    %v389 = vshrl.u32 %v388, 7
    %v390 = vsub.s32 %v387, %v389
    %v391 = vrot.slane %v23, %v390
    %v393 = vunpack.c.l.s4 1966171168
    %v394 = vunpack.c.0.s8 %v393
    %v395 = vlaneseq
    %v396 = vshrl.u32 %v395, 7
    %v397 = vsub.s32 %v394, %v396
    %v398 = vrot.slane %v391, %v397
    %v696 = vunpack.c.l.b16 %v24
    %v697 = vunpack.c.h.b16 %v24
    %v698 = vunpack.c.l.b16 %v25
    %v699 = vunpack.c.h.b16 %v25
    %v700 = vunpack.c.l.b16 %v26
    %v701 = vunpack.c.h.b16 %v26
    %v702 = vunpack.c.l.b16 %v27
    %v703 = vunpack.c.h.b16 %v27
    %v704 = vunpack.c.l.b16 %v28
    %v705 = vunpack.c.h.b16 %v28
    %v706 = vunpack.c.l.b16 %v29
    %v707 = vunpack.c.h.b16 %v29
    %v708 = vunpack.c.l.b16 %v30
    %v709 = vunpack.c.h.b16 %v30
    %v710 = vunpack.c.l.b16 %v31
    %v711 = vunpack.c.h.b16 %v31
    %v712 = vunpack.c.l.b16 %v32
    %v713 = vunpack.c.h.b16 %v32
    %v714 = vunpack.c.l.b16 %v33
    %v715 = vunpack.c.h.b16 %v33
    %v716 = vunpack.c.l.b16 %v34
    %v717 = vunpack.c.h.b16 %v34
    %v718 = vunpack.c.l.b16 %v35
    %v719 = vunpack.c.h.b16 %v35
    %v720 = vunpack.c.l.b16 %v36
    %v721 = vunpack.c.h.b16 %v36
    %v722 = vunpack.c.l.b16 %v37
    %v723 = vunpack.c.h.b16 %v37
    %v724 = vunpack.c.l.b16 %v38
    %v725 = vunpack.c.h.b16 %v38
    %v726 = vunpack.c.l.b16 %v39
    %v727 = vunpack.c.h.b16 %v39
    %v728 = vunpack.c.l.b16 %v40
    %v729 = vunpack.c.h.b16 %v40
    %v730 = vunpack.c.l.b16 %v41
    %v731 = vunpack.c.h.b16 %v41
    %v732 = vunpack.c.l.b16 %v42
    %v733 = vunpack.c.h.b16 %v42
    %v734 = vunpack.c.l.b16 %v43
    %v735 = vunpack.c.h.b16 %v43
    %v736 = vunpack.c.l.b16 %v44
    %v737 = vunpack.c.h.b16 %v44
    %v738 = vunpack.c.l.b16 %v45
    %v739 = vunpack.c.h.b16 %v45
    %v740 = vunpack.c.l.b16 %v46
    %v741 = vunpack.c.h.b16 %v46
    %v742 = vunpack.c.l.b16 %v47
    %v743 = vunpack.c.h.b16 %v47
    %v744 = vunpack.c.l.b16 %v48
    %v745 = vunpack.c.h.b16 %v48
    %v746 = vunpack.c.l.b16 %v49
    %v747 = vunpack.c.h.b16 %v49
    %v748 = vunpack.c.l.b16 %v50
    %v749 = vunpack.c.h.b16 %v50
    %v750 = vunpack.c.l.b16 %v51
    %v751 = vunpack.c.h.b16 %v51
    %v752 = vunpack.c.l.b16 %v52
    %v753 = vunpack.c.h.b16 %v52
    %v754 = vunpack.c.l.b16 %v53
    %v755 = vunpack.c.h.b16 %v53
    %v756 = vunpack.c.l.b16 %v54
    %v757 = vunpack.c.h.b16 %v54
    %v758 = vunpack.c.l.b16 %v55
    %v759 = vunpack.c.h.b16 %v55
    %v760 = vunpack.c.l.b16 %v56
    %v761 = vunpack.c.h.b16 %v56
    %v762 = vunpack.c.l.b16 %v57
    %v763 = vunpack.c.h.b16 %v57
    %v764 = vunpack.c.l.b16 %v58
    %v765 = vunpack.c.h.b16 %v58
    %v766 = vunpack.c.l.b16 %v59
    %v767 = vunpack.c.h.b16 %v59
    %v768 = vunpack.c.l.b16 %v60
    %v769 = vunpack.c.h.b16 %v60
    %v770 = vunpack.c.l.b16 %v61
    %v771 = vunpack.c.h.b16 %v61
    %v772 = vunpack.c.l.b16 %v62
    %v773 = vunpack.c.h.b16 %v62
    %v774 = vunpack.c.l.b16 %v63
    %v775 = vunpack.c.h.b16 %v63
    %v776 = vunpack.c.l.b16 %v64
    %v777 = vunpack.c.h.b16 %v64
    %v778 = vunpack.c.l.b16 %v65
    %v779 = vunpack.c.h.b16 %v65
    %v780 = vunpack.c.l.b16 %v66
    %v781 = vunpack.c.h.b16 %v66
    %v782 = vunpack.c.l.b16 %v67
    %v783 = vunpack.c.h.b16 %v67
    %v784 = vunpack.c.l.b16 %v68
    %v785 = vunpack.c.h.b16 %v68
    %v786 = vunpack.c.l.b16 %v69
    %v787 = vunpack.c.h.b16 %v69
    %v788 = vunpack.c.l.b16 %v70
    %v789 = vunpack.c.h.b16 %v70
    %v790 = vunpack.c.l.b16 %v71
    %v791 = vunpack.c.h.b16 %v71
    %v792 = vunpack.c.l.b16 %v72
    %v793 = vunpack.c.h.b16 %v72
    %v794 = vunpack.c.l.b16 %v73
    %v795 = vunpack.c.h.b16 %v73
    %v796 = vunpack.c.l.b16 %v74
    %v797 = vunpack.c.h.b16 %v74
    %v798 = vunpack.c.l.b16 %v75
    %v799 = vunpack.c.h.b16 %v75
    %v800 = vunpack.c.l.b16 %v76
    %v801 = vunpack.c.h.b16 %v76
    %v802 = vunpack.c.l.b16 %v77
    %v803 = vunpack.c.h.b16 %v77
    %v804 = vunpack.c.l.b16 %v78
    %v805 = vunpack.c.h.b16 %v78
    %v806 = vunpack.c.l.b16 %v79
    %v807 = vunpack.c.h.b16 %v79
    %v808 = vunpack.c.l.b16 %v80
    %v809 = vunpack.c.h.b16 %v80
    %v810 = vunpack.c.l.b16 %v81
    %v811 = vunpack.c.h.b16 %v81
    %v812 = vunpack.c.l.b16 %v82
    %v813 = vunpack.c.h.b16 %v82
    %v814 = vunpack.c.l.b16 %v83
    %v815 = vunpack.c.h.b16 %v83
    %v816 = vunpack.c.l.b16 %v84
    %v817 = vunpack.c.h.b16 %v84
    %v818 = vunpack.c.l.b16 %v85
    %v819 = vunpack.c.h.b16 %v85
    %v820 = vunpack.c.l.b16 %v86
    %v821 = vunpack.c.h.b16 %v86
    %v822 = vunpack.c.l.b16 %v87
    %v823 = vunpack.c.h.b16 %v87
    %v824 = vunpack.c.l.b16 %v88
    %v825 = vunpack.c.h.b16 %v88
    %v826 = vunpack.c.l.b16 %v89
    %v827 = vunpack.c.h.b16 %v89
    %v828 = vunpack.c.l.b16 %v90
    %v829 = vunpack.c.h.b16 %v90
    %v830 = vunpack.c.l.b16 %v91
    %v831 = vunpack.c.h.b16 %v91
    %v832 = vunpack.c.l.b16 %v92
    %v833 = vunpack.c.h.b16 %v92
    %v834 = vunpack.c.l.b16 %v93
    %v835 = vunpack.c.h.b16 %v93
    %v836 = vunpack.c.l.b16 %v94
    %v837 = vunpack.c.h.b16 %v94
    %v838 = vunpack.c.l.b16 %v95
    %v839 = vunpack.c.h.b16 %v95
    %v840 = vunpack.c.l.b16 %v96
    %v841 = vunpack.c.h.b16 %v96
    %v842 = vunpack.c.l.b16 %v97
    %v843 = vunpack.c.h.b16 %v97
    %v844 = vunpack.c.l.b16 %v98
    %v845 = vunpack.c.h.b16 %v98
    %v846 = vunpack.c.l.b16 %v99
    %v847 = vunpack.c.h.b16 %v99
    %v848 = vunpack.c.l.b16 %v100
    %v849 = vunpack.c.h.b16 %v100
    %v850 = vunpack.c.l.b16 %v101
    %v851 = vunpack.c.h.b16 %v101
    %v852 = vunpack.c.l.b16 %v102
    %v853 = vunpack.c.h.b16 %v102
    %v854 = vunpack.c.l.b16 %v103
    %v855 = vunpack.c.h.b16 %v103
    %v856 = vunpack.c.l.b16 %v104
    %v857 = vunpack.c.h.b16 %v104
    %v858 = vunpack.c.l.b16 %v105
    %v859 = vunpack.c.h.b16 %v105
    %v860 = vunpack.c.l.b16 %v106
    %v861 = vunpack.c.h.b16 %v106
    %v862 = vunpack.c.l.b16 %v107
    %v863 = vunpack.c.h.b16 %v107
    %v864 = vunpack.c.l.b16 %v108
    %v865 = vunpack.c.h.b16 %v108
    %v866 = vunpack.c.l.b16 %v109
    %v867 = vunpack.c.h.b16 %v109
    %v868 = vunpack.c.l.b16 %v110
    %v869 = vunpack.c.h.b16 %v110
    %v870 = vunpack.c.l.b16 %v111
    %v871 = vunpack.c.h.b16 %v111
    %v872 = vunpack.c.l.b16 %v112
    %v873 = vunpack.c.h.b16 %v112
    %v874 = vunpack.c.l.b16 %v113
    %v875 = vunpack.c.h.b16 %v113
    %v876 = vunpack.c.l.b16 %v114
    %v877 = vunpack.c.h.b16 %v114
    %v878 = vunpack.c.l.b16 %v115
    %v879 = vunpack.c.h.b16 %v115
    %v880 = vunpack.c.l.b16 %v116
    %v881 = vunpack.c.h.b16 %v116
    %v882 = vunpack.c.l.b16 %v117
    %v883 = vunpack.c.h.b16 %v117
    %v884 = vunpack.c.l.b16 %v118
    %v885 = vunpack.c.h.b16 %v118
    %v886 = vunpack.c.l.b16 %v119
    %v887 = vunpack.c.h.b16 %v119
    %v888 = vunpack.c.l.b16 %v120
    %v889 = vunpack.c.h.b16 %v120
    %v890 = vunpack.c.l.b16 %v121
    %v891 = vunpack.c.h.b16 %v121
    %v892 = vunpack.c.l.b16 %v122
    %v893 = vunpack.c.h.b16 %v122
    %v894 = vunpack.c.l.b16 %v123
    %v895 = vunpack.c.h.b16 %v123
    %v896 = vunpack.c.l.b16 %v124
    %v897 = vunpack.c.h.b16 %v124
    %v898 = vunpack.c.l.b16 %v125
    %v899 = vunpack.c.h.b16 %v125
    %v900 = vunpack.c.l.b16 %v126
    %v901 = vunpack.c.h.b16 %v126
    %v902 = vunpack.c.l.b16 %v127
    %v903 = vunpack.c.h.b16 %v127
    %v904 = vunpack.c.l.b16 %v128
    %v905 = vunpack.c.h.b16 %v128
    %v906 = vunpack.c.l.b16 %v129
    %v907 = vunpack.c.h.b16 %v129
    %v908 = vunpack.c.l.b16 %v130
    %v909 = vunpack.c.h.b16 %v130
    %v910 = vunpack.c.l.b16 %v131
    %v911 = vunpack.c.h.b16 %v131
    %v912 = vunpack.c.l.b16 %v132
    %v913 = vunpack.c.h.b16 %v132
    %v914 = vunpack.c.l.b16 %v133
    %v915 = vunpack.c.h.b16 %v133
    %v916 = vunpack.c.l.b16 %v134
    %v917 = vunpack.c.h.b16 %v134
    %v918 = vunpack.c.l.b16 %v135
    %v919 = vunpack.c.h.b16 %v135
    %v920 = vunpack.c.l.b16 %v136
    %v921 = vunpack.c.h.b16 %v136
    %v922 = vunpack.c.l.b16 %v137
    %v923 = vunpack.c.h.b16 %v137
    %v924 = vunpack.c.l.b16 %v138
    %v925 = vunpack.c.h.b16 %v138
    %v926 = vunpack.c.l.b16 %v139
    %v927 = vunpack.c.h.b16 %v139
    %v928 = vunpack.c.l.b16 %v140
    %v929 = vunpack.c.h.b16 %v140
    %v930 = vunpack.c.l.b16 %v141
    %v931 = vunpack.c.h.b16 %v141
    %v932 = vunpack.c.l.b16 %v142
    %v933 = vunpack.c.h.b16 %v142
    %v934 = vunpack.c.l.b16 %v143
    %v935 = vunpack.c.h.b16 %v143
    %v936 = vunpack.c.l.b16 %v144
    %v937 = vunpack.c.h.b16 %v144
    %v938 = vunpack.c.l.b16 %v145
    %v939 = vunpack.c.h.b16 %v145
    %v940 = vunpack.c.l.b16 %v146
    %v941 = vunpack.c.h.b16 %v146
    %v942 = vunpack.c.l.b16 %v147
    %v943 = vunpack.c.h.b16 %v147
    %v944 = vunpack.c.l.b16 %v148
    %v945 = vunpack.c.h.b16 %v148
    %v946 = vunpack.c.l.b16 %v149
    %v947 = vunpack.c.h.b16 %v149
    %v948 = vunpack.c.l.b16 %v150
    %v949 = vunpack.c.h.b16 %v150
    %v950 = vunpack.c.l.b16 %v151
    %v951 = vunpack.c.h.b16 %v151
    %v952 = vunpack.c.l.b16 %v152
    %v953 = vunpack.c.h.b16 %v152
    %v954 = vunpack.c.l.b16 %v153
    %v955 = vunpack.c.h.b16 %v153
    %v956 = vunpack.c.l.b16 %v154
    %v957 = vunpack.c.h.b16 %v154
    %v958 = vunpack.c.l.b16 %v155
    %v959 = vunpack.c.h.b16 %v155
    %v960 = vunpack.c.l.b16 %v156
    %v961 = vunpack.c.h.b16 %v156
    %v962 = vunpack.c.l.b16 %v157
    %v963 = vunpack.c.h.b16 %v157
    %v964 = vunpack.c.l.b16 %v158
    %v965 = vunpack.c.h.b16 %v158
    %v966 = vunpack.c.l.b16 %v159
    %v967 = vunpack.c.h.b16 %v159
    %v968 = vunpack.c.l.b16 %v160
    %v969 = vunpack.c.h.b16 %v160
    %v970 = vunpack.c.l.b16 %v161
    %v971 = vunpack.c.h.b16 %v161
    %v972 = vunpack.c.l.b16 %v162
    %v973 = vunpack.c.h.b16 %v162
    %v974 = vunpack.c.l.b16 %v163
    %v975 = vunpack.c.h.b16 %v163
    %v976 = vunpack.c.l.b16 %v164
    %v977 = vunpack.c.h.b16 %v164
    %v978 = vunpack.c.l.b16 %v165
    %v979 = vunpack.c.h.b16 %v165
    %v980 = vunpack.c.l.b16 %v166
    %v981 = vunpack.c.h.b16 %v166
    %v982 = vunpack.c.l.b16 %v167
    %v983 = vunpack.c.h.b16 %v167
    %v984 = vunpack.c.l.b16 %v168
    %v985 = vunpack.c.h.b16 %v168
    %v986 = vunpack.c.l.b16 %v169
    %v987 = vunpack.c.h.b16 %v169
    %v988 = vunpack.c.l.b16 %v170
    %v989 = vunpack.c.h.b16 %v170
    %v990 = vunpack.c.l.b16 %v171
    %v991 = vunpack.c.h.b16 %v171
    %v992 = vunpack.c.l.b16 %v172
    %v993 = vunpack.c.h.b16 %v172
    %v994 = vunpack.c.l.b16 %v173
    %v995 = vunpack.c.h.b16 %v173
    %v996 = vunpack.c.l.b16 %v174
    %v997 = vunpack.c.h.b16 %v174
    %v998 = vunpack.c.l.b16 %v175
    %v999 = vunpack.c.h.b16 %v175
    %v1000 = vunpack.c.l.b16 %v176
    %v1001 = vunpack.c.h.b16 %v176
    %v1002 = vunpack.c.l.b16 %v177
    %v1003 = vunpack.c.h.b16 %v177
    %v1004 = vunpack.c.l.b16 %v178
    %v1005 = vunpack.c.h.b16 %v178
    %v1006 = vunpack.c.l.b16 %v179
    %v1007 = vunpack.c.h.b16 %v179
    %v1008 = vunpack.c.l.b16 %v180
    %v1009 = vunpack.c.h.b16 %v180
    %v1010 = vunpack.c.l.b16 %v181
    %v1011 = vunpack.c.h.b16 %v181
    %v1012 = vunpack.c.l.b16 %v182
    %v1013 = vunpack.c.h.b16 %v182
    %v1014 = vunpack.c.l.b16 %v183
    %v1015 = vunpack.c.h.b16 %v183
    %v1016 = vunpack.c.l.b16 %v184
    %v1017 = vunpack.c.h.b16 %v184
    %v1018 = vunpack.c.l.b16 %v185
    %v1019 = vunpack.c.h.b16 %v185
    %v1020 = vunpack.c.l.b16 %v186
    %v1021 = vunpack.c.h.b16 %v186
    %v1022 = vunpack.c.l.b16 %v187
    %v1023 = vunpack.c.h.b16 %v187
    %v1024 = vunpack.c.l.b16 %v188
    %v1025 = vunpack.c.h.b16 %v188
    %v1026 = vunpack.c.l.b16 %v189
    %v1027 = vunpack.c.h.b16 %v189
    %v1028 = vunpack.c.l.b16 %v190
    %v1029 = vunpack.c.h.b16 %v190
    %v1030 = vunpack.c.l.b16 %v191
    %v1031 = vunpack.c.h.b16 %v191
    %v1032 = vunpack.c.l.b16 %v192
    %v1033 = vunpack.c.h.b16 %v192
    %v1034 = vunpack.c.l.b16 %v193
    %v1035 = vunpack.c.h.b16 %v193
    %v1036 = vunpack.c.l.b16 %v194
    %v1037 = vunpack.c.h.b16 %v194
    %v1038 = vunpack.c.l.b16 %v195
    %v1039 = vunpack.c.h.b16 %v195
    %v1040 = vunpack.c.l.b16 %v196
    %v1041 = vunpack.c.h.b16 %v196
    %v1042 = vunpack.c.l.b16 %v197
    %v1043 = vunpack.c.h.b16 %v197
    %v1044 = vunpack.c.l.b16 %v198
    %v1045 = vunpack.c.h.b16 %v198
    %v1046 = vunpack.c.l.b16 %v199
    %v1047 = vunpack.c.h.b16 %v199
    %v1048 = vunpack.c.l.b16 %v200
    %v1049 = vunpack.c.h.b16 %v200
    %v1050 = vunpack.c.l.b16 %v201
    %v1051 = vunpack.c.h.b16 %v201
    %v1052 = vunpack.c.l.b16 %v202
    %v1053 = vunpack.c.h.b16 %v202
    %v1054 = vunpack.c.l.b16 %v203
    %v1055 = vunpack.c.h.b16 %v203
    %v1056 = vunpack.c.l.b16 %v204
    %v1057 = vunpack.c.h.b16 %v204
    %v1058 = vunpack.c.l.b16 %v205
    %v1059 = vunpack.c.h.b16 %v205
    %v1060 = vunpack.c.l.b16 %v206
    %v1061 = vunpack.c.h.b16 %v206
    %v1062 = vunpack.c.l.b16 %v207
    %v1063 = vunpack.c.h.b16 %v207
    %v1064 = vunpack.c.l.b16 %v208
    %v1065 = vunpack.c.h.b16 %v208
    %v1066 = vunpack.c.l.b16 %v209
    %v1067 = vunpack.c.h.b16 %v209
    %v1068 = vunpack.c.l.b16 %v210
    %v1069 = vunpack.c.h.b16 %v210
    %v1070 = vunpack.c.l.b16 %v211
    %v1071 = vunpack.c.h.b16 %v211
    %v1072 = vunpack.c.l.b16 %v212
    %v1073 = vunpack.c.h.b16 %v212
    %v1074 = vunpack.c.l.b16 %v213
    %v1075 = vunpack.c.h.b16 %v213
    %v1076 = vunpack.c.l.b16 %v214
    %v1077 = vunpack.c.h.b16 %v214
    %v1078 = vunpack.c.l.b16 %v215
    %v1079 = vunpack.c.h.b16 %v215
    %v1080 = vunpack.c.l.b16 %v216
    %v1081 = vunpack.c.h.b16 %v216
    %v1082 = vunpack.c.l.b16 %v217
    %v1083 = vunpack.c.h.b16 %v217
    %v1084 = vunpack.c.l.b16 %v218
    %v1085 = vunpack.c.h.b16 %v218
    %v1086 = vunpack.c.l.b16 %v219
    %v1087 = vunpack.c.h.b16 %v219
    %v1088 = vunpack.c.l.b16 %v220
    %v1089 = vunpack.c.h.b16 %v220
    %v1090 = vunpack.c.l.b16 %v221
    %v1091 = vunpack.c.h.b16 %v221
    %v1092 = vunpack.c.l.b16 %v222
    %v1093 = vunpack.c.h.b16 %v222
    %v1094 = vunpack.c.l.b16 %v223
    %v1095 = vunpack.c.h.b16 %v223
    %v1096 = vunpack.c.l.b16 %v224
    %v1097 = vunpack.c.h.b16 %v224
    %v1098 = vunpack.c.l.b16 %v225
    %v1099 = vunpack.c.h.b16 %v225
    %v1100 = vunpack.c.l.b16 %v226
    %v1101 = vunpack.c.h.b16 %v226
    %v1102 = vunpack.c.l.b16 %v227
    %v1103 = vunpack.c.h.b16 %v227
    %v1104 = vunpack.c.l.b16 %v228
    %v1105 = vunpack.c.h.b16 %v228
    %v1106 = vunpack.c.l.b16 %v229
    %v1107 = vunpack.c.h.b16 %v229
    %v1108 = vunpack.c.l.b16 %v230
    %v1109 = vunpack.c.h.b16 %v230
    %v1110 = vunpack.c.l.b16 %v231
    %v1111 = vunpack.c.h.b16 %v231
    %v1112 = vunpack.c.l.b16 %v232
    %v1113 = vunpack.c.h.b16 %v232
    %v1114 = vunpack.c.l.b16 %v233
    %v1115 = vunpack.c.h.b16 %v233
    %v1116 = vunpack.c.l.b16 %v234
    %v1117 = vunpack.c.h.b16 %v234
    %v1118 = vunpack.c.l.b16 %v235
    %v1119 = vunpack.c.h.b16 %v235
    %v1120 = vunpack.c.l.b16 %v236
    %v1121 = vunpack.c.h.b16 %v236
    %v1122 = vunpack.c.l.b16 %v237
    %v1123 = vunpack.c.h.b16 %v237
    %v1124 = vunpack.c.l.b16 %v238
    %v1125 = vunpack.c.h.b16 %v238
    %v1126 = vunpack.c.l.b16 %v239
    %v1127 = vunpack.c.h.b16 %v239
    %v1128 = vunpack.c.l.b16 %v240
    %v1129 = vunpack.c.h.b16 %v240
    %v1130 = vunpack.c.l.b16 %v241
    %v1131 = vunpack.c.h.b16 %v241
    %v1132 = vunpack.c.l.b16 %v242
    %v1133 = vunpack.c.h.b16 %v242
    %v1134 = vunpack.c.l.b16 %v243
    %v1135 = vunpack.c.h.b16 %v243
    %v1136 = vunpack.c.l.b16 %v244
    %v1137 = vunpack.c.h.b16 %v244
    %v1138 = vunpack.c.l.b16 %v245
    %v1139 = vunpack.c.h.b16 %v245
    %v1140 = vunpack.c.l.b16 %v246
    %v1141 = vunpack.c.h.b16 %v246
    %v1142 = vunpack.c.l.b16 %v247
    %v1143 = vunpack.c.h.b16 %v247
    %v1144 = vunpack.c.l.b16 %v248
    %v1145 = vunpack.c.h.b16 %v248
    %v1146 = vunpack.c.l.b16 %v249
    %v1147 = vunpack.c.h.b16 %v249
    %v1148 = vunpack.c.l.b16 %v250
    %v1149 = vunpack.c.h.b16 %v250
    %v1150 = vunpack.c.l.b16 %v251
    %v1151 = vunpack.c.h.b16 %v251
    %v1152 = vunpack.c.l.b16 %v252
    %v1153 = vunpack.c.h.b16 %v252
    %v1154 = vunpack.c.l.b16 %v253
    %v1155 = vunpack.c.h.b16 %v253
    %v1156 = vunpack.c.l.b16 %v254
    %v1157 = vunpack.c.h.b16 %v254
    %v1158 = vunpack.c.l.b16 %v255
    %v1159 = vunpack.c.h.b16 %v255
    %v1160 = vunpack.c.l.b16 %v256
    %v1161 = vunpack.c.h.b16 %v256
    %v1162 = vunpack.c.l.b16 %v257
    %v1163 = vunpack.c.h.b16 %v257
    %v1164 = vunpack.c.l.b16 %v258
    %v1165 = vunpack.c.h.b16 %v258
    %v1166 = vunpack.c.l.b16 %v259
    %v1167 = vunpack.c.h.b16 %v259
    %v1168 = vunpack.c.l.b16 %v260
    %v1169 = vunpack.c.h.b16 %v260
    %v1170 = vunpack.c.l.b16 %v261
    %v1171 = vunpack.c.h.b16 %v261
    %v1172 = vunpack.c.l.b16 %v262
    %v1173 = vunpack.c.h.b16 %v262
    %v1174 = vunpack.c.l.b16 %v263
    %v1175 = vunpack.c.h.b16 %v263
    %v1176 = vunpack.c.l.b16 %v264
    %v1177 = vunpack.c.h.b16 %v264
    %v1178 = vunpack.c.l.b16 %v265
    %v1179 = vunpack.c.h.b16 %v265
    %v1180 = vunpack.c.l.b16 %v266
    %v1181 = vunpack.c.h.b16 %v266
    %v1182 = vunpack.c.l.b16 %v267
    %v1183 = vunpack.c.h.b16 %v267
    %v1184 = vunpack.c.l.b16 %v268
    %v1185 = vunpack.c.h.b16 %v268
    %v1186 = vunpack.c.l.b16 %v269
    %v1187 = vunpack.c.h.b16 %v269
    %v1188 = vunpack.c.l.b16 %v270
    %v1189 = vunpack.c.h.b16 %v270
    %v1190 = vunpack.c.l.b16 %v271
    %v1191 = vunpack.c.h.b16 %v271
    %v1192 = vunpack.c.l.b16 %v272
    %v1193 = vunpack.c.h.b16 %v272
    %v1194 = vunpack.c.l.b16 %v273
    %v1195 = vunpack.c.h.b16 %v273
    %v1196 = vunpack.c.l.b16 %v274
    %v1197 = vunpack.c.h.b16 %v274
    %v1198 = vunpack.c.l.b16 %v275
    %v1199 = vunpack.c.h.b16 %v275
    %v1200 = vunpack.c.l.b16 %v276
    %v1201 = vunpack.c.h.b16 %v276
    %v1202 = vunpack.c.l.b16 %v277
    %v1203 = vunpack.c.h.b16 %v277
    %v1204 = vunpack.c.l.b16 %v278
    %v1205 = vunpack.c.h.b16 %v278
    %v1206 = vunpack.c.l.b16 %v279
    %v1207 = vunpack.c.h.b16 %v279
    %v1208 = vunpack.c.l.b16 %v280
    %v1209 = vunpack.c.h.b16 %v280
    %v1210 = vunpack.c.l.b16 %v281
    %v1211 = vunpack.c.h.b16 %v281
    %v1212 = vunpack.c.l.b16 %v282
    %v1213 = vunpack.c.h.b16 %v282
    %v1214 = vunpack.c.l.b16 %v283
    %v1215 = vunpack.c.h.b16 %v283
    %v1216 = vunpack.c.l.b16 %v284
    %v1217 = vunpack.c.h.b16 %v284
    %v1218 = vunpack.c.l.b16 %v285
    %v1219 = vunpack.c.h.b16 %v285
    %v1220 = vunpack.c.l.b16 %v286
    %v1221 = vunpack.c.h.b16 %v286
    %v1222 = vunpack.c.l.b16 %v287
    %v1223 = vunpack.c.h.b16 %v287
    %v1224 = vunpack.c.l.b16 %v288
    %v1225 = vunpack.c.h.b16 %v288
    %v1226 = vunpack.c.l.b16 %v289
    %v1227 = vunpack.c.h.b16 %v289
    %v1228 = vunpack.c.l.b16 %v290
    %v1229 = vunpack.c.h.b16 %v290
    %v1230 = vunpack.c.l.b16 %v291
    %v1231 = vunpack.c.h.b16 %v291
    %v1232 = vunpack.c.l.b16 %v292
    %v1233 = vunpack.c.h.b16 %v292
    %v1234 = vunpack.c.l.b16 %v293
    %v1235 = vunpack.c.h.b16 %v293
    %v1236 = vunpack.c.l.b16 %v294
    %v1237 = vunpack.c.h.b16 %v294
    %v1238 = vunpack.c.l.b16 %v295
    %v1239 = vunpack.c.h.b16 %v295
    %v1240 = vunpack.c.l.b16 %v296
    %v1241 = vunpack.c.h.b16 %v296
    %v1242 = vunpack.c.l.b16 %v297
    %v1243 = vunpack.c.h.b16 %v297
    %v1244 = vunpack.c.l.b16 %v298
    %v1245 = vunpack.c.h.b16 %v298
    %v1246 = vunpack.c.l.b16 %v299
    %v1247 = vunpack.c.h.b16 %v299
    %v1248 = vunpack.c.l.b16 %v300
    %v1249 = vunpack.c.h.b16 %v300
    %v1250 = vunpack.c.l.b16 %v301
    %v1251 = vunpack.c.h.b16 %v301
    %v1252 = vunpack.c.l.b16 %v302
    %v1253 = vunpack.c.h.b16 %v302
    %v1254 = vunpack.c.l.b16 %v303
    %v1255 = vunpack.c.h.b16 %v303
    %v1256 = vunpack.c.l.b16 %v304
    %v1257 = vunpack.c.h.b16 %v304
    %v1258 = vunpack.c.l.b16 %v305
    %v1259 = vunpack.c.h.b16 %v305
    %v1260 = vunpack.c.l.b16 %v306
    %v1261 = vunpack.c.h.b16 %v306
    %v1262 = vunpack.c.l.b16 %v307
    %v1263 = vunpack.c.h.b16 %v307
    %v1264 = vunpack.c.l.b16 %v308
    %v1265 = vunpack.c.h.b16 %v308
    %v1266 = vunpack.c.l.b16 %v309
    %v1267 = vunpack.c.h.b16 %v309
    %v1268 = vunpack.c.l.b16 %v310
    %v1269 = vunpack.c.h.b16 %v310
    %v1270 = vunpack.c.l.b16 %v311
    %v1271 = vunpack.c.h.b16 %v311
    %v1272 = vpack.c.b16 %v700, %v696
    %v1273 = vpack.c.b16 %v701, %v697
    %v1274 = vpack.c.b16 %v702, %v698
    %v1275 = vpack.c.b16 %v703, %v699
    %v1276 = vpack.c.b16 %v708, %v704
    %v1277 = vpack.c.b16 %v709, %v705
    %v1278 = vpack.c.b16 %v710, %v706
    %v1279 = vpack.c.b16 %v711, %v707
    %v1280 = vpack.c.b16 %v716, %v712
    %v1281 = vpack.c.b16 %v717, %v713
    %v1282 = vpack.c.b16 %v718, %v714
    %v1283 = vpack.c.b16 %v719, %v715
    %v1284 = vpack.c.b16 %v724, %v720
    %v1285 = vpack.c.b16 %v725, %v721
    %v1286 = vpack.c.b16 %v726, %v722
    %v1287 = vpack.c.b16 %v727, %v723
    %v1288 = vpack.c.b16 %v732, %v728
    %v1289 = vpack.c.b16 %v733, %v729
    %v1290 = vpack.c.b16 %v734, %v730
    %v1291 = vpack.c.b16 %v735, %v731
    %v1292 = vpack.c.b16 %v740, %v736
    %v1293 = vpack.c.b16 %v741, %v737
    %v1294 = vpack.c.b16 %v742, %v738
    %v1295 = vpack.c.b16 %v743, %v739
    %v1296 = vpack.c.b16 %v748, %v744
    %v1297 = vpack.c.b16 %v749, %v745
    %v1298 = vpack.c.b16 %v750, %v746
    %v1299 = vpack.c.b16 %v751, %v747
    %v1300 = vpack.c.b16 %v756, %v752
    %v1301 = vpack.c.b16 %v757, %v753
    %v1302 = vpack.c.b16 %v758, %v754
    %v1303 = vpack.c.b16 %v759, %v755
    %v1304 = vpack.c.b16 %v764, %v760
    %v1305 = vpack.c.b16 %v765, %v761
    %v1306 = vpack.c.b16 %v766, %v762
    %v1307 = vpack.c.b16 %v767, %v763
    %v1308 = vpack.c.b16 %v772, %v768
    %v1309 = vpack.c.b16 %v773, %v769
    %v1310 = vpack.c.b16 %v774, %v770
    %v1311 = vpack.c.b16 %v775, %v771
    %v1312 = vpack.c.b16 %v780, %v776
    %v1313 = vpack.c.b16 %v781, %v777
    %v1314 = vpack.c.b16 %v782, %v778
    %v1315 = vpack.c.b16 %v783, %v779
    %v1316 = vpack.c.b16 %v788, %v784
    %v1317 = vpack.c.b16 %v789, %v785
    %v1318 = vpack.c.b16 %v790, %v786
    %v1319 = vpack.c.b16 %v791, %v787
    %v1320 = vpack.c.b16 %v796, %v792
    %v1321 = vpack.c.b16 %v797, %v793
    %v1322 = vpack.c.b16 %v798, %v794
    %v1323 = vpack.c.b16 %v799, %v795
    %v1324 = vpack.c.b16 %v804, %v800
    %v1325 = vpack.c.b16 %v805, %v801
    %v1326 = vpack.c.b16 %v806, %v802
    %v1327 = vpack.c.b16 %v807, %v803
    %v1328 = vpack.c.b16 %v812, %v808
    %v1329 = vpack.c.b16 %v813, %v809
    %v1330 = vpack.c.b16 %v814, %v810
    %v1331 = vpack.c.b16 %v815, %v811
    %v1332 = vpack.c.b16 %v820, %v816
    %v1333 = vpack.c.b16 %v821, %v817
    %v1334 = vpack.c.b16 %v822, %v818
    %v1335 = vpack.c.b16 %v823, %v819
    %v1336 = vpack.c.b16 %v828, %v824
    %v1337 = vpack.c.b16 %v829, %v825
    %v1338 = vpack.c.b16 %v830, %v826
    %v1339 = vpack.c.b16 %v831, %v827
    %v1340 = vpack.c.b16 %v836, %v832
    %v1341 = vpack.c.b16 %v837, %v833
    %v1342 = vpack.c.b16 %v838, %v834
    %v1343 = vpack.c.b16 %v839, %v835
    %v1344 = vpack.c.b16 %v844, %v840
    %v1345 = vpack.c.b16 %v845, %v841
    %v1346 = vpack.c.b16 %v846, %v842
    %v1347 = vpack.c.b16 %v847, %v843
    %v1348 = vpack.c.b16 %v852, %v848
    %v1349 = vpack.c.b16 %v853, %v849
    %v1350 = vpack.c.b16 %v854, %v850
    %v1351 = vpack.c.b16 %v855, %v851
    %v1352 = vpack.c.b16 %v860, %v856
    %v1353 = vpack.c.b16 %v861, %v857
    %v1354 = vpack.c.b16 %v862, %v858
    %v1355 = vpack.c.b16 %v863, %v859
    %v1356 = vpack.c.b16 %v868, %v864
    %v1357 = vpack.c.b16 %v869, %v865
    %v1358 = vpack.c.b16 %v870, %v866
    %v1359 = vpack.c.b16 %v871, %v867
    %v1360 = vpack.c.b16 %v876, %v872
    %v1361 = vpack.c.b16 %v877, %v873
    %v1362 = vpack.c.b16 %v878, %v874
    %v1363 = vpack.c.b16 %v879, %v875
    %v1364 = vpack.c.b16 %v884, %v880
    %v1365 = vpack.c.b16 %v885, %v881
    %v1366 = vpack.c.b16 %v886, %v882
    %v1367 = vpack.c.b16 %v887, %v883
    %v1368 = vpack.c.b16 %v892, %v888
    %v1369 = vpack.c.b16 %v893, %v889
    %v1370 = vpack.c.b16 %v894, %v890
    %v1371 = vpack.c.b16 %v895, %v891
    %v1372 = vpack.c.b16 %v900, %v896
    %v1373 = vpack.c.b16 %v901, %v897
    %v1374 = vpack.c.b16 %v902, %v898
    %v1375 = vpack.c.b16 %v903, %v899
    %v1376 = vpack.c.b16 %v908, %v904
    %v1377 = vpack.c.b16 %v909, %v905
    %v1378 = vpack.c.b16 %v910, %v906
    %v1379 = vpack.c.b16 %v911, %v907
    %v1380 = vpack.c.b16 %v916, %v912
    %v1381 = vpack.c.b16 %v917, %v913
    %v1382 = vpack.c.b16 %v918, %v914
    %v1383 = vpack.c.b16 %v919, %v915
    %v1384 = vpack.c.b16 %v924, %v920
    %v1385 = vpack.c.b16 %v925, %v921
    %v1386 = vpack.c.b16 %v926, %v922
    %v1387 = vpack.c.b16 %v927, %v923
    %v1388 = vpack.c.b16 %v932, %v928
    %v1389 = vpack.c.b16 %v933, %v929
    %v1390 = vpack.c.b16 %v934, %v930
    %v1391 = vpack.c.b16 %v935, %v931
    %v1392 = vpack.c.b16 %v940, %v936
    %v1393 = vpack.c.b16 %v941, %v937
    %v1394 = vpack.c.b16 %v942, %v938
    %v1395 = vpack.c.b16 %v943, %v939
    %v1396 = vpack.c.b16 %v948, %v944
    %v1397 = vpack.c.b16 %v949, %v945
    %v1398 = vpack.c.b16 %v950, %v946
    %v1399 = vpack.c.b16 %v951, %v947
    %v1400 = vpack.c.b16 %v956, %v952
    %v1401 = vpack.c.b16 %v957, %v953
    %v1402 = vpack.c.b16 %v958, %v954
    %v1403 = vpack.c.b16 %v959, %v955
    %v1404 = vpack.c.b16 %v964, %v960
    %v1405 = vpack.c.b16 %v965, %v961
    %v1406 = vpack.c.b16 %v966, %v962
    %v1407 = vpack.c.b16 %v967, %v963
    %v1408 = vpack.c.b16 %v972, %v968
    %v1409 = vpack.c.b16 %v973, %v969
    %v1410 = vpack.c.b16 %v974, %v970
    %v1411 = vpack.c.b16 %v975, %v971
    %v1412 = vpack.c.b16 %v980, %v976
    %v1413 = vpack.c.b16 %v981, %v977
    %v1414 = vpack.c.b16 %v982, %v978
    %v1415 = vpack.c.b16 %v983, %v979
    %v1416 = vpack.c.b16 %v988, %v984
    %v1417 = vpack.c.b16 %v989, %v985
    %v1418 = vpack.c.b16 %v990, %v986
    %v1419 = vpack.c.b16 %v991, %v987
    %v1420 = vpack.c.b16 %v996, %v992
    %v1421 = vpack.c.b16 %v997, %v993
    %v1422 = vpack.c.b16 %v998, %v994
    %v1423 = vpack.c.b16 %v999, %v995
    %v1424 = vpack.c.b16 %v1004, %v1000
    %v1425 = vpack.c.b16 %v1005, %v1001
    %v1426 = vpack.c.b16 %v1006, %v1002
    %v1427 = vpack.c.b16 %v1007, %v1003
    %v1428 = vpack.c.b16 %v1012, %v1008
    %v1429 = vpack.c.b16 %v1013, %v1009
    %v1430 = vpack.c.b16 %v1014, %v1010
    %v1431 = vpack.c.b16 %v1015, %v1011
    %v1432 = vpack.c.b16 %v1020, %v1016
    %v1433 = vpack.c.b16 %v1021, %v1017
    %v1434 = vpack.c.b16 %v1022, %v1018
    %v1435 = vpack.c.b16 %v1023, %v1019
    %v1436 = vpack.c.b16 %v1028, %v1024
    %v1437 = vpack.c.b16 %v1029, %v1025
    %v1438 = vpack.c.b16 %v1030, %v1026
    %v1439 = vpack.c.b16 %v1031, %v1027
    %v1440 = vpack.c.b16 %v1036, %v1032
    %v1441 = vpack.c.b16 %v1037, %v1033
    %v1442 = vpack.c.b16 %v1038, %v1034
    %v1443 = vpack.c.b16 %v1039, %v1035
    %v1444 = vpack.c.b16 %v1044, %v1040
    %v1445 = vpack.c.b16 %v1045, %v1041
    %v1446 = vpack.c.b16 %v1046, %v1042
    %v1447 = vpack.c.b16 %v1047, %v1043
    %v1448 = vpack.c.b16 %v1052, %v1048
    %v1449 = vpack.c.b16 %v1053, %v1049
    %v1450 = vpack.c.b16 %v1054, %v1050
    %v1451 = vpack.c.b16 %v1055, %v1051
    %v1452 = vpack.c.b16 %v1060, %v1056
    %v1453 = vpack.c.b16 %v1061, %v1057
    %v1454 = vpack.c.b16 %v1062, %v1058
    %v1455 = vpack.c.b16 %v1063, %v1059
    %v1456 = vpack.c.b16 %v1068, %v1064
    %v1457 = vpack.c.b16 %v1069, %v1065
    %v1458 = vpack.c.b16 %v1070, %v1066
    %v1459 = vpack.c.b16 %v1071, %v1067
    %v1460 = vpack.c.b16 %v1076, %v1072
    %v1461 = vpack.c.b16 %v1077, %v1073
    %v1462 = vpack.c.b16 %v1078, %v1074
    %v1463 = vpack.c.b16 %v1079, %v1075
    %v1464 = vpack.c.b16 %v1084, %v1080
    %v1465 = vpack.c.b16 %v1085, %v1081
    %v1466 = vpack.c.b16 %v1086, %v1082
    %v1467 = vpack.c.b16 %v1087, %v1083
    %v1468 = vpack.c.b16 %v1092, %v1088
    %v1469 = vpack.c.b16 %v1093, %v1089
    %v1470 = vpack.c.b16 %v1094, %v1090
    %v1471 = vpack.c.b16 %v1095, %v1091
    %v1472 = vpack.c.b16 %v1100, %v1096
    %v1473 = vpack.c.b16 %v1101, %v1097
    %v1474 = vpack.c.b16 %v1102, %v1098
    %v1475 = vpack.c.b16 %v1103, %v1099
    %v1476 = vpack.c.b16 %v1108, %v1104
    %v1477 = vpack.c.b16 %v1109, %v1105
    %v1478 = vpack.c.b16 %v1110, %v1106
    %v1479 = vpack.c.b16 %v1111, %v1107
    %v1480 = vpack.c.b16 %v1116, %v1112
    %v1481 = vpack.c.b16 %v1117, %v1113
    %v1482 = vpack.c.b16 %v1118, %v1114
    %v1483 = vpack.c.b16 %v1119, %v1115
    %v1484 = vpack.c.b16 %v1124, %v1120
    %v1485 = vpack.c.b16 %v1125, %v1121
    %v1486 = vpack.c.b16 %v1126, %v1122
    %v1487 = vpack.c.b16 %v1127, %v1123
    %v1488 = vpack.c.b16 %v1132, %v1128
    %v1489 = vpack.c.b16 %v1133, %v1129
    %v1490 = vpack.c.b16 %v1134, %v1130
    %v1491 = vpack.c.b16 %v1135, %v1131
    %v1492 = vpack.c.b16 %v1140, %v1136
    %v1493 = vpack.c.b16 %v1141, %v1137
    %v1494 = vpack.c.b16 %v1142, %v1138
    %v1495 = vpack.c.b16 %v1143, %v1139
    %v1496 = vpack.c.b16 %v1148, %v1144
    %v1497 = vpack.c.b16 %v1149, %v1145
    %v1498 = vpack.c.b16 %v1150, %v1146
    %v1499 = vpack.c.b16 %v1151, %v1147
    %v1500 = vpack.c.b16 %v1156, %v1152
    %v1501 = vpack.c.b16 %v1157, %v1153
    %v1502 = vpack.c.b16 %v1158, %v1154
    %v1503 = vpack.c.b16 %v1159, %v1155
    %v1504 = vpack.c.b16 %v1164, %v1160
    %v1505 = vpack.c.b16 %v1165, %v1161
    %v1506 = vpack.c.b16 %v1166, %v1162
    %v1507 = vpack.c.b16 %v1167, %v1163
    %v1508 = vpack.c.b16 %v1172, %v1168
    %v1509 = vpack.c.b16 %v1173, %v1169
    %v1510 = vpack.c.b16 %v1174, %v1170
    %v1511 = vpack.c.b16 %v1175, %v1171
    %v1512 = vpack.c.b16 %v1180, %v1176
    %v1513 = vpack.c.b16 %v1181, %v1177
    %v1514 = vpack.c.b16 %v1182, %v1178
    %v1515 = vpack.c.b16 %v1183, %v1179
    %v1516 = vpack.c.b16 %v1188, %v1184
    %v1517 = vpack.c.b16 %v1189, %v1185
    %v1518 = vpack.c.b16 %v1190, %v1186
    %v1519 = vpack.c.b16 %v1191, %v1187
    %v1520 = vpack.c.b16 %v1196, %v1192
    %v1521 = vpack.c.b16 %v1197, %v1193
    %v1522 = vpack.c.b16 %v1198, %v1194
    %v1523 = vpack.c.b16 %v1199, %v1195
    %v1524 = vpack.c.b16 %v1204, %v1200
    %v1525 = vpack.c.b16 %v1205, %v1201
    %v1526 = vpack.c.b16 %v1206, %v1202
    %v1527 = vpack.c.b16 %v1207, %v1203
    %v1528 = vpack.c.b16 %v1212, %v1208
    %v1529 = vpack.c.b16 %v1213, %v1209
    %v1530 = vpack.c.b16 %v1214, %v1210
    %v1531 = vpack.c.b16 %v1215, %v1211
    %v1532 = vpack.c.b16 %v1220, %v1216
    %v1533 = vpack.c.b16 %v1221, %v1217
    %v1534 = vpack.c.b16 %v1222, %v1218
    %v1535 = vpack.c.b16 %v1223, %v1219
    %v1536 = vpack.c.b16 %v1228, %v1224
    %v1537 = vpack.c.b16 %v1229, %v1225
    %v1538 = vpack.c.b16 %v1230, %v1226
    %v1539 = vpack.c.b16 %v1231, %v1227
    %v1540 = vpack.c.b16 %v1236, %v1232
    %v1541 = vpack.c.b16 %v1237, %v1233
    %v1542 = vpack.c.b16 %v1238, %v1234
    %v1543 = vpack.c.b16 %v1239, %v1235
    %v1544 = vpack.c.b16 %v1244, %v1240
    %v1545 = vpack.c.b16 %v1245, %v1241
    %v1546 = vpack.c.b16 %v1246, %v1242
    %v1547 = vpack.c.b16 %v1247, %v1243
    %v1548 = vpack.c.b16 %v1252, %v1248
    %v1549 = vpack.c.b16 %v1253, %v1249
    %v1550 = vpack.c.b16 %v1254, %v1250
    %v1551 = vpack.c.b16 %v1255, %v1251
    %v1552 = vpack.c.b16 %v1260, %v1256
    %v1553 = vpack.c.b16 %v1261, %v1257
    %v1554 = vpack.c.b16 %v1262, %v1258
    %v1555 = vpack.c.b16 %v1263, %v1259
    %v1556 = vpack.c.b16 %v1268, %v1264
    %v1557 = vpack.c.b16 %v1269, %v1265
    %v1558 = vpack.c.b16 %v1270, %v1266
    %v1559 = vpack.c.b16 %v1271, %v1267
    %1848 = vmatprep.subr.bf16.mxu0 %v1273
    %1849 = vmatpush1.bf16.msra.mxu0 %v1272
    %1850 = vmatprep.subr.bf16.mxu0 %v1277
    %1851 = vmatpush1.bf16.msra.mxu0 %v1276
    %1852 = vmatprep.subr.bf16.mxu0 %v1281
    %1853 = vmatpush1.bf16.msra.mxu0 %v1280
    %1854 = vmatprep.subr.bf16.mxu0 %v1285
    %1855 = vmatpush1.bf16.msra.mxu0 %v1284
    %1856 = vmatprep.subr.bf16.mxu0 %v1289
    %1857 = vmatpush1.bf16.msra.mxu0 %v1288
    %1858 = vmatprep.subr.bf16.mxu0 %v1293
    %1859 = vmatpush1.bf16.msra.mxu0 %v1292
    %1860 = vmatprep.subr.bf16.mxu0 %v1297
    %1861 = vmatpush1.bf16.msra.mxu0 %v1296
    %1862 = vmatprep.subr.bf16.mxu0 %v1301
    %1863 = vmatpush1.bf16.msra.mxu0 %v1300
    %1864 = vmatprep.subr.bf16.mxu0 %v1305
    %1865 = vmatpush1.bf16.msra.mxu0 %v1304
    %1866 = vmatprep.subr.bf16.mxu0 %v1309
    %1867 = vmatpush1.bf16.msra.mxu0 %v1308
    %1868 = vmatprep.subr.bf16.mxu0 %v1313
    %1869 = vmatpush1.bf16.msra.mxu0 %v1312
    %1870 = vmatprep.subr.bf16.mxu0 %v1317
    %1871 = vmatpush1.bf16.msra.mxu0 %v1316
    %1872 = vmatprep.subr.bf16.mxu0 %v1321
    %1873 = vmatpush1.bf16.msra.mxu0 %v1320
    %1874 = vmatprep.subr.bf16.mxu0 %v1325
    %1875 = vmatpush1.bf16.msra.mxu0 %v1324
    %1876 = vmatprep.subr.bf16.mxu0 %v1329
    %1877 = vmatpush1.bf16.msra.mxu0 %v1328
    %1878 = vmatprep.subr.bf16.mxu0 %v1333
    %1879 = vmatpush1.bf16.msra.mxu0 %v1332
    %1880 = vmatprep.mubr.bf16.mxu0 %v373
    %1881 = vmatmul.mubr.bf16.gmra.mrb[0].mxu0 %v359
    %v1882 = vpop.f32.mrb[0].mxu0
    %v1883 = vadd.f32 %v317, %v1882
    %v1884 = vpop.f32.mrb[0].mxu0
    %v1885 = vadd.f32 %v321, %v1884
    %v1886 = vpop.f32.mrb[0].mxu0
    %v1887 = vpop.f32.mrb[0].mxu0
    %1888 = vdwg.mxu0
    %1889 = vmatprep.subr.bf16.mxu0 %v1337
    %1890 = vmatpush1.bf16.msra.mxu0 %v1336
    %1891 = vmatprep.subr.bf16.mxu0 %v1341
    %1892 = vmatpush1.bf16.msra.mxu0 %v1340
    %1893 = vmatprep.subr.bf16.mxu0 %v1345
    %1894 = vmatpush1.bf16.msra.mxu0 %v1344
    %1895 = vmatprep.subr.bf16.mxu0 %v1349
    %1896 = vmatpush1.bf16.msra.mxu0 %v1348
    %1897 = vmatprep.subr.bf16.mxu0 %v1353
    %1898 = vmatpush1.bf16.msra.mxu0 %v1352
    %1899 = vmatprep.subr.bf16.mxu0 %v1357
    %1900 = vmatpush1.bf16.msra.mxu0 %v1356
    %1901 = vmatprep.subr.bf16.mxu0 %v1361
    %1902 = vmatpush1.bf16.msra.mxu0 %v1360
    %1903 = vmatprep.subr.bf16.mxu0 %v1365
    %1904 = vmatpush1.bf16.msra.mxu0 %v1364
    %1905 = vmatprep.subr.bf16.mxu0 %v1369
    %1906 = vmatpush1.bf16.msra.mxu0 %v1368
    %1907 = vmatprep.subr.bf16.mxu0 %v1373
    %1908 = vmatpush1.bf16.msra.mxu0 %v1372
    %1909 = vmatprep.subr.bf16.mxu0 %v1377
    %1910 = vmatpush1.bf16.msra.mxu0 %v1376
    %1911 = vmatprep.subr.bf16.mxu0 %v1381
    %1912 = vmatpush1.bf16.msra.mxu0 %v1380
    %1913 = vmatprep.subr.bf16.mxu0 %v1385
    %1914 = vmatpush1.bf16.msra.mxu0 %v1384
    %1915 = vmatprep.subr.bf16.mxu0 %v1389
    %1916 = vmatpush1.bf16.msra.mxu0 %v1388
    %1917 = vmatprep.subr.bf16.mxu0 %v1393
    %1918 = vmatpush1.bf16.msra.mxu0 %v1392
    %1919 = vmatprep.subr.bf16.mxu0 %v1397
    %1920 = vmatpush1.bf16.msra.mxu0 %v1396
    %1921 = vmatprep.mubr.bf16.mxu0 %v383
    %1922 = vmatmul.mubr.bf16.gmra.mrb[0].mxu0 %v381
    %v1923 = vpop.f32.mrb[0].mxu0
    %v1924 = vadd.f32 %v1883, %v1923
    %v1925 = vpop.f32.mrb[0].mxu0
    %v1926 = vadd.f32 %v1885, %v1925
    %v1927 = vpop.f32.mrb[0].mxu0
    %v1928 = vpop.f32.mrb[0].mxu0
    %1929 = vdwg.mxu0
    %1930 = vmatprep.subr.bf16.mxu0 %v1401
    %1931 = vmatpush1.bf16.msra.mxu0 %v1400
    %1932 = vmatprep.subr.bf16.mxu0 %v1405
    %1933 = vmatpush1.bf16.msra.mxu0 %v1404
    %1934 = vmatprep.subr.bf16.mxu0 %v1409
    %1935 = vmatpush1.bf16.msra.mxu0 %v1408
    %1936 = vmatprep.subr.bf16.mxu0 %v1413
    %1937 = vmatpush1.bf16.msra.mxu0 %v1412
    %1938 = vmatprep.subr.bf16.mxu0 %v1417
    %1939 = vmatpush1.bf16.msra.mxu0 %v1416
    %1940 = vmatprep.subr.bf16.mxu0 %v1421
    %1941 = vmatpush1.bf16.msra.mxu0 %v1420
    %1942 = vmatprep.subr.bf16.mxu0 %v1425
    %1943 = vmatpush1.bf16.msra.mxu0 %v1424
    %1944 = vmatprep.subr.bf16.mxu0 %v1429
    %1945 = vmatpush1.bf16.msra.mxu0 %v1428
    %1946 = vmatprep.subr.bf16.mxu0 %v1433
    %1947 = vmatpush1.bf16.msra.mxu0 %v1432
    %1948 = vmatprep.subr.bf16.mxu0 %v1437
    %1949 = vmatpush1.bf16.msra.mxu0 %v1436
    %1950 = vmatprep.subr.bf16.mxu0 %v1441
    %1951 = vmatpush1.bf16.msra.mxu0 %v1440
    %1952 = vmatprep.subr.bf16.mxu0 %v1445
    %1953 = vmatpush1.bf16.msra.mxu0 %v1444
    %1954 = vmatprep.subr.bf16.mxu0 %v1449
    %1955 = vmatpush1.bf16.msra.mxu0 %v1448
    %1956 = vmatprep.subr.bf16.mxu0 %v1453
    %1957 = vmatpush1.bf16.msra.mxu0 %v1452
    %1958 = vmatprep.subr.bf16.mxu0 %v1457
    %1959 = vmatpush1.bf16.msra.mxu0 %v1456
    %1960 = vmatprep.subr.bf16.mxu0 %v1461
    %1961 = vmatpush1.bf16.msra.mxu0 %v1460
    %1962 = vmatprep.mubr.bf16.mxu0 %v380
    %1963 = vmatmul.mubr.bf16.gmra.mrb[0].mxu0 %v366
    %v1964 = vpop.f32.mrb[0].mxu0
    %v1965 = vadd.f32 %v1924, %v1964
    %v1966 = vpop.f32.mrb[0].mxu0
    %v1967 = vadd.f32 %v1926, %v1966
    %v1968 = vpop.f32.mrb[0].mxu0
    %v1969 = vpop.f32.mrb[0].mxu0
    %1970 = vdwg.mxu0
    %1971 = vmatprep.subr.bf16.mxu0 %v1465
    %1972 = vmatpush1.bf16.msra.mxu0 %v1464
    %1973 = vmatprep.subr.bf16.mxu0 %v1469
    %1974 = vmatpush1.bf16.msra.mxu0 %v1468
    %1975 = vmatprep.subr.bf16.mxu0 %v1473
    %1976 = vmatpush1.bf16.msra.mxu0 %v1472
    %1977 = vmatprep.subr.bf16.mxu0 %v1477
    %1978 = vmatpush1.bf16.msra.mxu0 %v1476
    %1979 = vmatprep.subr.bf16.mxu0 %v1481
    %1980 = vmatpush1.bf16.msra.mxu0 %v1480
    %1981 = vmatprep.subr.bf16.mxu0 %v1485
    %1982 = vmatpush1.bf16.msra.mxu0 %v1484
    %1983 = vmatprep.subr.bf16.mxu0 %v1489
    %1984 = vmatpush1.bf16.msra.mxu0 %v1488
    %1985 = vmatprep.subr.bf16.mxu0 %v1493
    %1986 = vmatpush1.bf16.msra.mxu0 %v1492
    %1987 = vmatprep.subr.bf16.mxu0 %v1497
    %1988 = vmatpush1.bf16.msra.mxu0 %v1496
    %1989 = vmatprep.subr.bf16.mxu0 %v1501
    %1990 = vmatpush1.bf16.msra.mxu0 %v1500
    %1991 = vmatprep.subr.bf16.mxu0 %v1505
    %1992 = vmatpush1.bf16.msra.mxu0 %v1504
    %1993 = vmatprep.subr.bf16.mxu0 %v1509
    %1994 = vmatpush1.bf16.msra.mxu0 %v1508
    %1995 = vmatprep.subr.bf16.mxu0 %v1513
    %1996 = vmatpush1.bf16.msra.mxu0 %v1512
    %1997 = vmatprep.subr.bf16.mxu0 %v1517
    %1998 = vmatpush1.bf16.msra.mxu0 %v1516
    %1999 = vmatprep.subr.bf16.mxu0 %v1521
    %2000 = vmatpush1.bf16.msra.mxu0 %v1520
    %2001 = vmatprep.subr.bf16.mxu0 %v1525
    %2002 = vmatpush1.bf16.msra.mxu0 %v1524
    %2003 = vmatprep.mubr.bf16.mxu0 %v384
    %2004 = vmatmul.mubr.bf16.gmra.mrb[0].mxu0 %v382
    %v2005 = vpop.f32.mrb[0].mxu0
    %v2006 = vadd.f32 %v1965, %v2005
    %v2007 = vpop.f32.mrb[0].mxu0
    %v2008 = vadd.f32 %v1967, %v2007
    %v2009 = vpop.f32.mrb[0].mxu0
    %v2010 = vpop.f32.mrb[0].mxu0
    %2011 = vdwg.mxu0
    %2012 = vmatprep.subr.bf16.mxu0 %v1529
    %2013 = vmatpush1.bf16.msra.mxu0 %v1528
    %2014 = vmatprep.subr.bf16.mxu0 %v1533
    %2015 = vmatpush1.bf16.msra.mxu0 %v1532
    %2016 = vmatprep.subr.bf16.mxu0 %v1537
    %2017 = vmatpush1.bf16.msra.mxu0 %v1536
    %2018 = vmatprep.subr.bf16.mxu0 %v1541
    %2019 = vmatpush1.bf16.msra.mxu0 %v1540
    %2020 = vmatprep.subr.bf16.mxu0 %v1545
    %2021 = vmatpush1.bf16.msra.mxu0 %v1544
    %2022 = vmatprep.subr.bf16.mxu0 %v1549
    %2023 = vmatpush1.bf16.msra.mxu0 %v1548
    %2024 = vmatprep.subr.bf16.mxu0 %v1553
    %2025 = vmatpush1.bf16.msra.mxu0 %v1552
    %2026 = vmatprep.subr.bf16.mxu0 %v1557
    %2027 = vmatpush1.bf16.msra.mxu0 %v1556
    %2028 = vmatprep.subr.bf16.mxu0 0
    %2029 = vmatpush1.bf16.msra.mxu0 0
    %2030 = vmatprep.subr.bf16.mxu0 0
    %2031 = vmatpush1.bf16.msra.mxu0 0
    %2032 = vmatprep.subr.bf16.mxu0 0
    %2033 = vmatpush1.bf16.msra.mxu0 0
    %2034 = vmatprep.subr.bf16.mxu0 0
    %2035 = vmatpush1.bf16.msra.mxu0 0
    %2036 = vmatprep.subr.bf16.mxu0 0
    %2037 = vmatpush1.bf16.msra.mxu0 0
    %2038 = vmatprep.subr.bf16.mxu0 0
    %2039 = vmatpush1.bf16.msra.mxu0 0
    %2040 = vmatprep.subr.bf16.mxu0 0
    %2041 = vmatpush1.bf16.msra.mxu0 0
    %2042 = vmatprep.subr.bf16.mxu0 0
    %2043 = vmatpush1.bf16.msra.mxu0 0
    %2044 = vmatprep.mubr.bf16.mxu0 0
    %2045 = vmatmul.mubr.bf16.gmra.mrb[0].mxu0 %v398
    %v2046 = vpop.f32.mrb[0].mxu0
    %v2047 = vadd.f32 %v2006, %v2046
    %v2048 = vpop.f32.mrb[0].mxu0
    %v2049 = vadd.f32 %v2008, %v2048
    %v2050 = vpop.f32.mrb[0].mxu0
    %v2051 = vpop.f32.mrb[0].mxu0
    %2052 = vdwg.mxu0
    %2053 = vmatprep.subr.bf16.mxu0 %v1275
    %2054 = vmatpush1.bf16.msra.mxu0 %v1274
    %2055 = vmatprep.subr.bf16.mxu0 %v1279
    %2056 = vmatpush1.bf16.msra.mxu0 %v1278
    %2057 = vmatprep.subr.bf16.mxu0 %v1283
    %2058 = vmatpush1.bf16.msra.mxu0 %v1282
    %2059 = vmatprep.subr.bf16.mxu0 %v1287
    %2060 = vmatpush1.bf16.msra.mxu0 %v1286
    %2061 = vmatprep.subr.bf16.mxu0 %v1291
    %2062 = vmatpush1.bf16.msra.mxu0 %v1290
    %2063 = vmatprep.subr.bf16.mxu0 %v1295
    %2064 = vmatpush1.bf16.msra.mxu0 %v1294
    %2065 = vmatprep.subr.bf16.mxu0 %v1299
    %2066 = vmatpush1.bf16.msra.mxu0 %v1298
    %2067 = vmatprep.subr.bf16.mxu0 %v1303
    %2068 = vmatpush1.bf16.msra.mxu0 %v1302
    %2069 = vmatprep.subr.bf16.mxu0 %v1307
    %2070 = vmatpush1.bf16.msra.mxu0 %v1306
    %2071 = vmatprep.subr.bf16.mxu0 %v1311
    %2072 = vmatpush1.bf16.msra.mxu0 %v1310
    %2073 = vmatprep.subr.bf16.mxu0 %v1315
    %2074 = vmatpush1.bf16.msra.mxu0 %v1314
    %2075 = vmatprep.subr.bf16.mxu0 %v1319
    %2076 = vmatpush1.bf16.msra.mxu0 %v1318
    %2077 = vmatprep.subr.bf16.mxu0 %v1323
    %2078 = vmatpush1.bf16.msra.mxu0 %v1322
    %2079 = vmatprep.subr.bf16.mxu0 %v1327
    %2080 = vmatpush1.bf16.msra.mxu0 %v1326
    %2081 = vmatprep.subr.bf16.mxu0 %v1331
    %2082 = vmatpush1.bf16.msra.mxu0 %v1330
    %2083 = vmatprep.subr.bf16.mxu0 %v1335
    %2084 = vmatpush1.bf16.msra.mxu0 %v1334
    %2085 = vmatprep.mubr.bf16.mxu0 %v373
    %2086 = vmatmul.mubr.bf16.gmra.mrb[0].mxu0 %v359
    %v2087 = vpop.f32.mrb[0].mxu0
    %v2088 = vadd.f32 %v325, %v2087
    %v2089 = vpop.f32.mrb[0].mxu0
    %v2090 = vadd.f32 %v329, %v2089
    %v2091 = vpop.f32.mrb[0].mxu0
    %v2092 = vpop.f32.mrb[0].mxu0
    %2093 = vdwg.mxu0
    %2094 = vmatprep.subr.bf16.mxu0 %v1339
    %2095 = vmatpush1.bf16.msra.mxu0 %v1338
    %2096 = vmatprep.subr.bf16.mxu0 %v1343
    %2097 = vmatpush1.bf16.msra.mxu0 %v1342
    %2098 = vmatprep.subr.bf16.mxu0 %v1347
    %2099 = vmatpush1.bf16.msra.mxu0 %v1346
    %2100 = vmatprep.subr.bf16.mxu0 %v1351
    %2101 = vmatpush1.bf16.msra.mxu0 %v1350
    %2102 = vmatprep.subr.bf16.mxu0 %v1355
    %2103 = vmatpush1.bf16.msra.mxu0 %v1354
    %2104 = vmatprep.subr.bf16.mxu0 %v1359
    %2105 = vmatpush1.bf16.msra.mxu0 %v1358
    %2106 = vmatprep.subr.bf16.mxu0 %v1363
    %2107 = vmatpush1.bf16.msra.mxu0 %v1362
    %2108 = vmatprep.subr.bf16.mxu0 %v1367
    %2109 = vmatpush1.bf16.msra.mxu0 %v1366
    %2110 = vmatprep.subr.bf16.mxu0 %v1371
    %2111 = vmatpush1.bf16.msra.mxu0 %v1370
    %2112 = vmatprep.subr.bf16.mxu0 %v1375
    %2113 = vmatpush1.bf16.msra.mxu0 %v1374
    %2114 = vmatprep.subr.bf16.mxu0 %v1379
    %2115 = vmatpush1.bf16.msra.mxu0 %v1378
    %2116 = vmatprep.subr.bf16.mxu0 %v1383
    %2117 = vmatpush1.bf16.msra.mxu0 %v1382
    %2118 = vmatprep.subr.bf16.mxu0 %v1387
    %2119 = vmatpush1.bf16.msra.mxu0 %v1386
    %2120 = vmatprep.subr.bf16.mxu0 %v1391
    %2121 = vmatpush1.bf16.msra.mxu0 %v1390
    %2122 = vmatprep.subr.bf16.mxu0 %v1395
    %2123 = vmatpush1.bf16.msra.mxu0 %v1394
    %2124 = vmatprep.subr.bf16.mxu0 %v1399
    %2125 = vmatpush1.bf16.msra.mxu0 %v1398
    %2126 = vmatprep.mubr.bf16.mxu0 %v383
    %2127 = vmatmul.mubr.bf16.gmra.mrb[0].mxu0 %v381
    %v2128 = vpop.f32.mrb[0].mxu0
    %v2129 = vadd.f32 %v2088, %v2128
    %v2130 = vpop.f32.mrb[0].mxu0
    %v2131 = vadd.f32 %v2090, %v2130
    %v2132 = vpop.f32.mrb[0].mxu0
    %v2133 = vpop.f32.mrb[0].mxu0
    %2134 = vdwg.mxu0
    %2135 = vmatprep.subr.bf16.mxu0 %v1403
    %2136 = vmatpush1.bf16.msra.mxu0 %v1402
    %2137 = vmatprep.subr.bf16.mxu0 %v1407
    %2138 = vmatpush1.bf16.msra.mxu0 %v1406
    %2139 = vmatprep.subr.bf16.mxu0 %v1411
    %2140 = vmatpush1.bf16.msra.mxu0 %v1410
    %2141 = vmatprep.subr.bf16.mxu0 %v1415
    %2142 = vmatpush1.bf16.msra.mxu0 %v1414
    %2143 = vmatprep.subr.bf16.mxu0 %v1419
    %2144 = vmatpush1.bf16.msra.mxu0 %v1418
    %2145 = vmatprep.subr.bf16.mxu0 %v1423
    %2146 = vmatpush1.bf16.msra.mxu0 %v1422
    %2147 = vmatprep.subr.bf16.mxu0 %v1427
    %2148 = vmatpush1.bf16.msra.mxu0 %v1426
    %2149 = vmatprep.subr.bf16.mxu0 %v1431
    %2150 = vmatpush1.bf16.msra.mxu0 %v1430
    %2151 = vmatprep.subr.bf16.mxu0 %v1435
    %2152 = vmatpush1.bf16.msra.mxu0 %v1434
    %2153 = vmatprep.subr.bf16.mxu0 %v1439
    %2154 = vmatpush1.bf16.msra.mxu0 %v1438
    %2155 = vmatprep.subr.bf16.mxu0 %v1443
    %2156 = vmatpush1.bf16.msra.mxu0 %v1442
    %2157 = vmatprep.subr.bf16.mxu0 %v1447
    %2158 = vmatpush1.bf16.msra.mxu0 %v1446
    %2159 = vmatprep.subr.bf16.mxu0 %v1451
    %2160 = vmatpush1.bf16.msra.mxu0 %v1450
    %2161 = vmatprep.subr.bf16.mxu0 %v1455
    %2162 = vmatpush1.bf16.msra.mxu0 %v1454
    %2163 = vmatprep.subr.bf16.mxu0 %v1459
    %2164 = vmatpush1.bf16.msra.mxu0 %v1458
    %2165 = vmatprep.subr.bf16.mxu0 %v1463
    %2166 = vmatpush1.bf16.msra.mxu0 %v1462
    %2167 = vmatprep.mubr.bf16.mxu0 %v380
    %2168 = vmatmul.mubr.bf16.gmra.mrb[0].mxu0 %v366
    %v2169 = vpop.f32.mrb[0].mxu0
    %v2170 = vadd.f32 %v2129, %v2169
    %v2171 = vpop.f32.mrb[0].mxu0
    %v2172 = vadd.f32 %v2131, %v2171
    %v2173 = vpop.f32.mrb[0].mxu0
    %v2174 = vpop.f32.mrb[0].mxu0
    %2175 = vdwg.mxu0
    %2176 = vmatprep.subr.bf16.mxu0 %v1467
    %2177 = vmatpush1.bf16.msra.mxu0 %v1466
    %2178 = vmatprep.subr.bf16.mxu0 %v1471
    %2179 = vmatpush1.bf16.msra.mxu0 %v1470
    %2180 = vmatprep.subr.bf16.mxu0 %v1475
    %2181 = vmatpush1.bf16.msra.mxu0 %v1474
    %2182 = vmatprep.subr.bf16.mxu0 %v1479
    %2183 = vmatpush1.bf16.msra.mxu0 %v1478
    %2184 = vmatprep.subr.bf16.mxu0 %v1483
    %2185 = vmatpush1.bf16.msra.mxu0 %v1482
    %2186 = vmatprep.subr.bf16.mxu0 %v1487
    %2187 = vmatpush1.bf16.msra.mxu0 %v1486
    %2188 = vmatprep.subr.bf16.mxu0 %v1491
    %2189 = vmatpush1.bf16.msra.mxu0 %v1490
    %2190 = vmatprep.subr.bf16.mxu0 %v1495
    %2191 = vmatpush1.bf16.msra.mxu0 %v1494
    %2192 = vmatprep.subr.bf16.mxu0 %v1499
    %2193 = vmatpush1.bf16.msra.mxu0 %v1498
    %2194 = vmatprep.subr.bf16.mxu0 %v1503
    %2195 = vmatpush1.bf16.msra.mxu0 %v1502
    %2196 = vmatprep.subr.bf16.mxu0 %v1507
    %2197 = vmatpush1.bf16.msra.mxu0 %v1506
    %2198 = vmatprep.subr.bf16.mxu0 %v1511
    %2199 = vmatpush1.bf16.msra.mxu0 %v1510
    %2200 = vmatprep.subr.bf16.mxu0 %v1515
    %2201 = vmatpush1.bf16.msra.mxu0 %v1514
    %2202 = vmatprep.subr.bf16.mxu0 %v1519
    %2203 = vmatpush1.bf16.msra.mxu0 %v1518
    %2204 = vmatprep.subr.bf16.mxu0 %v1523
    %2205 = vmatpush1.bf16.msra.mxu0 %v1522
    %2206 = vmatprep.subr.bf16.mxu0 %v1527
    %2207 = vmatpush1.bf16.msra.mxu0 %v1526
    %2208 = vmatprep.mubr.bf16.mxu0 %v384
    %2209 = vmatmul.mubr.bf16.gmra.mrb[0].mxu0 %v382
    %v2210 = vpop.f32.mrb[0].mxu0
    %v2211 = vadd.f32 %v2170, %v2210
    %v2212 = vpop.f32.mrb[0].mxu0
    %v2213 = vadd.f32 %v2172, %v2212
    %v2214 = vpop.f32.mrb[0].mxu0
    %v2215 = vpop.f32.mrb[0].mxu0
    %2216 = vdwg.mxu0
    %2217 = vmatprep.subr.bf16.mxu0 %v1531
    %2218 = vmatpush1.bf16.msra.mxu0 %v1530
    %2219 = vmatprep.subr.bf16.mxu0 %v1535
    %2220 = vmatpush1.bf16.msra.mxu0 %v1534
    %2221 = vmatprep.subr.bf16.mxu0 %v1539
    %2222 = vmatpush1.bf16.msra.mxu0 %v1538
    %2223 = vmatprep.subr.bf16.mxu0 %v1543
    %2224 = vmatpush1.bf16.msra.mxu0 %v1542
    %2225 = vmatprep.subr.bf16.mxu0 %v1547
    %2226 = vmatpush1.bf16.msra.mxu0 %v1546
    %2227 = vmatprep.subr.bf16.mxu0 %v1551
    %2228 = vmatpush1.bf16.msra.mxu0 %v1550
    %2229 = vmatprep.subr.bf16.mxu0 %v1555
    %2230 = vmatpush1.bf16.msra.mxu0 %v1554
    %2231 = vmatprep.subr.bf16.mxu0 %v1559
    %2232 = vmatpush1.bf16.msra.mxu0 %v1558
    %2233 = vmatprep.subr.bf16.mxu0 0
    %2234 = vmatpush1.bf16.msra.mxu0 0
    %2235 = vmatprep.subr.bf16.mxu0 0
    %2236 = vmatpush1.bf16.msra.mxu0 0
    %2237 = vmatprep.subr.bf16.mxu0 0
    %2238 = vmatpush1.bf16.msra.mxu0 0
    %2239 = vmatprep.subr.bf16.mxu0 0
    %2240 = vmatpush1.bf16.msra.mxu0 0
    %2241 = vmatprep.subr.bf16.mxu0 0
    %2242 = vmatpush1.bf16.msra.mxu0 0
    %2243 = vmatprep.subr.bf16.mxu0 0
    %2244 = vmatpush1.bf16.msra.mxu0 0
    %2245 = vmatprep.subr.bf16.mxu0 0
    %2246 = vmatpush1.bf16.msra.mxu0 0
    %2247 = vmatprep.subr.bf16.mxu0 0
    %2248 = vmatpush1.bf16.msra.mxu0 0
    %2249 = vmatprep.mubr.bf16.mxu0 0
    %2250 = vmatmul.mubr.bf16.gmra.mrb[0].mxu0 %v398
    %v2251 = vpop.f32.mrb[0].mxu0
    %v2252 = vadd.f32 %v2211, %v2251
    %v2253 = vpop.f32.mrb[0].mxu0
    %v2254 = vadd.f32 %v2213, %v2253
    %v2255 = vpop.f32.mrb[0].mxu0
    %v2256 = vpop.f32.mrb[0].mxu0
    %2257 = vdwg.mxu0
    %v2258 = vmax.f32 %v2047, 0.0
    %v2259 = vmax.f32 %v2049, 0.0
    %v2260 = vmax.f32 %v2252, 0.0
    %v2261 = vmax.f32 %v2254, 0.0
    %v2262 = vpack.c.bf16 %v2258, %v2258
    %v2263 = vpack.c.bf16 %v2259, %v2259
    %v2264 = vpack.c.bf16 %v2260, %v2260
    %v2265 = vpack.c.bf16 %v2261, %v2261
    %v2266 = vld [vmem:[%s3] sm:$0xf]
    %v2267 = vld [vmem:[%s3 + $0x4] sm:$0xf]
    %v2268 = vld [vmem:[%s3 + $0x8] sm:$0xf]
    %v2269 = vld [vmem:[%s3 + $0xc] sm:$0xf]
    %v2270 = vld [vmem:[%s3 + $0x10] sm:$0xf]
    %v2271 = vld [vmem:[%s3 + $0x14] sm:$0xf]
    %v2272 = vld [vmem:[%s3 + $0x18] sm:$0xf]
    %v2273 = vld [vmem:[%s3 + $0x1c] sm:$0xf]
    %v2274 = vld [vmem:[%s3 + $0x20] sm:$0xf]
    %v2275 = vld [vmem:[%s3 + $0x24] sm:$0xf]
    %v2276 = vld [vmem:[%s3 + $0x28] sm:$0xf]
    %v2277 = vld [vmem:[%s3 + $0x2c] sm:$0xf]
    %v2278 = vld [vmem:[%s3 + $0x30] sm:$0xf]
    %v2279 = vld [vmem:[%s3 + $0x34] sm:$0xf]
    %v2280 = vld [vmem:[%s3 + $0x38] sm:$0xf]
    %v2281 = vld [vmem:[%s3 + $0x3c] sm:$0xf]
    %v2282 = vld [vmem:[%s3 + $0x40] sm:$0xf]
    %v2283 = vld [vmem:[%s3 + $0x44] sm:$0xf]
    %v2284 = vld [vmem:[%s3 + $0x48] sm:$0xf]
    %v2285 = vld [vmem:[%s3 + $0x4c] sm:$0xf]
    %v2286 = vld [vmem:[%s3 + $0x50] sm:$0xf]
    %v2287 = vld [vmem:[%s3 + $0x54] sm:$0xf]
    %v2288 = vld [vmem:[%s3 + $0x58] sm:$0xf]
    %v2289 = vld [vmem:[%s3 + $0x5c] sm:$0xf]
    %v2290 = vld [vmem:[%s3 + $0x60] sm:$0xf]
    %v2291 = vld [vmem:[%s3 + $0x64] sm:$0xf]
    %v2292 = vld [vmem:[%s3 + $0x68] sm:$0xf]
    %v2293 = vld [vmem:[%s3 + $0x6c] sm:$0xf]
    %v2294 = vld [vmem:[%s3 + $0x70] sm:$0xf]
    %v2295 = vld [vmem:[%s3 + $0x74] sm:$0xf]
    %v2296 = vld [vmem:[%s3 + $0x78] sm:$0xf]
    %v2297 = vld [vmem:[%s3 + $0x7c] sm:$0xf]
    %v2298 = vld [vmem:[%s3 + $0x80] sm:$0xf]
    %v2299 = vld [vmem:[%s3 + $0x84] sm:$0xf]
    %v2300 = vld [vmem:[%s3 + $0x88] sm:$0xf]
    %v2301 = vld [vmem:[%s3 + $0x8c] sm:$0xf]
    %v2302 = vld [vmem:[%s3 + $0x90] sm:$0xf]
    %v2303 = vld [vmem:[%s3 + $0x94] sm:$0xf]
    %v2304 = vld [vmem:[%s3 + $0x98] sm:$0xf]
    %v2305 = vld [vmem:[%s3 + $0x9c] sm:$0xf]
    %v2306 = vld [vmem:[%s3 + $0xa0] sm:$0xf]
    %v2307 = vld [vmem:[%s3 + $0xa4] sm:$0xf]
    %v2308 = vld [vmem:[%s3 + $0xa8] sm:$0xf]
    %v2309 = vld [vmem:[%s3 + $0xac] sm:$0xf]
    %v2310 = vld [vmem:[%s3 + $0xb0] sm:$0xf]
    %v2311 = vld [vmem:[%s3 + $0xb4] sm:$0xf]
    %v2312 = vld [vmem:[%s3 + $0xb8] sm:$0xf]
    %v2313 = vld [vmem:[%s3 + $0xbc] sm:$0xf]
    %v2314 = vld [vmem:[%s3 + $0xc0] sm:$0xf]
    %v2315 = vld [vmem:[%s3 + $0xc4] sm:$0xf]
    %v2316 = vld [vmem:[%s3 + $0xc8] sm:$0xf]
    %v2317 = vld [vmem:[%s3 + $0xcc] sm:$0xf]
    %v2318 = vld [vmem:[%s3 + $0xd0] sm:$0xf]
    %v2319 = vld [vmem:[%s3 + $0xd4] sm:$0xf]
    %v2320 = vld [vmem:[%s3 + $0xd8] sm:$0xf]
    %v2321 = vld [vmem:[%s3 + $0xdc] sm:$0xf]
    %v2322 = vld [vmem:[%s3 + $0xe0] sm:$0xf]
    %v2323 = vld [vmem:[%s3 + $0xe4] sm:$0xf]
    %v2324 = vld [vmem:[%s3 + $0xe8] sm:$0xf]
    %v2325 = vld [vmem:[%s3 + $0xec] sm:$0xf]
    %v2326 = vld [vmem:[%s3 + $0xf0] sm:$0xf]
    %v2327 = vld [vmem:[%s3 + $0xf4] sm:$0xf]
    %v2328 = vld [vmem:[%s3 + $0xf8] sm:$0xf]
    %v2329 = vld [vmem:[%s3 + $0xfc] sm:$0xf]
    %v2330 = vld [vmem:[%s4] sm:$0x1]
    %v2332 = vlaneseq
    %v2333 = vshrl.u32 %v2332, 7
    %v2334 = vsub.s32 0, %v2333
    %v2335 = vrot.slane %v2330, %v2334
    %v2401 = vunpack.c.l.b16 %v2266
    %v2402 = vunpack.c.l.b16 %v2267
    %v2403 = vunpack.c.l.b16 %v2268
    %v2404 = vunpack.c.l.b16 %v2269
    %v2405 = vunpack.c.l.b16 %v2270
    %v2406 = vunpack.c.l.b16 %v2271
    %v2407 = vunpack.c.l.b16 %v2272
    %v2408 = vunpack.c.l.b16 %v2273
    %v2409 = vunpack.c.l.b16 %v2274
    %v2410 = vunpack.c.l.b16 %v2275
    %v2411 = vunpack.c.l.b16 %v2276
    %v2412 = vunpack.c.l.b16 %v2277
    %v2413 = vunpack.c.l.b16 %v2278
    %v2414 = vunpack.c.l.b16 %v2279
    %v2415 = vunpack.c.l.b16 %v2280
    %v2416 = vunpack.c.l.b16 %v2281
    %v2417 = vunpack.c.l.b16 %v2282
    %v2418 = vunpack.c.l.b16 %v2283
    %v2419 = vunpack.c.l.b16 %v2284
    %v2420 = vunpack.c.l.b16 %v2285
    %v2421 = vunpack.c.l.b16 %v2286
    %v2422 = vunpack.c.l.b16 %v2287
    %v2423 = vunpack.c.l.b16 %v2288
    %v2424 = vunpack.c.l.b16 %v2289
    %v2425 = vunpack.c.l.b16 %v2290
    %v2426 = vunpack.c.l.b16 %v2291
    %v2427 = vunpack.c.l.b16 %v2292
    %v2428 = vunpack.c.l.b16 %v2293
    %v2429 = vunpack.c.l.b16 %v2294
    %v2430 = vunpack.c.l.b16 %v2295
    %v2431 = vunpack.c.l.b16 %v2296
    %v2432 = vunpack.c.l.b16 %v2297
    %v2433 = vunpack.c.l.b16 %v2298
    %v2434 = vunpack.c.l.b16 %v2299
    %v2435 = vunpack.c.l.b16 %v2300
    %v2436 = vunpack.c.l.b16 %v2301
    %v2437 = vunpack.c.l.b16 %v2302
    %v2438 = vunpack.c.l.b16 %v2303
    %v2439 = vunpack.c.l.b16 %v2304
    %v2440 = vunpack.c.l.b16 %v2305
    %v2441 = vunpack.c.l.b16 %v2306
    %v2442 = vunpack.c.l.b16 %v2307
    %v2443 = vunpack.c.l.b16 %v2308
    %v2444 = vunpack.c.l.b16 %v2309
    %v2445 = vunpack.c.l.b16 %v2310
    %v2446 = vunpack.c.l.b16 %v2311
    %v2447 = vunpack.c.l.b16 %v2312
    %v2448 = vunpack.c.l.b16 %v2313
    %v2449 = vunpack.c.l.b16 %v2314
    %v2450 = vunpack.c.l.b16 %v2315
    %v2451 = vunpack.c.l.b16 %v2316
    %v2452 = vunpack.c.l.b16 %v2317
    %v2453 = vunpack.c.l.b16 %v2318
    %v2454 = vunpack.c.l.b16 %v2319
    %v2455 = vunpack.c.l.b16 %v2320
    %v2456 = vunpack.c.l.b16 %v2321
    %v2457 = vunpack.c.l.b16 %v2322
    %v2458 = vunpack.c.l.b16 %v2323
    %v2459 = vunpack.c.l.b16 %v2324
    %v2460 = vunpack.c.l.b16 %v2325
    %v2461 = vunpack.c.l.b16 %v2326
    %v2462 = vunpack.c.l.b16 %v2327
    %v2463 = vunpack.c.l.b16 %v2328
    %v2464 = vunpack.c.l.b16 %v2329
    %v2465 = vpack.c.b16 %v2402, %v2401
    %v2466 = vpack.c.b16 %v2404, %v2403
    %v2467 = vpack.c.b16 %v2406, %v2405
    %v2468 = vpack.c.b16 %v2408, %v2407
    %v2469 = vpack.c.b16 %v2410, %v2409
    %v2470 = vpack.c.b16 %v2412, %v2411
    %v2471 = vpack.c.b16 %v2414, %v2413
    %v2472 = vpack.c.b16 %v2416, %v2415
    %v2473 = vpack.c.b16 %v2418, %v2417
    %v2474 = vpack.c.b16 %v2420, %v2419
    %v2475 = vpack.c.b16 %v2422, %v2421
    %v2476 = vpack.c.b16 %v2424, %v2423
    %v2477 = vpack.c.b16 %v2426, %v2425
    %v2478 = vpack.c.b16 %v2428, %v2427
    %v2479 = vpack.c.b16 %v2430, %v2429
    %v2480 = vpack.c.b16 %v2432, %v2431
    %v2481 = vpack.c.b16 %v2434, %v2433
    %v2482 = vpack.c.b16 %v2436, %v2435
    %v2483 = vpack.c.b16 %v2438, %v2437
    %v2484 = vpack.c.b16 %v2440, %v2439
    %v2485 = vpack.c.b16 %v2442, %v2441
    %v2486 = vpack.c.b16 %v2444, %v2443
    %v2487 = vpack.c.b16 %v2446, %v2445
    %v2488 = vpack.c.b16 %v2448, %v2447
    %v2489 = vpack.c.b16 %v2450, %v2449
    %v2490 = vpack.c.b16 %v2452, %v2451
    %v2491 = vpack.c.b16 %v2454, %v2453
    %v2492 = vpack.c.b16 %v2456, %v2455
    %v2493 = vpack.c.b16 %v2458, %v2457
    %v2494 = vpack.c.b16 %v2460, %v2459
    %v2495 = vpack.c.b16 %v2462, %v2461
    %v2496 = vpack.c.b16 %v2464, %v2463
    %2529 = vmatprep.subr.bf16.mxu0 0
    %2530 = vmatpush1.bf16.msra.mxu0 %v2465
    %2531 = vmatprep.subr.bf16.mxu0 0
    %2532 = vmatpush1.bf16.msra.mxu0 %v2466
    %2533 = vmatprep.subr.bf16.mxu0 0
    %2534 = vmatpush1.bf16.msra.mxu0 %v2467
    %2535 = vmatprep.subr.bf16.mxu0 0
    %2536 = vmatpush1.bf16.msra.mxu0 %v2468
    %2537 = vmatprep.subr.bf16.mxu0 0
    %2538 = vmatpush1.bf16.msra.mxu0 %v2469
    %2539 = vmatprep.subr.bf16.mxu0 0
    %2540 = vmatpush1.bf16.msra.mxu0 %v2470
    %2541 = vmatprep.subr.bf16.mxu0 0
    %2542 = vmatpush1.bf16.msra.mxu0 %v2471
    %2543 = vmatprep.subr.bf16.mxu0 0
    %2544 = vmatpush1.bf16.msra.mxu0 %v2472
    %2545 = vmatprep.subr.bf16.mxu0 0
    %2546 = vmatpush1.bf16.msra.mxu0 %v2473
    %2547 = vmatprep.subr.bf16.mxu0 0
    %2548 = vmatpush1.bf16.msra.mxu0 %v2474
    %2549 = vmatprep.subr.bf16.mxu0 0
    %2550 = vmatpush1.bf16.msra.mxu0 %v2475
    %2551 = vmatprep.subr.bf16.mxu0 0
    %2552 = vmatpush1.bf16.msra.mxu0 %v2476
    %2553 = vmatprep.subr.bf16.mxu0 0
    %2554 = vmatpush1.bf16.msra.mxu0 %v2477
    %2555 = vmatprep.subr.bf16.mxu0 0
    %2556 = vmatpush1.bf16.msra.mxu0 %v2478
    %2557 = vmatprep.subr.bf16.mxu0 0
    %2558 = vmatpush1.bf16.msra.mxu0 %v2479
    %2559 = vmatprep.subr.bf16.mxu0 0
    %2560 = vmatpush1.bf16.msra.mxu0 %v2480
    %2561 = vmatprep.mubr.bf16.mxu0 %v2263
    %2562 = vmatmul.mubr.bf16.gmra.mrb[0].mxu0 %v2262
    %v2563 = vpop.f32.mrb[0].mxu0
    %v2564 = vadd.f32 %v2335, %v2563
    %v2565 = vpop.f32.mrb[0].mxu0
    %v2566 = vpop.f32.mrb[0].mxu0
    %v2567 = vpop.f32.mrb[0].mxu0
    %2568 = vdwg.mxu0
    %2569 = vmatprep.subr.bf16.mxu0 0
    %2570 = vmatpush1.bf16.msra.mxu0 %v2481
    %2571 = vmatprep.subr.bf16.mxu0 0
    %2572 = vmatpush1.bf16.msra.mxu0 %v2482
    %2573 = vmatprep.subr.bf16.mxu0 0
    %2574 = vmatpush1.bf16.msra.mxu0 %v2483
    %2575 = vmatprep.subr.bf16.mxu0 0
    %2576 = vmatpush1.bf16.msra.mxu0 %v2484
    %2577 = vmatprep.subr.bf16.mxu0 0
    %2578 = vmatpush1.bf16.msra.mxu0 %v2485
    %2579 = vmatprep.subr.bf16.mxu0 0
    %2580 = vmatpush1.bf16.msra.mxu0 %v2486
    %2581 = vmatprep.subr.bf16.mxu0 0
    %2582 = vmatpush1.bf16.msra.mxu0 %v2487
    %2583 = vmatprep.subr.bf16.mxu0 0
    %2584 = vmatpush1.bf16.msra.mxu0 %v2488
    %2585 = vmatprep.subr.bf16.mxu0 0
    %2586 = vmatpush1.bf16.msra.mxu0 %v2489
    %2587 = vmatprep.subr.bf16.mxu0 0
    %2588 = vmatpush1.bf16.msra.mxu0 %v2490
    %2589 = vmatprep.subr.bf16.mxu0 0
    %2590 = vmatpush1.bf16.msra.mxu0 %v2491
    %2591 = vmatprep.subr.bf16.mxu0 0
    %2592 = vmatpush1.bf16.msra.mxu0 %v2492
    %2593 = vmatprep.subr.bf16.mxu0 0
    %2594 = vmatpush1.bf16.msra.mxu0 %v2493
    %2595 = vmatprep.subr.bf16.mxu0 0
    %2596 = vmatpush1.bf16.msra.mxu0 %v2494
    %2597 = vmatprep.subr.bf16.mxu0 0
    %2598 = vmatpush1.bf16.msra.mxu0 %v2495
    %2599 = vmatprep.subr.bf16.mxu0 0
    %2600 = vmatpush1.bf16.msra.mxu0 %v2496
    %2601 = vmatprep.mubr.bf16.mxu0 %v2265
    %2602 = vmatmul.mubr.bf16.gmra.mrb[0].mxu0 %v2264
    %v2603 = vpop.f32.mrb[0].mxu0
    %v2604 = vadd.f32 %v2564, %v2603
    %v2605 = vpop.f32.mrb[0].mxu0
    %v2606 = vpop.f32.mrb[0].mxu0
    %v2607 = vpop.f32.mrb[0].mxu0
    %2608 = vdwg.mxu0
    %2609 = vst [vmem:[#allocation2] sm:$0x3] %v2604
    // Predicated region
    $region22: #{cnn_forward.7} parent=1 // pred_check
      _
    $region23: #{cnn_forward.7} parent=1 // pred_check_branch
      %2611 = sbr.rel (0) target = $region25
    $region24: #{cnn_forward.7} parent=1 // pred_region
      %s2613 = ssub.s32 32, 32
      %2614 = vsyncadd [#allocation3], %s2613
      %s2616 = sshll.u32 [#allocation2], 4
      %s2617 = int_to_ptr.vmem [resolvable:$true] %s2616
      %2619 = dma.vmem_to_hbm [thread:$0]  %s2617, 32, %s5, [#allocation3]
    $region25: #{cnn_forward.7} parent=1 // pred_fallthru
      _
    // Predicated region
    $region26: #{cnn_forward.7} parent=1 // pred_check
      _
    $region27: #{cnn_forward.7} parent=1 // pred_check_branch
      %2621 = sbr.rel (0) target = $region29
    $region28: #{cnn_forward.7} parent=1 // pred_region
      %2622 = dma.done [#allocation3], 32
    $region29: #{cnn_forward.7} parent=1 // pred_fallthru
      _
    %2623 = vsyncpa [#allocation3], 1

</llo_original>
